<compile_context>
chip_gen: v7x
topology: tpu7x:2x2x1
jax: 0.10.0
libtpu: 0.0.40
codegen_flags: <defaults>
</compile_context>

<pallas_src>
import math
from functools import partial

import jax
import jax.numpy as jnp
from jax.experimental import pallas as pl
from jax.experimental.pallas import tpu as pltpu

HIDDEN = 32
N_HEADS = 4
N_LAYERS = 2
EXPANSION = 8.0 / 3.0
EPS = 1e-5
NEG_BIG = -1e30  # finite "minus infinity" for masked keys (avoids NaN rows)


def _swiglu_hidden(expansion_ratio: float, d_model: int) -> int:
    # same rounding as swiglu_correction_fn in the reference implementation
    return int(((expansion_ratio * d_model) + 255) // 256 * 256)


FFN_HIDDEN = _swiglu_hidden(EXPANSION, HIDDEN)
D_HEAD = HIDDEN // N_HEADS


def _layer_norm(v, gamma, beta=None, eps=EPS):
    mu = jnp.mean(v, axis=-1, keepdims=True)
    var = jnp.mean((v - mu) ** 2, axis=-1, keepdims=True)
    n = (v - mu) * jax.lax.rsqrt(var + eps)
    out = n * gamma
    if beta is not None:
        out = out + beta
    return out


def _headwise_layernorm(parts, gammas, d_model, eps=EPS):
    """LayerNorm over the full model dim, computed from per-head (N, dh) pieces.

    Uses only last-axis reductions (no cross-head re-assembly); gamma is
    pre-split per head in the wrapper (the 1/sqrt(d_head) scale is folded into
    the q gamma there).
    """
    s1 = sum(jnp.sum(p, axis=-1, keepdims=True) for p in parts)        # (N, 1)
    s2 = sum(jnp.sum(p * p, axis=-1, keepdims=True) for p in parts)    # (N, 1)
    mu = s1 / d_model
    var = s2 / d_model - mu * mu
    inv = jax.lax.rsqrt(var + eps)
    return [(p - mu) * inv * g for p, g in zip(parts, gammas)]


# ----------------------------------------------------------------------------
# Fused kernel: all layers for one block of TB batch elements per grid step.
# Rows are flattened to N = TB*S; cross-batch attention is masked by the
# precomputed block-diagonal bias.
# ----------------------------------------------------------------------------
def fused_transformer_kernel(x_ref, bias_ref,
                             ln1g_ref, ln1b_ref, wq_ref, wk_ref, wv_ref,
                             qg_ref, kg_ref, wo_ref,
                             ln2g_ref, ln2b_ref, w1_ref, w2_ref,
                             o_ref, *, n_layers, n_heads, d_model, ffn_hidden):
    x = x_ref[0].astype(jnp.float32)      # (N, D) flattened rows of this block
    bias = bias_ref[0]                    # (N, N) additive bias, loaded ONCE

    for l in range(n_layers):             # static, fully unrolled layer loop
        # ---------------- MultiHeadAttention (pre-LN) ----------------
        h = _layer_norm(x, ln1g_ref[l], ln1b_ref[l])                      # (N, D)

        # Per-head projections from wrapper-pre-split weights: plain 2-D
        # matmuls, no unaligned lane slices, no stacks, no transposes.
        q_parts = [jnp.dot(h, wq_ref[l, hh], preferred_element_type=jnp.float32)
                   for hh in range(n_heads)]                              # H x (N, dh)
        k_parts = [jnp.dot(h, wk_ref[l, hh], preferred_element_type=jnp.float32)
                   for hh in range(n_heads)]
        v_parts = [jnp.dot(h, wv_ref[l, hh], preferred_element_type=jnp.float32)
                   for hh in range(n_heads)]

        # q/k LayerNorm over the FULL model dim (joint across heads); the
        # 1/sqrt(d_head) scale is pre-folded into the q gamma in the wrapper.
        qn = _headwise_layernorm(q_parts, [qg_ref[l, hh] for hh in range(n_heads)], d_model)
        kn = _headwise_layernorm(k_parts, [kg_ref[l, hh] for hh in range(n_heads)], d_model)
        # TODO(synk): rotary embeddings not implemented (module default rotary=False).

        # Per-head attention with the head-sum fused into the output
        # projection: each head contributes ctx_h @ Wo_h directly.
        contribs = []
        for hh in range(n_heads):
            s = jax.lax.dot_general(qn[hh], kn[hh], (((1,), (1,)), ((), ())),
                                    preferred_element_type=jnp.float32)   # (N, N)
            s = s + bias
            m = jnp.max(s, axis=-1, keepdims=True)
            e = jnp.exp(s - m)
            p = e * pl.reciprocal(jnp.sum(e, axis=-1, keepdims=True), approx=True)
            ctx = jnp.dot(p, v_parts[hh], preferred_element_type=jnp.float32)      # (N, dh)
            contribs.append(jnp.dot(ctx, wo_ref[l, hh],
                                    preferred_element_type=jnp.float32))           # (N, D)
        x = x + sum(contribs)

        # ---------------- SwiGLU-LN FFN ----------------
        h2 = _layer_norm(x, ln2g_ref[l], ln2b_ref[l])
        u = jnp.dot(h2, w1_ref[l], preferred_element_type=jnp.float32)    # (N, 2F), single matmul
        u1 = u[:, :ffn_hidden]            # lane slice at 0    (aligned)
        u2 = u[:, ffn_hidden:]            # lane slice at F=256 (128-aligned, free)
        g = (u1 * jax.nn.sigmoid(u1)) * u2
        x = x + jnp.dot(g, w2_ref[l], preferred_element_type=jnp.float32)
        # TODO(synk): dropout omitted (identity on the inference/eval path).

    o_ref[0] = x.astype(o_ref.dtype)


# ----------------------------------------------------------------------------
# Wrapper: pack per-layer params into stacked, head-split, kernel-friendly
# arrays and run the whole stack in a single pallas_call.
# ----------------------------------------------------------------------------
def pack_params(layer_params):
    D, H, dh, F = HIDDEN, N_HEADS, D_HEAD, FFN_HIDDEN
    L = len(layer_params)
    stacked = [jnp.stack([p[i] for p in layer_params], axis=0) for i in range(10)]
    ln1g, ln1b, wqkv, qg, kg, wout, ln2g, ln2b, w1, w2 = stacked
    # Split the fused qkv weight and pre-split per head (all done wrapper-side
    # in XLA, so the kernel never touches non-128-aligned lane offsets).
    wq = wqkv[:, :, 0:D].reshape(L, D, H, dh).transpose(0, 2, 1, 3)      # (L, H, D, dh)
    wk = wqkv[:, :, D:2 * D].reshape(L, D, H, dh).transpose(0, 2, 1, 3)
    wv = wqkv[:, :, 2 * D:3 * D].reshape(L, D, H, dh).transpose(0, 2, 1, 3)
    qg_h = (qg / math.sqrt(dh)).reshape(L, 1, H, dh).transpose(0, 2, 1, 3)  # scale folded
    kg_h = kg.reshape(L, 1, H, dh).transpose(0, 2, 1, 3)                 # (L, H, 1, dh)
    wo_h = wout.reshape(L, H, dh, D)                                     # head-major rows
    # w1 stays fused: (L, D, 2F); the u1/u2 split at F=256 is 128-aligned.
    return [ln1g, ln1b, wq, wk, wv, qg_h, kg_h, wo_h, ln2g, ln2b, w1, w2]


def _pick_batch_tile(B, S, max_rows=256):
    """Largest divisor of B with tb*S <= max_rows (keeps block-diag scores sane)."""
    tb = 1
    for cand in range(1, B + 1):
        if B % cand == 0 and cand * S <= max_rows:
            tb = cand
    return tb


def transformer_forward(x, attention_mask, layer_params):
    """Matches Transformer.forward (stack of TransformerBlocks), fully fused."""
    B, S, D = x.shape
    if attention_mask is None:
        attention_mask = jnp.ones((B, S), jnp.float32)

    TB = _pick_batch_tile(B, S)          # whole batch per step at toy sizes -> grid=(1,)
    G = B // TB
    N = TB * S

    # Block-diagonal additive attention bias per grid block: queries of batch
    # element bi only see keys of bi (0 where attended, -1e30 where masked or
    # cross-batch).  Built wrapper-side; the kernel just adds it.
    key_bias = jnp.where(attention_mask.astype(jnp.float32) > 0.5, 0.0, NEG_BIG)
    key_bias = key_bias.reshape(G, TB, S)
    same_b = (jnp.arange(TB)[:, None, None, None]
              == jnp.arange(TB)[None, None, :, None])                    # (TB,1,TB,1)
    bias = jnp.where(same_b[None],
                     jnp.broadcast_to(key_bias[:, None, None, :, :], (G, TB, S, TB, S)),
                     NEG_BIG)
    bias = bias.reshape(G, N, N).astype(jnp.float32)

    # Flatten TB batch rows per block (free in XLA).
    x2 = x.reshape(G, N, D)

    packed = pack_params(layer_params)
    kernel = partial(fused_transformer_kernel, n_layers=len(layer_params),
                     n_heads=N_HEADS, d_model=D, ffn_hidden=FFN_HIDDEN)

    def const_spec(a):
        nd = a.ndim
        return pl.BlockSpec(a.shape, lambda g, _nd=nd: (0,) * _nd,
                            memory_space=pltpu.MemorySpace.VMEM)

    in_specs = [
        pl.BlockSpec((1, N, D), lambda g: (g, 0, 0)),   # activations: TB*S rows / step
        pl.BlockSpec((1, N, N), lambda g: (g, 0, 0)),   # block-diag additive mask bias
    ] + [const_spec(p) for p in packed]                 # grid-invariant weights

    # TODO(synk): at realistic D/FFN/L add a layer grid axis with streamed
    # per-layer weights (v7x has only 64 MiB VMEM) and cast matmul operands to
    # bf16 on v6e/v7x; both are noise at these toy dims.
    out2 = pl.pallas_call(
        kernel,
        grid=(G,),
        in_specs=in_specs,
        out_specs=pl.BlockSpec((1, N, D), lambda g: (g, 0, 0)),
        out_shape=jax.ShapeDtypeStruct((G, N, D), x.dtype),
        compiler_params=pltpu.CompilerParams(
            # harmless at G=1; lets megacore shard blocks once G >= 2
            dimension_semantics=("parallel",),
            vmem_limit_bytes=32 * 1024 * 1024,
        ),
    )(x2, bias, *packed)
    return out2.reshape(B, S, D)


# ---------------- deterministic parameter init ----------------
def init_layer_params(key, d, ffn):
    ks = jax.random.split(key, 4)
    s = 0.02
    ln1g = jnp.ones((1, d), jnp.float32)
    ln1b = jnp.zeros((1, d), jnp.float32)
    wqkv = s * jax.random.normal(ks[0], (d, 3 * d), jnp.float32)
    qg = jnp.ones((1, d), jnp.float32)
    kg = jnp.ones((1, d), jnp.float32)
    wout = s * jax.random.normal(ks[1], (d, d), jnp.float32)
    ln2g = jnp.ones((1, d), jnp.float32)
    ln2b = jnp.zeros((1, d), jnp.float32)
    w1 = s * jax.random.normal(ks[2], (d, 2 * ffn), jnp.float32)
    w2 = s * jax.random.normal(ks[3], (ffn, d), jnp.float32)
    return [ln1g, ln1b, wqkv, qg, kg, wout, ln2g, ln2b, w1, w2]


# ---------------- pure-JAX reference (for correctness check) ----------------
def reference_block(x, attention_mask, params):
    ln1g, ln1b, wqkv, qg, kg, wout, ln2g, ln2b, w1, w2 = params
    B, S, D = x.shape
    dh = D // N_HEADS
    h = _layer_norm(x, ln1g[0], ln1b[0])
    qkv = h @ wqkv
    q = _layer_norm(qkv[..., 0:D], qg[0])
    k = _layer_norm(qkv[..., D:2 * D], kg[0])
    v = qkv[..., 2 * D:3 * D]
    qh = q.reshape(B, S, N_HEADS, dh).transpose(0, 2, 1, 3)
    kh = k.reshape(B, S, N_HEADS, dh).transpose(0, 2, 1, 3)
    vh = v.reshape(B, S, N_HEADS, dh).transpose(0, 2, 1, 3)
    scores = jnp.einsum("bhqd,bhkd->bhqk", qh, kh) / math.sqrt(dh)
    bias = jnp.where(attention_mask[:, None, None, :] > 0.5, 0.0, NEG_BIG)
    scores = scores + bias
    m = jnp.max(scores, axis=-1, keepdims=True)
    p = jnp.exp(scores - m)
    p = p / jnp.sum(p, axis=-1, keepdims=True)
    ctx = jnp.einsum("bhqk,bhkd->bhqd", p, vh).transpose(0, 2, 1, 3).reshape(B, S, D)
    x = x + ctx @ wout
    h2 = _layer_norm(x, ln2g[0], ln2b[0])
    u = h2 @ w1
    u1, u2 = u[..., :FFN_HIDDEN], u[..., FFN_HIDDEN:]
    x = x + ((u1 * jax.nn.sigmoid(u1)) * u2) @ w2
    return x


def reference_transformer(x, attention_mask, layer_params):
    if attention_mask is None:
        attention_mask = jnp.ones(x.shape[:2], jnp.float32)
    for params in layer_params:
        x = reference_block(x, attention_mask, params)
    return x


if __name__ == "__main__":
    B, S = 2, 8
    key = jax.random.PRNGKey(0)
    kx, kp = jax.random.split(key)
    x = jax.random.normal(kx, (B, S, HIDDEN), jnp.float32)
    # 2-D attention mask like the PyTorch forward accepts: mask last 2 keys of batch 1.
    attention_mask = jnp.ones((B, S), jnp.float32).at[1, 6:].set(0.0)

    layer_keys = jax.random.split(kp, N_LAYERS)
    layer_params = [init_layer_params(k, HIDDEN, FFN_HIDDEN) for k in layer_keys]

    out = transformer_forward(x, attention_mask, layer_params)
    out = jax.block_until_ready(out)

    ref = reference_transformer(x, attention_mask, layer_params)
    assert out.shape == (B, S, HIDDEN)
    # tolerance relaxed slightly vs exact-divide version: softmax denominator
    # uses the EUP approximate reciprocal (error well below 1e-3 end-to-end).
    assert jnp.allclose(out, ref, atol=1e-3, rtol=1e-3), "mismatch vs JAX reference"
    print("KERNEL_OK")
</pallas_src>

<mosaic_0001>
module attributes {stable_mosaic.version = 11 : i64} {
  func.func @fused_transformer_kernel(%arg0: i32, %arg1: memref<1x16x32xf32, #tpu.memory_space<vmem>>, %arg2: memref<1x16x16xf32, #tpu.memory_space<vmem>>, %arg3: memref<2x1x32xf32, #tpu.memory_space<vmem>>, %arg4: memref<2x1x32xf32, #tpu.memory_space<vmem>>, %arg5: memref<2x4x32x8xf32, #tpu.memory_space<vmem>>, %arg6: memref<2x4x32x8xf32, #tpu.memory_space<vmem>>, %arg7: memref<2x4x32x8xf32, #tpu.memory_space<vmem>>, %arg8: memref<2x4x1x8xf32, #tpu.memory_space<vmem>>, %arg9: memref<2x4x1x8xf32, #tpu.memory_space<vmem>>, %arg10: memref<2x4x8x32xf32, #tpu.memory_space<vmem>>, %arg11: memref<2x1x32xf32, #tpu.memory_space<vmem>>, %arg12: memref<2x1x32xf32, #tpu.memory_space<vmem>>, %arg13: memref<2x32x512xf32, #tpu.memory_space<vmem>>, %arg14: memref<2x256x32xf32, #tpu.memory_space<vmem>>, %arg15: memref<1x16x32xf32, #tpu.memory_space<vmem>>) attributes {dimension_semantics = [#tpu.dimension_semantics<parallel>], iteration_bounds = array<i64: 1>, scalar_prefetch = 0 : i64, scratch_operands = 0 : i64, tpu.core_type = #tpu.core_type<tc>, window_params = [{transform_indices = @transform_0, window_bounds = array<i64: 1, 16, 32>}, {transform_indices = @transform_1, window_bounds = array<i64: 1, 16, 16>}, {pipeline_mode = #tpu.pipeline_mode<synchronous>, transform_indices = @transform_2, window_bounds = array<i64: 2, 1, 32>}, {pipeline_mode = #tpu.pipeline_mode<synchronous>, transform_indices = @transform_3, window_bounds = array<i64: 2, 1, 32>}, {pipeline_mode = #tpu.pipeline_mode<synchronous>, transform_indices = @transform_4, window_bounds = array<i64: 2, 4, 32, 8>}, {pipeline_mode = #tpu.pipeline_mode<synchronous>, transform_indices = @transform_5, window_bounds = array<i64: 2, 4, 32, 8>}, {pipeline_mode = #tpu.pipeline_mode<synchronous>, transform_indices = @transform_6, window_bounds = array<i64: 2, 4, 32, 8>}, {pipeline_mode = #tpu.pipeline_mode<synchronous>, transform_indices = @transform_7, window_bounds = array<i64: 2, 4, 1, 8>}, {pipeline_mode = #tpu.pipeline_mode<synchronous>, transform_indices = @transform_8, window_bounds = array<i64: 2, 4, 1, 8>}, {pipeline_mode = #tpu.pipeline_mode<synchronous>, transform_indices = @transform_9, window_bounds = array<i64: 2, 4, 8, 32>}, {pipeline_mode = #tpu.pipeline_mode<synchronous>, transform_indices = @transform_10, window_bounds = array<i64: 2, 1, 32>}, {pipeline_mode = #tpu.pipeline_mode<synchronous>, transform_indices = @transform_11, window_bounds = array<i64: 2, 1, 32>}, {pipeline_mode = #tpu.pipeline_mode<synchronous>, transform_indices = @transform_12, window_bounds = array<i64: 2, 32, 512>}, {pipeline_mode = #tpu.pipeline_mode<synchronous>, transform_indices = @transform_13, window_bounds = array<i64: 2, 256, 32>}, {transform_indices = @transform_14, window_bounds = array<i64: 1, 16, 32>}]} {
    %c0 = arith.constant 0 : index
    %c0_0 = arith.constant 0 : index
    %c0_1 = arith.constant 0 : index
    %0 = vector.load %arg1[%c0, %c0_0, %c0_1] : memref<1x16x32xf32, #tpu.memory_space<vmem>>, vector<1x16x32xf32>
    %1 = vector.shape_cast %0 : vector<1x16x32xf32> to vector<16x32xf32>
    %c0_2 = arith.constant 0 : index
    %c0_3 = arith.constant 0 : index
    %c0_4 = arith.constant 0 : index
    %2 = vector.load %arg2[%c0_2, %c0_3, %c0_4] : memref<1x16x16xf32, #tpu.memory_space<vmem>>, vector<1x16x16xf32>
    %3 = vector.shape_cast %2 : vector<1x16x16xf32> to vector<16x16xf32>
    %c0_5 = arith.constant 0 : index
    %c0_6 = arith.constant 0 : index
    %c0_7 = arith.constant 0 : index
    %4 = vector.load %arg3[%c0_5, %c0_6, %c0_7] : memref<2x1x32xf32, #tpu.memory_space<vmem>>, vector<1x1x32xf32>
    %5 = vector.shape_cast %4 : vector<1x1x32xf32> to vector<1x32xf32>
    %c0_8 = arith.constant 0 : index
    %c0_9 = arith.constant 0 : index
    %c0_10 = arith.constant 0 : index
    %6 = vector.load %arg4[%c0_8, %c0_9, %c0_10] : memref<2x1x32xf32, #tpu.memory_space<vmem>>, vector<1x1x32xf32>
    %7 = vector.shape_cast %6 : vector<1x1x32xf32> to vector<1x32xf32>
    %cst = arith.constant dense<0.000000e+00> : vector<16xf32>
    %8 = vector.multi_reduction <add>, %1, %cst [1] : vector<16x32xf32> to vector<16xf32>
    %9 = vector.shape_cast %8 : vector<16xf32> to vector<16x1xf32>
    %cst_11 = arith.constant 3.200000e+01 : f32
    %10 = vector.broadcast %cst_11 : f32 to vector<16x1xf32>
    %11 = arith.divf %9, %10 : vector<16x1xf32>
    %12 = vector.broadcast %11 : vector<16x1xf32> to vector<16x32xf32>
    %13 = arith.subf %1, %12 : vector<16x32xf32>
    %14 = arith.mulf %13, %13 : vector<16x32xf32>
    %cst_12 = arith.constant dense<0.000000e+00> : vector<16xf32>
    %15 = vector.multi_reduction <add>, %14, %cst_12 [1] : vector<16x32xf32> to vector<16xf32>
    %16 = vector.shape_cast %15 : vector<16xf32> to vector<16x1xf32>
    %cst_13 = arith.constant 3.200000e+01 : f32
    %17 = vector.broadcast %cst_13 : f32 to vector<16x1xf32>
    %18 = arith.divf %16, %17 : vector<16x1xf32>
    %19 = vector.broadcast %11 : vector<16x1xf32> to vector<16x32xf32>
    %20 = arith.subf %1, %19 : vector<16x32xf32>
    %cst_14 = arith.constant 9.99999974E-6 : f32
    %21 = vector.broadcast %cst_14 : f32 to vector<16x1xf32>
    %22 = arith.addf %18, %21 : vector<16x1xf32>
    %23 = math.rsqrt %22 : vector<16x1xf32>
    %24 = vector.broadcast %23 : vector<16x1xf32> to vector<16x32xf32>
    %25 = arith.mulf %20, %24 : vector<16x32xf32>
    %26 = vector.broadcast %5 : vector<1x32xf32> to vector<16x32xf32>
    %27 = arith.mulf %25, %26 : vector<16x32xf32>
    %28 = vector.broadcast %7 : vector<1x32xf32> to vector<16x32xf32>
    %29 = arith.addf %27, %28 : vector<16x32xf32>
    %c0_15 = arith.constant 0 : index
    %c0_16 = arith.constant 0 : index
    %c0_17 = arith.constant 0 : index
    %c0_18 = arith.constant 0 : index
    %30 = vector.load %arg5[%c0_15, %c0_16, %c0_17, %c0_18] : memref<2x4x32x8xf32, #tpu.memory_space<vmem>>, vector<1x1x32x8xf32>
    %31 = vector.shape_cast %30 : vector<1x1x32x8xf32> to vector<32x8xf32>
    %cst_19 = arith.constant dense<0.000000e+00> : vector<16x8xf32>
    %32 = tpu.matmul %29, %31, %cst_19 {dimension_numbers = #tpu.dot_dimension_numbers<[1], [0], [0], [1], [0, 0, 1, 1], [], []>} : vector<16x32xf32>, vector<32x8xf32>, vector<16x8xf32> -> vector<16x8xf32>
    %c0_20 = arith.constant 0 : index
    %c1 = arith.constant 1 : index
    %c0_21 = arith.constant 0 : index
    %c0_22 = arith.constant 0 : index
    %33 = vector.load %arg5[%c0_20, %c1, %c0_21, %c0_22] : memref<2x4x32x8xf32, #tpu.memory_space<vmem>>, vector<1x1x32x8xf32>
    %34 = vector.shape_cast %33 : vector<1x1x32x8xf32> to vector<32x8xf32>
    %cst_23 = arith.constant dense<0.000000e+00> : vector<16x8xf32>
    %35 = tpu.matmul %29, %34, %cst_23 {dimension_numbers = #tpu.dot_dimension_numbers<[1], [0], [0], [1], [0, 0, 1, 1], [], []>} : vector<16x32xf32>, vector<32x8xf32>, vector<16x8xf32> -> vector<16x8xf32>
    %c0_24 = arith.constant 0 : index
    %c2 = arith.constant 2 : index
    %c0_25 = arith.constant 0 : index
    %c0_26 = arith.constant 0 : index
    %36 = vector.load %arg5[%c0_24, %c2, %c0_25, %c0_26] : memref<2x4x32x8xf32, #tpu.memory_space<vmem>>, vector<1x1x32x8xf32>
    %37 = vector.shape_cast %36 : vector<1x1x32x8xf32> to vector<32x8xf32>
    %cst_27 = arith.constant dense<0.000000e+00> : vector<16x8xf32>
    %38 = tpu.matmul %29, %37, %cst_27 {dimension_numbers = #tpu.dot_dimension_numbers<[1], [0], [0], [1], [0, 0, 1, 1], [], []>} : vector<16x32xf32>, vector<32x8xf32>, vector<16x8xf32> -> vector<16x8xf32>
    %c0_28 = arith.constant 0 : index
    %c3 = arith.constant 3 : index
    %c0_29 = arith.constant 0 : index
    %c0_30 = arith.constant 0 : index
    %39 = vector.load %arg5[%c0_28, %c3, %c0_29, %c0_30] : memref<2x4x32x8xf32, #tpu.memory_space<vmem>>, vector<1x1x32x8xf32>
    %40 = vector.shape_cast %39 : vector<1x1x32x8xf32> to vector<32x8xf32>
    %cst_31 = arith.constant dense<0.000000e+00> : vector<16x8xf32>
    %41 = tpu.matmul %29, %40, %cst_31 {dimension_numbers = #tpu.dot_dimension_numbers<[1], [0], [0], [1], [0, 0, 1, 1], [], []>} : vector<16x32xf32>, vector<32x8xf32>, vector<16x8xf32> -> vector<16x8xf32>
    %c0_32 = arith.constant 0 : index
    %c0_33 = arith.constant 0 : index
    %c0_34 = arith.constant 0 : index
    %c0_35 = arith.constant 0 : index
    %42 = vector.load %arg6[%c0_32, %c0_33, %c0_34, %c0_35] : memref<2x4x32x8xf32, #tpu.memory_space<vmem>>, vector<1x1x32x8xf32>
    %43 = vector.shape_cast %42 : vector<1x1x32x8xf32> to vector<32x8xf32>
    %cst_36 = arith.constant dense<0.000000e+00> : vector<16x8xf32>
    %44 = tpu.matmul %29, %43, %cst_36 {dimension_numbers = #tpu.dot_dimension_numbers<[1], [0], [0], [1], [0, 0, 1, 1], [], []>} : vector<16x32xf32>, vector<32x8xf32>, vector<16x8xf32> -> vector<16x8xf32>
    %c0_37 = arith.constant 0 : index
    %c1_38 = arith.constant 1 : index
    %c0_39 = arith.constant 0 : index
    %c0_40 = arith.constant 0 : index
    %45 = vector.load %arg6[%c0_37, %c1_38, %c0_39, %c0_40] : memref<2x4x32x8xf32, #tpu.memory_space<vmem>>, vector<1x1x32x8xf32>
    %46 = vector.shape_cast %45 : vector<1x1x32x8xf32> to vector<32x8xf32>
    %cst_41 = arith.constant dense<0.000000e+00> : vector<16x8xf32>
    %47 = tpu.matmul %29, %46, %cst_41 {dimension_numbers = #tpu.dot_dimension_numbers<[1], [0], [0], [1], [0, 0, 1, 1], [], []>} : vector<16x32xf32>, vector<32x8xf32>, vector<16x8xf32> -> vector<16x8xf32>
    %c0_42 = arith.constant 0 : index
    %c2_43 = arith.constant 2 : index
    %c0_44 = arith.constant 0 : index
    %c0_45 = arith.constant 0 : index
    %48 = vector.load %arg6[%c0_42, %c2_43, %c0_44, %c0_45] : memref<2x4x32x8xf32, #tpu.memory_space<vmem>>, vector<1x1x32x8xf32>
    %49 = vector.shape_cast %48 : vector<1x1x32x8xf32> to vector<32x8xf32>
    %cst_46 = arith.constant dense<0.000000e+00> : vector<16x8xf32>
    %50 = tpu.matmul %29, %49, %cst_46 {dimension_numbers = #tpu.dot_dimension_numbers<[1], [0], [0], [1], [0, 0, 1, 1], [], []>} : vector<16x32xf32>, vector<32x8xf32>, vector<16x8xf32> -> vector<16x8xf32>
    %c0_47 = arith.constant 0 : index
    %c3_48 = arith.constant 3 : index
    %c0_49 = arith.constant 0 : index
    %c0_50 = arith.constant 0 : index
    %51 = vector.load %arg6[%c0_47, %c3_48, %c0_49, %c0_50] : memref<2x4x32x8xf32, #tpu.memory_space<vmem>>, vector<1x1x32x8xf32>
    %52 = vector.shape_cast %51 : vector<1x1x32x8xf32> to vector<32x8xf32>
    %cst_51 = arith.constant dense<0.000000e+00> : vector<16x8xf32>
    %53 = tpu.matmul %29, %52, %cst_51 {dimension_numbers = #tpu.dot_dimension_numbers<[1], [0], [0], [1], [0, 0, 1, 1], [], []>} : vector<16x32xf32>, vector<32x8xf32>, vector<16x8xf32> -> vector<16x8xf32>
    %c0_52 = arith.constant 0 : index
    %c0_53 = arith.constant 0 : index
    %c0_54 = arith.constant 0 : index
    %c0_55 = arith.constant 0 : index
    %54 = vector.load %arg7[%c0_52, %c0_53, %c0_54, %c0_55] : memref<2x4x32x8xf32, #tpu.memory_space<vmem>>, vector<1x1x32x8xf32>
    %55 = vector.shape_cast %54 : vector<1x1x32x8xf32> to vector<32x8xf32>
    %cst_56 = arith.constant dense<0.000000e+00> : vector<16x8xf32>
    %56 = tpu.matmul %29, %55, %cst_56 {dimension_numbers = #tpu.dot_dimension_numbers<[1], [0], [0], [1], [0, 0, 1, 1], [], []>} : vector<16x32xf32>, vector<32x8xf32>, vector<16x8xf32> -> vector<16x8xf32>
    %c0_57 = arith.constant 0 : index
    %c1_58 = arith.constant 1 : index
    %c0_59 = arith.constant 0 : index
    %c0_60 = arith.constant 0 : index
    %57 = vector.load %arg7[%c0_57, %c1_58, %c0_59, %c0_60] : memref<2x4x32x8xf32, #tpu.memory_space<vmem>>, vector<1x1x32x8xf32>
    %58 = vector.shape_cast %57 : vector<1x1x32x8xf32> to vector<32x8xf32>
    %cst_61 = arith.constant dense<0.000000e+00> : vector<16x8xf32>
    %59 = tpu.matmul %29, %58, %cst_61 {dimension_numbers = #tpu.dot_dimension_numbers<[1], [0], [0], [1], [0, 0, 1, 1], [], []>} : vector<16x32xf32>, vector<32x8xf32>, vector<16x8xf32> -> vector<16x8xf32>
    %c0_62 = arith.constant 0 : index
    %c2_63 = arith.constant 2 : index
    %c0_64 = arith.constant 0 : index
    %c0_65 = arith.constant 0 : index
    %60 = vector.load %arg7[%c0_62, %c2_63, %c0_64, %c0_65] : memref<2x4x32x8xf32, #tpu.memory_space<vmem>>, vector<1x1x32x8xf32>
    %61 = vector.shape_cast %60 : vector<1x1x32x8xf32> to vector<32x8xf32>
    %cst_66 = arith.constant dense<0.000000e+00> : vector<16x8xf32>
    %62 = tpu.matmul %29, %61, %cst_66 {dimension_numbers = #tpu.dot_dimension_numbers<[1], [0], [0], [1], [0, 0, 1, 1], [], []>} : vector<16x32xf32>, vector<32x8xf32>, vector<16x8xf32> -> vector<16x8xf32>
    %c0_67 = arith.constant 0 : index
    %c3_68 = arith.constant 3 : index
    %c0_69 = arith.constant 0 : index
    %c0_70 = arith.constant 0 : index
    %63 = vector.load %arg7[%c0_67, %c3_68, %c0_69, %c0_70] : memref<2x4x32x8xf32, #tpu.memory_space<vmem>>, vector<1x1x32x8xf32>
    %64 = vector.shape_cast %63 : vector<1x1x32x8xf32> to vector<32x8xf32>
    %cst_71 = arith.constant dense<0.000000e+00> : vector<16x8xf32>
    %65 = tpu.matmul %29, %64, %cst_71 {dimension_numbers = #tpu.dot_dimension_numbers<[1], [0], [0], [1], [0, 0, 1, 1], [], []>} : vector<16x32xf32>, vector<32x8xf32>, vector<16x8xf32> -> vector<16x8xf32>
    %c0_72 = arith.constant 0 : index
    %c0_73 = arith.constant 0 : index
    %c0_74 = arith.constant 0 : index
    %c0_75 = arith.constant 0 : index
    %66 = vector.load %arg8[%c0_72, %c0_73, %c0_74, %c0_75] : memref<2x4x1x8xf32, #tpu.memory_space<vmem>>, vector<1x1x1x8xf32>
    %67 = vector.shape_cast %66 : vector<1x1x1x8xf32> to vector<1x8xf32>
    %c0_76 = arith.constant 0 : index
    %c1_77 = arith.constant 1 : index
    %c0_78 = arith.constant 0 : index
    %c0_79 = arith.constant 0 : index
    %68 = vector.load %arg8[%c0_76, %c1_77, %c0_78, %c0_79] : memref<2x4x1x8xf32, #tpu.memory_space<vmem>>, vector<1x1x1x8xf32>
    %69 = vector.shape_cast %68 : vector<1x1x1x8xf32> to vector<1x8xf32>
    %c0_80 = arith.constant 0 : index
    %c2_81 = arith.constant 2 : index
    %c0_82 = arith.constant 0 : index
    %c0_83 = arith.constant 0 : index
    %70 = vector.load %arg8[%c0_80, %c2_81, %c0_82, %c0_83] : memref<2x4x1x8xf32, #tpu.memory_space<vmem>>, vector<1x1x1x8xf32>
    %71 = vector.shape_cast %70 : vector<1x1x1x8xf32> to vector<1x8xf32>
    %c0_84 = arith.constant 0 : index
    %c3_85 = arith.constant 3 : index
    %c0_86 = arith.constant 0 : index
    %c0_87 = arith.constant 0 : index
    %72 = vector.load %arg8[%c0_84, %c3_85, %c0_86, %c0_87] : memref<2x4x1x8xf32, #tpu.memory_space<vmem>>, vector<1x1x1x8xf32>
    %73 = vector.shape_cast %72 : vector<1x1x1x8xf32> to vector<1x8xf32>
    %cst_88 = arith.constant dense<0.000000e+00> : vector<16xf32>
    %74 = vector.multi_reduction <add>, %32, %cst_88 [1] : vector<16x8xf32> to vector<16xf32>
    %75 = vector.shape_cast %74 : vector<16xf32> to vector<16x1xf32>
    %cst_89 = arith.constant 0.000000e+00 : f32
    %76 = vector.broadcast %cst_89 : f32 to vector<16x1xf32>
    %77 = arith.addf %76, %75 : vector<16x1xf32>
    %cst_90 = arith.constant dense<0.000000e+00> : vector<16xf32>
    %78 = vector.multi_reduction <add>, %35, %cst_90 [1] : vector<16x8xf32> to vector<16xf32>
    %79 = vector.shape_cast %78 : vector<16xf32> to vector<16x1xf32>
    %80 = arith.addf %77, %79 : vector<16x1xf32>
    %cst_91 = arith.constant dense<0.000000e+00> : vector<16xf32>
    %81 = vector.multi_reduction <add>, %38, %cst_91 [1] : vector<16x8xf32> to vector<16xf32>
    %82 = vector.shape_cast %81 : vector<16xf32> to vector<16x1xf32>
    %83 = arith.addf %80, %82 : vector<16x1xf32>
    %cst_92 = arith.constant dense<0.000000e+00> : vector<16xf32>
    %84 = vector.multi_reduction <add>, %41, %cst_92 [1] : vector<16x8xf32> to vector<16xf32>
    %85 = vector.shape_cast %84 : vector<16xf32> to vector<16x1xf32>
    %86 = arith.addf %83, %85 : vector<16x1xf32>
    %87 = arith.mulf %32, %32 : vector<16x8xf32>
    %cst_93 = arith.constant dense<0.000000e+00> : vector<16xf32>
    %88 = vector.multi_reduction <add>, %87, %cst_93 [1] : vector<16x8xf32> to vector<16xf32>
    %89 = vector.shape_cast %88 : vector<16xf32> to vector<16x1xf32>
    %cst_94 = arith.constant 0.000000e+00 : f32
    %90 = vector.broadcast %cst_94 : f32 to vector<16x1xf32>
    %91 = arith.addf %90, %89 : vector<16x1xf32>
    %92 = arith.mulf %35, %35 : vector<16x8xf32>
    %cst_95 = arith.constant dense<0.000000e+00> : vector<16xf32>
    %93 = vector.multi_reduction <add>, %92, %cst_95 [1] : vector<16x8xf32> to vector<16xf32>
    %94 = vector.shape_cast %93 : vector<16xf32> to vector<16x1xf32>
    %95 = arith.addf %91, %94 : vector<16x1xf32>
    %96 = arith.mulf %38, %38 : vector<16x8xf32>
    %cst_96 = arith.constant dense<0.000000e+00> : vector<16xf32>
    %97 = vector.multi_reduction <add>, %96, %cst_96 [1] : vector<16x8xf32> to vector<16xf32>
    %98 = vector.shape_cast %97 : vector<16xf32> to vector<16x1xf32>
    %99 = arith.addf %95, %98 : vector<16x1xf32>
    %100 = arith.mulf %41, %41 : vector<16x8xf32>
    %cst_97 = arith.constant dense<0.000000e+00> : vector<16xf32>
    %101 = vector.multi_reduction <add>, %100, %cst_97 [1] : vector<16x8xf32> to vector<16xf32>
    %102 = vector.shape_cast %101 : vector<16xf32> to vector<16x1xf32>
    %103 = arith.addf %99, %102 : vector<16x1xf32>
    %cst_98 = arith.constant 3.200000e+01 : f32
    %104 = vector.broadcast %cst_98 : f32 to vector<16x1xf32>
    %105 = arith.divf %86, %104 : vector<16x1xf32>
    %cst_99 = arith.constant 3.200000e+01 : f32
    %106 = vector.broadcast %cst_99 : f32 to vector<16x1xf32>
    %107 = arith.divf %103, %106 : vector<16x1xf32>
    %108 = arith.mulf %105, %105 : vector<16x1xf32>
    %109 = arith.subf %107, %108 : vector<16x1xf32>
    %cst_100 = arith.constant 9.99999974E-6 : f32
    %110 = vector.broadcast %cst_100 : f32 to vector<16x1xf32>
    %111 = arith.addf %109, %110 : vector<16x1xf32>
    %112 = math.rsqrt %111 : vector<16x1xf32>
    %113 = vector.broadcast %105 : vector<16x1xf32> to vector<16x8xf32>
    %114 = arith.subf %32, %113 : vector<16x8xf32>
    %115 = vector.broadcast %112 : vector<16x1xf32> to vector<16x8xf32>
    %116 = arith.mulf %114, %115 : vector<16x8xf32>
    %117 = vector.broadcast %67 : vector<1x8xf32> to vector<16x8xf32>
    %118 = arith.mulf %116, %117 : vector<16x8xf32>
    %119 = vector.broadcast %105 : vector<16x1xf32> to vector<16x8xf32>
    %120 = arith.subf %35, %119 : vector<16x8xf32>
    %121 = vector.broadcast %112 : vector<16x1xf32> to vector<16x8xf32>
    %122 = arith.mulf %120, %121 : vector<16x8xf32>
    %123 = vector.broadcast %69 : vector<1x8xf32> to vector<16x8xf32>
    %124 = arith.mulf %122, %123 : vector<16x8xf32>
    %125 = vector.broadcast %105 : vector<16x1xf32> to vector<16x8xf32>
    %126 = arith.subf %38, %125 : vector<16x8xf32>
    %127 = vector.broadcast %112 : vector<16x1xf32> to vector<16x8xf32>
    %128 = arith.mulf %126, %127 : vector<16x8xf32>
    %129 = vector.broadcast %71 : vector<1x8xf32> to vector<16x8xf32>
    %130 = arith.mulf %128, %129 : vector<16x8xf32>
    %131 = vector.broadcast %105 : vector<16x1xf32> to vector<16x8xf32>
    %132 = arith.subf %41, %131 : vector<16x8xf32>
    %133 = vector.broadcast %112 : vector<16x1xf32> to vector<16x8xf32>
    %134 = arith.mulf %132, %133 : vector<16x8xf32>
    %135 = vector.broadcast %73 : vector<1x8xf32> to vector<16x8xf32>
    %136 = arith.mulf %134, %135 : vector<16x8xf32>
    %c0_101 = arith.constant 0 : index
    %c0_102 = arith.constant 0 : index
    %c0_103 = arith.constant 0 : index
    %c0_104 = arith.constant 0 : index
    %137 = vector.load %arg9[%c0_101, %c0_102, %c0_103, %c0_104] : memref<2x4x1x8xf32, #tpu.memory_space<vmem>>, vector<1x1x1x8xf32>
    %138 = vector.shape_cast %137 : vector<1x1x1x8xf32> to vector<1x8xf32>
    %c0_105 = arith.constant 0 : index
    %c1_106 = arith.constant 1 : index
    %c0_107 = arith.constant 0 : index
    %c0_108 = arith.constant 0 : index
    %139 = vector.load %arg9[%c0_105, %c1_106, %c0_107, %c0_108] : memref<2x4x1x8xf32, #tpu.memory_space<vmem>>, vector<1x1x1x8xf32>
    %140 = vector.shape_cast %139 : vector<1x1x1x8xf32> to vector<1x8xf32>
    %c0_109 = arith.constant 0 : index
    %c2_110 = arith.constant 2 : index
    %c0_111 = arith.constant 0 : index
    %c0_112 = arith.constant 0 : index
    %141 = vector.load %arg9[%c0_109, %c2_110, %c0_111, %c0_112] : memref<2x4x1x8xf32, #tpu.memory_space<vmem>>, vector<1x1x1x8xf32>
    %142 = vector.shape_cast %141 : vector<1x1x1x8xf32> to vector<1x8xf32>
    %c0_113 = arith.constant 0 : index
    %c3_114 = arith.constant 3 : index
    %c0_115 = arith.constant 0 : index
    %c0_116 = arith.constant 0 : index
    %143 = vector.load %arg9[%c0_113, %c3_114, %c0_115, %c0_116] : memref<2x4x1x8xf32, #tpu.memory_space<vmem>>, vector<1x1x1x8xf32>
    %144 = vector.shape_cast %143 : vector<1x1x1x8xf32> to vector<1x8xf32>
    %cst_117 = arith.constant dense<0.000000e+00> : vector<16xf32>
    %145 = vector.multi_reduction <add>, %44, %cst_117 [1] : vector<16x8xf32> to vector<16xf32>
    %146 = vector.shape_cast %145 : vector<16xf32> to vector<16x1xf32>
    %cst_118 = arith.constant 0.000000e+00 : f32
    %147 = vector.broadcast %cst_118 : f32 to vector<16x1xf32>
    %148 = arith.addf %147, %146 : vector<16x1xf32>
    %cst_119 = arith.constant dense<0.000000e+00> : vector<16xf32>
    %149 = vector.multi_reduction <add>, %47, %cst_119 [1] : vector<16x8xf32> to vector<16xf32>
    %150 = vector.shape_cast %149 : vector<16xf32> to vector<16x1xf32>
    %151 = arith.addf %148, %150 : vector<16x1xf32>
    %cst_120 = arith.constant dense<0.000000e+00> : vector<16xf32>
    %152 = vector.multi_reduction <add>, %50, %cst_120 [1] : vector<16x8xf32> to vector<16xf32>
    %153 = vector.shape_cast %152 : vector<16xf32> to vector<16x1xf32>
    %154 = arith.addf %151, %153 : vector<16x1xf32>
    %cst_121 = arith.constant dense<0.000000e+00> : vector<16xf32>
    %155 = vector.multi_reduction <add>, %53, %cst_121 [1] : vector<16x8xf32> to vector<16xf32>
    %156 = vector.shape_cast %155 : vector<16xf32> to vector<16x1xf32>
    %157 = arith.addf %154, %156 : vector<16x1xf32>
    %158 = arith.mulf %44, %44 : vector<16x8xf32>
    %cst_122 = arith.constant dense<0.000000e+00> : vector<16xf32>
    %159 = vector.multi_reduction <add>, %158, %cst_122 [1] : vector<16x8xf32> to vector<16xf32>
    %160 = vector.shape_cast %159 : vector<16xf32> to vector<16x1xf32>
    %cst_123 = arith.constant 0.000000e+00 : f32
    %161 = vector.broadcast %cst_123 : f32 to vector<16x1xf32>
    %162 = arith.addf %161, %160 : vector<16x1xf32>
    %163 = arith.mulf %47, %47 : vector<16x8xf32>
    %cst_124 = arith.constant dense<0.000000e+00> : vector<16xf32>
    %164 = vector.multi_reduction <add>, %163, %cst_124 [1] : vector<16x8xf32> to vector<16xf32>
    %165 = vector.shape_cast %164 : vector<16xf32> to vector<16x1xf32>
    %166 = arith.addf %162, %165 : vector<16x1xf32>
    %167 = arith.mulf %50, %50 : vector<16x8xf32>
    %cst_125 = arith.constant dense<0.000000e+00> : vector<16xf32>
    %168 = vector.multi_reduction <add>, %167, %cst_125 [1] : vector<16x8xf32> to vector<16xf32>
    %169 = vector.shape_cast %168 : vector<16xf32> to vector<16x1xf32>
    %170 = arith.addf %166, %169 : vector<16x1xf32>
    %171 = arith.mulf %53, %53 : vector<16x8xf32>
    %cst_126 = arith.constant dense<0.000000e+00> : vector<16xf32>
    %172 = vector.multi_reduction <add>, %171, %cst_126 [1] : vector<16x8xf32> to vector<16xf32>
    %173 = vector.shape_cast %172 : vector<16xf32> to vector<16x1xf32>
    %174 = arith.addf %170, %173 : vector<16x1xf32>
    %cst_127 = arith.constant 3.200000e+01 : f32
    %175 = vector.broadcast %cst_127 : f32 to vector<16x1xf32>
    %176 = arith.divf %157, %175 : vector<16x1xf32>
    %cst_128 = arith.constant 3.200000e+01 : f32
    %177 = vector.broadcast %cst_128 : f32 to vector<16x1xf32>
    %178 = arith.divf %174, %177 : vector<16x1xf32>
    %179 = arith.mulf %176, %176 : vector<16x1xf32>
    %180 = arith.subf %178, %179 : vector<16x1xf32>
    %cst_129 = arith.constant 9.99999974E-6 : f32
    %181 = vector.broadcast %cst_129 : f32 to vector<16x1xf32>
    %182 = arith.addf %180, %181 : vector<16x1xf32>
    %183 = math.rsqrt %182 : vector<16x1xf32>
    %184 = vector.broadcast %176 : vector<16x1xf32> to vector<16x8xf32>
    %185 = arith.subf %44, %184 : vector<16x8xf32>
    %186 = vector.broadcast %183 : vector<16x1xf32> to vector<16x8xf32>
    %187 = arith.mulf %185, %186 : vector<16x8xf32>
    %188 = vector.broadcast %138 : vector<1x8xf32> to vector<16x8xf32>
    %189 = arith.mulf %187, %188 : vector<16x8xf32>
    %190 = vector.broadcast %176 : vector<16x1xf32> to vector<16x8xf32>
    %191 = arith.subf %47, %190 : vector<16x8xf32>
    %192 = vector.broadcast %183 : vector<16x1xf32> to vector<16x8xf32>
    %193 = arith.mulf %191, %192 : vector<16x8xf32>
    %194 = vector.broadcast %140 : vector<1x8xf32> to vector<16x8xf32>
    %195 = arith.mulf %193, %194 : vector<16x8xf32>
    %196 = vector.broadcast %176 : vector<16x1xf32> to vector<16x8xf32>
    %197 = arith.subf %50, %196 : vector<16x8xf32>
    %198 = vector.broadcast %183 : vector<16x1xf32> to vector<16x8xf32>
    %199 = arith.mulf %197, %198 : vector<16x8xf32>
    %200 = vector.broadcast %142 : vector<1x8xf32> to vector<16x8xf32>
    %201 = arith.mulf %199, %200 : vector<16x8xf32>
    %202 = vector.broadcast %176 : vector<16x1xf32> to vector<16x8xf32>
    %203 = arith.subf %53, %202 : vector<16x8xf32>
    %204 = vector.broadcast %183 : vector<16x1xf32> to vector<16x8xf32>
    %205 = arith.mulf %203, %204 : vector<16x8xf32>
    %206 = vector.broadcast %144 : vector<1x8xf32> to vector<16x8xf32>
    %207 = arith.mulf %205, %206 : vector<16x8xf32>
    %cst_130 = arith.constant dense<0.000000e+00> : vector<16x16xf32>
    %208 = tpu.matmul %118, %189, %cst_130 {dimension_numbers = #tpu.dot_dimension_numbers<[1], [1], [0], [0], [0, 0, 1, 0], [], []>} : vector<16x8xf32>, vector<16x8xf32>, vector<16x16xf32> -> vector<16x16xf32>
    %209 = arith.addf %208, %3 : vector<16x16xf32>
    %cst_131 = arith.constant dense<0xFF800000> : vector<16xf32>
    %210 = vector.multi_reduction <maximumf>, %209, %cst_131 [1] : vector<16x16xf32> to vector<16xf32>
    %211 = vector.shape_cast %210 : vector<16xf32> to vector<16x1xf32>
    %212 = vector.broadcast %211 : vector<16x1xf32> to vector<16x16xf32>
    %213 = arith.subf %209, %212 : vector<16x16xf32>
    %214 = math.exp %213 : vector<16x16xf32>
    %cst_132 = arith.constant dense<0.000000e+00> : vector<16xf32>
    %215 = vector.multi_reduction <add>, %214, %cst_132 [1] : vector<16x16xf32> to vector<16xf32>
    %216 = vector.shape_cast %215 : vector<16xf32> to vector<16x1xf32>
    %217 = tpu.reciprocal %216 {approx = true} : vector<16x1xf32> -> vector<16x1xf32>
    %218 = vector.broadcast %217 : vector<16x1xf32> to vector<16x16xf32>
    %219 = arith.mulf %214, %218 : vector<16x16xf32>
    %cst_133 = arith.constant dense<0.000000e+00> : vector<16x8xf32>
    %220 = tpu.matmul %219, %56, %cst_133 {dimension_numbers = #tpu.dot_dimension_numbers<[1], [0], [0], [1], [0, 0, 1, 1], [], []>} : vector<16x16xf32>, vector<16x8xf32>, vector<16x8xf32> -> vector<16x8xf32>
    %c0_134 = arith.constant 0 : index
    %c0_135 = arith.constant 0 : index
    %c0_136 = arith.constant 0 : index
    %c0_137 = arith.constant 0 : index
    %221 = vector.load %arg10[%c0_134, %c0_135, %c0_136, %c0_137] : memref<2x4x8x32xf32, #tpu.memory_space<vmem>>, vector<1x1x8x32xf32>
    %222 = vector.shape_cast %221 : vector<1x1x8x32xf32> to vector<8x32xf32>
    %cst_138 = arith.constant dense<0.000000e+00> : vector<16x32xf32>
    %223 = tpu.matmul %220, %222, %cst_138 {dimension_numbers = #tpu.dot_dimension_numbers<[1], [0], [0], [1], [0, 0, 1, 1], [], []>} : vector<16x8xf32>, vector<8x32xf32>, vector<16x32xf32> -> vector<16x32xf32>
    %cst_139 = arith.constant dense<0.000000e+00> : vector<16x16xf32>
    %224 = tpu.matmul %124, %195, %cst_139 {dimension_numbers = #tpu.dot_dimension_numbers<[1], [1], [0], [0], [0, 0, 1, 0], [], []>} : vector<16x8xf32>, vector<16x8xf32>, vector<16x16xf32> -> vector<16x16xf32>
    %225 = arith.addf %224, %3 : vector<16x16xf32>
    %cst_140 = arith.constant dense<0xFF800000> : vector<16xf32>
    %226 = vector.multi_reduction <maximumf>, %225, %cst_140 [1] : vector<16x16xf32> to vector<16xf32>
    %227 = vector.shape_cast %226 : vector<16xf32> to vector<16x1xf32>
    %228 = vector.broadcast %227 : vector<16x1xf32> to vector<16x16xf32>
    %229 = arith.subf %225, %228 : vector<16x16xf32>
    %230 = math.exp %229 : vector<16x16xf32>
    %cst_141 = arith.constant dense<0.000000e+00> : vector<16xf32>
    %231 = vector.multi_reduction <add>, %230, %cst_141 [1] : vector<16x16xf32> to vector<16xf32>
    %232 = vector.shape_cast %231 : vector<16xf32> to vector<16x1xf32>
    %233 = tpu.reciprocal %232 {approx = true} : vector<16x1xf32> -> vector<16x1xf32>
    %234 = vector.broadcast %233 : vector<16x1xf32> to vector<16x16xf32>
    %235 = arith.mulf %230, %234 : vector<16x16xf32>
    %cst_142 = arith.constant dense<0.000000e+00> : vector<16x8xf32>
    %236 = tpu.matmul %235, %59, %cst_142 {dimension_numbers = #tpu.dot_dimension_numbers<[1], [0], [0], [1], [0, 0, 1, 1], [], []>} : vector<16x16xf32>, vector<16x8xf32>, vector<16x8xf32> -> vector<16x8xf32>
    %c0_143 = arith.constant 0 : index
    %c1_144 = arith.constant 1 : index
    %c0_145 = arith.constant 0 : index
    %c0_146 = arith.constant 0 : index
    %237 = vector.load %arg10[%c0_143, %c1_144, %c0_145, %c0_146] : memref<2x4x8x32xf32, #tpu.memory_space<vmem>>, vector<1x1x8x32xf32>
    %238 = vector.shape_cast %237 : vector<1x1x8x32xf32> to vector<8x32xf32>
    %cst_147 = arith.constant dense<0.000000e+00> : vector<16x32xf32>
    %239 = tpu.matmul %236, %238, %cst_147 {dimension_numbers = #tpu.dot_dimension_numbers<[1], [0], [0], [1], [0, 0, 1, 1], [], []>} : vector<16x8xf32>, vector<8x32xf32>, vector<16x32xf32> -> vector<16x32xf32>
    %cst_148 = arith.constant dense<0.000000e+00> : vector<16x16xf32>
    %240 = tpu.matmul %130, %201, %cst_148 {dimension_numbers = #tpu.dot_dimension_numbers<[1], [1], [0], [0], [0, 0, 1, 0], [], []>} : vector<16x8xf32>, vector<16x8xf32>, vector<16x16xf32> -> vector<16x16xf32>
    %241 = arith.addf %240, %3 : vector<16x16xf32>
    %cst_149 = arith.constant dense<0xFF800000> : vector<16xf32>
    %242 = vector.multi_reduction <maximumf>, %241, %cst_149 [1] : vector<16x16xf32> to vector<16xf32>
    %243 = vector.shape_cast %242 : vector<16xf32> to vector<16x1xf32>
    %244 = vector.broadcast %243 : vector<16x1xf32> to vector<16x16xf32>
    %245 = arith.subf %241, %244 : vector<16x16xf32>
    %246 = math.exp %245 : vector<16x16xf32>
    %cst_150 = arith.constant dense<0.000000e+00> : vector<16xf32>
    %247 = vector.multi_reduction <add>, %246, %cst_150 [1] : vector<16x16xf32> to vector<16xf32>
    %248 = vector.shape_cast %247 : vector<16xf32> to vector<16x1xf32>
    %249 = tpu.reciprocal %248 {approx = true} : vector<16x1xf32> -> vector<16x1xf32>
    %250 = vector.broadcast %249 : vector<16x1xf32> to vector<16x16xf32>
    %251 = arith.mulf %246, %250 : vector<16x16xf32>
    %cst_151 = arith.constant dense<0.000000e+00> : vector<16x8xf32>
    %252 = tpu.matmul %251, %62, %cst_151 {dimension_numbers = #tpu.dot_dimension_numbers<[1], [0], [0], [1], [0, 0, 1, 1], [], []>} : vector<16x16xf32>, vector<16x8xf32>, vector<16x8xf32> -> vector<16x8xf32>
    %c0_152 = arith.constant 0 : index
    %c2_153 = arith.constant 2 : index
    %c0_154 = arith.constant 0 : index
    %c0_155 = arith.constant 0 : index
    %253 = vector.load %arg10[%c0_152, %c2_153, %c0_154, %c0_155] : memref<2x4x8x32xf32, #tpu.memory_space<vmem>>, vector<1x1x8x32xf32>
    %254 = vector.shape_cast %253 : vector<1x1x8x32xf32> to vector<8x32xf32>
    %cst_156 = arith.constant dense<0.000000e+00> : vector<16x32xf32>
    %255 = tpu.matmul %252, %254, %cst_156 {dimension_numbers = #tpu.dot_dimension_numbers<[1], [0], [0], [1], [0, 0, 1, 1], [], []>} : vector<16x8xf32>, vector<8x32xf32>, vector<16x32xf32> -> vector<16x32xf32>
    %cst_157 = arith.constant dense<0.000000e+00> : vector<16x16xf32>
    %256 = tpu.matmul %136, %207, %cst_157 {dimension_numbers = #tpu.dot_dimension_numbers<[1], [1], [0], [0], [0, 0, 1, 0], [], []>} : vector<16x8xf32>, vector<16x8xf32>, vector<16x16xf32> -> vector<16x16xf32>
    %257 = arith.addf %256, %3 : vector<16x16xf32>
    %cst_158 = arith.constant dense<0xFF800000> : vector<16xf32>
    %258 = vector.multi_reduction <maximumf>, %257, %cst_158 [1] : vector<16x16xf32> to vector<16xf32>
    %259 = vector.shape_cast %258 : vector<16xf32> to vector<16x1xf32>
    %260 = vector.broadcast %259 : vector<16x1xf32> to vector<16x16xf32>
    %261 = arith.subf %257, %260 : vector<16x16xf32>
    %262 = math.exp %261 : vector<16x16xf32>
    %cst_159 = arith.constant dense<0.000000e+00> : vector<16xf32>
    %263 = vector.multi_reduction <add>, %262, %cst_159 [1] : vector<16x16xf32> to vector<16xf32>
    %264 = vector.shape_cast %263 : vector<16xf32> to vector<16x1xf32>
    %265 = tpu.reciprocal %264 {approx = true} : vector<16x1xf32> -> vector<16x1xf32>
    %266 = vector.broadcast %265 : vector<16x1xf32> to vector<16x16xf32>
    %267 = arith.mulf %262, %266 : vector<16x16xf32>
    %cst_160 = arith.constant dense<0.000000e+00> : vector<16x8xf32>
    %268 = tpu.matmul %267, %65, %cst_160 {dimension_numbers = #tpu.dot_dimension_numbers<[1], [0], [0], [1], [0, 0, 1, 1], [], []>} : vector<16x16xf32>, vector<16x8xf32>, vector<16x8xf32> -> vector<16x8xf32>
    %c0_161 = arith.constant 0 : index
    %c3_162 = arith.constant 3 : index
    %c0_163 = arith.constant 0 : index
    %c0_164 = arith.constant 0 : index
    %269 = vector.load %arg10[%c0_161, %c3_162, %c0_163, %c0_164] : memref<2x4x8x32xf32, #tpu.memory_space<vmem>>, vector<1x1x8x32xf32>
    %270 = vector.shape_cast %269 : vector<1x1x8x32xf32> to vector<8x32xf32>
    %cst_165 = arith.constant dense<0.000000e+00> : vector<16x32xf32>
    %271 = tpu.matmul %268, %270, %cst_165 {dimension_numbers = #tpu.dot_dimension_numbers<[1], [0], [0], [1], [0, 0, 1, 1], [], []>} : vector<16x8xf32>, vector<8x32xf32>, vector<16x32xf32> -> vector<16x32xf32>
    %cst_166 = arith.constant 0.000000e+00 : f32
    %272 = vector.broadcast %cst_166 : f32 to vector<16x32xf32>
    %273 = arith.addf %272, %223 : vector<16x32xf32>
    %274 = arith.addf %273, %239 : vector<16x32xf32>
    %275 = arith.addf %274, %255 : vector<16x32xf32>
    %276 = arith.addf %275, %271 : vector<16x32xf32>
    %277 = arith.addf %1, %276 : vector<16x32xf32>
    %c0_167 = arith.constant 0 : index
    %c0_168 = arith.constant 0 : index
    %c0_169 = arith.constant 0 : index
    %278 = vector.load %arg11[%c0_167, %c0_168, %c0_169] : memref<2x1x32xf32, #tpu.memory_space<vmem>>, vector<1x1x32xf32>
    %279 = vector.shape_cast %278 : vector<1x1x32xf32> to vector<1x32xf32>
    %c0_170 = arith.constant 0 : index
    %c0_171 = arith.constant 0 : index
    %c0_172 = arith.constant 0 : index
    %280 = vector.load %arg12[%c0_170, %c0_171, %c0_172] : memref<2x1x32xf32, #tpu.memory_space<vmem>>, vector<1x1x32xf32>
    %281 = vector.shape_cast %280 : vector<1x1x32xf32> to vector<1x32xf32>
    %cst_173 = arith.constant dense<0.000000e+00> : vector<16xf32>
    %282 = vector.multi_reduction <add>, %277, %cst_173 [1] : vector<16x32xf32> to vector<16xf32>
    %283 = vector.shape_cast %282 : vector<16xf32> to vector<16x1xf32>
    %cst_174 = arith.constant 3.200000e+01 : f32
    %284 = vector.broadcast %cst_174 : f32 to vector<16x1xf32>
    %285 = arith.divf %283, %284 : vector<16x1xf32>
    %286 = vector.broadcast %285 : vector<16x1xf32> to vector<16x32xf32>
    %287 = arith.subf %277, %286 : vector<16x32xf32>
    %288 = arith.mulf %287, %287 : vector<16x32xf32>
    %cst_175 = arith.constant dense<0.000000e+00> : vector<16xf32>
    %289 = vector.multi_reduction <add>, %288, %cst_175 [1] : vector<16x32xf32> to vector<16xf32>
    %290 = vector.shape_cast %289 : vector<16xf32> to vector<16x1xf32>
    %cst_176 = arith.constant 3.200000e+01 : f32
    %291 = vector.broadcast %cst_176 : f32 to vector<16x1xf32>
    %292 = arith.divf %290, %291 : vector<16x1xf32>
    %293 = vector.broadcast %285 : vector<16x1xf32> to vector<16x32xf32>
    %294 = arith.subf %277, %293 : vector<16x32xf32>
    %cst_177 = arith.constant 9.99999974E-6 : f32
    %295 = vector.broadcast %cst_177 : f32 to vector<16x1xf32>
    %296 = arith.addf %292, %295 : vector<16x1xf32>
    %297 = math.rsqrt %296 : vector<16x1xf32>
    %298 = vector.broadcast %297 : vector<16x1xf32> to vector<16x32xf32>
    %299 = arith.mulf %294, %298 : vector<16x32xf32>
    %300 = vector.broadcast %279 : vector<1x32xf32> to vector<16x32xf32>
    %301 = arith.mulf %299, %300 : vector<16x32xf32>
    %302 = vector.broadcast %281 : vector<1x32xf32> to vector<16x32xf32>
    %303 = arith.addf %301, %302 : vector<16x32xf32>
    %c0_178 = arith.constant 0 : index
    %c0_179 = arith.constant 0 : index
    %c0_180 = arith.constant 0 : index
    %304 = vector.load %arg13[%c0_178, %c0_179, %c0_180] : memref<2x32x512xf32, #tpu.memory_space<vmem>>, vector<1x32x512xf32>
    %305 = vector.shape_cast %304 : vector<1x32x512xf32> to vector<32x512xf32>
    %cst_181 = arith.constant dense<0.000000e+00> : vector<16x512xf32>
    %306 = tpu.matmul %303, %305, %cst_181 {dimension_numbers = #tpu.dot_dimension_numbers<[1], [0], [0], [1], [0, 0, 1, 1], [], []>} : vector<16x32xf32>, vector<32x512xf32>, vector<16x512xf32> -> vector<16x512xf32>
    %307 = vector.extract_strided_slice %306 {offsets = [0, 0], sizes = [16, 256], strides = [1, 1]} : vector<16x512xf32> to vector<16x256xf32>
    %308 = vector.extract_strided_slice %306 {offsets = [0, 256], sizes = [16, 256], strides = [1, 1]} : vector<16x512xf32> to vector<16x256xf32>
    %309 = arith.negf %307 : vector<16x256xf32>
    %310 = math.exp %309 : vector<16x256xf32>
    %cst_182 = arith.constant 1.000000e+00 : f32
    %311 = vector.broadcast %cst_182 : f32 to vector<16x256xf32>
    %312 = arith.addf %311, %310 : vector<16x256xf32>
    %313 = arith.divf %311, %312 : vector<16x256xf32>
    %314 = arith.mulf %307, %313 : vector<16x256xf32>
    %315 = arith.mulf %314, %308 : vector<16x256xf32>
    %c0_183 = arith.constant 0 : index
    %c0_184 = arith.constant 0 : index
    %c0_185 = arith.constant 0 : index
    %316 = vector.load %arg14[%c0_183, %c0_184, %c0_185] : memref<2x256x32xf32, #tpu.memory_space<vmem>>, vector<1x256x32xf32>
    %317 = vector.shape_cast %316 : vector<1x256x32xf32> to vector<256x32xf32>
    %cst_186 = arith.constant dense<0.000000e+00> : vector<16x32xf32>
    %318 = tpu.matmul %315, %317, %cst_186 {dimension_numbers = #tpu.dot_dimension_numbers<[1], [0], [0], [1], [0, 0, 1, 1], [], []>} : vector<16x256xf32>, vector<256x32xf32>, vector<16x32xf32> -> vector<16x32xf32>
    %319 = arith.addf %277, %318 : vector<16x32xf32>
    %c1_187 = arith.constant 1 : index
    %c0_188 = arith.constant 0 : index
    %c0_189 = arith.constant 0 : index
    %320 = vector.load %arg3[%c1_187, %c0_188, %c0_189] : memref<2x1x32xf32, #tpu.memory_space<vmem>>, vector<1x1x32xf32>
    %321 = vector.shape_cast %320 : vector<1x1x32xf32> to vector<1x32xf32>
    %c1_190 = arith.constant 1 : index
    %c0_191 = arith.constant 0 : index
    %c0_192 = arith.constant 0 : index
    %322 = vector.load %arg4[%c1_190, %c0_191, %c0_192] : memref<2x1x32xf32, #tpu.memory_space<vmem>>, vector<1x1x32xf32>
    %323 = vector.shape_cast %322 : vector<1x1x32xf32> to vector<1x32xf32>
    %cst_193 = arith.constant dense<0.000000e+00> : vector<16xf32>
    %324 = vector.multi_reduction <add>, %319, %cst_193 [1] : vector<16x32xf32> to vector<16xf32>
    %325 = vector.shape_cast %324 : vector<16xf32> to vector<16x1xf32>
    %cst_194 = arith.constant 3.200000e+01 : f32
    %326 = vector.broadcast %cst_194 : f32 to vector<16x1xf32>
    %327 = arith.divf %325, %326 : vector<16x1xf32>
    %328 = vector.broadcast %327 : vector<16x1xf32> to vector<16x32xf32>
    %329 = arith.subf %319, %328 : vector<16x32xf32>
    %330 = arith.mulf %329, %329 : vector<16x32xf32>
    %cst_195 = arith.constant dense<0.000000e+00> : vector<16xf32>
    %331 = vector.multi_reduction <add>, %330, %cst_195 [1] : vector<16x32xf32> to vector<16xf32>
    %332 = vector.shape_cast %331 : vector<16xf32> to vector<16x1xf32>
    %cst_196 = arith.constant 3.200000e+01 : f32
    %333 = vector.broadcast %cst_196 : f32 to vector<16x1xf32>
    %334 = arith.divf %332, %333 : vector<16x1xf32>
    %335 = vector.broadcast %327 : vector<16x1xf32> to vector<16x32xf32>
    %336 = arith.subf %319, %335 : vector<16x32xf32>
    %cst_197 = arith.constant 9.99999974E-6 : f32
    %337 = vector.broadcast %cst_197 : f32 to vector<16x1xf32>
    %338 = arith.addf %334, %337 : vector<16x1xf32>
    %339 = math.rsqrt %338 : vector<16x1xf32>
    %340 = vector.broadcast %339 : vector<16x1xf32> to vector<16x32xf32>
    %341 = arith.mulf %336, %340 : vector<16x32xf32>
    %342 = vector.broadcast %321 : vector<1x32xf32> to vector<16x32xf32>
    %343 = arith.mulf %341, %342 : vector<16x32xf32>
    %344 = vector.broadcast %323 : vector<1x32xf32> to vector<16x32xf32>
    %345 = arith.addf %343, %344 : vector<16x32xf32>
    %c1_198 = arith.constant 1 : index
    %c0_199 = arith.constant 0 : index
    %c0_200 = arith.constant 0 : index
    %c0_201 = arith.constant 0 : index
    %346 = vector.load %arg5[%c1_198, %c0_199, %c0_200, %c0_201] : memref<2x4x32x8xf32, #tpu.memory_space<vmem>>, vector<1x1x32x8xf32>
    %347 = vector.shape_cast %346 : vector<1x1x32x8xf32> to vector<32x8xf32>
    %cst_202 = arith.constant dense<0.000000e+00> : vector<16x8xf32>
    %348 = tpu.matmul %345, %347, %cst_202 {dimension_numbers = #tpu.dot_dimension_numbers<[1], [0], [0], [1], [0, 0, 1, 1], [], []>} : vector<16x32xf32>, vector<32x8xf32>, vector<16x8xf32> -> vector<16x8xf32>
    %c1_203 = arith.constant 1 : index
    %c1_204 = arith.constant 1 : index
    %c0_205 = arith.constant 0 : index
    %c0_206 = arith.constant 0 : index
    %349 = vector.load %arg5[%c1_203, %c1_204, %c0_205, %c0_206] : memref<2x4x32x8xf32, #tpu.memory_space<vmem>>, vector<1x1x32x8xf32>
    %350 = vector.shape_cast %349 : vector<1x1x32x8xf32> to vector<32x8xf32>
    %cst_207 = arith.constant dense<0.000000e+00> : vector<16x8xf32>
    %351 = tpu.matmul %345, %350, %cst_207 {dimension_numbers = #tpu.dot_dimension_numbers<[1], [0], [0], [1], [0, 0, 1, 1], [], []>} : vector<16x32xf32>, vector<32x8xf32>, vector<16x8xf32> -> vector<16x8xf32>
    %c1_208 = arith.constant 1 : index
    %c2_209 = arith.constant 2 : index
    %c0_210 = arith.constant 0 : index
    %c0_211 = arith.constant 0 : index
    %352 = vector.load %arg5[%c1_208, %c2_209, %c0_210, %c0_211] : memref<2x4x32x8xf32, #tpu.memory_space<vmem>>, vector<1x1x32x8xf32>
    %353 = vector.shape_cast %352 : vector<1x1x32x8xf32> to vector<32x8xf32>
    %cst_212 = arith.constant dense<0.000000e+00> : vector<16x8xf32>
    %354 = tpu.matmul %345, %353, %cst_212 {dimension_numbers = #tpu.dot_dimension_numbers<[1], [0], [0], [1], [0, 0, 1, 1], [], []>} : vector<16x32xf32>, vector<32x8xf32>, vector<16x8xf32> -> vector<16x8xf32>
    %c1_213 = arith.constant 1 : index
    %c3_214 = arith.constant 3 : index
    %c0_215 = arith.constant 0 : index
    %c0_216 = arith.constant 0 : index
    %355 = vector.load %arg5[%c1_213, %c3_214, %c0_215, %c0_216] : memref<2x4x32x8xf32, #tpu.memory_space<vmem>>, vector<1x1x32x8xf32>
    %356 = vector.shape_cast %355 : vector<1x1x32x8xf32> to vector<32x8xf32>
    %cst_217 = arith.constant dense<0.000000e+00> : vector<16x8xf32>
    %357 = tpu.matmul %345, %356, %cst_217 {dimension_numbers = #tpu.dot_dimension_numbers<[1], [0], [0], [1], [0, 0, 1, 1], [], []>} : vector<16x32xf32>, vector<32x8xf32>, vector<16x8xf32> -> vector<16x8xf32>
    %c1_218 = arith.constant 1 : index
    %c0_219 = arith.constant 0 : index
    %c0_220 = arith.constant 0 : index
    %c0_221 = arith.constant 0 : index
    %358 = vector.load %arg6[%c1_218, %c0_219, %c0_220, %c0_221] : memref<2x4x32x8xf32, #tpu.memory_space<vmem>>, vector<1x1x32x8xf32>
    %359 = vector.shape_cast %358 : vector<1x1x32x8xf32> to vector<32x8xf32>
    %cst_222 = arith.constant dense<0.000000e+00> : vector<16x8xf32>
    %360 = tpu.matmul %345, %359, %cst_222 {dimension_numbers = #tpu.dot_dimension_numbers<[1], [0], [0], [1], [0, 0, 1, 1], [], []>} : vector<16x32xf32>, vector<32x8xf32>, vector<16x8xf32> -> vector<16x8xf32>
    %c1_223 = arith.constant 1 : index
    %c1_224 = arith.constant 1 : index
    %c0_225 = arith.constant 0 : index
    %c0_226 = arith.constant 0 : index
    %361 = vector.load %arg6[%c1_223, %c1_224, %c0_225, %c0_226] : memref<2x4x32x8xf32, #tpu.memory_space<vmem>>, vector<1x1x32x8xf32>
    %362 = vector.shape_cast %361 : vector<1x1x32x8xf32> to vector<32x8xf32>
    %cst_227 = arith.constant dense<0.000000e+00> : vector<16x8xf32>
    %363 = tpu.matmul %345, %362, %cst_227 {dimension_numbers = #tpu.dot_dimension_numbers<[1], [0], [0], [1], [0, 0, 1, 1], [], []>} : vector<16x32xf32>, vector<32x8xf32>, vector<16x8xf32> -> vector<16x8xf32>
    %c1_228 = arith.constant 1 : index
    %c2_229 = arith.constant 2 : index
    %c0_230 = arith.constant 0 : index
    %c0_231 = arith.constant 0 : index
    %364 = vector.load %arg6[%c1_228, %c2_229, %c0_230, %c0_231] : memref<2x4x32x8xf32, #tpu.memory_space<vmem>>, vector<1x1x32x8xf32>
    %365 = vector.shape_cast %364 : vector<1x1x32x8xf32> to vector<32x8xf32>
    %cst_232 = arith.constant dense<0.000000e+00> : vector<16x8xf32>
    %366 = tpu.matmul %345, %365, %cst_232 {dimension_numbers = #tpu.dot_dimension_numbers<[1], [0], [0], [1], [0, 0, 1, 1], [], []>} : vector<16x32xf32>, vector<32x8xf32>, vector<16x8xf32> -> vector<16x8xf32>
    %c1_233 = arith.constant 1 : index
    %c3_234 = arith.constant 3 : index
    %c0_235 = arith.constant 0 : index
    %c0_236 = arith.constant 0 : index
    %367 = vector.load %arg6[%c1_233, %c3_234, %c0_235, %c0_236] : memref<2x4x32x8xf32, #tpu.memory_space<vmem>>, vector<1x1x32x8xf32>
    %368 = vector.shape_cast %367 : vector<1x1x32x8xf32> to vector<32x8xf32>
    %cst_237 = arith.constant dense<0.000000e+00> : vector<16x8xf32>
    %369 = tpu.matmul %345, %368, %cst_237 {dimension_numbers = #tpu.dot_dimension_numbers<[1], [0], [0], [1], [0, 0, 1, 1], [], []>} : vector<16x32xf32>, vector<32x8xf32>, vector<16x8xf32> -> vector<16x8xf32>
    %c1_238 = arith.constant 1 : index
    %c0_239 = arith.constant 0 : index
    %c0_240 = arith.constant 0 : index
    %c0_241 = arith.constant 0 : index
    %370 = vector.load %arg7[%c1_238, %c0_239, %c0_240, %c0_241] : memref<2x4x32x8xf32, #tpu.memory_space<vmem>>, vector<1x1x32x8xf32>
    %371 = vector.shape_cast %370 : vector<1x1x32x8xf32> to vector<32x8xf32>
    %cst_242 = arith.constant dense<0.000000e+00> : vector<16x8xf32>
    %372 = tpu.matmul %345, %371, %cst_242 {dimension_numbers = #tpu.dot_dimension_numbers<[1], [0], [0], [1], [0, 0, 1, 1], [], []>} : vector<16x32xf32>, vector<32x8xf32>, vector<16x8xf32> -> vector<16x8xf32>
    %c1_243 = arith.constant 1 : index
    %c1_244 = arith.constant 1 : index
    %c0_245 = arith.constant 0 : index
    %c0_246 = arith.constant 0 : index
    %373 = vector.load %arg7[%c1_243, %c1_244, %c0_245, %c0_246] : memref<2x4x32x8xf32, #tpu.memory_space<vmem>>, vector<1x1x32x8xf32>
    %374 = vector.shape_cast %373 : vector<1x1x32x8xf32> to vector<32x8xf32>
    %cst_247 = arith.constant dense<0.000000e+00> : vector<16x8xf32>
    %375 = tpu.matmul %345, %374, %cst_247 {dimension_numbers = #tpu.dot_dimension_numbers<[1], [0], [0], [1], [0, 0, 1, 1], [], []>} : vector<16x32xf32>, vector<32x8xf32>, vector<16x8xf32> -> vector<16x8xf32>
    %c1_248 = arith.constant 1 : index
    %c2_249 = arith.constant 2 : index
    %c0_250 = arith.constant 0 : index
    %c0_251 = arith.constant 0 : index
    %376 = vector.load %arg7[%c1_248, %c2_249, %c0_250, %c0_251] : memref<2x4x32x8xf32, #tpu.memory_space<vmem>>, vector<1x1x32x8xf32>
    %377 = vector.shape_cast %376 : vector<1x1x32x8xf32> to vector<32x8xf32>
    %cst_252 = arith.constant dense<0.000000e+00> : vector<16x8xf32>
    %378 = tpu.matmul %345, %377, %cst_252 {dimension_numbers = #tpu.dot_dimension_numbers<[1], [0], [0], [1], [0, 0, 1, 1], [], []>} : vector<16x32xf32>, vector<32x8xf32>, vector<16x8xf32> -> vector<16x8xf32>
    %c1_253 = arith.constant 1 : index
    %c3_254 = arith.constant 3 : index
    %c0_255 = arith.constant 0 : index
    %c0_256 = arith.constant 0 : index
    %379 = vector.load %arg7[%c1_253, %c3_254, %c0_255, %c0_256] : memref<2x4x32x8xf32, #tpu.memory_space<vmem>>, vector<1x1x32x8xf32>
    %380 = vector.shape_cast %379 : vector<1x1x32x8xf32> to vector<32x8xf32>
    %cst_257 = arith.constant dense<0.000000e+00> : vector<16x8xf32>
    %381 = tpu.matmul %345, %380, %cst_257 {dimension_numbers = #tpu.dot_dimension_numbers<[1], [0], [0], [1], [0, 0, 1, 1], [], []>} : vector<16x32xf32>, vector<32x8xf32>, vector<16x8xf32> -> vector<16x8xf32>
    %c1_258 = arith.constant 1 : index
    %c0_259 = arith.constant 0 : index
    %c0_260 = arith.constant 0 : index
    %c0_261 = arith.constant 0 : index
    %382 = vector.load %arg8[%c1_258, %c0_259, %c0_260, %c0_261] : memref<2x4x1x8xf32, #tpu.memory_space<vmem>>, vector<1x1x1x8xf32>
    %383 = vector.shape_cast %382 : vector<1x1x1x8xf32> to vector<1x8xf32>
    %c1_262 = arith.constant 1 : index
    %c1_263 = arith.constant 1 : index
    %c0_264 = arith.constant 0 : index
    %c0_265 = arith.constant 0 : index
    %384 = vector.load %arg8[%c1_262, %c1_263, %c0_264, %c0_265] : memref<2x4x1x8xf32, #tpu.memory_space<vmem>>, vector<1x1x1x8xf32>
    %385 = vector.shape_cast %384 : vector<1x1x1x8xf32> to vector<1x8xf32>
    %c1_266 = arith.constant 1 : index
    %c2_267 = arith.constant 2 : index
    %c0_268 = arith.constant 0 : index
    %c0_269 = arith.constant 0 : index
    %386 = vector.load %arg8[%c1_266, %c2_267, %c0_268, %c0_269] : memref<2x4x1x8xf32, #tpu.memory_space<vmem>>, vector<1x1x1x8xf32>
    %387 = vector.shape_cast %386 : vector<1x1x1x8xf32> to vector<1x8xf32>
    %c1_270 = arith.constant 1 : index
    %c3_271 = arith.constant 3 : index
    %c0_272 = arith.constant 0 : index
    %c0_273 = arith.constant 0 : index
    %388 = vector.load %arg8[%c1_270, %c3_271, %c0_272, %c0_273] : memref<2x4x1x8xf32, #tpu.memory_space<vmem>>, vector<1x1x1x8xf32>
    %389 = vector.shape_cast %388 : vector<1x1x1x8xf32> to vector<1x8xf32>
    %cst_274 = arith.constant dense<0.000000e+00> : vector<16xf32>
    %390 = vector.multi_reduction <add>, %348, %cst_274 [1] : vector<16x8xf32> to vector<16xf32>
    %391 = vector.shape_cast %390 : vector<16xf32> to vector<16x1xf32>
    %cst_275 = arith.constant 0.000000e+00 : f32
    %392 = vector.broadcast %cst_275 : f32 to vector<16x1xf32>
    %393 = arith.addf %392, %391 : vector<16x1xf32>
    %cst_276 = arith.constant dense<0.000000e+00> : vector<16xf32>
    %394 = vector.multi_reduction <add>, %351, %cst_276 [1] : vector<16x8xf32> to vector<16xf32>
    %395 = vector.shape_cast %394 : vector<16xf32> to vector<16x1xf32>
    %396 = arith.addf %393, %395 : vector<16x1xf32>
    %cst_277 = arith.constant dense<0.000000e+00> : vector<16xf32>
    %397 = vector.multi_reduction <add>, %354, %cst_277 [1] : vector<16x8xf32> to vector<16xf32>
    %398 = vector.shape_cast %397 : vector<16xf32> to vector<16x1xf32>
    %399 = arith.addf %396, %398 : vector<16x1xf32>
    %cst_278 = arith.constant dense<0.000000e+00> : vector<16xf32>
    %400 = vector.multi_reduction <add>, %357, %cst_278 [1] : vector<16x8xf32> to vector<16xf32>
    %401 = vector.shape_cast %400 : vector<16xf32> to vector<16x1xf32>
    %402 = arith.addf %399, %401 : vector<16x1xf32>
    %403 = arith.mulf %348, %348 : vector<16x8xf32>
    %cst_279 = arith.constant dense<0.000000e+00> : vector<16xf32>
    %404 = vector.multi_reduction <add>, %403, %cst_279 [1] : vector<16x8xf32> to vector<16xf32>
    %405 = vector.shape_cast %404 : vector<16xf32> to vector<16x1xf32>
    %cst_280 = arith.constant 0.000000e+00 : f32
    %406 = vector.broadcast %cst_280 : f32 to vector<16x1xf32>
    %407 = arith.addf %406, %405 : vector<16x1xf32>
    %408 = arith.mulf %351, %351 : vector<16x8xf32>
    %cst_281 = arith.constant dense<0.000000e+00> : vector<16xf32>
    %409 = vector.multi_reduction <add>, %408, %cst_281 [1] : vector<16x8xf32> to vector<16xf32>
    %410 = vector.shape_cast %409 : vector<16xf32> to vector<16x1xf32>
    %411 = arith.addf %407, %410 : vector<16x1xf32>
    %412 = arith.mulf %354, %354 : vector<16x8xf32>
    %cst_282 = arith.constant dense<0.000000e+00> : vector<16xf32>
    %413 = vector.multi_reduction <add>, %412, %cst_282 [1] : vector<16x8xf32> to vector<16xf32>
    %414 = vector.shape_cast %413 : vector<16xf32> to vector<16x1xf32>
    %415 = arith.addf %411, %414 : vector<16x1xf32>
    %416 = arith.mulf %357, %357 : vector<16x8xf32>
    %cst_283 = arith.constant dense<0.000000e+00> : vector<16xf32>
    %417 = vector.multi_reduction <add>, %416, %cst_283 [1] : vector<16x8xf32> to vector<16xf32>
    %418 = vector.shape_cast %417 : vector<16xf32> to vector<16x1xf32>
    %419 = arith.addf %415, %418 : vector<16x1xf32>
    %cst_284 = arith.constant 3.200000e+01 : f32
    %420 = vector.broadcast %cst_284 : f32 to vector<16x1xf32>
    %421 = arith.divf %402, %420 : vector<16x1xf32>
    %cst_285 = arith.constant 3.200000e+01 : f32
    %422 = vector.broadcast %cst_285 : f32 to vector<16x1xf32>
    %423 = arith.divf %419, %422 : vector<16x1xf32>
    %424 = arith.mulf %421, %421 : vector<16x1xf32>
    %425 = arith.subf %423, %424 : vector<16x1xf32>
    %cst_286 = arith.constant 9.99999974E-6 : f32
    %426 = vector.broadcast %cst_286 : f32 to vector<16x1xf32>
    %427 = arith.addf %425, %426 : vector<16x1xf32>
    %428 = math.rsqrt %427 : vector<16x1xf32>
    %429 = vector.broadcast %421 : vector<16x1xf32> to vector<16x8xf32>
    %430 = arith.subf %348, %429 : vector<16x8xf32>
    %431 = vector.broadcast %428 : vector<16x1xf32> to vector<16x8xf32>
    %432 = arith.mulf %430, %431 : vector<16x8xf32>
    %433 = vector.broadcast %383 : vector<1x8xf32> to vector<16x8xf32>
    %434 = arith.mulf %432, %433 : vector<16x8xf32>
    %435 = vector.broadcast %421 : vector<16x1xf32> to vector<16x8xf32>
    %436 = arith.subf %351, %435 : vector<16x8xf32>
    %437 = vector.broadcast %428 : vector<16x1xf32> to vector<16x8xf32>
    %438 = arith.mulf %436, %437 : vector<16x8xf32>
    %439 = vector.broadcast %385 : vector<1x8xf32> to vector<16x8xf32>
    %440 = arith.mulf %438, %439 : vector<16x8xf32>
    %441 = vector.broadcast %421 : vector<16x1xf32> to vector<16x8xf32>
    %442 = arith.subf %354, %441 : vector<16x8xf32>
    %443 = vector.broadcast %428 : vector<16x1xf32> to vector<16x8xf32>
    %444 = arith.mulf %442, %443 : vector<16x8xf32>
    %445 = vector.broadcast %387 : vector<1x8xf32> to vector<16x8xf32>
    %446 = arith.mulf %444, %445 : vector<16x8xf32>
    %447 = vector.broadcast %421 : vector<16x1xf32> to vector<16x8xf32>
    %448 = arith.subf %357, %447 : vector<16x8xf32>
    %449 = vector.broadcast %428 : vector<16x1xf32> to vector<16x8xf32>
    %450 = arith.mulf %448, %449 : vector<16x8xf32>
    %451 = vector.broadcast %389 : vector<1x8xf32> to vector<16x8xf32>
    %452 = arith.mulf %450, %451 : vector<16x8xf32>
    %c1_287 = arith.constant 1 : index
    %c0_288 = arith.constant 0 : index
    %c0_289 = arith.constant 0 : index
    %c0_290 = arith.constant 0 : index
    %453 = vector.load %arg9[%c1_287, %c0_288, %c0_289, %c0_290] : memref<2x4x1x8xf32, #tpu.memory_space<vmem>>, vector<1x1x1x8xf32>
    %454 = vector.shape_cast %453 : vector<1x1x1x8xf32> to vector<1x8xf32>
    %c1_291 = arith.constant 1 : index
    %c1_292 = arith.constant 1 : index
    %c0_293 = arith.constant 0 : index
    %c0_294 = arith.constant 0 : index
    %455 = vector.load %arg9[%c1_291, %c1_292, %c0_293, %c0_294] : memref<2x4x1x8xf32, #tpu.memory_space<vmem>>, vector<1x1x1x8xf32>
    %456 = vector.shape_cast %455 : vector<1x1x1x8xf32> to vector<1x8xf32>
    %c1_295 = arith.constant 1 : index
    %c2_296 = arith.constant 2 : index
    %c0_297 = arith.constant 0 : index
    %c0_298 = arith.constant 0 : index
    %457 = vector.load %arg9[%c1_295, %c2_296, %c0_297, %c0_298] : memref<2x4x1x8xf32, #tpu.memory_space<vmem>>, vector<1x1x1x8xf32>
    %458 = vector.shape_cast %457 : vector<1x1x1x8xf32> to vector<1x8xf32>
    %c1_299 = arith.constant 1 : index
    %c3_300 = arith.constant 3 : index
    %c0_301 = arith.constant 0 : index
    %c0_302 = arith.constant 0 : index
    %459 = vector.load %arg9[%c1_299, %c3_300, %c0_301, %c0_302] : memref<2x4x1x8xf32, #tpu.memory_space<vmem>>, vector<1x1x1x8xf32>
    %460 = vector.shape_cast %459 : vector<1x1x1x8xf32> to vector<1x8xf32>
    %cst_303 = arith.constant dense<0.000000e+00> : vector<16xf32>
    %461 = vector.multi_reduction <add>, %360, %cst_303 [1] : vector<16x8xf32> to vector<16xf32>
    %462 = vector.shape_cast %461 : vector<16xf32> to vector<16x1xf32>
    %cst_304 = arith.constant 0.000000e+00 : f32
    %463 = vector.broadcast %cst_304 : f32 to vector<16x1xf32>
    %464 = arith.addf %463, %462 : vector<16x1xf32>
    %cst_305 = arith.constant dense<0.000000e+00> : vector<16xf32>
    %465 = vector.multi_reduction <add>, %363, %cst_305 [1] : vector<16x8xf32> to vector<16xf32>
    %466 = vector.shape_cast %465 : vector<16xf32> to vector<16x1xf32>
    %467 = arith.addf %464, %466 : vector<16x1xf32>
    %cst_306 = arith.constant dense<0.000000e+00> : vector<16xf32>
    %468 = vector.multi_reduction <add>, %366, %cst_306 [1] : vector<16x8xf32> to vector<16xf32>
    %469 = vector.shape_cast %468 : vector<16xf32> to vector<16x1xf32>
    %470 = arith.addf %467, %469 : vector<16x1xf32>
    %cst_307 = arith.constant dense<0.000000e+00> : vector<16xf32>
    %471 = vector.multi_reduction <add>, %369, %cst_307 [1] : vector<16x8xf32> to vector<16xf32>
    %472 = vector.shape_cast %471 : vector<16xf32> to vector<16x1xf32>
    %473 = arith.addf %470, %472 : vector<16x1xf32>
    %474 = arith.mulf %360, %360 : vector<16x8xf32>
    %cst_308 = arith.constant dense<0.000000e+00> : vector<16xf32>
    %475 = vector.multi_reduction <add>, %474, %cst_308 [1] : vector<16x8xf32> to vector<16xf32>
    %476 = vector.shape_cast %475 : vector<16xf32> to vector<16x1xf32>
    %cst_309 = arith.constant 0.000000e+00 : f32
    %477 = vector.broadcast %cst_309 : f32 to vector<16x1xf32>
    %478 = arith.addf %477, %476 : vector<16x1xf32>
    %479 = arith.mulf %363, %363 : vector<16x8xf32>
    %cst_310 = arith.constant dense<0.000000e+00> : vector<16xf32>
    %480 = vector.multi_reduction <add>, %479, %cst_310 [1] : vector<16x8xf32> to vector<16xf32>
    %481 = vector.shape_cast %480 : vector<16xf32> to vector<16x1xf32>
    %482 = arith.addf %478, %481 : vector<16x1xf32>
    %483 = arith.mulf %366, %366 : vector<16x8xf32>
    %cst_311 = arith.constant dense<0.000000e+00> : vector<16xf32>
    %484 = vector.multi_reduction <add>, %483, %cst_311 [1] : vector<16x8xf32> to vector<16xf32>
    %485 = vector.shape_cast %484 : vector<16xf32> to vector<16x1xf32>
    %486 = arith.addf %482, %485 : vector<16x1xf32>
    %487 = arith.mulf %369, %369 : vector<16x8xf32>
    %cst_312 = arith.constant dense<0.000000e+00> : vector<16xf32>
    %488 = vector.multi_reduction <add>, %487, %cst_312 [1] : vector<16x8xf32> to vector<16xf32>
    %489 = vector.shape_cast %488 : vector<16xf32> to vector<16x1xf32>
    %490 = arith.addf %486, %489 : vector<16x1xf32>
    %cst_313 = arith.constant 3.200000e+01 : f32
    %491 = vector.broadcast %cst_313 : f32 to vector<16x1xf32>
    %492 = arith.divf %473, %491 : vector<16x1xf32>
    %cst_314 = arith.constant 3.200000e+01 : f32
    %493 = vector.broadcast %cst_314 : f32 to vector<16x1xf32>
    %494 = arith.divf %490, %493 : vector<16x1xf32>
    %495 = arith.mulf %492, %492 : vector<16x1xf32>
    %496 = arith.subf %494, %495 : vector<16x1xf32>
    %cst_315 = arith.constant 9.99999974E-6 : f32
    %497 = vector.broadcast %cst_315 : f32 to vector<16x1xf32>
    %498 = arith.addf %496, %497 : vector<16x1xf32>
    %499 = math.rsqrt %498 : vector<16x1xf32>
    %500 = vector.broadcast %492 : vector<16x1xf32> to vector<16x8xf32>
    %501 = arith.subf %360, %500 : vector<16x8xf32>
    %502 = vector.broadcast %499 : vector<16x1xf32> to vector<16x8xf32>
    %503 = arith.mulf %501, %502 : vector<16x8xf32>
    %504 = vector.broadcast %454 : vector<1x8xf32> to vector<16x8xf32>
    %505 = arith.mulf %503, %504 : vector<16x8xf32>
    %506 = vector.broadcast %492 : vector<16x1xf32> to vector<16x8xf32>
    %507 = arith.subf %363, %506 : vector<16x8xf32>
    %508 = vector.broadcast %499 : vector<16x1xf32> to vector<16x8xf32>
    %509 = arith.mulf %507, %508 : vector<16x8xf32>
    %510 = vector.broadcast %456 : vector<1x8xf32> to vector<16x8xf32>
    %511 = arith.mulf %509, %510 : vector<16x8xf32>
    %512 = vector.broadcast %492 : vector<16x1xf32> to vector<16x8xf32>
    %513 = arith.subf %366, %512 : vector<16x8xf32>
    %514 = vector.broadcast %499 : vector<16x1xf32> to vector<16x8xf32>
    %515 = arith.mulf %513, %514 : vector<16x8xf32>
    %516 = vector.broadcast %458 : vector<1x8xf32> to vector<16x8xf32>
    %517 = arith.mulf %515, %516 : vector<16x8xf32>
    %518 = vector.broadcast %492 : vector<16x1xf32> to vector<16x8xf32>
    %519 = arith.subf %369, %518 : vector<16x8xf32>
    %520 = vector.broadcast %499 : vector<16x1xf32> to vector<16x8xf32>
    %521 = arith.mulf %519, %520 : vector<16x8xf32>
    %522 = vector.broadcast %460 : vector<1x8xf32> to vector<16x8xf32>
    %523 = arith.mulf %521, %522 : vector<16x8xf32>
    %cst_316 = arith.constant dense<0.000000e+00> : vector<16x16xf32>
    %524 = tpu.matmul %434, %505, %cst_316 {dimension_numbers = #tpu.dot_dimension_numbers<[1], [1], [0], [0], [0, 0, 1, 0], [], []>} : vector<16x8xf32>, vector<16x8xf32>, vector<16x16xf32> -> vector<16x16xf32>
    %525 = arith.addf %524, %3 : vector<16x16xf32>
    %cst_317 = arith.constant dense<0xFF800000> : vector<16xf32>
    %526 = vector.multi_reduction <maximumf>, %525, %cst_317 [1] : vector<16x16xf32> to vector<16xf32>
    %527 = vector.shape_cast %526 : vector<16xf32> to vector<16x1xf32>
    %528 = vector.broadcast %527 : vector<16x1xf32> to vector<16x16xf32>
    %529 = arith.subf %525, %528 : vector<16x16xf32>
    %530 = math.exp %529 : vector<16x16xf32>
    %cst_318 = arith.constant dense<0.000000e+00> : vector<16xf32>
    %531 = vector.multi_reduction <add>, %530, %cst_318 [1] : vector<16x16xf32> to vector<16xf32>
    %532 = vector.shape_cast %531 : vector<16xf32> to vector<16x1xf32>
    %533 = tpu.reciprocal %532 {approx = true} : vector<16x1xf32> -> vector<16x1xf32>
    %534 = vector.broadcast %533 : vector<16x1xf32> to vector<16x16xf32>
    %535 = arith.mulf %530, %534 : vector<16x16xf32>
    %cst_319 = arith.constant dense<0.000000e+00> : vector<16x8xf32>
    %536 = tpu.matmul %535, %372, %cst_319 {dimension_numbers = #tpu.dot_dimension_numbers<[1], [0], [0], [1], [0, 0, 1, 1], [], []>} : vector<16x16xf32>, vector<16x8xf32>, vector<16x8xf32> -> vector<16x8xf32>
    %c1_320 = arith.constant 1 : index
    %c0_321 = arith.constant 0 : index
    %c0_322 = arith.constant 0 : index
    %c0_323 = arith.constant 0 : index
    %537 = vector.load %arg10[%c1_320, %c0_321, %c0_322, %c0_323] : memref<2x4x8x32xf32, #tpu.memory_space<vmem>>, vector<1x1x8x32xf32>
    %538 = vector.shape_cast %537 : vector<1x1x8x32xf32> to vector<8x32xf32>
    %cst_324 = arith.constant dense<0.000000e+00> : vector<16x32xf32>
    %539 = tpu.matmul %536, %538, %cst_324 {dimension_numbers = #tpu.dot_dimension_numbers<[1], [0], [0], [1], [0, 0, 1, 1], [], []>} : vector<16x8xf32>, vector<8x32xf32>, vector<16x32xf32> -> vector<16x32xf32>
    %cst_325 = arith.constant dense<0.000000e+00> : vector<16x16xf32>
    %540 = tpu.matmul %440, %511, %cst_325 {dimension_numbers = #tpu.dot_dimension_numbers<[1], [1], [0], [0], [0, 0, 1, 0], [], []>} : vector<16x8xf32>, vector<16x8xf32>, vector<16x16xf32> -> vector<16x16xf32>
    %541 = arith.addf %540, %3 : vector<16x16xf32>
    %cst_326 = arith.constant dense<0xFF800000> : vector<16xf32>
    %542 = vector.multi_reduction <maximumf>, %541, %cst_326 [1] : vector<16x16xf32> to vector<16xf32>
    %543 = vector.shape_cast %542 : vector<16xf32> to vector<16x1xf32>
    %544 = vector.broadcast %543 : vector<16x1xf32> to vector<16x16xf32>
    %545 = arith.subf %541, %544 : vector<16x16xf32>
    %546 = math.exp %545 : vector<16x16xf32>
    %cst_327 = arith.constant dense<0.000000e+00> : vector<16xf32>
    %547 = vector.multi_reduction <add>, %546, %cst_327 [1] : vector<16x16xf32> to vector<16xf32>
    %548 = vector.shape_cast %547 : vector<16xf32> to vector<16x1xf32>
    %549 = tpu.reciprocal %548 {approx = true} : vector<16x1xf32> -> vector<16x1xf32>
    %550 = vector.broadcast %549 : vector<16x1xf32> to vector<16x16xf32>
    %551 = arith.mulf %546, %550 : vector<16x16xf32>
    %cst_328 = arith.constant dense<0.000000e+00> : vector<16x8xf32>
    %552 = tpu.matmul %551, %375, %cst_328 {dimension_numbers = #tpu.dot_dimension_numbers<[1], [0], [0], [1], [0, 0, 1, 1], [], []>} : vector<16x16xf32>, vector<16x8xf32>, vector<16x8xf32> -> vector<16x8xf32>
    %c1_329 = arith.constant 1 : index
    %c1_330 = arith.constant 1 : index
    %c0_331 = arith.constant 0 : index
    %c0_332 = arith.constant 0 : index
    %553 = vector.load %arg10[%c1_329, %c1_330, %c0_331, %c0_332] : memref<2x4x8x32xf32, #tpu.memory_space<vmem>>, vector<1x1x8x32xf32>
    %554 = vector.shape_cast %553 : vector<1x1x8x32xf32> to vector<8x32xf32>
    %cst_333 = arith.constant dense<0.000000e+00> : vector<16x32xf32>
    %555 = tpu.matmul %552, %554, %cst_333 {dimension_numbers = #tpu.dot_dimension_numbers<[1], [0], [0], [1], [0, 0, 1, 1], [], []>} : vector<16x8xf32>, vector<8x32xf32>, vector<16x32xf32> -> vector<16x32xf32>
    %cst_334 = arith.constant dense<0.000000e+00> : vector<16x16xf32>
    %556 = tpu.matmul %446, %517, %cst_334 {dimension_numbers = #tpu.dot_dimension_numbers<[1], [1], [0], [0], [0, 0, 1, 0], [], []>} : vector<16x8xf32>, vector<16x8xf32>, vector<16x16xf32> -> vector<16x16xf32>
    %557 = arith.addf %556, %3 : vector<16x16xf32>
    %cst_335 = arith.constant dense<0xFF800000> : vector<16xf32>
    %558 = vector.multi_reduction <maximumf>, %557, %cst_335 [1] : vector<16x16xf32> to vector<16xf32>
    %559 = vector.shape_cast %558 : vector<16xf32> to vector<16x1xf32>
    %560 = vector.broadcast %559 : vector<16x1xf32> to vector<16x16xf32>
    %561 = arith.subf %557, %560 : vector<16x16xf32>
    %562 = math.exp %561 : vector<16x16xf32>
    %cst_336 = arith.constant dense<0.000000e+00> : vector<16xf32>
    %563 = vector.multi_reduction <add>, %562, %cst_336 [1] : vector<16x16xf32> to vector<16xf32>
    %564 = vector.shape_cast %563 : vector<16xf32> to vector<16x1xf32>
    %565 = tpu.reciprocal %564 {approx = true} : vector<16x1xf32> -> vector<16x1xf32>
    %566 = vector.broadcast %565 : vector<16x1xf32> to vector<16x16xf32>
    %567 = arith.mulf %562, %566 : vector<16x16xf32>
    %cst_337 = arith.constant dense<0.000000e+00> : vector<16x8xf32>
    %568 = tpu.matmul %567, %378, %cst_337 {dimension_numbers = #tpu.dot_dimension_numbers<[1], [0], [0], [1], [0, 0, 1, 1], [], []>} : vector<16x16xf32>, vector<16x8xf32>, vector<16x8xf32> -> vector<16x8xf32>
    %c1_338 = arith.constant 1 : index
    %c2_339 = arith.constant 2 : index
    %c0_340 = arith.constant 0 : index
    %c0_341 = arith.constant 0 : index
    %569 = vector.load %arg10[%c1_338, %c2_339, %c0_340, %c0_341] : memref<2x4x8x32xf32, #tpu.memory_space<vmem>>, vector<1x1x8x32xf32>
    %570 = vector.shape_cast %569 : vector<1x1x8x32xf32> to vector<8x32xf32>
    %cst_342 = arith.constant dense<0.000000e+00> : vector<16x32xf32>
    %571 = tpu.matmul %568, %570, %cst_342 {dimension_numbers = #tpu.dot_dimension_numbers<[1], [0], [0], [1], [0, 0, 1, 1], [], []>} : vector<16x8xf32>, vector<8x32xf32>, vector<16x32xf32> -> vector<16x32xf32>
    %cst_343 = arith.constant dense<0.000000e+00> : vector<16x16xf32>
    %572 = tpu.matmul %452, %523, %cst_343 {dimension_numbers = #tpu.dot_dimension_numbers<[1], [1], [0], [0], [0, 0, 1, 0], [], []>} : vector<16x8xf32>, vector<16x8xf32>, vector<16x16xf32> -> vector<16x16xf32>
    %573 = arith.addf %572, %3 : vector<16x16xf32>
    %cst_344 = arith.constant dense<0xFF800000> : vector<16xf32>
    %574 = vector.multi_reduction <maximumf>, %573, %cst_344 [1] : vector<16x16xf32> to vector<16xf32>
    %575 = vector.shape_cast %574 : vector<16xf32> to vector<16x1xf32>
    %576 = vector.broadcast %575 : vector<16x1xf32> to vector<16x16xf32>
    %577 = arith.subf %573, %576 : vector<16x16xf32>
    %578 = math.exp %577 : vector<16x16xf32>
    %cst_345 = arith.constant dense<0.000000e+00> : vector<16xf32>
    %579 = vector.multi_reduction <add>, %578, %cst_345 [1] : vector<16x16xf32> to vector<16xf32>
    %580 = vector.shape_cast %579 : vector<16xf32> to vector<16x1xf32>
    %581 = tpu.reciprocal %580 {approx = true} : vector<16x1xf32> -> vector<16x1xf32>
    %582 = vector.broadcast %581 : vector<16x1xf32> to vector<16x16xf32>
    %583 = arith.mulf %578, %582 : vector<16x16xf32>
    %cst_346 = arith.constant dense<0.000000e+00> : vector<16x8xf32>
    %584 = tpu.matmul %583, %381, %cst_346 {dimension_numbers = #tpu.dot_dimension_numbers<[1], [0], [0], [1], [0, 0, 1, 1], [], []>} : vector<16x16xf32>, vector<16x8xf32>, vector<16x8xf32> -> vector<16x8xf32>
    %c1_347 = arith.constant 1 : index
    %c3_348 = arith.constant 3 : index
    %c0_349 = arith.constant 0 : index
    %c0_350 = arith.constant 0 : index
    %585 = vector.load %arg10[%c1_347, %c3_348, %c0_349, %c0_350] : memref<2x4x8x32xf32, #tpu.memory_space<vmem>>, vector<1x1x8x32xf32>
    %586 = vector.shape_cast %585 : vector<1x1x8x32xf32> to vector<8x32xf32>
    %cst_351 = arith.constant dense<0.000000e+00> : vector<16x32xf32>
    %587 = tpu.matmul %584, %586, %cst_351 {dimension_numbers = #tpu.dot_dimension_numbers<[1], [0], [0], [1], [0, 0, 1, 1], [], []>} : vector<16x8xf32>, vector<8x32xf32>, vector<16x32xf32> -> vector<16x32xf32>
    %cst_352 = arith.constant 0.000000e+00 : f32
    %588 = vector.broadcast %cst_352 : f32 to vector<16x32xf32>
    %589 = arith.addf %588, %539 : vector<16x32xf32>
    %590 = arith.addf %589, %555 : vector<16x32xf32>
    %591 = arith.addf %590, %571 : vector<16x32xf32>
    %592 = arith.addf %591, %587 : vector<16x32xf32>
    %593 = arith.addf %319, %592 : vector<16x32xf32>
    %c1_353 = arith.constant 1 : index
    %c0_354 = arith.constant 0 : index
    %c0_355 = arith.constant 0 : index
    %594 = vector.load %arg11[%c1_353, %c0_354, %c0_355] : memref<2x1x32xf32, #tpu.memory_space<vmem>>, vector<1x1x32xf32>
    %595 = vector.shape_cast %594 : vector<1x1x32xf32> to vector<1x32xf32>
    %c1_356 = arith.constant 1 : index
    %c0_357 = arith.constant 0 : index
    %c0_358 = arith.constant 0 : index
    %596 = vector.load %arg12[%c1_356, %c0_357, %c0_358] : memref<2x1x32xf32, #tpu.memory_space<vmem>>, vector<1x1x32xf32>
    %597 = vector.shape_cast %596 : vector<1x1x32xf32> to vector<1x32xf32>
    %cst_359 = arith.constant dense<0.000000e+00> : vector<16xf32>
    %598 = vector.multi_reduction <add>, %593, %cst_359 [1] : vector<16x32xf32> to vector<16xf32>
    %599 = vector.shape_cast %598 : vector<16xf32> to vector<16x1xf32>
    %cst_360 = arith.constant 3.200000e+01 : f32
    %600 = vector.broadcast %cst_360 : f32 to vector<16x1xf32>
    %601 = arith.divf %599, %600 : vector<16x1xf32>
    %602 = vector.broadcast %601 : vector<16x1xf32> to vector<16x32xf32>
    %603 = arith.subf %593, %602 : vector<16x32xf32>
    %604 = arith.mulf %603, %603 : vector<16x32xf32>
    %cst_361 = arith.constant dense<0.000000e+00> : vector<16xf32>
    %605 = vector.multi_reduction <add>, %604, %cst_361 [1] : vector<16x32xf32> to vector<16xf32>
    %606 = vector.shape_cast %605 : vector<16xf32> to vector<16x1xf32>
    %cst_362 = arith.constant 3.200000e+01 : f32
    %607 = vector.broadcast %cst_362 : f32 to vector<16x1xf32>
    %608 = arith.divf %606, %607 : vector<16x1xf32>
    %609 = vector.broadcast %601 : vector<16x1xf32> to vector<16x32xf32>
    %610 = arith.subf %593, %609 : vector<16x32xf32>
    %cst_363 = arith.constant 9.99999974E-6 : f32
    %611 = vector.broadcast %cst_363 : f32 to vector<16x1xf32>
    %612 = arith.addf %608, %611 : vector<16x1xf32>
    %613 = math.rsqrt %612 : vector<16x1xf32>
    %614 = vector.broadcast %613 : vector<16x1xf32> to vector<16x32xf32>
    %615 = arith.mulf %610, %614 : vector<16x32xf32>
    %616 = vector.broadcast %595 : vector<1x32xf32> to vector<16x32xf32>
    %617 = arith.mulf %615, %616 : vector<16x32xf32>
    %618 = vector.broadcast %597 : vector<1x32xf32> to vector<16x32xf32>
    %619 = arith.addf %617, %618 : vector<16x32xf32>
    %c1_364 = arith.constant 1 : index
    %c0_365 = arith.constant 0 : index
    %c0_366 = arith.constant 0 : index
    %620 = vector.load %arg13[%c1_364, %c0_365, %c0_366] : memref<2x32x512xf32, #tpu.memory_space<vmem>>, vector<1x32x512xf32>
    %621 = vector.shape_cast %620 : vector<1x32x512xf32> to vector<32x512xf32>
    %cst_367 = arith.constant dense<0.000000e+00> : vector<16x512xf32>
    %622 = tpu.matmul %619, %621, %cst_367 {dimension_numbers = #tpu.dot_dimension_numbers<[1], [0], [0], [1], [0, 0, 1, 1], [], []>} : vector<16x32xf32>, vector<32x512xf32>, vector<16x512xf32> -> vector<16x512xf32>
    %623 = vector.extract_strided_slice %622 {offsets = [0, 0], sizes = [16, 256], strides = [1, 1]} : vector<16x512xf32> to vector<16x256xf32>
    %624 = vector.extract_strided_slice %622 {offsets = [0, 256], sizes = [16, 256], strides = [1, 1]} : vector<16x512xf32> to vector<16x256xf32>
    %625 = arith.negf %623 : vector<16x256xf32>
    %626 = math.exp %625 : vector<16x256xf32>
    %cst_368 = arith.constant 1.000000e+00 : f32
    %627 = vector.broadcast %cst_368 : f32 to vector<16x256xf32>
    %628 = arith.addf %627, %626 : vector<16x256xf32>
    %629 = arith.divf %627, %628 : vector<16x256xf32>
    %630 = arith.mulf %623, %629 : vector<16x256xf32>
    %631 = arith.mulf %630, %624 : vector<16x256xf32>
    %c1_369 = arith.constant 1 : index
    %c0_370 = arith.constant 0 : index
    %c0_371 = arith.constant 0 : index
    %632 = vector.load %arg14[%c1_369, %c0_370, %c0_371] : memref<2x256x32xf32, #tpu.memory_space<vmem>>, vector<1x256x32xf32>
    %633 = vector.shape_cast %632 : vector<1x256x32xf32> to vector<256x32xf32>
    %cst_372 = arith.constant dense<0.000000e+00> : vector<16x32xf32>
    %634 = tpu.matmul %631, %633, %cst_372 {dimension_numbers = #tpu.dot_dimension_numbers<[1], [0], [0], [1], [0, 0, 1, 1], [], []>} : vector<16x256xf32>, vector<256x32xf32>, vector<16x32xf32> -> vector<16x32xf32>
    %635 = arith.addf %593, %634 : vector<16x32xf32>
    %c0_373 = arith.constant 0 : index
    %c0_374 = arith.constant 0 : index
    %c0_375 = arith.constant 0 : index
    %636 = vector.load %arg15[%c0_373, %c0_374, %c0_375] : memref<1x16x32xf32, #tpu.memory_space<vmem>>, vector<1x16x32xf32>
    %637 = vector.shape_cast %636 : vector<1x16x32xf32> to vector<16x32xf32>
    %638 = vector.shape_cast %635 : vector<16x32xf32> to vector<1x16x32xf32>
    tpu.vector_store %arg15[%c0_373, %c0_374, %c0_375], %638 {strides = array<i32>} : memref<1x16x32xf32, #tpu.memory_space<vmem>>, vector<1x16x32xf32>,
    return
  }
  func.func @transform_0(%arg0: i32) -> (i32, i32, i32) {
    %c0_i32 = arith.constant 0 : i32
    %c0_i32_0 = arith.constant 0 : i32
    %c0_i32_1 = arith.constant 0 : i32
    return %arg0, %c0_i32, %c0_i32_0 : i32, i32, i32
  }
  func.func @transform_1(%arg0: i32) -> (i32, i32, i32) {
    %c0_i32 = arith.constant 0 : i32
    %c0_i32_0 = arith.constant 0 : i32
    %c0_i32_1 = arith.constant 0 : i32
    return %arg0, %c0_i32, %c0_i32_0 : i32, i32, i32
  }
  func.func @transform_2(%arg0: i32) -> (i32, i32, i32) {
    %c0_i32 = arith.constant 0 : i32
    %c0_i32_0 = arith.constant 0 : i32
    %c0_i32_1 = arith.constant 0 : i32
    %c0_i32_2 = arith.constant 0 : i32
    return %c0_i32, %c0_i32_0, %c0_i32_1 : i32, i32, i32
  }
  func.func @transform_3(%arg0: i32) -> (i32, i32, i32) {
    %c0_i32 = arith.constant 0 : i32
    %c0_i32_0 = arith.constant 0 : i32
    %c0_i32_1 = arith.constant 0 : i32
    %c0_i32_2 = arith.constant 0 : i32
    return %c0_i32, %c0_i32_0, %c0_i32_1 : i32, i32, i32
  }
  func.func @transform_4(%arg0: i32) -> (i32, i32, i32, i32) {
    %c0_i32 = arith.constant 0 : i32
    %c0_i32_0 = arith.constant 0 : i32
    %c0_i32_1 = arith.constant 0 : i32
    %c0_i32_2 = arith.constant 0 : i32
    %c0_i32_3 = arith.constant 0 : i32
    return %c0_i32, %c0_i32_0, %c0_i32_1, %c0_i32_2 : i32, i32, i32, i32
  }
  func.func @transform_5(%arg0: i32) -> (i32, i32, i32, i32) {
    %c0_i32 = arith.constant 0 : i32
    %c0_i32_0 = arith.constant 0 : i32
    %c0_i32_1 = arith.constant 0 : i32
    %c0_i32_2 = arith.constant 0 : i32
    %c0_i32_3 = arith.constant 0 : i32
    return %c0_i32, %c0_i32_0, %c0_i32_1, %c0_i32_2 : i32, i32, i32, i32
  }
  func.func @transform_6(%arg0: i32) -> (i32, i32, i32, i32) {
    %c0_i32 = arith.constant 0 : i32
    %c0_i32_0 = arith.constant 0 : i32
    %c0_i32_1 = arith.constant 0 : i32
    %c0_i32_2 = arith.constant 0 : i32
    %c0_i32_3 = arith.constant 0 : i32
    return %c0_i32, %c0_i32_0, %c0_i32_1, %c0_i32_2 : i32, i32, i32, i32
  }
  func.func @transform_7(%arg0: i32) -> (i32, i32, i32, i32) {
    %c0_i32 = arith.constant 0 : i32
    %c0_i32_0 = arith.constant 0 : i32
    %c0_i32_1 = arith.constant 0 : i32
    %c0_i32_2 = arith.constant 0 : i32
    %c0_i32_3 = arith.constant 0 : i32
    return %c0_i32, %c0_i32_0, %c0_i32_1, %c0_i32_2 : i32, i32, i32, i32
  }
  func.func @transform_8(%arg0: i32) -> (i32, i32, i32, i32) {
    %c0_i32 = arith.constant 0 : i32
    %c0_i32_0 = arith.constant 0 : i32
    %c0_i32_1 = arith.constant 0 : i32
    %c0_i32_2 = arith.constant 0 : i32
    %c0_i32_3 = arith.constant 0 : i32
    return %c0_i32, %c0_i32_0, %c0_i32_1, %c0_i32_2 : i32, i32, i32, i32
  }
  func.func @transform_9(%arg0: i32) -> (i32, i32, i32, i32) {
    %c0_i32 = arith.constant 0 : i32
    %c0_i32_0 = arith.constant 0 : i32
    %c0_i32_1 = arith.constant 0 : i32
    %c0_i32_2 = arith.constant 0 : i32
    %c0_i32_3 = arith.constant 0 : i32
    return %c0_i32, %c0_i32_0, %c0_i32_1, %c0_i32_2 : i32, i32, i32, i32
  }
  func.func @transform_10(%arg0: i32) -> (i32, i32, i32) {
    %c0_i32 = arith.constant 0 : i32
    %c0_i32_0 = arith.constant 0 : i32
    %c0_i32_1 = arith.constant 0 : i32
    %c0_i32_2 = arith.constant 0 : i32
    return %c0_i32, %c0_i32_0, %c0_i32_1 : i32, i32, i32
  }
  func.func @transform_11(%arg0: i32) -> (i32, i32, i32) {
    %c0_i32 = arith.constant 0 : i32
    %c0_i32_0 = arith.constant 0 : i32
    %c0_i32_1 = arith.constant 0 : i32
    %c0_i32_2 = arith.constant 0 : i32
    return %c0_i32, %c0_i32_0, %c0_i32_1 : i32, i32, i32
  }
  func.func @transform_12(%arg0: i32) -> (i32, i32, i32) {
    %c0_i32 = arith.constant 0 : i32
    %c0_i32_0 = arith.constant 0 : i32
    %c0_i32_1 = arith.constant 0 : i32
    %c0_i32_2 = arith.constant 0 : i32
    return %c0_i32, %c0_i32_0, %c0_i32_1 : i32, i32, i32
  }
  func.func @transform_13(%arg0: i32) -> (i32, i32, i32) {
    %c0_i32 = arith.constant 0 : i32
    %c0_i32_0 = arith.constant 0 : i32
    %c0_i32_1 = arith.constant 0 : i32
    %c0_i32_2 = arith.constant 0 : i32
    return %c0_i32, %c0_i32_0, %c0_i32_1 : i32, i32, i32
  }
  func.func @transform_14(%arg0: i32) -> (i32, i32, i32) {
    %c0_i32 = arith.constant 0 : i32
    %c0_i32_0 = arith.constant 0 : i32
    %c0_i32_1 = arith.constant 0 : i32
    return %arg0, %c0_i32, %c0_i32_0 : i32, i32, i32
  }
}

</mosaic_0001>

<llo_original>
// kernel: tpu_custom_call.1
$region0: #{tpu_custom_call.1}
  #allocation0 [shape = 'u32[]', space=smem, size = 0x4, offset = 0x4, fixed_abs, tag = 'smem constant byte address 0x4 - core index']
  #allocation1 [shape = 'u32[144,128]{1,0:T(1,128)}', space=vmem, size = 0x12000, scoped, tag = 'internal scratch']
  %s0 = inlined_call_operand.vmem [shape: f32[1,16,32], index: 0, kind: input, shape index: {}]
  %s1 = inlined_call_operand.vmem [shape: f32[1,16,16], index: 1, kind: input, shape index: {}]
  %s2 = inlined_call_operand.vmem [shape: f32[2,1,32], index: 2, kind: input, shape index: {}]
  %s3 = inlined_call_operand.vmem [shape: f32[2,1,32], index: 3, kind: input, shape index: {}]
  %s4 = inlined_call_operand.vmem [shape: f32[2,4,32,8], index: 4, kind: input, shape index: {}]
  %s5 = inlined_call_operand.vmem [shape: f32[2,4,32,8], index: 5, kind: input, shape index: {}]
  %s6 = inlined_call_operand.vmem [shape: f32[2,4,32,8], index: 6, kind: input, shape index: {}]
  %s7 = inlined_call_operand.vmem [shape: f32[2,4,1,8], index: 7, kind: input, shape index: {}]
  %s8 = inlined_call_operand.vmem [shape: f32[2,4,1,8], index: 8, kind: input, shape index: {}]
  %s9 = inlined_call_operand.vmem [shape: f32[2,4,8,32], index: 9, kind: input, shape index: {}]
  %s10 = inlined_call_operand.vmem [shape: f32[2,1,32], index: 10, kind: input, shape index: {}]
  %s11 = inlined_call_operand.vmem [shape: f32[2,1,32], index: 11, kind: input, shape index: {}]
  %s12 = inlined_call_operand.vmem [shape: f32[2,32,512], index: 12, kind: input, shape index: {}]
  %s13 = inlined_call_operand.vmem [shape: f32[2,256,32], index: 13, kind: input, shape index: {}]
  %s14 = inlined_call_operand.hbm [shape: f32[1,16,32], index: 14, kind: output, shape index: {}]
  %s15 = sld [smem:[#allocation0]]
  $region66: #{tpu_custom_call.1} parent=0
    _
  %s17 = ssub.s32 1, %s15
  %s18 = scalar_select 0, %s17, %s15
  $region1: #{tpu_custom_call.1} parent=0
    #allocation2 [shape = 'u8[8192]{0}', space=vmem, size = 0x2000, scoped, tag = 'output window, operand 0, single buffered']
    #allocation3 [shape = 's32[1]{0}', space=sflag, size = 0x4, scoped, tag = 'scoped memory for tpu_custom_call.1']
    %19 = vsyncpa [#allocation3], 0
    // Predicated region
    $region2: #{tpu_custom_call.1} parent=1 // pred_check
      _
    $region3: #{tpu_custom_call.1} parent=1 // pred_check_branch
      %21 = sbr.rel (0) target = $region5
    $region4: #{tpu_custom_call.1} parent=1 // pred_region
      _
    $region5: #{tpu_custom_call.1} parent=1 // pred_fallthru
      _
    // Predicated region
    $region6: #{tpu_custom_call.1} parent=1 // pred_check
      _
    $region7: #{tpu_custom_call.1} parent=1 // pred_check_branch
      %23 = sbr.rel (0) target = $region9
    $region8: #{tpu_custom_call.1} parent=1 // pred_region
      _
    $region9: #{tpu_custom_call.1} parent=1 // pred_fallthru
      _
    // Predicated region
    $region10: #{tpu_custom_call.1} parent=1 // pred_check
      _
    $region11: #{tpu_custom_call.1} parent=1 // pred_check_branch
      %25 = sbr.rel (0) target = $region13
    $region12: #{tpu_custom_call.1} parent=1 // pred_region
      _
    $region13: #{tpu_custom_call.1} parent=1 // pred_fallthru
      _
    // Predicated region
    $region14: #{tpu_custom_call.1} parent=1 // pred_check
      _
    $region15: #{tpu_custom_call.1} parent=1 // pred_check_branch
      %27 = sbr.rel (0) target = $region17
    $region16: #{tpu_custom_call.1} parent=1 // pred_region
      _
    $region17: #{tpu_custom_call.1} parent=1 // pred_fallthru
      _
    // Predicated region
    $region18: #{tpu_custom_call.1} parent=1 // pred_check
      _
    $region19: #{tpu_custom_call.1} parent=1 // pred_check_branch
      %29 = sbr.rel (0) target = $region21
    $region20: #{tpu_custom_call.1} parent=1 // pred_region
      _
    $region21: #{tpu_custom_call.1} parent=1 // pred_fallthru
      _
    // Predicated region
    $region22: #{tpu_custom_call.1} parent=1 // pred_check
      _
    $region23: #{tpu_custom_call.1} parent=1 // pred_check_branch
      %31 = sbr.rel (0) target = $region25
    $region24: #{tpu_custom_call.1} parent=1 // pred_region
      _
    $region25: #{tpu_custom_call.1} parent=1 // pred_fallthru
      _
    // Predicated region
    $region26: #{tpu_custom_call.1} parent=1 // pred_check
      _
    $region27: #{tpu_custom_call.1} parent=1 // pred_check_branch
      %33 = sbr.rel (0) target = $region29
    $region28: #{tpu_custom_call.1} parent=1 // pred_region
      _
    $region29: #{tpu_custom_call.1} parent=1 // pred_fallthru
      _
    // Predicated region
    $region30: #{tpu_custom_call.1} parent=1 // pred_check
      _
    $region31: #{tpu_custom_call.1} parent=1 // pred_check_branch
      %35 = sbr.rel (0) target = $region33
    $region32: #{tpu_custom_call.1} parent=1 // pred_region
      _
    $region33: #{tpu_custom_call.1} parent=1 // pred_fallthru
      _
    // Predicated region
    $region34: #{tpu_custom_call.1} parent=1 // pred_check
      _
    $region35: #{tpu_custom_call.1} parent=1 // pred_check_branch
      %37 = sbr.rel (0) target = $region37
    $region36: #{tpu_custom_call.1} parent=1 // pred_region
      _
    $region37: #{tpu_custom_call.1} parent=1 // pred_fallthru
      _
    // Predicated region
    $region38: #{tpu_custom_call.1} parent=1 // pred_check
      _
    $region39: #{tpu_custom_call.1} parent=1 // pred_check_branch
      %39 = sbr.rel (0) target = $region41
    $region40: #{tpu_custom_call.1} parent=1 // pred_region
      _
    $region41: #{tpu_custom_call.1} parent=1 // pred_fallthru
      _
    // Predicated region
    $region42: #{tpu_custom_call.1} parent=1 // pred_check
      _
    $region43: #{tpu_custom_call.1} parent=1 // pred_check_branch
      %41 = sbr.rel (0) target = $region45
    $region44: #{tpu_custom_call.1} parent=1 // pred_region
      _
    $region45: #{tpu_custom_call.1} parent=1 // pred_fallthru
      _
    // Predicated region
    $region46: #{tpu_custom_call.1} parent=1 // pred_check
      _
    $region47: #{tpu_custom_call.1} parent=1 // pred_check_branch
      %43 = sbr.rel (0) target = $region49
    $region48: #{tpu_custom_call.1} parent=1 // pred_region
      _
    $region49: #{tpu_custom_call.1} parent=1 // pred_fallthru
      _
    // Predicated region
    $region50: #{tpu_custom_call.1} parent=1 // pred_check
      _
    $region51: #{tpu_custom_call.1} parent=1 // pred_check_branch
      %45 = sbr.rel (0) target = $region53
    $region52: #{tpu_custom_call.1} parent=1 // pred_region
      _
    $region53: #{tpu_custom_call.1} parent=1 // pred_fallthru
      _
    // Predicated region
    $region54: #{tpu_custom_call.1} parent=1 // pred_check
      _
    $region55: #{tpu_custom_call.1} parent=1 // pred_check_branch
      %47 = sbr.rel (0) target = $region57
    $region56: #{tpu_custom_call.1} parent=1 // pred_region
      _
    $region57: #{tpu_custom_call.1} parent=1 // pred_fallthru
      _
    %v48 = vld [vmem:[%s0] sm:$0xff]
    %v49 = vld [vmem:[%s0 + $0x8] sm:$0xff]
    %v50 = vld [vmem:[%s1] sm:$0xff]
    %v51 = vld [vmem:[%s1 + $0x8] sm:$0xff]
    %v52 = vld [vmem:[%s2] sm:$0x1]
    %v53 = vld [vmem:[%s3] sm:$0x1]
    %vm54 = vcmask 261120
    %v55 = vsel %vm54, %v48, 0.0
    %56 = vadd.xlane.f32.xlu0 %v55
    %v57 = vpop.xlane.xlu0 %56
    %v58 = vsel %vm54, %v49, 0.0
    %59 = vadd.xlane.f32.xlu0 %v58
    %v60 = vpop.xlane.xlu0 %59
    %v61 = vrcp.pop 32.0
    %v62 = vmul.f32 %v57, %v61
    %v63 = vmul.f32 %v60, %v61
    %v64 = vsub.f32 %v48, %v62
    %v65 = vsub.f32 %v49, %v63
    %v66 = vmul.f32 %v64, %v64
    %v67 = vmul.f32 %v65, %v65
    %v68 = vsel %vm54, %v66, 0.0
    %69 = vadd.xlane.f32.xlu0 %v68
    %v70 = vpop.xlane.xlu0 %69
    %v71 = vsel %vm54, %v67, 0.0
    %72 = vadd.xlane.f32.xlu0 %v71
    %v73 = vpop.xlane.xlu0 %72
    %v74 = vmul.f32 %v70, %v61
    %v75 = vmul.f32 %v73, %v61
    %v76 = vadd.f32 %v74, 1e-05
    %v77 = vadd.f32 %v75, 1e-05
    %v78 = vrsqrt.pop %v76
    %v79 = vrsqrt.pop %v77
    %v80 = vmul.f32 %v64, %v78
    %v81 = vmul.f32 %v65, %v79
    %v83 = vlaneseq
    %v84 = vshrl.u32 %v83, 7
    %v85 = vsub.s32 0, %v84
    %v86 = vrot.slane %v52, %v85
    %v88 = vmul.f32 %v80, %v86
    %v89 = vmul.f32 %v81, %v86
    %v91 = vlaneseq
    %v92 = vshrl.u32 %v91, 7
    %v93 = vsub.s32 0, %v92
    %v94 = vrot.slane %v53, %v93
    %v96 = vadd.f32 %v88, %v94
    %v97 = vadd.f32 %v89, %v94
    %v98 = vld [vmem:[%s4] sm:$0xff]
    %v99 = vld [vmem:[%s4 + $0x8] sm:$0xff]
    %v100 = vld [vmem:[%s4 + $0x10] sm:$0xff]
    %v101 = vld [vmem:[%s4 + $0x18] sm:$0xff]
    %v103 = vsel %vm54, %v96, 0
    %v106 = vsel %vm54, %v97, 0
    %108 = vmatprep.subr.mxu0 0.0
    %109 = vmatpush1.msra.mxu0 %v98
    %110 = vmatprep.subr.mxu0 0.0
    %111 = vmatpush1.msra.mxu0 %v99
    %112 = vmatprep.subr.mxu0 0.0
    %113 = vmatpush1.msra.mxu0 %v100
    %114 = vmatprep.subr.mxu0 0.0
    %115 = vmatpush1.msra.mxu0 %v101
    %116 = vmatprep.subr.mxu0 0.0
    %117 = vmatpush1.msra.mxu0 0.0
    %118 = vmatprep.subr.mxu0 0.0
    %119 = vmatpush1.msra.mxu0 0.0
    %120 = vmatprep.subr.mxu0 0.0
    %121 = vmatpush1.msra.mxu0 0.0
    %122 = vmatprep.subr.mxu0 0.0
    %123 = vmatpush1.msra.mxu0 0.0
    %124 = vmatprep.subr.mxu0 0.0
    %125 = vmatpush1.msra.mxu0 0.0
    %126 = vmatprep.subr.mxu0 0.0
    %127 = vmatpush1.msra.mxu0 0.0
    %128 = vmatprep.subr.mxu0 0.0
    %129 = vmatpush1.msra.mxu0 0.0
    %130 = vmatprep.subr.mxu0 0.0
    %131 = vmatpush1.msra.mxu0 0.0
    %132 = vmatprep.subr.mxu0 0.0
    %133 = vmatpush1.msra.mxu0 0.0
    %134 = vmatprep.subr.mxu0 0.0
    %135 = vmatpush1.msra.mxu0 0.0
    %136 = vmatprep.subr.mxu0 0.0
    %137 = vmatpush1.msra.mxu0 0.0
    %138 = vmatprep.subr.mxu0 0.0
    %139 = vmatpush1.msra.mxu0 0.0
    %140 = vmatprep.subr.mxu0 0.0
    %141 = vmatpush1.msra.mxu0 0.0
    %142 = vmatprep.subr.mxu0 0.0
    %143 = vmatpush1.msra.mxu0 0.0
    %144 = vmatprep.subr.mxu0 0.0
    %145 = vmatpush1.msra.mxu0 0.0
    %146 = vmatprep.subr.mxu0 0.0
    %147 = vmatpush1.msra.mxu0 0.0
    %148 = vmatprep.subr.mxu0 0.0
    %149 = vmatpush1.msra.mxu0 0.0
    %150 = vmatprep.subr.mxu0 0.0
    %151 = vmatpush1.msra.mxu0 0.0
    %152 = vmatprep.subr.mxu0 0.0
    %153 = vmatpush1.msra.mxu0 0.0
    %154 = vmatprep.subr.mxu0 0.0
    %155 = vmatpush1.msra.mxu0 0.0
    %156 = vmatprep.subr.mxu0 0.0
    %157 = vmatpush1.msra.mxu0 0.0
    %158 = vmatprep.subr.mxu0 0.0
    %159 = vmatpush1.msra.mxu0 0.0
    %160 = vmatprep.subr.mxu0 0.0
    %161 = vmatpush1.msra.mxu0 0.0
    %162 = vmatprep.subr.mxu0 0.0
    %163 = vmatpush1.msra.mxu0 0.0
    %164 = vmatprep.subr.mxu0 0.0
    %165 = vmatpush1.msra.mxu0 0.0
    %166 = vmatprep.subr.mxu0 0.0
    %167 = vmatpush1.msra.mxu0 0.0
    %168 = vmatprep.subr.mxu0 0.0
    %169 = vmatpush1.msra.mxu0 0.0
    %170 = vmatprep.subr.mxu0 0.0
    %171 = vmatpush1.msra.mxu0 0.0
    %172 = vmatprep.mubr.f32.mxu0 0.0
    %173 = vmatmul.mubr.f32.gmra.mrb[0].mxu0 %v103
    %v174 = vpop.f32.mrb[0].mxu0
    %v175 = vadd.f32 0.0, %v174
    %v176 = vpop.f32.mrb[0].mxu0
    %177 = vmatprep.mubr.f32.mxu0 0.0
    %178 = vmatmul.mubr.f32.gmra.mrb[0].mxu0 %v106
    %v179 = vpop.f32.mrb[0].mxu0
    %v180 = vadd.f32 0.0, %v179
    %v181 = vpop.f32.mrb[0].mxu0
    %182 = vdwg.mxu0
    %s183 = scalar_lea.vmem %s4, 32
    %v184 = vld [vmem:[%s183] sm:$0xff]
    %v185 = vld [vmem:[%s183 + $0x8] sm:$0xff]
    %v186 = vld [vmem:[%s183 + $0x10] sm:$0xff]
    %v187 = vld [vmem:[%s183 + $0x18] sm:$0xff]
    %188 = vmatprep.subr.mxu0 0.0
    %189 = vmatpush1.msra.mxu0 %v184
    %190 = vmatprep.subr.mxu0 0.0
    %191 = vmatpush1.msra.mxu0 %v185
    %192 = vmatprep.subr.mxu0 0.0
    %193 = vmatpush1.msra.mxu0 %v186
    %194 = vmatprep.subr.mxu0 0.0
    %195 = vmatpush1.msra.mxu0 %v187
    %196 = vmatprep.subr.mxu0 0.0
    %197 = vmatpush1.msra.mxu0 0.0
    %198 = vmatprep.subr.mxu0 0.0
    %199 = vmatpush1.msra.mxu0 0.0
    %200 = vmatprep.subr.mxu0 0.0
    %201 = vmatpush1.msra.mxu0 0.0
    %202 = vmatprep.subr.mxu0 0.0
    %203 = vmatpush1.msra.mxu0 0.0
    %204 = vmatprep.subr.mxu0 0.0
    %205 = vmatpush1.msra.mxu0 0.0
    %206 = vmatprep.subr.mxu0 0.0
    %207 = vmatpush1.msra.mxu0 0.0
    %208 = vmatprep.subr.mxu0 0.0
    %209 = vmatpush1.msra.mxu0 0.0
    %210 = vmatprep.subr.mxu0 0.0
    %211 = vmatpush1.msra.mxu0 0.0
    %212 = vmatprep.subr.mxu0 0.0
    %213 = vmatpush1.msra.mxu0 0.0
    %214 = vmatprep.subr.mxu0 0.0
    %215 = vmatpush1.msra.mxu0 0.0
    %216 = vmatprep.subr.mxu0 0.0
    %217 = vmatpush1.msra.mxu0 0.0
    %218 = vmatprep.subr.mxu0 0.0
    %219 = vmatpush1.msra.mxu0 0.0
    %220 = vmatprep.subr.mxu0 0.0
    %221 = vmatpush1.msra.mxu0 0.0
    %222 = vmatprep.subr.mxu0 0.0
    %223 = vmatpush1.msra.mxu0 0.0
    %224 = vmatprep.subr.mxu0 0.0
    %225 = vmatpush1.msra.mxu0 0.0
    %226 = vmatprep.subr.mxu0 0.0
    %227 = vmatpush1.msra.mxu0 0.0
    %228 = vmatprep.subr.mxu0 0.0
    %229 = vmatpush1.msra.mxu0 0.0
    %230 = vmatprep.subr.mxu0 0.0
    %231 = vmatpush1.msra.mxu0 0.0
    %232 = vmatprep.subr.mxu0 0.0
    %233 = vmatpush1.msra.mxu0 0.0
    %234 = vmatprep.subr.mxu0 0.0
    %235 = vmatpush1.msra.mxu0 0.0
    %236 = vmatprep.subr.mxu0 0.0
    %237 = vmatpush1.msra.mxu0 0.0
    %238 = vmatprep.subr.mxu0 0.0
    %239 = vmatpush1.msra.mxu0 0.0
    %240 = vmatprep.subr.mxu0 0.0
    %241 = vmatpush1.msra.mxu0 0.0
    %242 = vmatprep.subr.mxu0 0.0
    %243 = vmatpush1.msra.mxu0 0.0
    %244 = vmatprep.subr.mxu0 0.0
    %245 = vmatpush1.msra.mxu0 0.0
    %246 = vmatprep.subr.mxu0 0.0
    %247 = vmatpush1.msra.mxu0 0.0
    %248 = vmatprep.subr.mxu0 0.0
    %249 = vmatpush1.msra.mxu0 0.0
    %250 = vmatprep.subr.mxu0 0.0
    %251 = vmatpush1.msra.mxu0 0.0
    %252 = vmatprep.mubr.f32.mxu0 0.0
    %253 = vmatmul.mubr.f32.gmra.mrb[0].mxu0 %v103
    %v254 = vpop.f32.mrb[0].mxu0
    %v255 = vadd.f32 0.0, %v254
    %v256 = vpop.f32.mrb[0].mxu0
    %257 = vmatprep.mubr.f32.mxu0 0.0
    %258 = vmatmul.mubr.f32.gmra.mrb[0].mxu0 %v106
    %v259 = vpop.f32.mrb[0].mxu0
    %v260 = vadd.f32 0.0, %v259
    %v261 = vpop.f32.mrb[0].mxu0
    %262 = vdwg.mxu0
    %s263 = scalar_lea.vmem %s4, 64
    %v264 = vld [vmem:[%s263] sm:$0xff]
    %v265 = vld [vmem:[%s263 + $0x8] sm:$0xff]
    %v266 = vld [vmem:[%s263 + $0x10] sm:$0xff]
    %v267 = vld [vmem:[%s263 + $0x18] sm:$0xff]
    %268 = vmatprep.subr.mxu0 0.0
    %269 = vmatpush1.msra.mxu0 %v264
    %270 = vmatprep.subr.mxu0 0.0
    %271 = vmatpush1.msra.mxu0 %v265
    %272 = vmatprep.subr.mxu0 0.0
    %273 = vmatpush1.msra.mxu0 %v266
    %274 = vmatprep.subr.mxu0 0.0
    %275 = vmatpush1.msra.mxu0 %v267
    %276 = vmatprep.subr.mxu0 0.0
    %277 = vmatpush1.msra.mxu0 0.0
    %278 = vmatprep.subr.mxu0 0.0
    %279 = vmatpush1.msra.mxu0 0.0
    %280 = vmatprep.subr.mxu0 0.0
    %281 = vmatpush1.msra.mxu0 0.0
    %282 = vmatprep.subr.mxu0 0.0
    %283 = vmatpush1.msra.mxu0 0.0
    %284 = vmatprep.subr.mxu0 0.0
    %285 = vmatpush1.msra.mxu0 0.0
    %286 = vmatprep.subr.mxu0 0.0
    %287 = vmatpush1.msra.mxu0 0.0
    %288 = vmatprep.subr.mxu0 0.0
    %289 = vmatpush1.msra.mxu0 0.0
    %290 = vmatprep.subr.mxu0 0.0
    %291 = vmatpush1.msra.mxu0 0.0
    %292 = vmatprep.subr.mxu0 0.0
    %293 = vmatpush1.msra.mxu0 0.0
    %294 = vmatprep.subr.mxu0 0.0
    %295 = vmatpush1.msra.mxu0 0.0
    %296 = vmatprep.subr.mxu0 0.0
    %297 = vmatpush1.msra.mxu0 0.0
    %298 = vmatprep.subr.mxu0 0.0
    %299 = vmatpush1.msra.mxu0 0.0
    %300 = vmatprep.subr.mxu0 0.0
    %301 = vmatpush1.msra.mxu0 0.0
    %302 = vmatprep.subr.mxu0 0.0
    %303 = vmatpush1.msra.mxu0 0.0
    %304 = vmatprep.subr.mxu0 0.0
    %305 = vmatpush1.msra.mxu0 0.0
    %306 = vmatprep.subr.mxu0 0.0
    %307 = vmatpush1.msra.mxu0 0.0
    %308 = vmatprep.subr.mxu0 0.0
    %309 = vmatpush1.msra.mxu0 0.0
    %310 = vmatprep.subr.mxu0 0.0
    %311 = vmatpush1.msra.mxu0 0.0
    %312 = vmatprep.subr.mxu0 0.0
    %313 = vmatpush1.msra.mxu0 0.0
    %314 = vmatprep.subr.mxu0 0.0
    %315 = vmatpush1.msra.mxu0 0.0
    %316 = vmatprep.subr.mxu0 0.0
    %317 = vmatpush1.msra.mxu0 0.0
    %318 = vmatprep.subr.mxu0 0.0
    %319 = vmatpush1.msra.mxu0 0.0
    %320 = vmatprep.subr.mxu0 0.0
    %321 = vmatpush1.msra.mxu0 0.0
    %322 = vmatprep.subr.mxu0 0.0
    %323 = vmatpush1.msra.mxu0 0.0
    %324 = vmatprep.subr.mxu0 0.0
    %325 = vmatpush1.msra.mxu0 0.0
    %326 = vmatprep.subr.mxu0 0.0
    %327 = vmatpush1.msra.mxu0 0.0
    %328 = vmatprep.subr.mxu0 0.0
    %329 = vmatpush1.msra.mxu0 0.0
    %330 = vmatprep.subr.mxu0 0.0
    %331 = vmatpush1.msra.mxu0 0.0
    %332 = vmatprep.mubr.f32.mxu0 0.0
    %333 = vmatmul.mubr.f32.gmra.mrb[0].mxu0 %v103
    %v334 = vpop.f32.mrb[0].mxu0
    %v335 = vadd.f32 0.0, %v334
    %v336 = vpop.f32.mrb[0].mxu0
    %337 = vmatprep.mubr.f32.mxu0 0.0
    %338 = vmatmul.mubr.f32.gmra.mrb[0].mxu0 %v106
    %v339 = vpop.f32.mrb[0].mxu0
    %v340 = vadd.f32 0.0, %v339
    %v341 = vpop.f32.mrb[0].mxu0
    %342 = vdwg.mxu0
    %s343 = scalar_lea.vmem %s4, 96
    %v344 = vld [vmem:[%s343] sm:$0xff]
    %v345 = vld [vmem:[%s343 + $0x8] sm:$0xff]
    %v346 = vld [vmem:[%s343 + $0x10] sm:$0xff]
    %v347 = vld [vmem:[%s343 + $0x18] sm:$0xff]
    %348 = vmatprep.subr.mxu0 0.0
    %349 = vmatpush1.msra.mxu0 %v344
    %350 = vmatprep.subr.mxu0 0.0
    %351 = vmatpush1.msra.mxu0 %v345
    %352 = vmatprep.subr.mxu0 0.0
    %353 = vmatpush1.msra.mxu0 %v346
    %354 = vmatprep.subr.mxu0 0.0
    %355 = vmatpush1.msra.mxu0 %v347
    %356 = vmatprep.subr.mxu0 0.0
    %357 = vmatpush1.msra.mxu0 0.0
    %358 = vmatprep.subr.mxu0 0.0
    %359 = vmatpush1.msra.mxu0 0.0
    %360 = vmatprep.subr.mxu0 0.0
    %361 = vmatpush1.msra.mxu0 0.0
    %362 = vmatprep.subr.mxu0 0.0
    %363 = vmatpush1.msra.mxu0 0.0
    %364 = vmatprep.subr.mxu0 0.0
    %365 = vmatpush1.msra.mxu0 0.0
    %366 = vmatprep.subr.mxu0 0.0
    %367 = vmatpush1.msra.mxu0 0.0
    %368 = vmatprep.subr.mxu0 0.0
    %369 = vmatpush1.msra.mxu0 0.0
    %370 = vmatprep.subr.mxu0 0.0
    %371 = vmatpush1.msra.mxu0 0.0
    %372 = vmatprep.subr.mxu0 0.0
    %373 = vmatpush1.msra.mxu0 0.0
    %374 = vmatprep.subr.mxu0 0.0
    %375 = vmatpush1.msra.mxu0 0.0
    %376 = vmatprep.subr.mxu0 0.0
    %377 = vmatpush1.msra.mxu0 0.0
    %378 = vmatprep.subr.mxu0 0.0
    %379 = vmatpush1.msra.mxu0 0.0
    %380 = vmatprep.subr.mxu0 0.0
    %381 = vmatpush1.msra.mxu0 0.0
    %382 = vmatprep.subr.mxu0 0.0
    %383 = vmatpush1.msra.mxu0 0.0
    %384 = vmatprep.subr.mxu0 0.0
    %385 = vmatpush1.msra.mxu0 0.0
    %386 = vmatprep.subr.mxu0 0.0
    %387 = vmatpush1.msra.mxu0 0.0
    %388 = vmatprep.subr.mxu0 0.0
    %389 = vmatpush1.msra.mxu0 0.0
    %390 = vmatprep.subr.mxu0 0.0
    %391 = vmatpush1.msra.mxu0 0.0
    %392 = vmatprep.subr.mxu0 0.0
    %393 = vmatpush1.msra.mxu0 0.0
    %394 = vmatprep.subr.mxu0 0.0
    %395 = vmatpush1.msra.mxu0 0.0
    %396 = vmatprep.subr.mxu0 0.0
    %397 = vmatpush1.msra.mxu0 0.0
    %398 = vmatprep.subr.mxu0 0.0
    %399 = vmatpush1.msra.mxu0 0.0
    %400 = vmatprep.subr.mxu0 0.0
    %401 = vmatpush1.msra.mxu0 0.0
    %402 = vmatprep.subr.mxu0 0.0
    %403 = vmatpush1.msra.mxu0 0.0
    %404 = vmatprep.subr.mxu0 0.0
    %405 = vmatpush1.msra.mxu0 0.0
    %406 = vmatprep.subr.mxu0 0.0
    %407 = vmatpush1.msra.mxu0 0.0
    %408 = vmatprep.subr.mxu0 0.0
    %409 = vmatpush1.msra.mxu0 0.0
    %410 = vmatprep.subr.mxu0 0.0
    %411 = vmatpush1.msra.mxu0 0.0
    %412 = vmatprep.mubr.f32.mxu0 0.0
    %413 = vmatmul.mubr.f32.gmra.mrb[0].mxu0 %v103
    %v414 = vpop.f32.mrb[0].mxu0
    %v415 = vadd.f32 0.0, %v414
    %v416 = vpop.f32.mrb[0].mxu0
    %417 = vmatprep.mubr.f32.mxu0 0.0
    %418 = vmatmul.mubr.f32.gmra.mrb[0].mxu0 %v106
    %v419 = vpop.f32.mrb[0].mxu0
    %v420 = vadd.f32 0.0, %v419
    %v421 = vpop.f32.mrb[0].mxu0
    %422 = vdwg.mxu0
    %v423 = vld [vmem:[%s5] sm:$0xff]
    %v424 = vld [vmem:[%s5 + $0x8] sm:$0xff]
    %v425 = vld [vmem:[%s5 + $0x10] sm:$0xff]
    %v426 = vld [vmem:[%s5 + $0x18] sm:$0xff]
    %427 = vmatprep.subr.mxu0 0.0
    %428 = vmatpush1.msra.mxu0 %v423
    %429 = vmatprep.subr.mxu0 0.0
    %430 = vmatpush1.msra.mxu0 %v424
    %431 = vmatprep.subr.mxu0 0.0
    %432 = vmatpush1.msra.mxu0 %v425
    %433 = vmatprep.subr.mxu0 0.0
    %434 = vmatpush1.msra.mxu0 %v426
    %435 = vmatprep.subr.mxu0 0.0
    %436 = vmatpush1.msra.mxu0 0.0
    %437 = vmatprep.subr.mxu0 0.0
    %438 = vmatpush1.msra.mxu0 0.0
    %439 = vmatprep.subr.mxu0 0.0
    %440 = vmatpush1.msra.mxu0 0.0
    %441 = vmatprep.subr.mxu0 0.0
    %442 = vmatpush1.msra.mxu0 0.0
    %443 = vmatprep.subr.mxu0 0.0
    %444 = vmatpush1.msra.mxu0 0.0
    %445 = vmatprep.subr.mxu0 0.0
    %446 = vmatpush1.msra.mxu0 0.0
    %447 = vmatprep.subr.mxu0 0.0
    %448 = vmatpush1.msra.mxu0 0.0
    %449 = vmatprep.subr.mxu0 0.0
    %450 = vmatpush1.msra.mxu0 0.0
    %451 = vmatprep.subr.mxu0 0.0
    %452 = vmatpush1.msra.mxu0 0.0
    %453 = vmatprep.subr.mxu0 0.0
    %454 = vmatpush1.msra.mxu0 0.0
    %455 = vmatprep.subr.mxu0 0.0
    %456 = vmatpush1.msra.mxu0 0.0
    %457 = vmatprep.subr.mxu0 0.0
    %458 = vmatpush1.msra.mxu0 0.0
    %459 = vmatprep.subr.mxu0 0.0
    %460 = vmatpush1.msra.mxu0 0.0
    %461 = vmatprep.subr.mxu0 0.0
    %462 = vmatpush1.msra.mxu0 0.0
    %463 = vmatprep.subr.mxu0 0.0
    %464 = vmatpush1.msra.mxu0 0.0
    %465 = vmatprep.subr.mxu0 0.0
    %466 = vmatpush1.msra.mxu0 0.0
    %467 = vmatprep.subr.mxu0 0.0
    %468 = vmatpush1.msra.mxu0 0.0
    %469 = vmatprep.subr.mxu0 0.0
    %470 = vmatpush1.msra.mxu0 0.0
    %471 = vmatprep.subr.mxu0 0.0
    %472 = vmatpush1.msra.mxu0 0.0
    %473 = vmatprep.subr.mxu0 0.0
    %474 = vmatpush1.msra.mxu0 0.0
    %475 = vmatprep.subr.mxu0 0.0
    %476 = vmatpush1.msra.mxu0 0.0
    %477 = vmatprep.subr.mxu0 0.0
    %478 = vmatpush1.msra.mxu0 0.0
    %479 = vmatprep.subr.mxu0 0.0
    %480 = vmatpush1.msra.mxu0 0.0
    %481 = vmatprep.subr.mxu0 0.0
    %482 = vmatpush1.msra.mxu0 0.0
    %483 = vmatprep.subr.mxu0 0.0
    %484 = vmatpush1.msra.mxu0 0.0
    %485 = vmatprep.subr.mxu0 0.0
    %486 = vmatpush1.msra.mxu0 0.0
    %487 = vmatprep.subr.mxu0 0.0
    %488 = vmatpush1.msra.mxu0 0.0
    %489 = vmatprep.subr.mxu0 0.0
    %490 = vmatpush1.msra.mxu0 0.0
    %491 = vmatprep.mubr.f32.mxu0 0.0
    %492 = vmatmul.mubr.f32.gmra.mrb[0].mxu0 %v103
    %v493 = vpop.f32.mrb[0].mxu0
    %v494 = vadd.f32 0.0, %v493
    %v495 = vpop.f32.mrb[0].mxu0
    %496 = vmatprep.mubr.f32.mxu0 0.0
    %497 = vmatmul.mubr.f32.gmra.mrb[0].mxu0 %v106
    %v498 = vpop.f32.mrb[0].mxu0
    %v499 = vadd.f32 0.0, %v498
    %v500 = vpop.f32.mrb[0].mxu0
    %501 = vdwg.mxu0
    %s502 = scalar_lea.vmem %s5, 32
    %v503 = vld [vmem:[%s502] sm:$0xff]
    %v504 = vld [vmem:[%s502 + $0x8] sm:$0xff]
    %v505 = vld [vmem:[%s502 + $0x10] sm:$0xff]
    %v506 = vld [vmem:[%s502 + $0x18] sm:$0xff]
    %507 = vmatprep.subr.mxu0 0.0
    %508 = vmatpush1.msra.mxu0 %v503
    %509 = vmatprep.subr.mxu0 0.0
    %510 = vmatpush1.msra.mxu0 %v504
    %511 = vmatprep.subr.mxu0 0.0
    %512 = vmatpush1.msra.mxu0 %v505
    %513 = vmatprep.subr.mxu0 0.0
    %514 = vmatpush1.msra.mxu0 %v506
    %515 = vmatprep.subr.mxu0 0.0
    %516 = vmatpush1.msra.mxu0 0.0
    %517 = vmatprep.subr.mxu0 0.0
    %518 = vmatpush1.msra.mxu0 0.0
    %519 = vmatprep.subr.mxu0 0.0
    %520 = vmatpush1.msra.mxu0 0.0
    %521 = vmatprep.subr.mxu0 0.0
    %522 = vmatpush1.msra.mxu0 0.0
    %523 = vmatprep.subr.mxu0 0.0
    %524 = vmatpush1.msra.mxu0 0.0
    %525 = vmatprep.subr.mxu0 0.0
    %526 = vmatpush1.msra.mxu0 0.0
    %527 = vmatprep.subr.mxu0 0.0
    %528 = vmatpush1.msra.mxu0 0.0
    %529 = vmatprep.subr.mxu0 0.0
    %530 = vmatpush1.msra.mxu0 0.0
    %531 = vmatprep.subr.mxu0 0.0
    %532 = vmatpush1.msra.mxu0 0.0
    %533 = vmatprep.subr.mxu0 0.0
    %534 = vmatpush1.msra.mxu0 0.0
    %535 = vmatprep.subr.mxu0 0.0
    %536 = vmatpush1.msra.mxu0 0.0
    %537 = vmatprep.subr.mxu0 0.0
    %538 = vmatpush1.msra.mxu0 0.0
    %539 = vmatprep.subr.mxu0 0.0
    %540 = vmatpush1.msra.mxu0 0.0
    %541 = vmatprep.subr.mxu0 0.0
    %542 = vmatpush1.msra.mxu0 0.0
    %543 = vmatprep.subr.mxu0 0.0
    %544 = vmatpush1.msra.mxu0 0.0
    %545 = vmatprep.subr.mxu0 0.0
    %546 = vmatpush1.msra.mxu0 0.0
    %547 = vmatprep.subr.mxu0 0.0
    %548 = vmatpush1.msra.mxu0 0.0
    %549 = vmatprep.subr.mxu0 0.0
    %550 = vmatpush1.msra.mxu0 0.0
    %551 = vmatprep.subr.mxu0 0.0
    %552 = vmatpush1.msra.mxu0 0.0
    %553 = vmatprep.subr.mxu0 0.0
    %554 = vmatpush1.msra.mxu0 0.0
    %555 = vmatprep.subr.mxu0 0.0
    %556 = vmatpush1.msra.mxu0 0.0
    %557 = vmatprep.subr.mxu0 0.0
    %558 = vmatpush1.msra.mxu0 0.0
    %559 = vmatprep.subr.mxu0 0.0
    %560 = vmatpush1.msra.mxu0 0.0
    %561 = vmatprep.subr.mxu0 0.0
    %562 = vmatpush1.msra.mxu0 0.0
    %563 = vmatprep.subr.mxu0 0.0
    %564 = vmatpush1.msra.mxu0 0.0
    %565 = vmatprep.subr.mxu0 0.0
    %566 = vmatpush1.msra.mxu0 0.0
    %567 = vmatprep.subr.mxu0 0.0
    %568 = vmatpush1.msra.mxu0 0.0
    %569 = vmatprep.subr.mxu0 0.0
    %570 = vmatpush1.msra.mxu0 0.0
    %571 = vmatprep.mubr.f32.mxu0 0.0
    %572 = vmatmul.mubr.f32.gmra.mrb[0].mxu0 %v103
    %v573 = vpop.f32.mrb[0].mxu0
    %v574 = vadd.f32 0.0, %v573
    %v575 = vpop.f32.mrb[0].mxu0
    %576 = vmatprep.mubr.f32.mxu0 0.0
    %577 = vmatmul.mubr.f32.gmra.mrb[0].mxu0 %v106
    %v578 = vpop.f32.mrb[0].mxu0
    %v579 = vadd.f32 0.0, %v578
    %v580 = vpop.f32.mrb[0].mxu0
    %581 = vdwg.mxu0
    %s582 = scalar_lea.vmem %s5, 64
    %v583 = vld [vmem:[%s582] sm:$0xff]
    %v584 = vld [vmem:[%s582 + $0x8] sm:$0xff]
    %v585 = vld [vmem:[%s582 + $0x10] sm:$0xff]
    %v586 = vld [vmem:[%s582 + $0x18] sm:$0xff]
    %587 = vmatprep.subr.mxu0 0.0
    %588 = vmatpush1.msra.mxu0 %v583
    %589 = vmatprep.subr.mxu0 0.0
    %590 = vmatpush1.msra.mxu0 %v584
    %591 = vmatprep.subr.mxu0 0.0
    %592 = vmatpush1.msra.mxu0 %v585
    %593 = vmatprep.subr.mxu0 0.0
    %594 = vmatpush1.msra.mxu0 %v586
    %595 = vmatprep.subr.mxu0 0.0
    %596 = vmatpush1.msra.mxu0 0.0
    %597 = vmatprep.subr.mxu0 0.0
    %598 = vmatpush1.msra.mxu0 0.0
    %599 = vmatprep.subr.mxu0 0.0
    %600 = vmatpush1.msra.mxu0 0.0
    %601 = vmatprep.subr.mxu0 0.0
    %602 = vmatpush1.msra.mxu0 0.0
    %603 = vmatprep.subr.mxu0 0.0
    %604 = vmatpush1.msra.mxu0 0.0
    %605 = vmatprep.subr.mxu0 0.0
    %606 = vmatpush1.msra.mxu0 0.0
    %607 = vmatprep.subr.mxu0 0.0
    %608 = vmatpush1.msra.mxu0 0.0
    %609 = vmatprep.subr.mxu0 0.0
    %610 = vmatpush1.msra.mxu0 0.0
    %611 = vmatprep.subr.mxu0 0.0
    %612 = vmatpush1.msra.mxu0 0.0
    %613 = vmatprep.subr.mxu0 0.0
    %614 = vmatpush1.msra.mxu0 0.0
    %615 = vmatprep.subr.mxu0 0.0
    %616 = vmatpush1.msra.mxu0 0.0
    %617 = vmatprep.subr.mxu0 0.0
    %618 = vmatpush1.msra.mxu0 0.0
    %619 = vmatprep.subr.mxu0 0.0
    %620 = vmatpush1.msra.mxu0 0.0
    %621 = vmatprep.subr.mxu0 0.0
    %622 = vmatpush1.msra.mxu0 0.0
    %623 = vmatprep.subr.mxu0 0.0
    %624 = vmatpush1.msra.mxu0 0.0
    %625 = vmatprep.subr.mxu0 0.0
    %626 = vmatpush1.msra.mxu0 0.0
    %627 = vmatprep.subr.mxu0 0.0
    %628 = vmatpush1.msra.mxu0 0.0
    %629 = vmatprep.subr.mxu0 0.0
    %630 = vmatpush1.msra.mxu0 0.0
    %631 = vmatprep.subr.mxu0 0.0
    %632 = vmatpush1.msra.mxu0 0.0
    %633 = vmatprep.subr.mxu0 0.0
    %634 = vmatpush1.msra.mxu0 0.0
    %635 = vmatprep.subr.mxu0 0.0
    %636 = vmatpush1.msra.mxu0 0.0
    %637 = vmatprep.subr.mxu0 0.0
    %638 = vmatpush1.msra.mxu0 0.0
    %639 = vmatprep.subr.mxu0 0.0
    %640 = vmatpush1.msra.mxu0 0.0
    %641 = vmatprep.subr.mxu0 0.0
    %642 = vmatpush1.msra.mxu0 0.0
    %643 = vmatprep.subr.mxu0 0.0
    %644 = vmatpush1.msra.mxu0 0.0
    %645 = vmatprep.subr.mxu0 0.0
    %646 = vmatpush1.msra.mxu0 0.0
    %647 = vmatprep.subr.mxu0 0.0
    %648 = vmatpush1.msra.mxu0 0.0
    %649 = vmatprep.subr.mxu0 0.0
    %650 = vmatpush1.msra.mxu0 0.0
    %651 = vmatprep.mubr.f32.mxu0 0.0
    %652 = vmatmul.mubr.f32.gmra.mrb[0].mxu0 %v103
    %v653 = vpop.f32.mrb[0].mxu0
    %v654 = vadd.f32 0.0, %v653
    %v655 = vpop.f32.mrb[0].mxu0
    %656 = vmatprep.mubr.f32.mxu0 0.0
    %657 = vmatmul.mubr.f32.gmra.mrb[0].mxu0 %v106
    %v658 = vpop.f32.mrb[0].mxu0
    %v659 = vadd.f32 0.0, %v658
    %v660 = vpop.f32.mrb[0].mxu0
    %661 = vdwg.mxu0
    %s662 = scalar_lea.vmem %s5, 96
    %v663 = vld [vmem:[%s662] sm:$0xff]
    %v664 = vld [vmem:[%s662 + $0x8] sm:$0xff]
    %v665 = vld [vmem:[%s662 + $0x10] sm:$0xff]
    %v666 = vld [vmem:[%s662 + $0x18] sm:$0xff]
    %667 = vmatprep.subr.mxu0 0.0
    %668 = vmatpush1.msra.mxu0 %v663
    %669 = vmatprep.subr.mxu0 0.0
    %670 = vmatpush1.msra.mxu0 %v664
    %671 = vmatprep.subr.mxu0 0.0
    %672 = vmatpush1.msra.mxu0 %v665
    %673 = vmatprep.subr.mxu0 0.0
    %674 = vmatpush1.msra.mxu0 %v666
    %675 = vmatprep.subr.mxu0 0.0
    %676 = vmatpush1.msra.mxu0 0.0
    %677 = vmatprep.subr.mxu0 0.0
    %678 = vmatpush1.msra.mxu0 0.0
    %679 = vmatprep.subr.mxu0 0.0
    %680 = vmatpush1.msra.mxu0 0.0
    %681 = vmatprep.subr.mxu0 0.0
    %682 = vmatpush1.msra.mxu0 0.0
    %683 = vmatprep.subr.mxu0 0.0
    %684 = vmatpush1.msra.mxu0 0.0
    %685 = vmatprep.subr.mxu0 0.0
    %686 = vmatpush1.msra.mxu0 0.0
    %687 = vmatprep.subr.mxu0 0.0
    %688 = vmatpush1.msra.mxu0 0.0
    %689 = vmatprep.subr.mxu0 0.0
    %690 = vmatpush1.msra.mxu0 0.0
    %691 = vmatprep.subr.mxu0 0.0
    %692 = vmatpush1.msra.mxu0 0.0
    %693 = vmatprep.subr.mxu0 0.0
    %694 = vmatpush1.msra.mxu0 0.0
    %695 = vmatprep.subr.mxu0 0.0
    %696 = vmatpush1.msra.mxu0 0.0
    %697 = vmatprep.subr.mxu0 0.0
    %698 = vmatpush1.msra.mxu0 0.0
    %699 = vmatprep.subr.mxu0 0.0
    %700 = vmatpush1.msra.mxu0 0.0
    %701 = vmatprep.subr.mxu0 0.0
    %702 = vmatpush1.msra.mxu0 0.0
    %703 = vmatprep.subr.mxu0 0.0
    %704 = vmatpush1.msra.mxu0 0.0
    %705 = vmatprep.subr.mxu0 0.0
    %706 = vmatpush1.msra.mxu0 0.0
    %707 = vmatprep.subr.mxu0 0.0
    %708 = vmatpush1.msra.mxu0 0.0
    %709 = vmatprep.subr.mxu0 0.0
    %710 = vmatpush1.msra.mxu0 0.0
    %711 = vmatprep.subr.mxu0 0.0
    %712 = vmatpush1.msra.mxu0 0.0
    %713 = vmatprep.subr.mxu0 0.0
    %714 = vmatpush1.msra.mxu0 0.0
    %715 = vmatprep.subr.mxu0 0.0
    %716 = vmatpush1.msra.mxu0 0.0
    %717 = vmatprep.subr.mxu0 0.0
    %718 = vmatpush1.msra.mxu0 0.0
    %719 = vmatprep.subr.mxu0 0.0
    %720 = vmatpush1.msra.mxu0 0.0
    %721 = vmatprep.subr.mxu0 0.0
    %722 = vmatpush1.msra.mxu0 0.0
    %723 = vmatprep.subr.mxu0 0.0
    %724 = vmatpush1.msra.mxu0 0.0
    %725 = vmatprep.subr.mxu0 0.0
    %726 = vmatpush1.msra.mxu0 0.0
    %727 = vmatprep.subr.mxu0 0.0
    %728 = vmatpush1.msra.mxu0 0.0
    %729 = vmatprep.subr.mxu0 0.0
    %730 = vmatpush1.msra.mxu0 0.0
    %731 = vmatprep.mubr.f32.mxu0 0.0
    %732 = vmatmul.mubr.f32.gmra.mrb[0].mxu0 %v103
    %v733 = vpop.f32.mrb[0].mxu0
    %v734 = vadd.f32 0.0, %v733
    %v735 = vpop.f32.mrb[0].mxu0
    %736 = vmatprep.mubr.f32.mxu0 0.0
    %737 = vmatmul.mubr.f32.gmra.mrb[0].mxu0 %v106
    %v738 = vpop.f32.mrb[0].mxu0
    %v739 = vadd.f32 0.0, %v738
    %v740 = vpop.f32.mrb[0].mxu0
    %741 = vdwg.mxu0
    %v742 = vld [vmem:[%s6] sm:$0xff]
    %v743 = vld [vmem:[%s6 + $0x8] sm:$0xff]
    %v744 = vld [vmem:[%s6 + $0x10] sm:$0xff]
    %v745 = vld [vmem:[%s6 + $0x18] sm:$0xff]
    %746 = vmatprep.subr.mxu0 0.0
    %747 = vmatpush1.msra.mxu0 %v742
    %748 = vmatprep.subr.mxu0 0.0
    %749 = vmatpush1.msra.mxu0 %v743
    %750 = vmatprep.subr.mxu0 0.0
    %751 = vmatpush1.msra.mxu0 %v744
    %752 = vmatprep.subr.mxu0 0.0
    %753 = vmatpush1.msra.mxu0 %v745
    %754 = vmatprep.subr.mxu0 0.0
    %755 = vmatpush1.msra.mxu0 0.0
    %756 = vmatprep.subr.mxu0 0.0
    %757 = vmatpush1.msra.mxu0 0.0
    %758 = vmatprep.subr.mxu0 0.0
    %759 = vmatpush1.msra.mxu0 0.0
    %760 = vmatprep.subr.mxu0 0.0
    %761 = vmatpush1.msra.mxu0 0.0
    %762 = vmatprep.subr.mxu0 0.0
    %763 = vmatpush1.msra.mxu0 0.0
    %764 = vmatprep.subr.mxu0 0.0
    %765 = vmatpush1.msra.mxu0 0.0
    %766 = vmatprep.subr.mxu0 0.0
    %767 = vmatpush1.msra.mxu0 0.0
    %768 = vmatprep.subr.mxu0 0.0
    %769 = vmatpush1.msra.mxu0 0.0
    %770 = vmatprep.subr.mxu0 0.0
    %771 = vmatpush1.msra.mxu0 0.0
    %772 = vmatprep.subr.mxu0 0.0
    %773 = vmatpush1.msra.mxu0 0.0
    %774 = vmatprep.subr.mxu0 0.0
    %775 = vmatpush1.msra.mxu0 0.0
    %776 = vmatprep.subr.mxu0 0.0
    %777 = vmatpush1.msra.mxu0 0.0
    %778 = vmatprep.subr.mxu0 0.0
    %779 = vmatpush1.msra.mxu0 0.0
    %780 = vmatprep.subr.mxu0 0.0
    %781 = vmatpush1.msra.mxu0 0.0
    %782 = vmatprep.subr.mxu0 0.0
    %783 = vmatpush1.msra.mxu0 0.0
    %784 = vmatprep.subr.mxu0 0.0
    %785 = vmatpush1.msra.mxu0 0.0
    %786 = vmatprep.subr.mxu0 0.0
    %787 = vmatpush1.msra.mxu0 0.0
    %788 = vmatprep.subr.mxu0 0.0
    %789 = vmatpush1.msra.mxu0 0.0
    %790 = vmatprep.subr.mxu0 0.0
    %791 = vmatpush1.msra.mxu0 0.0
    %792 = vmatprep.subr.mxu0 0.0
    %793 = vmatpush1.msra.mxu0 0.0
    %794 = vmatprep.subr.mxu0 0.0
    %795 = vmatpush1.msra.mxu0 0.0
    %796 = vmatprep.subr.mxu0 0.0
    %797 = vmatpush1.msra.mxu0 0.0
    %798 = vmatprep.subr.mxu0 0.0
    %799 = vmatpush1.msra.mxu0 0.0
    %800 = vmatprep.subr.mxu0 0.0
    %801 = vmatpush1.msra.mxu0 0.0
    %802 = vmatprep.subr.mxu0 0.0
    %803 = vmatpush1.msra.mxu0 0.0
    %804 = vmatprep.subr.mxu0 0.0
    %805 = vmatpush1.msra.mxu0 0.0
    %806 = vmatprep.subr.mxu0 0.0
    %807 = vmatpush1.msra.mxu0 0.0
    %808 = vmatprep.subr.mxu0 0.0
    %809 = vmatpush1.msra.mxu0 0.0
    %810 = vmatprep.mubr.f32.mxu0 0.0
    %811 = vmatmul.mubr.f32.gmra.mrb[0].mxu0 %v103
    %v812 = vpop.f32.mrb[0].mxu0
    %v813 = vadd.f32 0.0, %v812
    %v814 = vpop.f32.mrb[0].mxu0
    %815 = vmatprep.mubr.f32.mxu0 0.0
    %816 = vmatmul.mubr.f32.gmra.mrb[0].mxu0 %v106
    %v817 = vpop.f32.mrb[0].mxu0
    %v818 = vadd.f32 0.0, %v817
    %v819 = vpop.f32.mrb[0].mxu0
    %820 = vdwg.mxu0
    %s821 = scalar_lea.vmem %s6, 32
    %v822 = vld [vmem:[%s821] sm:$0xff]
    %v823 = vld [vmem:[%s821 + $0x8] sm:$0xff]
    %v824 = vld [vmem:[%s821 + $0x10] sm:$0xff]
    %v825 = vld [vmem:[%s821 + $0x18] sm:$0xff]
    %826 = vmatprep.subr.mxu0 0.0
    %827 = vmatpush1.msra.mxu0 %v822
    %828 = vmatprep.subr.mxu0 0.0
    %829 = vmatpush1.msra.mxu0 %v823
    %830 = vmatprep.subr.mxu0 0.0
    %831 = vmatpush1.msra.mxu0 %v824
    %832 = vmatprep.subr.mxu0 0.0
    %833 = vmatpush1.msra.mxu0 %v825
    %834 = vmatprep.subr.mxu0 0.0
    %835 = vmatpush1.msra.mxu0 0.0
    %836 = vmatprep.subr.mxu0 0.0
    %837 = vmatpush1.msra.mxu0 0.0
    %838 = vmatprep.subr.mxu0 0.0
    %839 = vmatpush1.msra.mxu0 0.0
    %840 = vmatprep.subr.mxu0 0.0
    %841 = vmatpush1.msra.mxu0 0.0
    %842 = vmatprep.subr.mxu0 0.0
    %843 = vmatpush1.msra.mxu0 0.0
    %844 = vmatprep.subr.mxu0 0.0
    %845 = vmatpush1.msra.mxu0 0.0
    %846 = vmatprep.subr.mxu0 0.0
    %847 = vmatpush1.msra.mxu0 0.0
    %848 = vmatprep.subr.mxu0 0.0
    %849 = vmatpush1.msra.mxu0 0.0
    %850 = vmatprep.subr.mxu0 0.0
    %851 = vmatpush1.msra.mxu0 0.0
    %852 = vmatprep.subr.mxu0 0.0
    %853 = vmatpush1.msra.mxu0 0.0
    %854 = vmatprep.subr.mxu0 0.0
    %855 = vmatpush1.msra.mxu0 0.0
    %856 = vmatprep.subr.mxu0 0.0
    %857 = vmatpush1.msra.mxu0 0.0
    %858 = vmatprep.subr.mxu0 0.0
    %859 = vmatpush1.msra.mxu0 0.0
    %860 = vmatprep.subr.mxu0 0.0
    %861 = vmatpush1.msra.mxu0 0.0
    %862 = vmatprep.subr.mxu0 0.0
    %863 = vmatpush1.msra.mxu0 0.0
    %864 = vmatprep.subr.mxu0 0.0
    %865 = vmatpush1.msra.mxu0 0.0
    %866 = vmatprep.subr.mxu0 0.0
    %867 = vmatpush1.msra.mxu0 0.0
    %868 = vmatprep.subr.mxu0 0.0
    %869 = vmatpush1.msra.mxu0 0.0
    %870 = vmatprep.subr.mxu0 0.0
    %871 = vmatpush1.msra.mxu0 0.0
    %872 = vmatprep.subr.mxu0 0.0
    %873 = vmatpush1.msra.mxu0 0.0
    %874 = vmatprep.subr.mxu0 0.0
    %875 = vmatpush1.msra.mxu0 0.0
    %876 = vmatprep.subr.mxu0 0.0
    %877 = vmatpush1.msra.mxu0 0.0
    %878 = vmatprep.subr.mxu0 0.0
    %879 = vmatpush1.msra.mxu0 0.0
    %880 = vmatprep.subr.mxu0 0.0
    %881 = vmatpush1.msra.mxu0 0.0
    %882 = vmatprep.subr.mxu0 0.0
    %883 = vmatpush1.msra.mxu0 0.0
    %884 = vmatprep.subr.mxu0 0.0
    %885 = vmatpush1.msra.mxu0 0.0
    %886 = vmatprep.subr.mxu0 0.0
    %887 = vmatpush1.msra.mxu0 0.0
    %888 = vmatprep.subr.mxu0 0.0
    %889 = vmatpush1.msra.mxu0 0.0
    %890 = vmatprep.mubr.f32.mxu0 0.0
    %891 = vmatmul.mubr.f32.gmra.mrb[0].mxu0 %v103
    %v892 = vpop.f32.mrb[0].mxu0
    %v893 = vadd.f32 0.0, %v892
    %v894 = vpop.f32.mrb[0].mxu0
    %895 = vmatprep.mubr.f32.mxu0 0.0
    %896 = vmatmul.mubr.f32.gmra.mrb[0].mxu0 %v106
    %v897 = vpop.f32.mrb[0].mxu0
    %v898 = vadd.f32 0.0, %v897
    %v899 = vpop.f32.mrb[0].mxu0
    %900 = vdwg.mxu0
    %s901 = scalar_lea.vmem %s6, 64
    %v902 = vld [vmem:[%s901] sm:$0xff]
    %v903 = vld [vmem:[%s901 + $0x8] sm:$0xff]
    %v904 = vld [vmem:[%s901 + $0x10] sm:$0xff]
    %v905 = vld [vmem:[%s901 + $0x18] sm:$0xff]
    %906 = vmatprep.subr.mxu0 0.0
    %907 = vmatpush1.msra.mxu0 %v902
    %908 = vmatprep.subr.mxu0 0.0
    %909 = vmatpush1.msra.mxu0 %v903
    %910 = vmatprep.subr.mxu0 0.0
    %911 = vmatpush1.msra.mxu0 %v904
    %912 = vmatprep.subr.mxu0 0.0
    %913 = vmatpush1.msra.mxu0 %v905
    %914 = vmatprep.subr.mxu0 0.0
    %915 = vmatpush1.msra.mxu0 0.0
    %916 = vmatprep.subr.mxu0 0.0
    %917 = vmatpush1.msra.mxu0 0.0
    %918 = vmatprep.subr.mxu0 0.0
    %919 = vmatpush1.msra.mxu0 0.0
    %920 = vmatprep.subr.mxu0 0.0
    %921 = vmatpush1.msra.mxu0 0.0
    %922 = vmatprep.subr.mxu0 0.0
    %923 = vmatpush1.msra.mxu0 0.0
    %924 = vmatprep.subr.mxu0 0.0
    %925 = vmatpush1.msra.mxu0 0.0
    %926 = vmatprep.subr.mxu0 0.0
    %927 = vmatpush1.msra.mxu0 0.0
    %928 = vmatprep.subr.mxu0 0.0
    %929 = vmatpush1.msra.mxu0 0.0
    %930 = vmatprep.subr.mxu0 0.0
    %931 = vmatpush1.msra.mxu0 0.0
    %932 = vmatprep.subr.mxu0 0.0
    %933 = vmatpush1.msra.mxu0 0.0
    %934 = vmatprep.subr.mxu0 0.0
    %935 = vmatpush1.msra.mxu0 0.0
    %936 = vmatprep.subr.mxu0 0.0
    %937 = vmatpush1.msra.mxu0 0.0
    %938 = vmatprep.subr.mxu0 0.0
    %939 = vmatpush1.msra.mxu0 0.0
    %940 = vmatprep.subr.mxu0 0.0
    %941 = vmatpush1.msra.mxu0 0.0
    %942 = vmatprep.subr.mxu0 0.0
    %943 = vmatpush1.msra.mxu0 0.0
    %944 = vmatprep.subr.mxu0 0.0
    %945 = vmatpush1.msra.mxu0 0.0
    %946 = vmatprep.subr.mxu0 0.0
    %947 = vmatpush1.msra.mxu0 0.0
    %948 = vmatprep.subr.mxu0 0.0
    %949 = vmatpush1.msra.mxu0 0.0
    %950 = vmatprep.subr.mxu0 0.0
    %951 = vmatpush1.msra.mxu0 0.0
    %952 = vmatprep.subr.mxu0 0.0
    %953 = vmatpush1.msra.mxu0 0.0
    %954 = vmatprep.subr.mxu0 0.0
    %955 = vmatpush1.msra.mxu0 0.0
    %956 = vmatprep.subr.mxu0 0.0
    %957 = vmatpush1.msra.mxu0 0.0
    %958 = vmatprep.subr.mxu0 0.0
    %959 = vmatpush1.msra.mxu0 0.0
    %960 = vmatprep.subr.mxu0 0.0
    %961 = vmatpush1.msra.mxu0 0.0
    %962 = vmatprep.subr.mxu0 0.0
    %963 = vmatpush1.msra.mxu0 0.0
    %964 = vmatprep.subr.mxu0 0.0
    %965 = vmatpush1.msra.mxu0 0.0
    %966 = vmatprep.subr.mxu0 0.0
    %967 = vmatpush1.msra.mxu0 0.0
    %968 = vmatprep.subr.mxu0 0.0
    %969 = vmatpush1.msra.mxu0 0.0
    %970 = vmatprep.mubr.f32.mxu0 0.0
    %971 = vmatmul.mubr.f32.gmra.mrb[0].mxu0 %v103
    %v972 = vpop.f32.mrb[0].mxu0
    %v973 = vadd.f32 0.0, %v972
    %v974 = vpop.f32.mrb[0].mxu0
    %975 = vmatprep.mubr.f32.mxu0 0.0
    %976 = vmatmul.mubr.f32.gmra.mrb[0].mxu0 %v106
    %v977 = vpop.f32.mrb[0].mxu0
    %v978 = vadd.f32 0.0, %v977
    %v979 = vpop.f32.mrb[0].mxu0
    %980 = vdwg.mxu0
    %s981 = scalar_lea.vmem %s6, 96
    %v982 = vld [vmem:[%s981] sm:$0xff]
    %v983 = vld [vmem:[%s981 + $0x8] sm:$0xff]
    %v984 = vld [vmem:[%s981 + $0x10] sm:$0xff]
    %v985 = vld [vmem:[%s981 + $0x18] sm:$0xff]
    %986 = vmatprep.subr.mxu0 0.0
    %987 = vmatpush1.msra.mxu0 %v982
    %988 = vmatprep.subr.mxu0 0.0
    %989 = vmatpush1.msra.mxu0 %v983
    %990 = vmatprep.subr.mxu0 0.0
    %991 = vmatpush1.msra.mxu0 %v984
    %992 = vmatprep.subr.mxu0 0.0
    %993 = vmatpush1.msra.mxu0 %v985
    %994 = vmatprep.subr.mxu0 0.0
    %995 = vmatpush1.msra.mxu0 0.0
    %996 = vmatprep.subr.mxu0 0.0
    %997 = vmatpush1.msra.mxu0 0.0
    %998 = vmatprep.subr.mxu0 0.0
    %999 = vmatpush1.msra.mxu0 0.0
    %1000 = vmatprep.subr.mxu0 0.0
    %1001 = vmatpush1.msra.mxu0 0.0
    %1002 = vmatprep.subr.mxu0 0.0
    %1003 = vmatpush1.msra.mxu0 0.0
    %1004 = vmatprep.subr.mxu0 0.0
    %1005 = vmatpush1.msra.mxu0 0.0
    %1006 = vmatprep.subr.mxu0 0.0
    %1007 = vmatpush1.msra.mxu0 0.0
    %1008 = vmatprep.subr.mxu0 0.0
    %1009 = vmatpush1.msra.mxu0 0.0
    %1010 = vmatprep.subr.mxu0 0.0
    %1011 = vmatpush1.msra.mxu0 0.0
    %1012 = vmatprep.subr.mxu0 0.0
    %1013 = vmatpush1.msra.mxu0 0.0
    %1014 = vmatprep.subr.mxu0 0.0
    %1015 = vmatpush1.msra.mxu0 0.0
    %1016 = vmatprep.subr.mxu0 0.0
    %1017 = vmatpush1.msra.mxu0 0.0
    %1018 = vmatprep.subr.mxu0 0.0
    %1019 = vmatpush1.msra.mxu0 0.0
    %1020 = vmatprep.subr.mxu0 0.0
    %1021 = vmatpush1.msra.mxu0 0.0
    %1022 = vmatprep.subr.mxu0 0.0
    %1023 = vmatpush1.msra.mxu0 0.0
    %1024 = vmatprep.subr.mxu0 0.0
    %1025 = vmatpush1.msra.mxu0 0.0
    %1026 = vmatprep.subr.mxu0 0.0
    %1027 = vmatpush1.msra.mxu0 0.0
    %1028 = vmatprep.subr.mxu0 0.0
    %1029 = vmatpush1.msra.mxu0 0.0
    %1030 = vmatprep.subr.mxu0 0.0
    %1031 = vmatpush1.msra.mxu0 0.0
    %1032 = vmatprep.subr.mxu0 0.0
    %1033 = vmatpush1.msra.mxu0 0.0
    %1034 = vmatprep.subr.mxu0 0.0
    %1035 = vmatpush1.msra.mxu0 0.0
    %1036 = vmatprep.subr.mxu0 0.0
    %1037 = vmatpush1.msra.mxu0 0.0
    %1038 = vmatprep.subr.mxu0 0.0
    %1039 = vmatpush1.msra.mxu0 0.0
    %1040 = vmatprep.subr.mxu0 0.0
    %1041 = vmatpush1.msra.mxu0 0.0
    %1042 = vmatprep.subr.mxu0 0.0
    %1043 = vmatpush1.msra.mxu0 0.0
    %1044 = vmatprep.subr.mxu0 0.0
    %1045 = vmatpush1.msra.mxu0 0.0
    %1046 = vmatprep.subr.mxu0 0.0
    %1047 = vmatpush1.msra.mxu0 0.0
    %1048 = vmatprep.subr.mxu0 0.0
    %1049 = vmatpush1.msra.mxu0 0.0
    %1050 = vmatprep.mubr.f32.mxu0 0.0
    %1051 = vmatmul.mubr.f32.gmra.mrb[0].mxu0 %v103
    %v1052 = vpop.f32.mrb[0].mxu0
    %v1053 = vadd.f32 0.0, %v1052
    %v1054 = vpop.f32.mrb[0].mxu0
    %1055 = vmatprep.mubr.f32.mxu0 0.0
    %1056 = vmatmul.mubr.f32.gmra.mrb[0].mxu0 %v106
    %v1057 = vpop.f32.mrb[0].mxu0
    %v1058 = vadd.f32 0.0, %v1057
    %v1059 = vpop.f32.mrb[0].mxu0
    %1060 = vdwg.mxu0
    %v1061 = vld [vmem:[%s7] sm:$0x1]
    %s1062 = scalar_lea.vmem %s7, 1
    %v1063 = vld [vmem:[%s1062] sm:$0x1]
    %s1064 = scalar_lea.vmem %s7, 2
    %v1065 = vld [vmem:[%s1064] sm:$0x1]
    %s1066 = scalar_lea.vmem %s7, 3
    %v1067 = vld [vmem:[%s1066] sm:$0x1]
    %vm1068 = vcmask 64512
    %v1069 = vsel %vm1068, %v175, 0.0
    %1070 = vadd.xlane.f32.xlu0 %v1069
    %v1071 = vpop.xlane.xlu0 %1070
    %v1072 = vsel %vm1068, %v180, 0.0
    %1073 = vadd.xlane.f32.xlu0 %v1072
    %v1074 = vpop.xlane.xlu0 %1073
    %v1075 = vadd.f32 %v1071, 0.0
    %v1076 = vadd.f32 %v1074, 0.0
    %v1077 = vsel %vm1068, %v255, 0.0
    %1078 = vadd.xlane.f32.xlu0 %v1077
    %v1079 = vpop.xlane.xlu0 %1078
    %v1080 = vsel %vm1068, %v260, 0.0
    %1081 = vadd.xlane.f32.xlu0 %v1080
    %v1082 = vpop.xlane.xlu0 %1081
    %v1083 = vadd.f32 %v1075, %v1079
    %v1084 = vadd.f32 %v1076, %v1082
    %v1085 = vsel %vm1068, %v335, 0.0
    %1086 = vadd.xlane.f32.xlu0 %v1085
    %v1087 = vpop.xlane.xlu0 %1086
    %v1088 = vsel %vm1068, %v340, 0.0
    %1089 = vadd.xlane.f32.xlu0 %v1088
    %v1090 = vpop.xlane.xlu0 %1089
    %v1091 = vadd.f32 %v1083, %v1087
    %v1092 = vadd.f32 %v1084, %v1090
    %v1093 = vsel %vm1068, %v415, 0.0
    %1094 = vadd.xlane.f32.xlu0 %v1093
    %v1095 = vpop.xlane.xlu0 %1094
    %v1096 = vsel %vm1068, %v420, 0.0
    %1097 = vadd.xlane.f32.xlu0 %v1096
    %v1098 = vpop.xlane.xlu0 %1097
    %v1099 = vadd.f32 %v1091, %v1095
    %v1100 = vadd.f32 %v1092, %v1098
    %v1101 = vmul.f32 %v175, %v175
    %v1102 = vmul.f32 %v180, %v180
    %v1103 = vsel %vm1068, %v1101, 0.0
    %1104 = vadd.xlane.f32.xlu0 %v1103
    %v1105 = vpop.xlane.xlu0 %1104
    %v1106 = vsel %vm1068, %v1102, 0.0
    %1107 = vadd.xlane.f32.xlu0 %v1106
    %v1108 = vpop.xlane.xlu0 %1107
    %v1109 = vadd.f32 %v1105, 0.0
    %v1110 = vadd.f32 %v1108, 0.0
    %v1111 = vmul.f32 %v255, %v255
    %v1112 = vmul.f32 %v260, %v260
    %v1113 = vsel %vm1068, %v1111, 0.0
    %1114 = vadd.xlane.f32.xlu0 %v1113
    %v1115 = vpop.xlane.xlu0 %1114
    %v1116 = vsel %vm1068, %v1112, 0.0
    %1117 = vadd.xlane.f32.xlu0 %v1116
    %v1118 = vpop.xlane.xlu0 %1117
    %v1119 = vadd.f32 %v1109, %v1115
    %v1120 = vadd.f32 %v1110, %v1118
    %v1121 = vmul.f32 %v335, %v335
    %v1122 = vmul.f32 %v340, %v340
    %v1123 = vsel %vm1068, %v1121, 0.0
    %1124 = vadd.xlane.f32.xlu0 %v1123
    %v1125 = vpop.xlane.xlu0 %1124
    %v1126 = vsel %vm1068, %v1122, 0.0
    %1127 = vadd.xlane.f32.xlu0 %v1126
    %v1128 = vpop.xlane.xlu0 %1127
    %v1129 = vadd.f32 %v1119, %v1125
    %v1130 = vadd.f32 %v1120, %v1128
    %v1131 = vmul.f32 %v415, %v415
    %v1132 = vmul.f32 %v420, %v420
    %v1133 = vsel %vm1068, %v1131, 0.0
    %1134 = vadd.xlane.f32.xlu0 %v1133
    %v1135 = vpop.xlane.xlu0 %1134
    %v1136 = vsel %vm1068, %v1132, 0.0
    %1137 = vadd.xlane.f32.xlu0 %v1136
    %v1138 = vpop.xlane.xlu0 %1137
    %v1139 = vadd.f32 %v1129, %v1135
    %v1140 = vadd.f32 %v1130, %v1138
    %v1141 = vmul.f32 %v1099, %v61
    %v1142 = vmul.f32 %v1100, %v61
    %v1143 = vmul.f32 %v1139, %v61
    %v1144 = vmul.f32 %v1140, %v61
    %v1145 = vmul.f32 %v1141, %v1141
    %v1146 = vmul.f32 %v1142, %v1142
    %v1147 = vsub.f32 %v1143, %v1145
    %v1148 = vsub.f32 %v1144, %v1146
    %v1149 = vadd.f32 %v1147, 1e-05
    %v1150 = vadd.f32 %v1148, 1e-05
    %v1151 = vrsqrt.pop %v1149
    %v1152 = vrsqrt.pop %v1150
    %v1153 = vsub.f32 %v175, %v1141
    %v1154 = vsub.f32 %v180, %v1142
    %v1155 = vmul.f32 %v1153, %v1151
    %v1156 = vmul.f32 %v1154, %v1152
    %v1158 = vlaneseq
    %v1159 = vshrl.u32 %v1158, 7
    %v1160 = vsub.s32 0, %v1159
    %v1161 = vrot.slane %v1061, %v1160
    %v1163 = vmul.f32 %v1155, %v1161
    %v1164 = vmul.f32 %v1156, %v1161
    %v1165 = vsub.f32 %v255, %v1141
    %v1166 = vsub.f32 %v260, %v1142
    %v1167 = vmul.f32 %v1165, %v1151
    %v1168 = vmul.f32 %v1166, %v1152
    %v1170 = vlaneseq
    %v1171 = vshrl.u32 %v1170, 7
    %v1172 = vsub.s32 0, %v1171
    %v1173 = vrot.slane %v1063, %v1172
    %v1175 = vmul.f32 %v1167, %v1173
    %v1176 = vmul.f32 %v1168, %v1173
    %v1177 = vsub.f32 %v335, %v1141
    %v1178 = vsub.f32 %v340, %v1142
    %v1179 = vmul.f32 %v1177, %v1151
    %v1180 = vmul.f32 %v1178, %v1152
    %v1182 = vlaneseq
    %v1183 = vshrl.u32 %v1182, 7
    %v1184 = vsub.s32 0, %v1183
    %v1185 = vrot.slane %v1065, %v1184
    %v1187 = vmul.f32 %v1179, %v1185
    %v1188 = vmul.f32 %v1180, %v1185
    %v1189 = vsub.f32 %v415, %v1141
    %v1190 = vsub.f32 %v420, %v1142
    %v1191 = vmul.f32 %v1189, %v1151
    %v1192 = vmul.f32 %v1190, %v1152
    %v1194 = vlaneseq
    %v1195 = vshrl.u32 %v1194, 7
    %v1196 = vsub.s32 0, %v1195
    %v1197 = vrot.slane %v1067, %v1196
    %v1199 = vmul.f32 %v1191, %v1197
    %v1200 = vmul.f32 %v1192, %v1197
    %v1201 = vld [vmem:[%s8] sm:$0x1]
    %s1202 = scalar_lea.vmem %s8, 1
    %v1203 = vld [vmem:[%s1202] sm:$0x1]
    %s1204 = scalar_lea.vmem %s8, 2
    %v1205 = vld [vmem:[%s1204] sm:$0x1]
    %s1206 = scalar_lea.vmem %s8, 3
    %v1207 = vld [vmem:[%s1206] sm:$0x1]
    %v1208 = vsel %vm1068, %v494, 0.0
    %1209 = vadd.xlane.f32.xlu0 %v1208
    %v1210 = vpop.xlane.xlu0 %1209
    %v1211 = vsel %vm1068, %v499, 0.0
    %1212 = vadd.xlane.f32.xlu0 %v1211
    %v1213 = vpop.xlane.xlu0 %1212
    %v1214 = vadd.f32 %v1210, 0.0
    %v1215 = vadd.f32 %v1213, 0.0
    %v1216 = vsel %vm1068, %v574, 0.0
    %1217 = vadd.xlane.f32.xlu0 %v1216
    %v1218 = vpop.xlane.xlu0 %1217
    %v1219 = vsel %vm1068, %v579, 0.0
    %1220 = vadd.xlane.f32.xlu0 %v1219
    %v1221 = vpop.xlane.xlu0 %1220
    %v1222 = vadd.f32 %v1214, %v1218
    %v1223 = vadd.f32 %v1215, %v1221
    %v1224 = vsel %vm1068, %v654, 0.0
    %1225 = vadd.xlane.f32.xlu0 %v1224
    %v1226 = vpop.xlane.xlu0 %1225
    %v1227 = vsel %vm1068, %v659, 0.0
    %1228 = vadd.xlane.f32.xlu0 %v1227
    %v1229 = vpop.xlane.xlu0 %1228
    %v1230 = vadd.f32 %v1222, %v1226
    %v1231 = vadd.f32 %v1223, %v1229
    %v1232 = vsel %vm1068, %v734, 0.0
    %1233 = vadd.xlane.f32.xlu0 %v1232
    %v1234 = vpop.xlane.xlu0 %1233
    %v1235 = vsel %vm1068, %v739, 0.0
    %1236 = vadd.xlane.f32.xlu0 %v1235
    %v1237 = vpop.xlane.xlu0 %1236
    %v1238 = vadd.f32 %v1230, %v1234
    %v1239 = vadd.f32 %v1231, %v1237
    %v1240 = vmul.f32 %v494, %v494
    %v1241 = vmul.f32 %v499, %v499
    %v1242 = vsel %vm1068, %v1240, 0.0
    %1243 = vadd.xlane.f32.xlu0 %v1242
    %v1244 = vpop.xlane.xlu0 %1243
    %v1245 = vsel %vm1068, %v1241, 0.0
    %1246 = vadd.xlane.f32.xlu0 %v1245
    %v1247 = vpop.xlane.xlu0 %1246
    %v1248 = vadd.f32 %v1244, 0.0
    %v1249 = vadd.f32 %v1247, 0.0
    %v1250 = vmul.f32 %v574, %v574
    %v1251 = vmul.f32 %v579, %v579
    %v1252 = vsel %vm1068, %v1250, 0.0
    %1253 = vadd.xlane.f32.xlu0 %v1252
    %v1254 = vpop.xlane.xlu0 %1253
    %v1255 = vsel %vm1068, %v1251, 0.0
    %1256 = vadd.xlane.f32.xlu0 %v1255
    %v1257 = vpop.xlane.xlu0 %1256
    %v1258 = vadd.f32 %v1248, %v1254
    %v1259 = vadd.f32 %v1249, %v1257
    %v1260 = vmul.f32 %v654, %v654
    %v1261 = vmul.f32 %v659, %v659
    %v1262 = vsel %vm1068, %v1260, 0.0
    %1263 = vadd.xlane.f32.xlu0 %v1262
    %v1264 = vpop.xlane.xlu0 %1263
    %v1265 = vsel %vm1068, %v1261, 0.0
    %1266 = vadd.xlane.f32.xlu0 %v1265
    %v1267 = vpop.xlane.xlu0 %1266
    %v1268 = vadd.f32 %v1258, %v1264
    %v1269 = vadd.f32 %v1259, %v1267
    %v1270 = vmul.f32 %v734, %v734
    %v1271 = vmul.f32 %v739, %v739
    %v1272 = vsel %vm1068, %v1270, 0.0
    %1273 = vadd.xlane.f32.xlu0 %v1272
    %v1274 = vpop.xlane.xlu0 %1273
    %v1275 = vsel %vm1068, %v1271, 0.0
    %1276 = vadd.xlane.f32.xlu0 %v1275
    %v1277 = vpop.xlane.xlu0 %1276
    %v1278 = vadd.f32 %v1268, %v1274
    %v1279 = vadd.f32 %v1269, %v1277
    %v1280 = vmul.f32 %v1238, %v61
    %v1281 = vmul.f32 %v1239, %v61
    %v1282 = vmul.f32 %v1278, %v61
    %v1283 = vmul.f32 %v1279, %v61
    %v1284 = vmul.f32 %v1280, %v1280
    %v1285 = vmul.f32 %v1281, %v1281
    %v1286 = vsub.f32 %v1282, %v1284
    %v1287 = vsub.f32 %v1283, %v1285
    %v1288 = vadd.f32 %v1286, 1e-05
    %v1289 = vadd.f32 %v1287, 1e-05
    %v1290 = vrsqrt.pop %v1288
    %v1291 = vrsqrt.pop %v1289
    %v1292 = vsub.f32 %v494, %v1280
    %v1293 = vsub.f32 %v499, %v1281
    %v1294 = vmul.f32 %v1292, %v1290
    %v1295 = vmul.f32 %v1293, %v1291
    %v1297 = vlaneseq
    %v1298 = vshrl.u32 %v1297, 7
    %v1299 = vsub.s32 0, %v1298
    %v1300 = vrot.slane %v1201, %v1299
    %v1302 = vmul.f32 %v1294, %v1300
    %v1303 = vmul.f32 %v1295, %v1300
    %v1304 = vsub.f32 %v574, %v1280
    %v1305 = vsub.f32 %v579, %v1281
    %v1306 = vmul.f32 %v1304, %v1290
    %v1307 = vmul.f32 %v1305, %v1291
    %v1309 = vlaneseq
    %v1310 = vshrl.u32 %v1309, 7
    %v1311 = vsub.s32 0, %v1310
    %v1312 = vrot.slane %v1203, %v1311
    %v1314 = vmul.f32 %v1306, %v1312
    %v1315 = vmul.f32 %v1307, %v1312
    %v1316 = vsub.f32 %v654, %v1280
    %v1317 = vsub.f32 %v659, %v1281
    %v1318 = vmul.f32 %v1316, %v1290
    %v1319 = vmul.f32 %v1317, %v1291
    %v1321 = vlaneseq
    %v1322 = vshrl.u32 %v1321, 7
    %v1323 = vsub.s32 0, %v1322
    %v1324 = vrot.slane %v1205, %v1323
    %v1326 = vmul.f32 %v1318, %v1324
    %v1327 = vmul.f32 %v1319, %v1324
    %v1328 = vsub.f32 %v734, %v1280
    %v1329 = vsub.f32 %v739, %v1281
    %v1330 = vmul.f32 %v1328, %v1290
    %v1331 = vmul.f32 %v1329, %v1291
    %v1333 = vlaneseq
    %v1334 = vshrl.u32 %v1333, 7
    %v1335 = vsub.s32 0, %v1334
    %v1336 = vrot.slane %v1207, %v1335
    %v1338 = vmul.f32 %v1330, %v1336
    %v1339 = vmul.f32 %v1331, %v1336
    %v1341 = vsel %vm1068, %v1163, 0
    %v1344 = vsel %vm1068, %v1164, 0
    %v1347 = vsel %vm1068, %v1302, 0
    %v1350 = vsel %vm1068, %v1303, 0
    %1352 = vmatprep.subr.mxu0 0.0
    %1353 = vmatpush1.xpose.msra.mxu0 %v1347
    %1354 = vmatprep.subr.mxu0 0.0
    %1355 = vmatpush1.xpose.msra.mxu0 %v1350
    %1356 = vmatprep.subr.mxu0 0.0
    %1357 = vmatpush1.xpose.msra.mxu0 0.0
    %1358 = vmatprep.subr.mxu0 0.0
    %1359 = vmatpush1.xpose.msra.mxu0 0.0
    %1360 = vmatprep.subr.mxu0 0.0
    %1361 = vmatpush1.xpose.msra.mxu0 0.0
    %1362 = vmatprep.subr.mxu0 0.0
    %1363 = vmatpush1.xpose.msra.mxu0 0.0
    %1364 = vmatprep.subr.mxu0 0.0
    %1365 = vmatpush1.xpose.msra.mxu0 0.0
    %1366 = vmatprep.subr.mxu0 0.0
    %1367 = vmatpush1.xpose.msra.mxu0 0.0
    %1368 = vmatprep.subr.mxu0 0.0
    %1369 = vmatpush1.xpose.msra.mxu0 0.0
    %1370 = vmatprep.subr.mxu0 0.0
    %1371 = vmatpush1.xpose.msra.mxu0 0.0
    %1372 = vmatprep.subr.mxu0 0.0
    %1373 = vmatpush1.xpose.msra.mxu0 0.0
    %1374 = vmatprep.subr.mxu0 0.0
    %1375 = vmatpush1.xpose.msra.mxu0 0.0
    %1376 = vmatprep.subr.mxu0 0.0
    %1377 = vmatpush1.xpose.msra.mxu0 0.0
    %1378 = vmatprep.subr.mxu0 0.0
    %1379 = vmatpush1.xpose.msra.mxu0 0.0
    %1380 = vmatprep.subr.mxu0 0.0
    %1381 = vmatpush1.xpose.msra.mxu0 0.0
    %1382 = vmatprep.subr.mxu0 0.0
    %1383 = vmatpush1.xpose.msra.mxu0 0.0
    %1384 = vmatprep.subr.mxu0 0.0
    %1385 = vmatpush1.xpose.msra.mxu0 0.0
    %1386 = vmatprep.subr.mxu0 0.0
    %1387 = vmatpush1.xpose.msra.mxu0 0.0
    %1388 = vmatprep.subr.mxu0 0.0
    %1389 = vmatpush1.xpose.msra.mxu0 0.0
    %1390 = vmatprep.subr.mxu0 0.0
    %1391 = vmatpush1.xpose.msra.mxu0 0.0
    %1392 = vmatprep.subr.mxu0 0.0
    %1393 = vmatpush1.xpose.msra.mxu0 0.0
    %1394 = vmatprep.subr.mxu0 0.0
    %1395 = vmatpush1.xpose.msra.mxu0 0.0
    %1396 = vmatprep.subr.mxu0 0.0
    %1397 = vmatpush1.xpose.msra.mxu0 0.0
    %1398 = vmatprep.subr.mxu0 0.0
    %1399 = vmatpush1.xpose.msra.mxu0 0.0
    %1400 = vmatprep.subr.mxu0 0.0
    %1401 = vmatpush1.xpose.msra.mxu0 0.0
    %1402 = vmatprep.subr.mxu0 0.0
    %1403 = vmatpush1.xpose.msra.mxu0 0.0
    %1404 = vmatprep.subr.mxu0 0.0
    %1405 = vmatpush1.xpose.msra.mxu0 0.0
    %1406 = vmatprep.subr.mxu0 0.0
    %1407 = vmatpush1.xpose.msra.mxu0 0.0
    %1408 = vmatprep.subr.mxu0 0.0
    %1409 = vmatpush1.xpose.msra.mxu0 0.0
    %1410 = vmatprep.subr.mxu0 0.0
    %1411 = vmatpush1.xpose.msra.mxu0 0.0
    %1412 = vmatprep.subr.mxu0 0.0
    %1413 = vmatpush1.xpose.msra.mxu0 0.0
    %1414 = vmatprep.subr.mxu0 0.0
    %1415 = vmatpush1.xpose.msra.mxu0 0.0
    %1416 = vmatprep.mubr.f32.mxu0 0.0
    %1417 = vmatmul.mubr.f32.gmra.mrb[0].mxu0 %v1341
    %v1418 = vpop.f32.mrb[0].mxu0
    %v1419 = vadd.f32 %v50, %v1418
    %v1420 = vpop.f32.mrb[0].mxu0
    %1421 = vmatprep.mubr.f32.mxu0 0.0
    %1422 = vmatmul.mubr.f32.gmra.mrb[0].mxu0 %v1344
    %v1423 = vpop.f32.mrb[0].mxu0
    %v1424 = vadd.f32 %v51, %v1423
    %v1425 = vpop.f32.mrb[0].mxu0
    %1426 = vdwg.mxu0
    %vm1427 = vcmask 130048
    %v1428 = vsel %vm1427, %v1419, -inf
    %1429 = vmax.xlane.f32.xlu0 %v1428
    %v1430 = vpop.xlane.xlu0 %1429
    %v1431 = vsel %vm1427, %v1424, -inf
    %1432 = vmax.xlane.f32.xlu0 %v1431
    %v1433 = vpop.xlane.xlu0 %1432
    %v1434 = vsub.f32 %v1419, %v1430
    %v1435 = vsub.f32 %v1424, %v1433
    %v1436 = vmul.f32 %v1434, 1.442695
    %v1437 = vpow.pop %v1436
    %v1438 = vmul.f32 %v1435, 1.442695
    %v1439 = vpow.pop %v1438
    %v1440 = vsel %vm1427, %v1437, 0.0
    %1441 = vadd.xlane.f32.xlu0 %v1440
    %v1442 = vpop.xlane.xlu0 %1441
    %v1443 = vsel %vm1427, %v1439, 0.0
    %1444 = vadd.xlane.f32.xlu0 %v1443
    %v1445 = vpop.xlane.xlu0 %1444
    %v1446 = vrcp.pop %v1442
    %v1447 = vrcp.pop %v1445
    %v1448 = vmul.f32 %v1437, %v1446
    %v1449 = vmul.f32 %v1439, %v1447
    %v1451 = vsel %vm1427, %v1448, 0
    %v1454 = vsel %vm1427, %v1449, 0
    %1456 = vmatprep.subr.mxu0 0.0
    %1457 = vmatpush1.msra.mxu0 %v813
    %1458 = vmatprep.subr.mxu0 0.0
    %1459 = vmatpush1.msra.mxu0 %v818
    %1460 = vmatprep.subr.mxu0 0.0
    %1461 = vmatpush1.msra.mxu0 0.0
    %1462 = vmatprep.subr.mxu0 0.0
    %1463 = vmatpush1.msra.mxu0 0.0
    %1464 = vmatprep.subr.mxu0 0.0
    %1465 = vmatpush1.msra.mxu0 0.0
    %1466 = vmatprep.subr.mxu0 0.0
    %1467 = vmatpush1.msra.mxu0 0.0
    %1468 = vmatprep.subr.mxu0 0.0
    %1469 = vmatpush1.msra.mxu0 0.0
    %1470 = vmatprep.subr.mxu0 0.0
    %1471 = vmatpush1.msra.mxu0 0.0
    %1472 = vmatprep.subr.mxu0 0.0
    %1473 = vmatpush1.msra.mxu0 0.0
    %1474 = vmatprep.subr.mxu0 0.0
    %1475 = vmatpush1.msra.mxu0 0.0
    %1476 = vmatprep.subr.mxu0 0.0
    %1477 = vmatpush1.msra.mxu0 0.0
    %1478 = vmatprep.subr.mxu0 0.0
    %1479 = vmatpush1.msra.mxu0 0.0
    %1480 = vmatprep.subr.mxu0 0.0
    %1481 = vmatpush1.msra.mxu0 0.0
    %1482 = vmatprep.subr.mxu0 0.0
    %1483 = vmatpush1.msra.mxu0 0.0
    %1484 = vmatprep.subr.mxu0 0.0
    %1485 = vmatpush1.msra.mxu0 0.0
    %1486 = vmatprep.subr.mxu0 0.0
    %1487 = vmatpush1.msra.mxu0 0.0
    %1488 = vmatprep.subr.mxu0 0.0
    %1489 = vmatpush1.msra.mxu0 0.0
    %1490 = vmatprep.subr.mxu0 0.0
    %1491 = vmatpush1.msra.mxu0 0.0
    %1492 = vmatprep.subr.mxu0 0.0
    %1493 = vmatpush1.msra.mxu0 0.0
    %1494 = vmatprep.subr.mxu0 0.0
    %1495 = vmatpush1.msra.mxu0 0.0
    %1496 = vmatprep.subr.mxu0 0.0
    %1497 = vmatpush1.msra.mxu0 0.0
    %1498 = vmatprep.subr.mxu0 0.0
    %1499 = vmatpush1.msra.mxu0 0.0
    %1500 = vmatprep.subr.mxu0 0.0
    %1501 = vmatpush1.msra.mxu0 0.0
    %1502 = vmatprep.subr.mxu0 0.0
    %1503 = vmatpush1.msra.mxu0 0.0
    %1504 = vmatprep.subr.mxu0 0.0
    %1505 = vmatpush1.msra.mxu0 0.0
    %1506 = vmatprep.subr.mxu0 0.0
    %1507 = vmatpush1.msra.mxu0 0.0
    %1508 = vmatprep.subr.mxu0 0.0
    %1509 = vmatpush1.msra.mxu0 0.0
    %1510 = vmatprep.subr.mxu0 0.0
    %1511 = vmatpush1.msra.mxu0 0.0
    %1512 = vmatprep.subr.mxu0 0.0
    %1513 = vmatpush1.msra.mxu0 0.0
    %1514 = vmatprep.subr.mxu0 0.0
    %1515 = vmatpush1.msra.mxu0 0.0
    %1516 = vmatprep.subr.mxu0 0.0
    %1517 = vmatpush1.msra.mxu0 0.0
    %1518 = vmatprep.subr.mxu0 0.0
    %1519 = vmatpush1.msra.mxu0 0.0
    %1520 = vmatprep.mubr.f32.mxu0 0.0
    %1521 = vmatmul.mubr.f32.gmra.mrb[0].mxu0 %v1451
    %v1522 = vpop.f32.mrb[0].mxu0
    %v1523 = vadd.f32 0.0, %v1522
    %v1524 = vpop.f32.mrb[0].mxu0
    %1525 = vmatprep.mubr.f32.mxu0 0.0
    %1526 = vmatmul.mubr.f32.gmra.mrb[0].mxu0 %v1454
    %v1527 = vpop.f32.mrb[0].mxu0
    %v1528 = vadd.f32 0.0, %v1527
    %v1529 = vpop.f32.mrb[0].mxu0
    %1530 = vdwg.mxu0
    %v1531 = vld [vmem:[%s9] sm:$0xff]
    %v1533 = vsel %vm1068, %v1175, 0
    %v1536 = vsel %vm1068, %v1176, 0
    %v1539 = vsel %vm1068, %v1314, 0
    %v1542 = vsel %vm1068, %v1315, 0
    %1544 = vmatprep.subr.mxu0 0.0
    %1545 = vmatpush1.xpose.msra.mxu0 %v1539
    %1546 = vmatprep.subr.mxu0 0.0
    %1547 = vmatpush1.xpose.msra.mxu0 %v1542
    %1548 = vmatprep.subr.mxu0 0.0
    %1549 = vmatpush1.xpose.msra.mxu0 0.0
    %1550 = vmatprep.subr.mxu0 0.0
    %1551 = vmatpush1.xpose.msra.mxu0 0.0
    %1552 = vmatprep.subr.mxu0 0.0
    %1553 = vmatpush1.xpose.msra.mxu0 0.0
    %1554 = vmatprep.subr.mxu0 0.0
    %1555 = vmatpush1.xpose.msra.mxu0 0.0
    %1556 = vmatprep.subr.mxu0 0.0
    %1557 = vmatpush1.xpose.msra.mxu0 0.0
    %1558 = vmatprep.subr.mxu0 0.0
    %1559 = vmatpush1.xpose.msra.mxu0 0.0
    %1560 = vmatprep.subr.mxu0 0.0
    %1561 = vmatpush1.xpose.msra.mxu0 0.0
    %1562 = vmatprep.subr.mxu0 0.0
    %1563 = vmatpush1.xpose.msra.mxu0 0.0
    %1564 = vmatprep.subr.mxu0 0.0
    %1565 = vmatpush1.xpose.msra.mxu0 0.0
    %1566 = vmatprep.subr.mxu0 0.0
    %1567 = vmatpush1.xpose.msra.mxu0 0.0
    %1568 = vmatprep.subr.mxu0 0.0
    %1569 = vmatpush1.xpose.msra.mxu0 0.0
    %1570 = vmatprep.subr.mxu0 0.0
    %1571 = vmatpush1.xpose.msra.mxu0 0.0
    %1572 = vmatprep.subr.mxu0 0.0
    %1573 = vmatpush1.xpose.msra.mxu0 0.0
    %1574 = vmatprep.subr.mxu0 0.0
    %1575 = vmatpush1.xpose.msra.mxu0 0.0
    %1576 = vmatprep.subr.mxu0 0.0
    %1577 = vmatpush1.xpose.msra.mxu0 0.0
    %1578 = vmatprep.subr.mxu0 0.0
    %1579 = vmatpush1.xpose.msra.mxu0 0.0
    %1580 = vmatprep.subr.mxu0 0.0
    %1581 = vmatpush1.xpose.msra.mxu0 0.0
    %1582 = vmatprep.subr.mxu0 0.0
    %1583 = vmatpush1.xpose.msra.mxu0 0.0
    %1584 = vmatprep.subr.mxu0 0.0
    %1585 = vmatpush1.xpose.msra.mxu0 0.0
    %1586 = vmatprep.subr.mxu0 0.0
    %1587 = vmatpush1.xpose.msra.mxu0 0.0
    %1588 = vmatprep.subr.mxu0 0.0
    %1589 = vmatpush1.xpose.msra.mxu0 0.0
    %1590 = vmatprep.subr.mxu0 0.0
    %1591 = vmatpush1.xpose.msra.mxu0 0.0
    %1592 = vmatprep.subr.mxu0 0.0
    %1593 = vmatpush1.xpose.msra.mxu0 0.0
    %1594 = vmatprep.subr.mxu0 0.0
    %1595 = vmatpush1.xpose.msra.mxu0 0.0
    %1596 = vmatprep.subr.mxu0 0.0
    %1597 = vmatpush1.xpose.msra.mxu0 0.0
    %1598 = vmatprep.subr.mxu0 0.0
    %1599 = vmatpush1.xpose.msra.mxu0 0.0
    %1600 = vmatprep.subr.mxu0 0.0
    %1601 = vmatpush1.xpose.msra.mxu0 0.0
    %1602 = vmatprep.subr.mxu0 0.0
    %1603 = vmatpush1.xpose.msra.mxu0 0.0
    %1604 = vmatprep.subr.mxu0 0.0
    %1605 = vmatpush1.xpose.msra.mxu0 0.0
    %1606 = vmatprep.subr.mxu0 0.0
    %1607 = vmatpush1.xpose.msra.mxu0 0.0
    %1608 = vmatprep.mubr.f32.mxu0 0.0
    %1609 = vmatmul.mubr.f32.gmra.mrb[0].mxu0 %v1533
    %v1610 = vpop.f32.mrb[0].mxu0
    %v1611 = vadd.f32 %v50, %v1610
    %v1612 = vpop.f32.mrb[0].mxu0
    %1613 = vmatprep.mubr.f32.mxu0 0.0
    %1614 = vmatmul.mubr.f32.gmra.mrb[0].mxu0 %v1536
    %v1615 = vpop.f32.mrb[0].mxu0
    %v1616 = vadd.f32 %v51, %v1615
    %v1617 = vpop.f32.mrb[0].mxu0
    %1618 = vdwg.mxu0
    %v1619 = vsel %vm1427, %v1611, -inf
    %1620 = vmax.xlane.f32.xlu0 %v1619
    %v1621 = vpop.xlane.xlu0 %1620
    %v1622 = vsel %vm1427, %v1616, -inf
    %1623 = vmax.xlane.f32.xlu0 %v1622
    %v1624 = vpop.xlane.xlu0 %1623
    %v1625 = vsub.f32 %v1611, %v1621
    %v1626 = vsub.f32 %v1616, %v1624
    %v1627 = vmul.f32 %v1625, 1.442695
    %v1628 = vpow.pop %v1627
    %v1629 = vmul.f32 %v1626, 1.442695
    %v1630 = vpow.pop %v1629
    %v1631 = vsel %vm1427, %v1628, 0.0
    %1632 = vadd.xlane.f32.xlu0 %v1631
    %v1633 = vpop.xlane.xlu0 %1632
    %v1634 = vsel %vm1427, %v1630, 0.0
    %1635 = vadd.xlane.f32.xlu0 %v1634
    %v1636 = vpop.xlane.xlu0 %1635
    %v1637 = vrcp.pop %v1633
    %v1638 = vrcp.pop %v1636
    %v1639 = vmul.f32 %v1628, %v1637
    %v1640 = vmul.f32 %v1630, %v1638
    %v1642 = vsel %vm1427, %v1639, 0
    %v1645 = vsel %vm1427, %v1640, 0
    %1647 = vmatprep.subr.mxu0 0.0
    %1648 = vmatpush1.msra.mxu0 %v893
    %1649 = vmatprep.subr.mxu0 0.0
    %1650 = vmatpush1.msra.mxu0 %v898
    %1651 = vmatprep.subr.mxu0 0.0
    %1652 = vmatpush1.msra.mxu0 0.0
    %1653 = vmatprep.subr.mxu0 0.0
    %1654 = vmatpush1.msra.mxu0 0.0
    %1655 = vmatprep.subr.mxu0 0.0
    %1656 = vmatpush1.msra.mxu0 0.0
    %1657 = vmatprep.subr.mxu0 0.0
    %1658 = vmatpush1.msra.mxu0 0.0
    %1659 = vmatprep.subr.mxu0 0.0
    %1660 = vmatpush1.msra.mxu0 0.0
    %1661 = vmatprep.subr.mxu0 0.0
    %1662 = vmatpush1.msra.mxu0 0.0
    %1663 = vmatprep.subr.mxu0 0.0
    %1664 = vmatpush1.msra.mxu0 0.0
    %1665 = vmatprep.subr.mxu0 0.0
    %1666 = vmatpush1.msra.mxu0 0.0
    %1667 = vmatprep.subr.mxu0 0.0
    %1668 = vmatpush1.msra.mxu0 0.0
    %1669 = vmatprep.subr.mxu0 0.0
    %1670 = vmatpush1.msra.mxu0 0.0
    %1671 = vmatprep.subr.mxu0 0.0
    %1672 = vmatpush1.msra.mxu0 0.0
    %1673 = vmatprep.subr.mxu0 0.0
    %1674 = vmatpush1.msra.mxu0 0.0
    %1675 = vmatprep.subr.mxu0 0.0
    %1676 = vmatpush1.msra.mxu0 0.0
    %1677 = vmatprep.subr.mxu0 0.0
    %1678 = vmatpush1.msra.mxu0 0.0
    %1679 = vmatprep.subr.mxu0 0.0
    %1680 = vmatpush1.msra.mxu0 0.0
    %1681 = vmatprep.subr.mxu0 0.0
    %1682 = vmatpush1.msra.mxu0 0.0
    %1683 = vmatprep.subr.mxu0 0.0
    %1684 = vmatpush1.msra.mxu0 0.0
    %1685 = vmatprep.subr.mxu0 0.0
    %1686 = vmatpush1.msra.mxu0 0.0
    %1687 = vmatprep.subr.mxu0 0.0
    %1688 = vmatpush1.msra.mxu0 0.0
    %1689 = vmatprep.subr.mxu0 0.0
    %1690 = vmatpush1.msra.mxu0 0.0
    %1691 = vmatprep.subr.mxu0 0.0
    %1692 = vmatpush1.msra.mxu0 0.0
    %1693 = vmatprep.subr.mxu0 0.0
    %1694 = vmatpush1.msra.mxu0 0.0
    %1695 = vmatprep.subr.mxu0 0.0
    %1696 = vmatpush1.msra.mxu0 0.0
    %1697 = vmatprep.subr.mxu0 0.0
    %1698 = vmatpush1.msra.mxu0 0.0
    %1699 = vmatprep.subr.mxu0 0.0
    %1700 = vmatpush1.msra.mxu0 0.0
    %1701 = vmatprep.subr.mxu0 0.0
    %1702 = vmatpush1.msra.mxu0 0.0
    %1703 = vmatprep.subr.mxu0 0.0
    %1704 = vmatpush1.msra.mxu0 0.0
    %1705 = vmatprep.subr.mxu0 0.0
    %1706 = vmatpush1.msra.mxu0 0.0
    %1707 = vmatprep.subr.mxu0 0.0
    %1708 = vmatpush1.msra.mxu0 0.0
    %1709 = vmatprep.subr.mxu0 0.0
    %1710 = vmatpush1.msra.mxu0 0.0
    %1711 = vmatprep.mubr.f32.mxu0 0.0
    %1712 = vmatmul.mubr.f32.gmra.mrb[0].mxu0 %v1642
    %v1713 = vpop.f32.mrb[0].mxu0
    %v1714 = vadd.f32 0.0, %v1713
    %v1715 = vpop.f32.mrb[0].mxu0
    %1716 = vmatprep.mubr.f32.mxu0 0.0
    %1717 = vmatmul.mubr.f32.gmra.mrb[0].mxu0 %v1645
    %v1718 = vpop.f32.mrb[0].mxu0
    %v1719 = vadd.f32 0.0, %v1718
    %v1720 = vpop.f32.mrb[0].mxu0
    %1721 = vdwg.mxu0
    %s1722 = scalar_lea.vmem %s9, 8
    %v1723 = vld [vmem:[%s1722] sm:$0xff]
    %v1725 = vsel %vm1068, %v1714, 0
    %v1728 = vsel %vm1068, %v1719, 0
    %1730 = vmatprep.subr.mxu0 0.0
    %1731 = vmatpush1.msra.mxu0 %v1723
    %1732 = vmatprep.subr.mxu0 0.0
    %1733 = vmatpush1.msra.mxu0 0.0
    %1734 = vmatprep.subr.mxu0 0.0
    %1735 = vmatpush1.msra.mxu0 0.0
    %1736 = vmatprep.subr.mxu0 0.0
    %1737 = vmatpush1.msra.mxu0 0.0
    %1738 = vmatprep.subr.mxu0 0.0
    %1739 = vmatpush1.msra.mxu0 0.0
    %1740 = vmatprep.subr.mxu0 0.0
    %1741 = vmatpush1.msra.mxu0 0.0
    %1742 = vmatprep.subr.mxu0 0.0
    %1743 = vmatpush1.msra.mxu0 0.0
    %1744 = vmatprep.subr.mxu0 0.0
    %1745 = vmatpush1.msra.mxu0 0.0
    %1746 = vmatprep.subr.mxu0 0.0
    %1747 = vmatpush1.msra.mxu0 0.0
    %1748 = vmatprep.subr.mxu0 0.0
    %1749 = vmatpush1.msra.mxu0 0.0
    %1750 = vmatprep.subr.mxu0 0.0
    %1751 = vmatpush1.msra.mxu0 0.0
    %1752 = vmatprep.subr.mxu0 0.0
    %1753 = vmatpush1.msra.mxu0 0.0
    %1754 = vmatprep.subr.mxu0 0.0
    %1755 = vmatpush1.msra.mxu0 0.0
    %1756 = vmatprep.subr.mxu0 0.0
    %1757 = vmatpush1.msra.mxu0 0.0
    %1758 = vmatprep.subr.mxu0 0.0
    %1759 = vmatpush1.msra.mxu0 0.0
    %1760 = vmatprep.subr.mxu0 0.0
    %1761 = vmatpush1.msra.mxu0 0.0
    %1762 = vmatprep.subr.mxu0 0.0
    %1763 = vmatpush1.msra.mxu0 0.0
    %1764 = vmatprep.subr.mxu0 0.0
    %1765 = vmatpush1.msra.mxu0 0.0
    %1766 = vmatprep.subr.mxu0 0.0
    %1767 = vmatpush1.msra.mxu0 0.0
    %1768 = vmatprep.subr.mxu0 0.0
    %1769 = vmatpush1.msra.mxu0 0.0
    %1770 = vmatprep.subr.mxu0 0.0
    %1771 = vmatpush1.msra.mxu0 0.0
    %1772 = vmatprep.subr.mxu0 0.0
    %1773 = vmatpush1.msra.mxu0 0.0
    %1774 = vmatprep.subr.mxu0 0.0
    %1775 = vmatpush1.msra.mxu0 0.0
    %1776 = vmatprep.subr.mxu0 0.0
    %1777 = vmatpush1.msra.mxu0 0.0
    %1778 = vmatprep.subr.mxu0 0.0
    %1779 = vmatpush1.msra.mxu0 0.0
    %1780 = vmatprep.subr.mxu0 0.0
    %1781 = vmatpush1.msra.mxu0 0.0
    %1782 = vmatprep.subr.mxu0 0.0
    %1783 = vmatpush1.msra.mxu0 0.0
    %1784 = vmatprep.subr.mxu0 0.0
    %1785 = vmatpush1.msra.mxu0 0.0
    %1786 = vmatprep.subr.mxu0 0.0
    %1787 = vmatpush1.msra.mxu0 0.0
    %1788 = vmatprep.subr.mxu0 0.0
    %1789 = vmatpush1.msra.mxu0 0.0
    %1790 = vmatprep.subr.mxu0 0.0
    %1791 = vmatpush1.msra.mxu0 0.0
    %1792 = vmatprep.subr.mxu0 0.0
    %1793 = vmatpush1.msra.mxu0 0.0
    %1794 = vmatprep.mubr.f32.mxu0 0.0
    %1795 = vmatmul.mubr.f32.gmra.mrb[0].mxu0 %v1725
    %v1796 = vpop.f32.mrb[0].mxu0
    %v1797 = vadd.f32 0.0, %v1796
    %v1798 = vpop.f32.mrb[0].mxu0
    %1799 = vmatprep.mubr.f32.mxu0 0.0
    %1800 = vmatmul.mubr.f32.gmra.mrb[0].mxu0 %v1728
    %v1801 = vpop.f32.mrb[0].mxu0
    %v1802 = vadd.f32 0.0, %v1801
    %v1803 = vpop.f32.mrb[0].mxu0
    %1804 = vdwg.mxu0
    %v1806 = vsel %vm1068, %v1187, 0
    %v1809 = vsel %vm1068, %v1188, 0
    %v1812 = vsel %vm1068, %v1326, 0
    %v1815 = vsel %vm1068, %v1327, 0
    %1817 = vmatprep.subr.mxu0 0.0
    %1818 = vmatpush1.xpose.msra.mxu0 %v1812
    %1819 = vmatprep.subr.mxu0 0.0
    %1820 = vmatpush1.xpose.msra.mxu0 %v1815
    %1821 = vmatprep.subr.mxu0 0.0
    %1822 = vmatpush1.xpose.msra.mxu0 0.0
    %1823 = vmatprep.subr.mxu0 0.0
    %1824 = vmatpush1.xpose.msra.mxu0 0.0
    %1825 = vmatprep.subr.mxu0 0.0
    %1826 = vmatpush1.xpose.msra.mxu0 0.0
    %1827 = vmatprep.subr.mxu0 0.0
    %1828 = vmatpush1.xpose.msra.mxu0 0.0
    %1829 = vmatprep.subr.mxu0 0.0
    %1830 = vmatpush1.xpose.msra.mxu0 0.0
    %1831 = vmatprep.subr.mxu0 0.0
    %1832 = vmatpush1.xpose.msra.mxu0 0.0
    %1833 = vmatprep.subr.mxu0 0.0
    %1834 = vmatpush1.xpose.msra.mxu0 0.0
    %1835 = vmatprep.subr.mxu0 0.0
    %1836 = vmatpush1.xpose.msra.mxu0 0.0
    %1837 = vmatprep.subr.mxu0 0.0
    %1838 = vmatpush1.xpose.msra.mxu0 0.0
    %1839 = vmatprep.subr.mxu0 0.0
    %1840 = vmatpush1.xpose.msra.mxu0 0.0
    %1841 = vmatprep.subr.mxu0 0.0
    %1842 = vmatpush1.xpose.msra.mxu0 0.0
    %1843 = vmatprep.subr.mxu0 0.0
    %1844 = vmatpush1.xpose.msra.mxu0 0.0
    %1845 = vmatprep.subr.mxu0 0.0
    %1846 = vmatpush1.xpose.msra.mxu0 0.0
    %1847 = vmatprep.subr.mxu0 0.0
    %1848 = vmatpush1.xpose.msra.mxu0 0.0
    %1849 = vmatprep.subr.mxu0 0.0
    %1850 = vmatpush1.xpose.msra.mxu0 0.0
    %1851 = vmatprep.subr.mxu0 0.0
    %1852 = vmatpush1.xpose.msra.mxu0 0.0
    %1853 = vmatprep.subr.mxu0 0.0
    %1854 = vmatpush1.xpose.msra.mxu0 0.0
    %1855 = vmatprep.subr.mxu0 0.0
    %1856 = vmatpush1.xpose.msra.mxu0 0.0
    %1857 = vmatprep.subr.mxu0 0.0
    %1858 = vmatpush1.xpose.msra.mxu0 0.0
    %1859 = vmatprep.subr.mxu0 0.0
    %1860 = vmatpush1.xpose.msra.mxu0 0.0
    %1861 = vmatprep.subr.mxu0 0.0
    %1862 = vmatpush1.xpose.msra.mxu0 0.0
    %1863 = vmatprep.subr.mxu0 0.0
    %1864 = vmatpush1.xpose.msra.mxu0 0.0
    %1865 = vmatprep.subr.mxu0 0.0
    %1866 = vmatpush1.xpose.msra.mxu0 0.0
    %1867 = vmatprep.subr.mxu0 0.0
    %1868 = vmatpush1.xpose.msra.mxu0 0.0
    %1869 = vmatprep.subr.mxu0 0.0
    %1870 = vmatpush1.xpose.msra.mxu0 0.0
    %1871 = vmatprep.subr.mxu0 0.0
    %1872 = vmatpush1.xpose.msra.mxu0 0.0
    %1873 = vmatprep.subr.mxu0 0.0
    %1874 = vmatpush1.xpose.msra.mxu0 0.0
    %1875 = vmatprep.subr.mxu0 0.0
    %1876 = vmatpush1.xpose.msra.mxu0 0.0
    %1877 = vmatprep.subr.mxu0 0.0
    %1878 = vmatpush1.xpose.msra.mxu0 0.0
    %1879 = vmatprep.subr.mxu0 0.0
    %1880 = vmatpush1.xpose.msra.mxu0 0.0
    %1881 = vmatprep.mubr.f32.mxu0 0.0
    %1882 = vmatmul.mubr.f32.gmra.mrb[0].mxu0 %v1806
    %v1883 = vpop.f32.mrb[0].mxu0
    %v1884 = vadd.f32 %v50, %v1883
    %v1885 = vpop.f32.mrb[0].mxu0
    %1886 = vmatprep.mubr.f32.mxu0 0.0
    %1887 = vmatmul.mubr.f32.gmra.mrb[0].mxu0 %v1809
    %v1888 = vpop.f32.mrb[0].mxu0
    %v1889 = vadd.f32 %v51, %v1888
    %v1890 = vpop.f32.mrb[0].mxu0
    %1891 = vdwg.mxu0
    %v1892 = vsel %vm1427, %v1884, -inf
    %1893 = vmax.xlane.f32.xlu0 %v1892
    %v1894 = vpop.xlane.xlu0 %1893
    %v1895 = vsel %vm1427, %v1889, -inf
    %1896 = vmax.xlane.f32.xlu0 %v1895
    %v1897 = vpop.xlane.xlu0 %1896
    %v1898 = vsub.f32 %v1884, %v1894
    %v1899 = vsub.f32 %v1889, %v1897
    %v1900 = vmul.f32 %v1898, 1.442695
    %v1901 = vpow.pop %v1900
    %v1902 = vmul.f32 %v1899, 1.442695
    %v1903 = vpow.pop %v1902
    %v1904 = vsel %vm1427, %v1901, 0.0
    %1905 = vadd.xlane.f32.xlu0 %v1904
    %v1906 = vpop.xlane.xlu0 %1905
    %v1907 = vsel %vm1427, %v1903, 0.0
    %1908 = vadd.xlane.f32.xlu0 %v1907
    %v1909 = vpop.xlane.xlu0 %1908
    %v1910 = vrcp.pop %v1906
    %v1911 = vrcp.pop %v1909
    %v1912 = vmul.f32 %v1901, %v1910
    %v1913 = vmul.f32 %v1903, %v1911
    %v1915 = vsel %vm1427, %v1912, 0
    %v1918 = vsel %vm1427, %v1913, 0
    %1920 = vmatprep.subr.mxu0 0.0
    %1921 = vmatpush1.msra.mxu0 %v973
    %1922 = vmatprep.subr.mxu0 0.0
    %1923 = vmatpush1.msra.mxu0 %v978
    %1924 = vmatprep.subr.mxu0 0.0
    %1925 = vmatpush1.msra.mxu0 0.0
    %1926 = vmatprep.subr.mxu0 0.0
    %1927 = vmatpush1.msra.mxu0 0.0
    %1928 = vmatprep.subr.mxu0 0.0
    %1929 = vmatpush1.msra.mxu0 0.0
    %1930 = vmatprep.subr.mxu0 0.0
    %1931 = vmatpush1.msra.mxu0 0.0
    %1932 = vmatprep.subr.mxu0 0.0
    %1933 = vmatpush1.msra.mxu0 0.0
    %1934 = vmatprep.subr.mxu0 0.0
    %1935 = vmatpush1.msra.mxu0 0.0
    %1936 = vmatprep.subr.mxu0 0.0
    %1937 = vmatpush1.msra.mxu0 0.0
    %1938 = vmatprep.subr.mxu0 0.0
    %1939 = vmatpush1.msra.mxu0 0.0
    %1940 = vmatprep.subr.mxu0 0.0
    %1941 = vmatpush1.msra.mxu0 0.0
    %1942 = vmatprep.subr.mxu0 0.0
    %1943 = vmatpush1.msra.mxu0 0.0
    %1944 = vmatprep.subr.mxu0 0.0
    %1945 = vmatpush1.msra.mxu0 0.0
    %1946 = vmatprep.subr.mxu0 0.0
    %1947 = vmatpush1.msra.mxu0 0.0
    %1948 = vmatprep.subr.mxu0 0.0
    %1949 = vmatpush1.msra.mxu0 0.0
    %1950 = vmatprep.subr.mxu0 0.0
    %1951 = vmatpush1.msra.mxu0 0.0
    %1952 = vmatprep.subr.mxu0 0.0
    %1953 = vmatpush1.msra.mxu0 0.0
    %1954 = vmatprep.subr.mxu0 0.0
    %1955 = vmatpush1.msra.mxu0 0.0
    %1956 = vmatprep.subr.mxu0 0.0
    %1957 = vmatpush1.msra.mxu0 0.0
    %1958 = vmatprep.subr.mxu0 0.0
    %1959 = vmatpush1.msra.mxu0 0.0
    %1960 = vmatprep.subr.mxu0 0.0
    %1961 = vmatpush1.msra.mxu0 0.0
    %1962 = vmatprep.subr.mxu0 0.0
    %1963 = vmatpush1.msra.mxu0 0.0
    %1964 = vmatprep.subr.mxu0 0.0
    %1965 = vmatpush1.msra.mxu0 0.0
    %1966 = vmatprep.subr.mxu0 0.0
    %1967 = vmatpush1.msra.mxu0 0.0
    %1968 = vmatprep.subr.mxu0 0.0
    %1969 = vmatpush1.msra.mxu0 0.0
    %1970 = vmatprep.subr.mxu0 0.0
    %1971 = vmatpush1.msra.mxu0 0.0
    %1972 = vmatprep.subr.mxu0 0.0
    %1973 = vmatpush1.msra.mxu0 0.0
    %1974 = vmatprep.subr.mxu0 0.0
    %1975 = vmatpush1.msra.mxu0 0.0
    %1976 = vmatprep.subr.mxu0 0.0
    %1977 = vmatpush1.msra.mxu0 0.0
    %1978 = vmatprep.subr.mxu0 0.0
    %1979 = vmatpush1.msra.mxu0 0.0
    %1980 = vmatprep.subr.mxu0 0.0
    %1981 = vmatpush1.msra.mxu0 0.0
    %1982 = vmatprep.subr.mxu0 0.0
    %1983 = vmatpush1.msra.mxu0 0.0
    %1984 = vmatprep.mubr.f32.mxu0 0.0
    %1985 = vmatmul.mubr.f32.gmra.mrb[0].mxu0 %v1915
    %v1986 = vpop.f32.mrb[0].mxu0
    %v1987 = vadd.f32 0.0, %v1986
    %v1988 = vpop.f32.mrb[0].mxu0
    %1989 = vmatprep.mubr.f32.mxu0 0.0
    %1990 = vmatmul.mubr.f32.gmra.mrb[0].mxu0 %v1918
    %v1991 = vpop.f32.mrb[0].mxu0
    %v1992 = vadd.f32 0.0, %v1991
    %v1993 = vpop.f32.mrb[0].mxu0
    %1994 = vdwg.mxu0
    %s1995 = scalar_lea.vmem %s9, 16
    %v1996 = vld [vmem:[%s1995] sm:$0xff]
    %v1998 = vsel %vm1068, %v1987, 0
    %v2001 = vsel %vm1068, %v1992, 0
    %2003 = vmatprep.subr.mxu0 0.0
    %2004 = vmatpush1.msra.mxu0 %v1996
    %2005 = vmatprep.subr.mxu0 0.0
    %2006 = vmatpush1.msra.mxu0 0.0
    %2007 = vmatprep.subr.mxu0 0.0
    %2008 = vmatpush1.msra.mxu0 0.0
    %2009 = vmatprep.subr.mxu0 0.0
    %2010 = vmatpush1.msra.mxu0 0.0
    %2011 = vmatprep.subr.mxu0 0.0
    %2012 = vmatpush1.msra.mxu0 0.0
    %2013 = vmatprep.subr.mxu0 0.0
    %2014 = vmatpush1.msra.mxu0 0.0
    %2015 = vmatprep.subr.mxu0 0.0
    %2016 = vmatpush1.msra.mxu0 0.0
    %2017 = vmatprep.subr.mxu0 0.0
    %2018 = vmatpush1.msra.mxu0 0.0
    %2019 = vmatprep.subr.mxu0 0.0
    %2020 = vmatpush1.msra.mxu0 0.0
    %2021 = vmatprep.subr.mxu0 0.0
    %2022 = vmatpush1.msra.mxu0 0.0
    %2023 = vmatprep.subr.mxu0 0.0
    %2024 = vmatpush1.msra.mxu0 0.0
    %2025 = vmatprep.subr.mxu0 0.0
    %2026 = vmatpush1.msra.mxu0 0.0
    %2027 = vmatprep.subr.mxu0 0.0
    %2028 = vmatpush1.msra.mxu0 0.0
    %2029 = vmatprep.subr.mxu0 0.0
    %2030 = vmatpush1.msra.mxu0 0.0
    %2031 = vmatprep.subr.mxu0 0.0
    %2032 = vmatpush1.msra.mxu0 0.0
    %2033 = vmatprep.subr.mxu0 0.0
    %2034 = vmatpush1.msra.mxu0 0.0
    %2035 = vmatprep.subr.mxu0 0.0
    %2036 = vmatpush1.msra.mxu0 0.0
    %2037 = vmatprep.subr.mxu0 0.0
    %2038 = vmatpush1.msra.mxu0 0.0
    %2039 = vmatprep.subr.mxu0 0.0
    %2040 = vmatpush1.msra.mxu0 0.0
    %2041 = vmatprep.subr.mxu0 0.0
    %2042 = vmatpush1.msra.mxu0 0.0
    %2043 = vmatprep.subr.mxu0 0.0
    %2044 = vmatpush1.msra.mxu0 0.0
    %2045 = vmatprep.subr.mxu0 0.0
    %2046 = vmatpush1.msra.mxu0 0.0
    %2047 = vmatprep.subr.mxu0 0.0
    %2048 = vmatpush1.msra.mxu0 0.0
    %2049 = vmatprep.subr.mxu0 0.0
    %2050 = vmatpush1.msra.mxu0 0.0
    %2051 = vmatprep.subr.mxu0 0.0
    %2052 = vmatpush1.msra.mxu0 0.0
    %2053 = vmatprep.subr.mxu0 0.0
    %2054 = vmatpush1.msra.mxu0 0.0
    %2055 = vmatprep.subr.mxu0 0.0
    %2056 = vmatpush1.msra.mxu0 0.0
    %2057 = vmatprep.subr.mxu0 0.0
    %2058 = vmatpush1.msra.mxu0 0.0
    %2059 = vmatprep.subr.mxu0 0.0
    %2060 = vmatpush1.msra.mxu0 0.0
    %2061 = vmatprep.subr.mxu0 0.0
    %2062 = vmatpush1.msra.mxu0 0.0
    %2063 = vmatprep.subr.mxu0 0.0
    %2064 = vmatpush1.msra.mxu0 0.0
    %2065 = vmatprep.subr.mxu0 0.0
    %2066 = vmatpush1.msra.mxu0 0.0
    %2067 = vmatprep.mubr.f32.mxu0 0.0
    %2068 = vmatmul.mubr.f32.gmra.mrb[0].mxu0 %v1998
    %v2069 = vpop.f32.mrb[0].mxu0
    %v2070 = vadd.f32 0.0, %v2069
    %v2071 = vpop.f32.mrb[0].mxu0
    %2072 = vmatprep.mubr.f32.mxu0 0.0
    %2073 = vmatmul.mubr.f32.gmra.mrb[0].mxu0 %v2001
    %v2074 = vpop.f32.mrb[0].mxu0
    %v2075 = vadd.f32 0.0, %v2074
    %v2076 = vpop.f32.mrb[0].mxu0
    %2077 = vdwg.mxu0
    %v2079 = vsel %vm1068, %v1199, 0
    %v2082 = vsel %vm1068, %v1200, 0
    %v2085 = vsel %vm1068, %v1338, 0
    %v2088 = vsel %vm1068, %v1339, 0
    %2090 = vmatprep.subr.mxu0 0.0
    %2091 = vmatpush1.xpose.msra.mxu0 %v2085
    %2092 = vmatprep.subr.mxu0 0.0
    %2093 = vmatpush1.xpose.msra.mxu0 %v2088
    %2094 = vmatprep.subr.mxu0 0.0
    %2095 = vmatpush1.xpose.msra.mxu0 0.0
    %2096 = vmatprep.subr.mxu0 0.0
    %2097 = vmatpush1.xpose.msra.mxu0 0.0
    %2098 = vmatprep.subr.mxu0 0.0
    %2099 = vmatpush1.xpose.msra.mxu0 0.0
    %2100 = vmatprep.subr.mxu0 0.0
    %2101 = vmatpush1.xpose.msra.mxu0 0.0
    %2102 = vmatprep.subr.mxu0 0.0
    %2103 = vmatpush1.xpose.msra.mxu0 0.0
    %2104 = vmatprep.subr.mxu0 0.0
    %2105 = vmatpush1.xpose.msra.mxu0 0.0
    %2106 = vmatprep.subr.mxu0 0.0
    %2107 = vmatpush1.xpose.msra.mxu0 0.0
    %2108 = vmatprep.subr.mxu0 0.0
    %2109 = vmatpush1.xpose.msra.mxu0 0.0
    %2110 = vmatprep.subr.mxu0 0.0
    %2111 = vmatpush1.xpose.msra.mxu0 0.0
    %2112 = vmatprep.subr.mxu0 0.0
    %2113 = vmatpush1.xpose.msra.mxu0 0.0
    %2114 = vmatprep.subr.mxu0 0.0
    %2115 = vmatpush1.xpose.msra.mxu0 0.0
    %2116 = vmatprep.subr.mxu0 0.0
    %2117 = vmatpush1.xpose.msra.mxu0 0.0
    %2118 = vmatprep.subr.mxu0 0.0
    %2119 = vmatpush1.xpose.msra.mxu0 0.0
    %2120 = vmatprep.subr.mxu0 0.0
    %2121 = vmatpush1.xpose.msra.mxu0 0.0
    %2122 = vmatprep.subr.mxu0 0.0
    %2123 = vmatpush1.xpose.msra.mxu0 0.0
    %2124 = vmatprep.subr.mxu0 0.0
    %2125 = vmatpush1.xpose.msra.mxu0 0.0
    %2126 = vmatprep.subr.mxu0 0.0
    %2127 = vmatpush1.xpose.msra.mxu0 0.0
    %2128 = vmatprep.subr.mxu0 0.0
    %2129 = vmatpush1.xpose.msra.mxu0 0.0
    %2130 = vmatprep.subr.mxu0 0.0
    %2131 = vmatpush1.xpose.msra.mxu0 0.0
    %2132 = vmatprep.subr.mxu0 0.0
    %2133 = vmatpush1.xpose.msra.mxu0 0.0
    %2134 = vmatprep.subr.mxu0 0.0
    %2135 = vmatpush1.xpose.msra.mxu0 0.0
    %2136 = vmatprep.subr.mxu0 0.0
    %2137 = vmatpush1.xpose.msra.mxu0 0.0
    %2138 = vmatprep.subr.mxu0 0.0
    %2139 = vmatpush1.xpose.msra.mxu0 0.0
    %2140 = vmatprep.subr.mxu0 0.0
    %2141 = vmatpush1.xpose.msra.mxu0 0.0
    %2142 = vmatprep.subr.mxu0 0.0
    %2143 = vmatpush1.xpose.msra.mxu0 0.0
    %2144 = vmatprep.subr.mxu0 0.0
    %2145 = vmatpush1.xpose.msra.mxu0 0.0
    %2146 = vmatprep.subr.mxu0 0.0
    %2147 = vmatpush1.xpose.msra.mxu0 0.0
    %2148 = vmatprep.subr.mxu0 0.0
    %2149 = vmatpush1.xpose.msra.mxu0 0.0
    %2150 = vmatprep.subr.mxu0 0.0
    %2151 = vmatpush1.xpose.msra.mxu0 0.0
    %2152 = vmatprep.subr.mxu0 0.0
    %2153 = vmatpush1.xpose.msra.mxu0 0.0
    %2154 = vmatprep.mubr.f32.mxu0 0.0
    %2155 = vmatmul.mubr.f32.gmra.mrb[0].mxu0 %v2079
    %v2156 = vpop.f32.mrb[0].mxu0
    %v2157 = vadd.f32 %v50, %v2156
    %v2158 = vpop.f32.mrb[0].mxu0
    %2159 = vmatprep.mubr.f32.mxu0 0.0
    %2160 = vmatmul.mubr.f32.gmra.mrb[0].mxu0 %v2082
    %v2161 = vpop.f32.mrb[0].mxu0
    %v2162 = vadd.f32 %v51, %v2161
    %v2163 = vpop.f32.mrb[0].mxu0
    %2164 = vdwg.mxu0
    %v2165 = vsel %vm1427, %v2157, -inf
    %2166 = vmax.xlane.f32.xlu0 %v2165
    %v2167 = vpop.xlane.xlu0 %2166
    %v2168 = vsel %vm1427, %v2162, -inf
    %2169 = vmax.xlane.f32.xlu0 %v2168
    %v2170 = vpop.xlane.xlu0 %2169
    %v2171 = vsub.f32 %v2157, %v2167
    %v2172 = vsub.f32 %v2162, %v2170
    %v2173 = vmul.f32 %v2171, 1.442695
    %v2174 = vpow.pop %v2173
    %v2175 = vmul.f32 %v2172, 1.442695
    %v2176 = vpow.pop %v2175
    %v2177 = vsel %vm1427, %v2174, 0.0
    %2178 = vadd.xlane.f32.xlu0 %v2177
    %v2179 = vpop.xlane.xlu0 %2178
    %v2180 = vsel %vm1427, %v2176, 0.0
    %2181 = vadd.xlane.f32.xlu0 %v2180
    %v2182 = vpop.xlane.xlu0 %2181
    %v2183 = vrcp.pop %v2179
    %v2184 = vrcp.pop %v2182
    %v2185 = vmul.f32 %v2174, %v2183
    %v2186 = vmul.f32 %v2176, %v2184
    %v2188 = vsel %vm1427, %v2185, 0
    %v2191 = vsel %vm1427, %v2186, 0
    %2193 = vmatprep.subr.mxu0 0.0
    %2194 = vmatpush1.msra.mxu0 %v1053
    %2195 = vmatprep.subr.mxu0 0.0
    %2196 = vmatpush1.msra.mxu0 %v1058
    %2197 = vmatprep.subr.mxu0 0.0
    %2198 = vmatpush1.msra.mxu0 0.0
    %2199 = vmatprep.subr.mxu0 0.0
    %2200 = vmatpush1.msra.mxu0 0.0
    %2201 = vmatprep.subr.mxu0 0.0
    %2202 = vmatpush1.msra.mxu0 0.0
    %2203 = vmatprep.subr.mxu0 0.0
    %2204 = vmatpush1.msra.mxu0 0.0
    %2205 = vmatprep.subr.mxu0 0.0
    %2206 = vmatpush1.msra.mxu0 0.0
    %2207 = vmatprep.subr.mxu0 0.0
    %2208 = vmatpush1.msra.mxu0 0.0
    %2209 = vmatprep.subr.mxu0 0.0
    %2210 = vmatpush1.msra.mxu0 0.0
    %2211 = vmatprep.subr.mxu0 0.0
    %2212 = vmatpush1.msra.mxu0 0.0
    %2213 = vmatprep.subr.mxu0 0.0
    %2214 = vmatpush1.msra.mxu0 0.0
    %2215 = vmatprep.subr.mxu0 0.0
    %2216 = vmatpush1.msra.mxu0 0.0
    %2217 = vmatprep.subr.mxu0 0.0
    %2218 = vmatpush1.msra.mxu0 0.0
    %2219 = vmatprep.subr.mxu0 0.0
    %2220 = vmatpush1.msra.mxu0 0.0
    %2221 = vmatprep.subr.mxu0 0.0
    %2222 = vmatpush1.msra.mxu0 0.0
    %2223 = vmatprep.subr.mxu0 0.0
    %2224 = vmatpush1.msra.mxu0 0.0
    %2225 = vmatprep.subr.mxu0 0.0
    %2226 = vmatpush1.msra.mxu0 0.0
    %2227 = vmatprep.subr.mxu0 0.0
    %2228 = vmatpush1.msra.mxu0 0.0
    %2229 = vmatprep.subr.mxu0 0.0
    %2230 = vmatpush1.msra.mxu0 0.0
    %2231 = vmatprep.subr.mxu0 0.0
    %2232 = vmatpush1.msra.mxu0 0.0
    %2233 = vmatprep.subr.mxu0 0.0
    %2234 = vmatpush1.msra.mxu0 0.0
    %2235 = vmatprep.subr.mxu0 0.0
    %2236 = vmatpush1.msra.mxu0 0.0
    %2237 = vmatprep.subr.mxu0 0.0
    %2238 = vmatpush1.msra.mxu0 0.0
    %2239 = vmatprep.subr.mxu0 0.0
    %2240 = vmatpush1.msra.mxu0 0.0
    %2241 = vmatprep.subr.mxu0 0.0
    %2242 = vmatpush1.msra.mxu0 0.0
    %2243 = vmatprep.subr.mxu0 0.0
    %2244 = vmatpush1.msra.mxu0 0.0
    %2245 = vmatprep.subr.mxu0 0.0
    %2246 = vmatpush1.msra.mxu0 0.0
    %2247 = vmatprep.subr.mxu0 0.0
    %2248 = vmatpush1.msra.mxu0 0.0
    %2249 = vmatprep.subr.mxu0 0.0
    %2250 = vmatpush1.msra.mxu0 0.0
    %2251 = vmatprep.subr.mxu0 0.0
    %2252 = vmatpush1.msra.mxu0 0.0
    %2253 = vmatprep.subr.mxu0 0.0
    %2254 = vmatpush1.msra.mxu0 0.0
    %2255 = vmatprep.subr.mxu0 0.0
    %2256 = vmatpush1.msra.mxu0 0.0
    %2257 = vmatprep.mubr.f32.mxu0 0.0
    %2258 = vmatmul.mubr.f32.gmra.mrb[0].mxu0 %v2188
    %v2259 = vpop.f32.mrb[0].mxu0
    %v2260 = vadd.f32 0.0, %v2259
    %v2261 = vpop.f32.mrb[0].mxu0
    %2262 = vmatprep.mubr.f32.mxu0 0.0
    %2263 = vmatmul.mubr.f32.gmra.mrb[0].mxu0 %v2191
    %v2264 = vpop.f32.mrb[0].mxu0
    %v2265 = vadd.f32 0.0, %v2264
    %v2266 = vpop.f32.mrb[0].mxu0
    %2267 = vdwg.mxu0
    %s2268 = scalar_lea.vmem %s9, 24
    %v2269 = vld [vmem:[%s2268] sm:$0xff]
    %v2271 = vsel %vm1068, %v2260, 0
    %v2274 = vsel %vm1068, %v2265, 0
    %2276 = vmatprep.subr.mxu0 0.0
    %2277 = vmatpush1.msra.mxu0 %v2269
    %2278 = vmatprep.subr.mxu0 0.0
    %2279 = vmatpush1.msra.mxu0 0.0
    %2280 = vmatprep.subr.mxu0 0.0
    %2281 = vmatpush1.msra.mxu0 0.0
    %2282 = vmatprep.subr.mxu0 0.0
    %2283 = vmatpush1.msra.mxu0 0.0
    %2284 = vmatprep.subr.mxu0 0.0
    %2285 = vmatpush1.msra.mxu0 0.0
    %2286 = vmatprep.subr.mxu0 0.0
    %2287 = vmatpush1.msra.mxu0 0.0
    %2288 = vmatprep.subr.mxu0 0.0
    %2289 = vmatpush1.msra.mxu0 0.0
    %2290 = vmatprep.subr.mxu0 0.0
    %2291 = vmatpush1.msra.mxu0 0.0
    %2292 = vmatprep.subr.mxu0 0.0
    %2293 = vmatpush1.msra.mxu0 0.0
    %2294 = vmatprep.subr.mxu0 0.0
    %2295 = vmatpush1.msra.mxu0 0.0
    %2296 = vmatprep.subr.mxu0 0.0
    %2297 = vmatpush1.msra.mxu0 0.0
    %2298 = vmatprep.subr.mxu0 0.0
    %2299 = vmatpush1.msra.mxu0 0.0
    %2300 = vmatprep.subr.mxu0 0.0
    %2301 = vmatpush1.msra.mxu0 0.0
    %2302 = vmatprep.subr.mxu0 0.0
    %2303 = vmatpush1.msra.mxu0 0.0
    %2304 = vmatprep.subr.mxu0 0.0
    %2305 = vmatpush1.msra.mxu0 0.0
    %2306 = vmatprep.subr.mxu0 0.0
    %2307 = vmatpush1.msra.mxu0 0.0
    %2308 = vmatprep.subr.mxu0 0.0
    %2309 = vmatpush1.msra.mxu0 0.0
    %2310 = vmatprep.subr.mxu0 0.0
    %2311 = vmatpush1.msra.mxu0 0.0
    %2312 = vmatprep.subr.mxu0 0.0
    %2313 = vmatpush1.msra.mxu0 0.0
    %2314 = vmatprep.subr.mxu0 0.0
    %2315 = vmatpush1.msra.mxu0 0.0
    %2316 = vmatprep.subr.mxu0 0.0
    %2317 = vmatpush1.msra.mxu0 0.0
    %2318 = vmatprep.subr.mxu0 0.0
    %2319 = vmatpush1.msra.mxu0 0.0
    %2320 = vmatprep.subr.mxu0 0.0
    %2321 = vmatpush1.msra.mxu0 0.0
    %2322 = vmatprep.subr.mxu0 0.0
    %2323 = vmatpush1.msra.mxu0 0.0
    %2324 = vmatprep.subr.mxu0 0.0
    %2325 = vmatpush1.msra.mxu0 0.0
    %2326 = vmatprep.subr.mxu0 0.0
    %2327 = vmatpush1.msra.mxu0 0.0
    %2328 = vmatprep.subr.mxu0 0.0
    %2329 = vmatpush1.msra.mxu0 0.0
    %2330 = vmatprep.subr.mxu0 0.0
    %2331 = vmatpush1.msra.mxu0 0.0
    %2332 = vmatprep.subr.mxu0 0.0
    %2333 = vmatpush1.msra.mxu0 0.0
    %2334 = vmatprep.subr.mxu0 0.0
    %2335 = vmatpush1.msra.mxu0 0.0
    %2336 = vmatprep.subr.mxu0 0.0
    %2337 = vmatpush1.msra.mxu0 0.0
    %2338 = vmatprep.subr.mxu0 0.0
    %2339 = vmatpush1.msra.mxu0 0.0
    %2340 = vmatprep.mubr.f32.mxu0 0.0
    %2341 = vmatmul.mubr.f32.gmra.mrb[0].mxu0 %v2271
    %v2342 = vpop.f32.mrb[0].mxu0
    %v2343 = vadd.f32 0.0, %v2342
    %v2344 = vpop.f32.mrb[0].mxu0
    %2345 = vmatprep.mubr.f32.mxu0 0.0
    %2346 = vmatmul.mubr.f32.gmra.mrb[0].mxu0 %v2274
    %v2347 = vpop.f32.mrb[0].mxu0
    %v2348 = vadd.f32 0.0, %v2347
    %v2349 = vpop.f32.mrb[0].mxu0
    %2350 = vdwg.mxu0
    %v2352 = vsel %vm1068, %v1523, 0
    %v2355 = vsel %vm1068, %v1528, 0
    %2357 = vmatprep.subr.mxu0 0.0
    %2358 = vmatpush1.msra.mxu0 %v1531
    %2359 = vmatprep.subr.mxu0 0.0
    %2360 = vmatpush1.msra.mxu0 0.0
    %2361 = vmatprep.subr.mxu0 0.0
    %2362 = vmatpush1.msra.mxu0 0.0
    %2363 = vmatprep.subr.mxu0 0.0
    %2364 = vmatpush1.msra.mxu0 0.0
    %2365 = vmatprep.subr.mxu0 0.0
    %2366 = vmatpush1.msra.mxu0 0.0
    %2367 = vmatprep.subr.mxu0 0.0
    %2368 = vmatpush1.msra.mxu0 0.0
    %2369 = vmatprep.subr.mxu0 0.0
    %2370 = vmatpush1.msra.mxu0 0.0
    %2371 = vmatprep.subr.mxu0 0.0
    %2372 = vmatpush1.msra.mxu0 0.0
    %2373 = vmatprep.subr.mxu0 0.0
    %2374 = vmatpush1.msra.mxu0 0.0
    %2375 = vmatprep.subr.mxu0 0.0
    %2376 = vmatpush1.msra.mxu0 0.0
    %2377 = vmatprep.subr.mxu0 0.0
    %2378 = vmatpush1.msra.mxu0 0.0
    %2379 = vmatprep.subr.mxu0 0.0
    %2380 = vmatpush1.msra.mxu0 0.0
    %2381 = vmatprep.subr.mxu0 0.0
    %2382 = vmatpush1.msra.mxu0 0.0
    %2383 = vmatprep.subr.mxu0 0.0
    %2384 = vmatpush1.msra.mxu0 0.0
    %2385 = vmatprep.subr.mxu0 0.0
    %2386 = vmatpush1.msra.mxu0 0.0
    %2387 = vmatprep.subr.mxu0 0.0
    %2388 = vmatpush1.msra.mxu0 0.0
    %2389 = vmatprep.subr.mxu0 0.0
    %2390 = vmatpush1.msra.mxu0 0.0
    %2391 = vmatprep.subr.mxu0 0.0
    %2392 = vmatpush1.msra.mxu0 0.0
    %2393 = vmatprep.subr.mxu0 0.0
    %2394 = vmatpush1.msra.mxu0 0.0
    %2395 = vmatprep.subr.mxu0 0.0
    %2396 = vmatpush1.msra.mxu0 0.0
    %2397 = vmatprep.subr.mxu0 0.0
    %2398 = vmatpush1.msra.mxu0 0.0
    %2399 = vmatprep.subr.mxu0 0.0
    %2400 = vmatpush1.msra.mxu0 0.0
    %2401 = vmatprep.subr.mxu0 0.0
    %2402 = vmatpush1.msra.mxu0 0.0
    %2403 = vmatprep.subr.mxu0 0.0
    %2404 = vmatpush1.msra.mxu0 0.0
    %2405 = vmatprep.subr.mxu0 0.0
    %2406 = vmatpush1.msra.mxu0 0.0
    %2407 = vmatprep.subr.mxu0 0.0
    %2408 = vmatpush1.msra.mxu0 0.0
    %2409 = vmatprep.subr.mxu0 0.0
    %2410 = vmatpush1.msra.mxu0 0.0
    %2411 = vmatprep.subr.mxu0 0.0
    %2412 = vmatpush1.msra.mxu0 0.0
    %2413 = vmatprep.subr.mxu0 0.0
    %2414 = vmatpush1.msra.mxu0 0.0
    %2415 = vmatprep.subr.mxu0 0.0
    %2416 = vmatpush1.msra.mxu0 0.0
    %2417 = vmatprep.subr.mxu0 0.0
    %2418 = vmatpush1.msra.mxu0 0.0
    %2419 = vmatprep.subr.mxu0 0.0
    %2420 = vmatpush1.msra.mxu0 0.0
    %2421 = vmatprep.mubr.f32.mxu0 0.0
    %2422 = vmatmul.mubr.f32.gmra.mrb[0].mxu0 %v2352
    %v2423 = vpop.f32.mrb[0].mxu0
    %v2424 = vadd.f32 %v1797, %v2423
    %v2425 = vpop.f32.mrb[0].mxu0
    %2426 = vmatprep.mubr.f32.mxu0 0.0
    %2427 = vmatmul.mubr.f32.gmra.mrb[0].mxu0 %v2355
    %v2428 = vpop.f32.mrb[0].mxu0
    %v2429 = vadd.f32 %v1802, %v2428
    %v2430 = vpop.f32.mrb[0].mxu0
    %2431 = vdwg.mxu0
    %v2432 = vadd.f32 %v2424, %v2070
    %v2433 = vadd.f32 %v2429, %v2075
    %v2434 = vadd.f32 %v2432, %v2343
    %v2435 = vadd.f32 %v2433, %v2348
    %v2436 = vadd.f32 %v48, %v2434
    %v2437 = vadd.f32 %v49, %v2435
    %v2438 = vld [vmem:[%s10] sm:$0x1]
    %v2439 = vld [vmem:[%s11] sm:$0x1]
    %v2440 = vsel %vm54, %v2436, 0.0
    %2441 = vadd.xlane.f32.xlu0 %v2440
    %v2442 = vpop.xlane.xlu0 %2441
    %v2443 = vsel %vm54, %v2437, 0.0
    %2444 = vadd.xlane.f32.xlu0 %v2443
    %v2445 = vpop.xlane.xlu0 %2444
    %v2446 = vmul.f32 %v2442, %v61
    %v2447 = vmul.f32 %v2445, %v61
    %v2448 = vsub.f32 %v2436, %v2446
    %v2449 = vsub.f32 %v2437, %v2447
    %v2450 = vmul.f32 %v2448, %v2448
    %v2451 = vmul.f32 %v2449, %v2449
    %v2452 = vsel %vm54, %v2450, 0.0
    %2453 = vadd.xlane.f32.xlu0 %v2452
    %v2454 = vpop.xlane.xlu0 %2453
    %v2455 = vsel %vm54, %v2451, 0.0
    %2456 = vadd.xlane.f32.xlu0 %v2455
    %v2457 = vpop.xlane.xlu0 %2456
    %v2458 = vmul.f32 %v2454, %v61
    %v2459 = vmul.f32 %v2457, %v61
    %v2460 = vadd.f32 %v2458, 1e-05
    %v2461 = vadd.f32 %v2459, 1e-05
    %v2462 = vrsqrt.pop %v2460
    %v2463 = vrsqrt.pop %v2461
    %v2464 = vmul.f32 %v2448, %v2462
    %v2465 = vmul.f32 %v2449, %v2463
    %v2467 = vlaneseq
    %v2468 = vshrl.u32 %v2467, 7
    %v2469 = vsub.s32 0, %v2468
    %v2470 = vrot.slane %v2438, %v2469
    %v2472 = vmul.f32 %v2464, %v2470
    %v2473 = vmul.f32 %v2465, %v2470
    %v2475 = vlaneseq
    %v2476 = vshrl.u32 %v2475, 7
    %v2477 = vsub.s32 0, %v2476
    %v2478 = vrot.slane %v2439, %v2477
    %v2480 = vadd.f32 %v2472, %v2478
    %v2481 = vadd.f32 %v2473, %v2478
    %v2482 = vld [vmem:[%s12] sm:$0xff]
    %v2483 = vld [vmem:[%s12 + $0x8] sm:$0xff]
    %v2484 = vld [vmem:[%s12 + $0x10] sm:$0xff]
    %v2485 = vld [vmem:[%s12 + $0x18] sm:$0xff]
    %v2486 = vld [vmem:[%s12 + $0x20] sm:$0xff]
    %v2487 = vld [vmem:[%s12 + $0x28] sm:$0xff]
    %v2488 = vld [vmem:[%s12 + $0x30] sm:$0xff]
    %v2489 = vld [vmem:[%s12 + $0x38] sm:$0xff]
    %v2490 = vld [vmem:[%s12 + $0x40] sm:$0xff]
    %v2491 = vld [vmem:[%s12 + $0x48] sm:$0xff]
    %v2492 = vld [vmem:[%s12 + $0x50] sm:$0xff]
    %v2493 = vld [vmem:[%s12 + $0x58] sm:$0xff]
    %v2494 = vld [vmem:[%s12 + $0x60] sm:$0xff]
    %v2495 = vld [vmem:[%s12 + $0x68] sm:$0xff]
    %v2496 = vld [vmem:[%s12 + $0x70] sm:$0xff]
    %v2497 = vld [vmem:[%s12 + $0x78] sm:$0xff]
    %v2499 = vsel %vm54, %v2480, 0
    %v2502 = vsel %vm54, %v2481, 0
    %2504 = vmatprep.subr.mxu0 %v2483
    %2505 = vmatpush1.msra.mxu0 %v2482
    %2506 = vmatprep.subr.mxu0 %v2487
    %2507 = vmatpush1.msra.mxu0 %v2486
    %2508 = vmatprep.subr.mxu0 %v2491
    %2509 = vmatpush1.msra.mxu0 %v2490
    %2510 = vmatprep.subr.mxu0 %v2495
    %2511 = vmatpush1.msra.mxu0 %v2494
    %2512 = vmatprep.subr.mxu0 0.0
    %2513 = vmatpush1.msra.mxu0 0.0
    %2514 = vmatprep.subr.mxu0 0.0
    %2515 = vmatpush1.msra.mxu0 0.0
    %2516 = vmatprep.subr.mxu0 0.0
    %2517 = vmatpush1.msra.mxu0 0.0
    %2518 = vmatprep.subr.mxu0 0.0
    %2519 = vmatpush1.msra.mxu0 0.0
    %2520 = vmatprep.subr.mxu0 0.0
    %2521 = vmatpush1.msra.mxu0 0.0
    %2522 = vmatprep.subr.mxu0 0.0
    %2523 = vmatpush1.msra.mxu0 0.0
    %2524 = vmatprep.subr.mxu0 0.0
    %2525 = vmatpush1.msra.mxu0 0.0
    %2526 = vmatprep.subr.mxu0 0.0
    %2527 = vmatpush1.msra.mxu0 0.0
    %2528 = vmatprep.subr.mxu0 0.0
    %2529 = vmatpush1.msra.mxu0 0.0
    %2530 = vmatprep.subr.mxu0 0.0
    %2531 = vmatpush1.msra.mxu0 0.0
    %2532 = vmatprep.subr.mxu0 0.0
    %2533 = vmatpush1.msra.mxu0 0.0
    %2534 = vmatprep.subr.mxu0 0.0
    %2535 = vmatpush1.msra.mxu0 0.0
    %2536 = vmatprep.subr.mxu0 0.0
    %2537 = vmatpush1.msra.mxu0 0.0
    %2538 = vmatprep.subr.mxu0 0.0
    %2539 = vmatpush1.msra.mxu0 0.0
    %2540 = vmatprep.subr.mxu0 0.0
    %2541 = vmatpush1.msra.mxu0 0.0
    %2542 = vmatprep.subr.mxu0 0.0
    %2543 = vmatpush1.msra.mxu0 0.0
    %2544 = vmatprep.subr.mxu0 0.0
    %2545 = vmatpush1.msra.mxu0 0.0
    %2546 = vmatprep.subr.mxu0 0.0
    %2547 = vmatpush1.msra.mxu0 0.0
    %2548 = vmatprep.subr.mxu0 0.0
    %2549 = vmatpush1.msra.mxu0 0.0
    %2550 = vmatprep.subr.mxu0 0.0
    %2551 = vmatpush1.msra.mxu0 0.0
    %2552 = vmatprep.subr.mxu0 0.0
    %2553 = vmatpush1.msra.mxu0 0.0
    %2554 = vmatprep.subr.mxu0 0.0
    %2555 = vmatpush1.msra.mxu0 0.0
    %2556 = vmatprep.subr.mxu0 0.0
    %2557 = vmatpush1.msra.mxu0 0.0
    %2558 = vmatprep.subr.mxu0 0.0
    %2559 = vmatpush1.msra.mxu0 0.0
    %2560 = vmatprep.subr.mxu0 0.0
    %2561 = vmatpush1.msra.mxu0 0.0
    %2562 = vmatprep.subr.mxu0 0.0
    %2563 = vmatpush1.msra.mxu0 0.0
    %2564 = vmatprep.subr.mxu0 0.0
    %2565 = vmatpush1.msra.mxu0 0.0
    %2566 = vmatprep.subr.mxu0 0.0
    %2567 = vmatpush1.msra.mxu0 0.0
    %2568 = vmatprep.mubr.f32.mxu0 0.0
    %2569 = vmatmul.mubr.f32.gmra.mrb[0].mxu0 %v2499
    %v2570 = vpop.f32.mrb[0].mxu0
    %v2571 = vadd.f32 0.0, %v2570
    %v2572 = vpop.f32.mrb[0].mxu0
    %v2573 = vadd.f32 0.0, %v2572
    %2574 = vmatprep.mubr.f32.mxu0 0.0
    %2575 = vmatmul.mubr.f32.gmra.mrb[0].mxu0 %v2502
    %v2576 = vpop.f32.mrb[0].mxu0
    %v2577 = vadd.f32 0.0, %v2576
    %v2578 = vpop.f32.mrb[0].mxu0
    %v2579 = vadd.f32 0.0, %v2578
    %2580 = vdwg.mxu0
    %2581 = vmatprep.subr.mxu0 %v2485
    %2582 = vmatpush1.msra.mxu0 %v2484
    %2583 = vmatprep.subr.mxu0 %v2489
    %2584 = vmatpush1.msra.mxu0 %v2488
    %2585 = vmatprep.subr.mxu0 %v2493
    %2586 = vmatpush1.msra.mxu0 %v2492
    %2587 = vmatprep.subr.mxu0 %v2497
    %2588 = vmatpush1.msra.mxu0 %v2496
    %2589 = vmatprep.subr.mxu0 0.0
    %2590 = vmatpush1.msra.mxu0 0.0
    %2591 = vmatprep.subr.mxu0 0.0
    %2592 = vmatpush1.msra.mxu0 0.0
    %2593 = vmatprep.subr.mxu0 0.0
    %2594 = vmatpush1.msra.mxu0 0.0
    %2595 = vmatprep.subr.mxu0 0.0
    %2596 = vmatpush1.msra.mxu0 0.0
    %2597 = vmatprep.subr.mxu0 0.0
    %2598 = vmatpush1.msra.mxu0 0.0
    %2599 = vmatprep.subr.mxu0 0.0
    %2600 = vmatpush1.msra.mxu0 0.0
    %2601 = vmatprep.subr.mxu0 0.0
    %2602 = vmatpush1.msra.mxu0 0.0
    %2603 = vmatprep.subr.mxu0 0.0
    %2604 = vmatpush1.msra.mxu0 0.0
    %2605 = vmatprep.subr.mxu0 0.0
    %2606 = vmatpush1.msra.mxu0 0.0
    %2607 = vmatprep.subr.mxu0 0.0
    %2608 = vmatpush1.msra.mxu0 0.0
    %2609 = vmatprep.subr.mxu0 0.0
    %2610 = vmatpush1.msra.mxu0 0.0
    %2611 = vmatprep.subr.mxu0 0.0
    %2612 = vmatpush1.msra.mxu0 0.0
    %2613 = vmatprep.subr.mxu0 0.0
    %2614 = vmatpush1.msra.mxu0 0.0
    %2615 = vmatprep.subr.mxu0 0.0
    %2616 = vmatpush1.msra.mxu0 0.0
    %2617 = vmatprep.subr.mxu0 0.0
    %2618 = vmatpush1.msra.mxu0 0.0
    %2619 = vmatprep.subr.mxu0 0.0
    %2620 = vmatpush1.msra.mxu0 0.0
    %2621 = vmatprep.subr.mxu0 0.0
    %2622 = vmatpush1.msra.mxu0 0.0
    %2623 = vmatprep.subr.mxu0 0.0
    %2624 = vmatpush1.msra.mxu0 0.0
    %2625 = vmatprep.subr.mxu0 0.0
    %2626 = vmatpush1.msra.mxu0 0.0
    %2627 = vmatprep.subr.mxu0 0.0
    %2628 = vmatpush1.msra.mxu0 0.0
    %2629 = vmatprep.subr.mxu0 0.0
    %2630 = vmatpush1.msra.mxu0 0.0
    %2631 = vmatprep.subr.mxu0 0.0
    %2632 = vmatpush1.msra.mxu0 0.0
    %2633 = vmatprep.subr.mxu0 0.0
    %2634 = vmatpush1.msra.mxu0 0.0
    %2635 = vmatprep.subr.mxu0 0.0
    %2636 = vmatpush1.msra.mxu0 0.0
    %2637 = vmatprep.subr.mxu0 0.0
    %2638 = vmatpush1.msra.mxu0 0.0
    %2639 = vmatprep.subr.mxu0 0.0
    %2640 = vmatpush1.msra.mxu0 0.0
    %2641 = vmatprep.subr.mxu0 0.0
    %2642 = vmatpush1.msra.mxu0 0.0
    %2643 = vmatprep.subr.mxu0 0.0
    %2644 = vmatpush1.msra.mxu0 0.0
    %2645 = vmatprep.mubr.f32.mxu0 0.0
    %2646 = vmatmul.mubr.f32.gmra.mrb[0].mxu0 %v2499
    %v2647 = vpop.f32.mrb[0].mxu0
    %v2648 = vadd.f32 0.0, %v2647
    %v2649 = vpop.f32.mrb[0].mxu0
    %v2650 = vadd.f32 0.0, %v2649
    %2651 = vmatprep.mubr.f32.mxu0 0.0
    %2652 = vmatmul.mubr.f32.gmra.mrb[0].mxu0 %v2502
    %v2653 = vpop.f32.mrb[0].mxu0
    %v2654 = vadd.f32 0.0, %v2653
    %v2655 = vpop.f32.mrb[0].mxu0
    %v2656 = vadd.f32 0.0, %v2655
    %2657 = vdwg.mxu0
    %v2658 = vxor.u32 %v2571, 2147483648
    %v2659 = vxor.u32 %v2573, 2147483648
    %v2660 = vxor.u32 %v2577, 2147483648
    %v2661 = vxor.u32 %v2579, 2147483648
    %v2662 = vmul.f32 %v2658, 1.442695
    %v2663 = vpow.pop %v2662
    %v2664 = vmul.f32 %v2659, 1.442695
    %v2665 = vpow.pop %v2664
    %v2666 = vmul.f32 %v2660, 1.442695
    %v2667 = vpow.pop %v2666
    %v2668 = vmul.f32 %v2661, 1.442695
    %v2669 = vpow.pop %v2668
    %v2670 = vadd.f32 %v2663, 1.0
    %v2671 = vadd.f32 %v2665, 1.0
    %v2672 = vadd.f32 %v2667, 1.0
    %v2673 = vadd.f32 %v2669, 1.0
    %v2674 = vrcp.pop %v2670
    %v2675 = vmul.f32 1.0, %v2674
    %v2676 = vrcp.pop %v2671
    %v2677 = vmul.f32 1.0, %v2676
    %v2678 = vrcp.pop %v2672
    %v2679 = vmul.f32 1.0, %v2678
    %v2680 = vrcp.pop %v2673
    %v2681 = vmul.f32 1.0, %v2680
    %v2682 = vmul.f32 %v2571, %v2675
    %v2683 = vmul.f32 %v2573, %v2677
    %v2684 = vmul.f32 %v2577, %v2679
    %v2685 = vmul.f32 %v2579, %v2681
    %v2686 = vmul.f32 %v2682, %v2648
    %v2687 = vmul.f32 %v2683, %v2650
    %v2688 = vmul.f32 %v2684, %v2654
    %v2689 = vmul.f32 %v2685, %v2656
    %v2690 = vld [vmem:[%s13] sm:$0xff]
    %v2691 = vld [vmem:[%s13 + $0x8] sm:$0xff]
    %v2692 = vld [vmem:[%s13 + $0x10] sm:$0xff]
    %v2693 = vld [vmem:[%s13 + $0x18] sm:$0xff]
    %v2694 = vld [vmem:[%s13 + $0x20] sm:$0xff]
    %v2695 = vld [vmem:[%s13 + $0x28] sm:$0xff]
    %v2696 = vld [vmem:[%s13 + $0x30] sm:$0xff]
    %v2697 = vld [vmem:[%s13 + $0x38] sm:$0xff]
    %v2698 = vld [vmem:[%s13 + $0x40] sm:$0xff]
    %v2699 = vld [vmem:[%s13 + $0x48] sm:$0xff]
    %v2700 = vld [vmem:[%s13 + $0x50] sm:$0xff]
    %v2701 = vld [vmem:[%s13 + $0x58] sm:$0xff]
    %v2702 = vld [vmem:[%s13 + $0x60] sm:$0xff]
    %v2703 = vld [vmem:[%s13 + $0x68] sm:$0xff]
    %v2704 = vld [vmem:[%s13 + $0x70] sm:$0xff]
    %v2705 = vld [vmem:[%s13 + $0x78] sm:$0xff]
    %v2706 = vld [vmem:[%s13 + $0x80] sm:$0xff]
    %v2707 = vld [vmem:[%s13 + $0x88] sm:$0xff]
    %v2708 = vld [vmem:[%s13 + $0x90] sm:$0xff]
    %v2709 = vld [vmem:[%s13 + $0x98] sm:$0xff]
    %v2710 = vld [vmem:[%s13 + $0xa0] sm:$0xff]
    %v2711 = vld [vmem:[%s13 + $0xa8] sm:$0xff]
    %v2712 = vld [vmem:[%s13 + $0xb0] sm:$0xff]
    %v2713 = vld [vmem:[%s13 + $0xb8] sm:$0xff]
    %v2714 = vld [vmem:[%s13 + $0xc0] sm:$0xff]
    %v2715 = vld [vmem:[%s13 + $0xc8] sm:$0xff]
    %v2716 = vld [vmem:[%s13 + $0xd0] sm:$0xff]
    %v2717 = vld [vmem:[%s13 + $0xd8] sm:$0xff]
    %v2718 = vld [vmem:[%s13 + $0xe0] sm:$0xff]
    %v2719 = vld [vmem:[%s13 + $0xe8] sm:$0xff]
    %v2720 = vld [vmem:[%s13 + $0xf0] sm:$0xff]
    %v2721 = vld [vmem:[%s13 + $0xf8] sm:$0xff]
    %2722 = vmatprep.subr.mxu0 0.0
    %2723 = vmatpush1.msra.mxu0 %v2690
    %2724 = vmatprep.subr.mxu0 0.0
    %2725 = vmatpush1.msra.mxu0 %v2691
    %2726 = vmatprep.subr.mxu0 0.0
    %2727 = vmatpush1.msra.mxu0 %v2692
    %2728 = vmatprep.subr.mxu0 0.0
    %2729 = vmatpush1.msra.mxu0 %v2693
    %2730 = vmatprep.subr.mxu0 0.0
    %2731 = vmatpush1.msra.mxu0 %v2694
    %2732 = vmatprep.subr.mxu0 0.0
    %2733 = vmatpush1.msra.mxu0 %v2695
    %2734 = vmatprep.subr.mxu0 0.0
    %2735 = vmatpush1.msra.mxu0 %v2696
    %2736 = vmatprep.subr.mxu0 0.0
    %2737 = vmatpush1.msra.mxu0 %v2697
    %2738 = vmatprep.subr.mxu0 0.0
    %2739 = vmatpush1.msra.mxu0 %v2698
    %2740 = vmatprep.subr.mxu0 0.0
    %2741 = vmatpush1.msra.mxu0 %v2699
    %2742 = vmatprep.subr.mxu0 0.0
    %2743 = vmatpush1.msra.mxu0 %v2700
    %2744 = vmatprep.subr.mxu0 0.0
    %2745 = vmatpush1.msra.mxu0 %v2701
    %2746 = vmatprep.subr.mxu0 0.0
    %2747 = vmatpush1.msra.mxu0 %v2702
    %2748 = vmatprep.subr.mxu0 0.0
    %2749 = vmatpush1.msra.mxu0 %v2703
    %2750 = vmatprep.subr.mxu0 0.0
    %2751 = vmatpush1.msra.mxu0 %v2704
    %2752 = vmatprep.subr.mxu0 0.0
    %2753 = vmatpush1.msra.mxu0 %v2705
    %2754 = vmatprep.subr.mxu0 0.0
    %2755 = vmatpush1.msra.mxu0 %v2706
    %2756 = vmatprep.subr.mxu0 0.0
    %2757 = vmatpush1.msra.mxu0 %v2707
    %2758 = vmatprep.subr.mxu0 0.0
    %2759 = vmatpush1.msra.mxu0 %v2708
    %2760 = vmatprep.subr.mxu0 0.0
    %2761 = vmatpush1.msra.mxu0 %v2709
    %2762 = vmatprep.subr.mxu0 0.0
    %2763 = vmatpush1.msra.mxu0 %v2710
    %2764 = vmatprep.subr.mxu0 0.0
    %2765 = vmatpush1.msra.mxu0 %v2711
    %2766 = vmatprep.subr.mxu0 0.0
    %2767 = vmatpush1.msra.mxu0 %v2712
    %2768 = vmatprep.subr.mxu0 0.0
    %2769 = vmatpush1.msra.mxu0 %v2713
    %2770 = vmatprep.subr.mxu0 0.0
    %2771 = vmatpush1.msra.mxu0 %v2714
    %2772 = vmatprep.subr.mxu0 0.0
    %2773 = vmatpush1.msra.mxu0 %v2715
    %2774 = vmatprep.subr.mxu0 0.0
    %2775 = vmatpush1.msra.mxu0 %v2716
    %2776 = vmatprep.subr.mxu0 0.0
    %2777 = vmatpush1.msra.mxu0 %v2717
    %2778 = vmatprep.subr.mxu0 0.0
    %2779 = vmatpush1.msra.mxu0 %v2718
    %2780 = vmatprep.subr.mxu0 0.0
    %2781 = vmatpush1.msra.mxu0 %v2719
    %2782 = vmatprep.subr.mxu0 0.0
    %2783 = vmatpush1.msra.mxu0 %v2720
    %2784 = vmatprep.subr.mxu0 0.0
    %2785 = vmatpush1.msra.mxu0 %v2721
    %2786 = vmatprep.mubr.f32.mxu0 %v2687
    %2787 = vmatmul.mubr.f32.gmra.mrb[0].mxu0 %v2686
    %v2788 = vpop.f32.mrb[0].mxu0
    %v2789 = vadd.f32 0.0, %v2788
    %v2790 = vpop.f32.mrb[0].mxu0
    %2791 = vmatprep.mubr.f32.mxu0 %v2689
    %2792 = vmatmul.mubr.f32.gmra.mrb[0].mxu0 %v2688
    %v2793 = vpop.f32.mrb[0].mxu0
    %v2794 = vadd.f32 0.0, %v2793
    %v2795 = vpop.f32.mrb[0].mxu0
    %2796 = vdwg.mxu0
    %v2797 = vadd.f32 %v2436, %v2789
    %v2798 = vadd.f32 %v2437, %v2794
    %s2799 = scalar_lea.vmem %s2, 1
    %v2800 = vld [vmem:[%s2799] sm:$0x1]
    %s2801 = scalar_lea.vmem %s3, 1
    %v2802 = vld [vmem:[%s2801] sm:$0x1]
    %v2803 = vsel %vm54, %v2797, 0.0
    %2804 = vadd.xlane.f32.xlu0 %v2803
    %v2805 = vpop.xlane.xlu0 %2804
    %v2806 = vsel %vm54, %v2798, 0.0
    %2807 = vadd.xlane.f32.xlu0 %v2806
    %v2808 = vpop.xlane.xlu0 %2807
    %v2809 = vmul.f32 %v2805, %v61
    %v2810 = vmul.f32 %v2808, %v61
    %v2811 = vsub.f32 %v2797, %v2809
    %v2812 = vsub.f32 %v2798, %v2810
    %v2813 = vmul.f32 %v2811, %v2811
    %v2814 = vmul.f32 %v2812, %v2812
    %v2815 = vsel %vm54, %v2813, 0.0
    %2816 = vadd.xlane.f32.xlu0 %v2815
    %v2817 = vpop.xlane.xlu0 %2816
    %v2818 = vsel %vm54, %v2814, 0.0
    %2819 = vadd.xlane.f32.xlu0 %v2818
    %v2820 = vpop.xlane.xlu0 %2819
    %v2821 = vmul.f32 %v2817, %v61
    %v2822 = vmul.f32 %v2820, %v61
    %v2823 = vadd.f32 %v2821, 1e-05
    %v2824 = vadd.f32 %v2822, 1e-05
    %v2825 = vrsqrt.pop %v2823
    %v2826 = vrsqrt.pop %v2824
    %v2827 = vmul.f32 %v2811, %v2825
    %v2828 = vmul.f32 %v2812, %v2826
    %v2830 = vlaneseq
    %v2831 = vshrl.u32 %v2830, 7
    %v2832 = vsub.s32 0, %v2831
    %v2833 = vrot.slane %v2800, %v2832
    %v2835 = vmul.f32 %v2827, %v2833
    %v2836 = vmul.f32 %v2828, %v2833
    %v2838 = vlaneseq
    %v2839 = vshrl.u32 %v2838, 7
    %v2840 = vsub.s32 0, %v2839
    %v2841 = vrot.slane %v2802, %v2840
    %v2843 = vadd.f32 %v2835, %v2841
    %v2844 = vadd.f32 %v2836, %v2841
    %s2845 = scalar_lea.vmem %s4, 128
    %v2846 = vld [vmem:[%s2845] sm:$0xff]
    %v2847 = vld [vmem:[%s2845 + $0x8] sm:$0xff]
    %v2848 = vld [vmem:[%s2845 + $0x10] sm:$0xff]
    %v2849 = vld [vmem:[%s2845 + $0x18] sm:$0xff]
    %v2851 = vsel %vm54, %v2843, 0
    %v2854 = vsel %vm54, %v2844, 0
    %2856 = vmatprep.subr.mxu0 0.0
    %2857 = vmatpush1.msra.mxu0 %v2846
    %2858 = vmatprep.subr.mxu0 0.0
    %2859 = vmatpush1.msra.mxu0 %v2847
    %2860 = vmatprep.subr.mxu0 0.0
    %2861 = vmatpush1.msra.mxu0 %v2848
    %2862 = vmatprep.subr.mxu0 0.0
    %2863 = vmatpush1.msra.mxu0 %v2849
    %2864 = vmatprep.subr.mxu0 0.0
    %2865 = vmatpush1.msra.mxu0 0.0
    %2866 = vmatprep.subr.mxu0 0.0
    %2867 = vmatpush1.msra.mxu0 0.0
    %2868 = vmatprep.subr.mxu0 0.0
    %2869 = vmatpush1.msra.mxu0 0.0
    %2870 = vmatprep.subr.mxu0 0.0
    %2871 = vmatpush1.msra.mxu0 0.0
    %2872 = vmatprep.subr.mxu0 0.0
    %2873 = vmatpush1.msra.mxu0 0.0
    %2874 = vmatprep.subr.mxu0 0.0
    %2875 = vmatpush1.msra.mxu0 0.0
    %2876 = vmatprep.subr.mxu0 0.0
    %2877 = vmatpush1.msra.mxu0 0.0
    %2878 = vmatprep.subr.mxu0 0.0
    %2879 = vmatpush1.msra.mxu0 0.0
    %2880 = vmatprep.subr.mxu0 0.0
    %2881 = vmatpush1.msra.mxu0 0.0
    %2882 = vmatprep.subr.mxu0 0.0
    %2883 = vmatpush1.msra.mxu0 0.0
    %2884 = vmatprep.subr.mxu0 0.0
    %2885 = vmatpush1.msra.mxu0 0.0
    %2886 = vmatprep.subr.mxu0 0.0
    %2887 = vmatpush1.msra.mxu0 0.0
    %2888 = vmatprep.subr.mxu0 0.0
    %2889 = vmatpush1.msra.mxu0 0.0
    %2890 = vmatprep.subr.mxu0 0.0
    %2891 = vmatpush1.msra.mxu0 0.0
    %2892 = vmatprep.subr.mxu0 0.0
    %2893 = vmatpush1.msra.mxu0 0.0
    %2894 = vmatprep.subr.mxu0 0.0
    %2895 = vmatpush1.msra.mxu0 0.0
    %2896 = vmatprep.subr.mxu0 0.0
    %2897 = vmatpush1.msra.mxu0 0.0
    %2898 = vmatprep.subr.mxu0 0.0
    %2899 = vmatpush1.msra.mxu0 0.0
    %2900 = vmatprep.subr.mxu0 0.0
    %2901 = vmatpush1.msra.mxu0 0.0
    %2902 = vmatprep.subr.mxu0 0.0
    %2903 = vmatpush1.msra.mxu0 0.0
    %2904 = vmatprep.subr.mxu0 0.0
    %2905 = vmatpush1.msra.mxu0 0.0
    %2906 = vmatprep.subr.mxu0 0.0
    %2907 = vmatpush1.msra.mxu0 0.0
    %2908 = vmatprep.subr.mxu0 0.0
    %2909 = vmatpush1.msra.mxu0 0.0
    %2910 = vmatprep.subr.mxu0 0.0
    %2911 = vmatpush1.msra.mxu0 0.0
    %2912 = vmatprep.subr.mxu0 0.0
    %2913 = vmatpush1.msra.mxu0 0.0
    %2914 = vmatprep.subr.mxu0 0.0
    %2915 = vmatpush1.msra.mxu0 0.0
    %2916 = vmatprep.subr.mxu0 0.0
    %2917 = vmatpush1.msra.mxu0 0.0
    %2918 = vmatprep.subr.mxu0 0.0
    %2919 = vmatpush1.msra.mxu0 0.0
    %2920 = vmatprep.mubr.f32.mxu0 0.0
    %2921 = vmatmul.mubr.f32.gmra.mrb[0].mxu0 %v2851
    %v2922 = vpop.f32.mrb[0].mxu0
    %v2923 = vadd.f32 0.0, %v2922
    %v2924 = vpop.f32.mrb[0].mxu0
    %2925 = vmatprep.mubr.f32.mxu0 0.0
    %2926 = vmatmul.mubr.f32.gmra.mrb[0].mxu0 %v2854
    %v2927 = vpop.f32.mrb[0].mxu0
    %v2928 = vadd.f32 0.0, %v2927
    %v2929 = vpop.f32.mrb[0].mxu0
    %2930 = vdwg.mxu0
    %s2931 = scalar_lea.vmem %s4, 160
    %v2932 = vld [vmem:[%s2931] sm:$0xff]
    %v2933 = vld [vmem:[%s2931 + $0x8] sm:$0xff]
    %v2934 = vld [vmem:[%s2931 + $0x10] sm:$0xff]
    %v2935 = vld [vmem:[%s2931 + $0x18] sm:$0xff]
    %2936 = vmatprep.subr.mxu0 0.0
    %2937 = vmatpush1.msra.mxu0 %v2932
    %2938 = vmatprep.subr.mxu0 0.0
    %2939 = vmatpush1.msra.mxu0 %v2933
    %2940 = vmatprep.subr.mxu0 0.0
    %2941 = vmatpush1.msra.mxu0 %v2934
    %2942 = vmatprep.subr.mxu0 0.0
    %2943 = vmatpush1.msra.mxu0 %v2935
    %2944 = vmatprep.subr.mxu0 0.0
    %2945 = vmatpush1.msra.mxu0 0.0
    %2946 = vmatprep.subr.mxu0 0.0
    %2947 = vmatpush1.msra.mxu0 0.0
    %2948 = vmatprep.subr.mxu0 0.0
    %2949 = vmatpush1.msra.mxu0 0.0
    %2950 = vmatprep.subr.mxu0 0.0
    %2951 = vmatpush1.msra.mxu0 0.0
    %2952 = vmatprep.subr.mxu0 0.0
    %2953 = vmatpush1.msra.mxu0 0.0
    %2954 = vmatprep.subr.mxu0 0.0
    %2955 = vmatpush1.msra.mxu0 0.0
    %2956 = vmatprep.subr.mxu0 0.0
    %2957 = vmatpush1.msra.mxu0 0.0
    %2958 = vmatprep.subr.mxu0 0.0
    %2959 = vmatpush1.msra.mxu0 0.0
    %2960 = vmatprep.subr.mxu0 0.0
    %2961 = vmatpush1.msra.mxu0 0.0
    %2962 = vmatprep.subr.mxu0 0.0
    %2963 = vmatpush1.msra.mxu0 0.0
    %2964 = vmatprep.subr.mxu0 0.0
    %2965 = vmatpush1.msra.mxu0 0.0
    %2966 = vmatprep.subr.mxu0 0.0
    %2967 = vmatpush1.msra.mxu0 0.0
    %2968 = vmatprep.subr.mxu0 0.0
    %2969 = vmatpush1.msra.mxu0 0.0
    %2970 = vmatprep.subr.mxu0 0.0
    %2971 = vmatpush1.msra.mxu0 0.0
    %2972 = vmatprep.subr.mxu0 0.0
    %2973 = vmatpush1.msra.mxu0 0.0
    %2974 = vmatprep.subr.mxu0 0.0
    %2975 = vmatpush1.msra.mxu0 0.0
    %2976 = vmatprep.subr.mxu0 0.0
    %2977 = vmatpush1.msra.mxu0 0.0
    %2978 = vmatprep.subr.mxu0 0.0
    %2979 = vmatpush1.msra.mxu0 0.0
    %2980 = vmatprep.subr.mxu0 0.0
    %2981 = vmatpush1.msra.mxu0 0.0
    %2982 = vmatprep.subr.mxu0 0.0
    %2983 = vmatpush1.msra.mxu0 0.0
    %2984 = vmatprep.subr.mxu0 0.0
    %2985 = vmatpush1.msra.mxu0 0.0
    %2986 = vmatprep.subr.mxu0 0.0
    %2987 = vmatpush1.msra.mxu0 0.0
    %2988 = vmatprep.subr.mxu0 0.0
    %2989 = vmatpush1.msra.mxu0 0.0
    %2990 = vmatprep.subr.mxu0 0.0
    %2991 = vmatpush1.msra.mxu0 0.0
    %2992 = vmatprep.subr.mxu0 0.0
    %2993 = vmatpush1.msra.mxu0 0.0
    %2994 = vmatprep.subr.mxu0 0.0
    %2995 = vmatpush1.msra.mxu0 0.0
    %2996 = vmatprep.subr.mxu0 0.0
    %2997 = vmatpush1.msra.mxu0 0.0
    %2998 = vmatprep.subr.mxu0 0.0
    %2999 = vmatpush1.msra.mxu0 0.0
    %3000 = vmatprep.mubr.f32.mxu0 0.0
    %3001 = vmatmul.mubr.f32.gmra.mrb[0].mxu0 %v2851
    %v3002 = vpop.f32.mrb[0].mxu0
    %v3003 = vadd.f32 0.0, %v3002
    %v3004 = vpop.f32.mrb[0].mxu0
    %3005 = vmatprep.mubr.f32.mxu0 0.0
    %3006 = vmatmul.mubr.f32.gmra.mrb[0].mxu0 %v2854
    %v3007 = vpop.f32.mrb[0].mxu0
    %v3008 = vadd.f32 0.0, %v3007
    %v3009 = vpop.f32.mrb[0].mxu0
    %3010 = vdwg.mxu0
    %s3011 = scalar_lea.vmem %s4, 192
    %v3012 = vld [vmem:[%s3011] sm:$0xff]
    %v3013 = vld [vmem:[%s3011 + $0x8] sm:$0xff]
    %v3014 = vld [vmem:[%s3011 + $0x10] sm:$0xff]
    %v3015 = vld [vmem:[%s3011 + $0x18] sm:$0xff]
    %3016 = vmatprep.subr.mxu0 0.0
    %3017 = vmatpush1.msra.mxu0 %v3012
    %3018 = vmatprep.subr.mxu0 0.0
    %3019 = vmatpush1.msra.mxu0 %v3013
    %3020 = vmatprep.subr.mxu0 0.0
    %3021 = vmatpush1.msra.mxu0 %v3014
    %3022 = vmatprep.subr.mxu0 0.0
    %3023 = vmatpush1.msra.mxu0 %v3015
    %3024 = vmatprep.subr.mxu0 0.0
    %3025 = vmatpush1.msra.mxu0 0.0
    %3026 = vmatprep.subr.mxu0 0.0
    %3027 = vmatpush1.msra.mxu0 0.0
    %3028 = vmatprep.subr.mxu0 0.0
    %3029 = vmatpush1.msra.mxu0 0.0
    %3030 = vmatprep.subr.mxu0 0.0
    %3031 = vmatpush1.msra.mxu0 0.0
    %3032 = vmatprep.subr.mxu0 0.0
    %3033 = vmatpush1.msra.mxu0 0.0
    %3034 = vmatprep.subr.mxu0 0.0
    %3035 = vmatpush1.msra.mxu0 0.0
    %3036 = vmatprep.subr.mxu0 0.0
    %3037 = vmatpush1.msra.mxu0 0.0
    %3038 = vmatprep.subr.mxu0 0.0
    %3039 = vmatpush1.msra.mxu0 0.0
    %3040 = vmatprep.subr.mxu0 0.0
    %3041 = vmatpush1.msra.mxu0 0.0
    %3042 = vmatprep.subr.mxu0 0.0
    %3043 = vmatpush1.msra.mxu0 0.0
    %3044 = vmatprep.subr.mxu0 0.0
    %3045 = vmatpush1.msra.mxu0 0.0
    %3046 = vmatprep.subr.mxu0 0.0
    %3047 = vmatpush1.msra.mxu0 0.0
    %3048 = vmatprep.subr.mxu0 0.0
    %3049 = vmatpush1.msra.mxu0 0.0
    %3050 = vmatprep.subr.mxu0 0.0
    %3051 = vmatpush1.msra.mxu0 0.0
    %3052 = vmatprep.subr.mxu0 0.0
    %3053 = vmatpush1.msra.mxu0 0.0
    %3054 = vmatprep.subr.mxu0 0.0
    %3055 = vmatpush1.msra.mxu0 0.0
    %3056 = vmatprep.subr.mxu0 0.0
    %3057 = vmatpush1.msra.mxu0 0.0
    %3058 = vmatprep.subr.mxu0 0.0
    %3059 = vmatpush1.msra.mxu0 0.0
    %3060 = vmatprep.subr.mxu0 0.0
    %3061 = vmatpush1.msra.mxu0 0.0
    %3062 = vmatprep.subr.mxu0 0.0
    %3063 = vmatpush1.msra.mxu0 0.0
    %3064 = vmatprep.subr.mxu0 0.0
    %3065 = vmatpush1.msra.mxu0 0.0
    %3066 = vmatprep.subr.mxu0 0.0
    %3067 = vmatpush1.msra.mxu0 0.0
    %3068 = vmatprep.subr.mxu0 0.0
    %3069 = vmatpush1.msra.mxu0 0.0
    %3070 = vmatprep.subr.mxu0 0.0
    %3071 = vmatpush1.msra.mxu0 0.0
    %3072 = vmatprep.subr.mxu0 0.0
    %3073 = vmatpush1.msra.mxu0 0.0
    %3074 = vmatprep.subr.mxu0 0.0
    %3075 = vmatpush1.msra.mxu0 0.0
    %3076 = vmatprep.subr.mxu0 0.0
    %3077 = vmatpush1.msra.mxu0 0.0
    %3078 = vmatprep.subr.mxu0 0.0
    %3079 = vmatpush1.msra.mxu0 0.0
    %3080 = vmatprep.mubr.f32.mxu0 0.0
    %3081 = vmatmul.mubr.f32.gmra.mrb[0].mxu0 %v2851
    %v3082 = vpop.f32.mrb[0].mxu0
    %v3083 = vadd.f32 0.0, %v3082
    %v3084 = vpop.f32.mrb[0].mxu0
    %3085 = vmatprep.mubr.f32.mxu0 0.0
    %3086 = vmatmul.mubr.f32.gmra.mrb[0].mxu0 %v2854
    %v3087 = vpop.f32.mrb[0].mxu0
    %v3088 = vadd.f32 0.0, %v3087
    %v3089 = vpop.f32.mrb[0].mxu0
    %3090 = vdwg.mxu0
    %s3091 = scalar_lea.vmem %s4, 224
    %v3092 = vld [vmem:[%s3091] sm:$0xff]
    %v3093 = vld [vmem:[%s3091 + $0x8] sm:$0xff]
    %v3094 = vld [vmem:[%s3091 + $0x10] sm:$0xff]
    %v3095 = vld [vmem:[%s3091 + $0x18] sm:$0xff]
    %3096 = vmatprep.subr.mxu0 0.0
    %3097 = vmatpush1.msra.mxu0 %v3092
    %3098 = vmatprep.subr.mxu0 0.0
    %3099 = vmatpush1.msra.mxu0 %v3093
    %3100 = vmatprep.subr.mxu0 0.0
    %3101 = vmatpush1.msra.mxu0 %v3094
    %3102 = vmatprep.subr.mxu0 0.0
    %3103 = vmatpush1.msra.mxu0 %v3095
    %3104 = vmatprep.subr.mxu0 0.0
    %3105 = vmatpush1.msra.mxu0 0.0
    %3106 = vmatprep.subr.mxu0 0.0
    %3107 = vmatpush1.msra.mxu0 0.0
    %3108 = vmatprep.subr.mxu0 0.0
    %3109 = vmatpush1.msra.mxu0 0.0
    %3110 = vmatprep.subr.mxu0 0.0
    %3111 = vmatpush1.msra.mxu0 0.0
    %3112 = vmatprep.subr.mxu0 0.0
    %3113 = vmatpush1.msra.mxu0 0.0
    %3114 = vmatprep.subr.mxu0 0.0
    %3115 = vmatpush1.msra.mxu0 0.0
    %3116 = vmatprep.subr.mxu0 0.0
    %3117 = vmatpush1.msra.mxu0 0.0
    %3118 = vmatprep.subr.mxu0 0.0
    %3119 = vmatpush1.msra.mxu0 0.0
    %3120 = vmatprep.subr.mxu0 0.0
    %3121 = vmatpush1.msra.mxu0 0.0
    %3122 = vmatprep.subr.mxu0 0.0
    %3123 = vmatpush1.msra.mxu0 0.0
    %3124 = vmatprep.subr.mxu0 0.0
    %3125 = vmatpush1.msra.mxu0 0.0
    %3126 = vmatprep.subr.mxu0 0.0
    %3127 = vmatpush1.msra.mxu0 0.0
    %3128 = vmatprep.subr.mxu0 0.0
    %3129 = vmatpush1.msra.mxu0 0.0
    %3130 = vmatprep.subr.mxu0 0.0
    %3131 = vmatpush1.msra.mxu0 0.0
    %3132 = vmatprep.subr.mxu0 0.0
    %3133 = vmatpush1.msra.mxu0 0.0
    %3134 = vmatprep.subr.mxu0 0.0
    %3135 = vmatpush1.msra.mxu0 0.0
    %3136 = vmatprep.subr.mxu0 0.0
    %3137 = vmatpush1.msra.mxu0 0.0
    %3138 = vmatprep.subr.mxu0 0.0
    %3139 = vmatpush1.msra.mxu0 0.0
    %3140 = vmatprep.subr.mxu0 0.0
    %3141 = vmatpush1.msra.mxu0 0.0
    %3142 = vmatprep.subr.mxu0 0.0
    %3143 = vmatpush1.msra.mxu0 0.0
    %3144 = vmatprep.subr.mxu0 0.0
    %3145 = vmatpush1.msra.mxu0 0.0
    %3146 = vmatprep.subr.mxu0 0.0
    %3147 = vmatpush1.msra.mxu0 0.0
    %3148 = vmatprep.subr.mxu0 0.0
    %3149 = vmatpush1.msra.mxu0 0.0
    %3150 = vmatprep.subr.mxu0 0.0
    %3151 = vmatpush1.msra.mxu0 0.0
    %3152 = vmatprep.subr.mxu0 0.0
    %3153 = vmatpush1.msra.mxu0 0.0
    %3154 = vmatprep.subr.mxu0 0.0
    %3155 = vmatpush1.msra.mxu0 0.0
    %3156 = vmatprep.subr.mxu0 0.0
    %3157 = vmatpush1.msra.mxu0 0.0
    %3158 = vmatprep.subr.mxu0 0.0
    %3159 = vmatpush1.msra.mxu0 0.0
    %3160 = vmatprep.mubr.f32.mxu0 0.0
    %3161 = vmatmul.mubr.f32.gmra.mrb[0].mxu0 %v2851
    %v3162 = vpop.f32.mrb[0].mxu0
    %v3163 = vadd.f32 0.0, %v3162
    %v3164 = vpop.f32.mrb[0].mxu0
    %3165 = vmatprep.mubr.f32.mxu0 0.0
    %3166 = vmatmul.mubr.f32.gmra.mrb[0].mxu0 %v2854
    %v3167 = vpop.f32.mrb[0].mxu0
    %v3168 = vadd.f32 0.0, %v3167
    %v3169 = vpop.f32.mrb[0].mxu0
    %3170 = vdwg.mxu0
    %s3171 = scalar_lea.vmem %s5, 128
    %v3172 = vld [vmem:[%s3171] sm:$0xff]
    %v3173 = vld [vmem:[%s3171 + $0x8] sm:$0xff]
    %v3174 = vld [vmem:[%s3171 + $0x10] sm:$0xff]
    %v3175 = vld [vmem:[%s3171 + $0x18] sm:$0xff]
    %3176 = vmatprep.subr.mxu0 0.0
    %3177 = vmatpush1.msra.mxu0 %v3172
    %3178 = vmatprep.subr.mxu0 0.0
    %3179 = vmatpush1.msra.mxu0 %v3173
    %3180 = vmatprep.subr.mxu0 0.0
    %3181 = vmatpush1.msra.mxu0 %v3174
    %3182 = vmatprep.subr.mxu0 0.0
    %3183 = vmatpush1.msra.mxu0 %v3175
    %3184 = vmatprep.subr.mxu0 0.0
    %3185 = vmatpush1.msra.mxu0 0.0
    %3186 = vmatprep.subr.mxu0 0.0
    %3187 = vmatpush1.msra.mxu0 0.0
    %3188 = vmatprep.subr.mxu0 0.0
    %3189 = vmatpush1.msra.mxu0 0.0
    %3190 = vmatprep.subr.mxu0 0.0
    %3191 = vmatpush1.msra.mxu0 0.0
    %3192 = vmatprep.subr.mxu0 0.0
    %3193 = vmatpush1.msra.mxu0 0.0
    %3194 = vmatprep.subr.mxu0 0.0
    %3195 = vmatpush1.msra.mxu0 0.0
    %3196 = vmatprep.subr.mxu0 0.0
    %3197 = vmatpush1.msra.mxu0 0.0
    %3198 = vmatprep.subr.mxu0 0.0
    %3199 = vmatpush1.msra.mxu0 0.0
    %3200 = vmatprep.subr.mxu0 0.0
    %3201 = vmatpush1.msra.mxu0 0.0
    %3202 = vmatprep.subr.mxu0 0.0
    %3203 = vmatpush1.msra.mxu0 0.0
    %3204 = vmatprep.subr.mxu0 0.0
    %3205 = vmatpush1.msra.mxu0 0.0
    %3206 = vmatprep.subr.mxu0 0.0
    %3207 = vmatpush1.msra.mxu0 0.0
    %3208 = vmatprep.subr.mxu0 0.0
    %3209 = vmatpush1.msra.mxu0 0.0
    %3210 = vmatprep.subr.mxu0 0.0
    %3211 = vmatpush1.msra.mxu0 0.0
    %3212 = vmatprep.subr.mxu0 0.0
    %3213 = vmatpush1.msra.mxu0 0.0
    %3214 = vmatprep.subr.mxu0 0.0
    %3215 = vmatpush1.msra.mxu0 0.0
    %3216 = vmatprep.subr.mxu0 0.0
    %3217 = vmatpush1.msra.mxu0 0.0
    %3218 = vmatprep.subr.mxu0 0.0
    %3219 = vmatpush1.msra.mxu0 0.0
    %3220 = vmatprep.subr.mxu0 0.0
    %3221 = vmatpush1.msra.mxu0 0.0
    %3222 = vmatprep.subr.mxu0 0.0
    %3223 = vmatpush1.msra.mxu0 0.0
    %3224 = vmatprep.subr.mxu0 0.0
    %3225 = vmatpush1.msra.mxu0 0.0
    %3226 = vmatprep.subr.mxu0 0.0
    %3227 = vmatpush1.msra.mxu0 0.0
    %3228 = vmatprep.subr.mxu0 0.0
    %3229 = vmatpush1.msra.mxu0 0.0
    %3230 = vmatprep.subr.mxu0 0.0
    %3231 = vmatpush1.msra.mxu0 0.0
    %3232 = vmatprep.subr.mxu0 0.0
    %3233 = vmatpush1.msra.mxu0 0.0
    %3234 = vmatprep.subr.mxu0 0.0
    %3235 = vmatpush1.msra.mxu0 0.0
    %3236 = vmatprep.subr.mxu0 0.0
    %3237 = vmatpush1.msra.mxu0 0.0
    %3238 = vmatprep.subr.mxu0 0.0
    %3239 = vmatpush1.msra.mxu0 0.0
    %3240 = vmatprep.mubr.f32.mxu0 0.0
    %3241 = vmatmul.mubr.f32.gmra.mrb[0].mxu0 %v2851
    %v3242 = vpop.f32.mrb[0].mxu0
    %v3243 = vadd.f32 0.0, %v3242
    %v3244 = vpop.f32.mrb[0].mxu0
    %3245 = vmatprep.mubr.f32.mxu0 0.0
    %3246 = vmatmul.mubr.f32.gmra.mrb[0].mxu0 %v2854
    %v3247 = vpop.f32.mrb[0].mxu0
    %v3248 = vadd.f32 0.0, %v3247
    %v3249 = vpop.f32.mrb[0].mxu0
    %3250 = vdwg.mxu0
    %s3251 = scalar_lea.vmem %s5, 160
    %v3252 = vld [vmem:[%s3251] sm:$0xff]
    %v3253 = vld [vmem:[%s3251 + $0x8] sm:$0xff]
    %v3254 = vld [vmem:[%s3251 + $0x10] sm:$0xff]
    %v3255 = vld [vmem:[%s3251 + $0x18] sm:$0xff]
    %3256 = vmatprep.subr.mxu0 0.0
    %3257 = vmatpush1.msra.mxu0 %v3252
    %3258 = vmatprep.subr.mxu0 0.0
    %3259 = vmatpush1.msra.mxu0 %v3253
    %3260 = vmatprep.subr.mxu0 0.0
    %3261 = vmatpush1.msra.mxu0 %v3254
    %3262 = vmatprep.subr.mxu0 0.0
    %3263 = vmatpush1.msra.mxu0 %v3255
    %3264 = vmatprep.subr.mxu0 0.0
    %3265 = vmatpush1.msra.mxu0 0.0
    %3266 = vmatprep.subr.mxu0 0.0
    %3267 = vmatpush1.msra.mxu0 0.0
    %3268 = vmatprep.subr.mxu0 0.0
    %3269 = vmatpush1.msra.mxu0 0.0
    %3270 = vmatprep.subr.mxu0 0.0
    %3271 = vmatpush1.msra.mxu0 0.0
    %3272 = vmatprep.subr.mxu0 0.0
    %3273 = vmatpush1.msra.mxu0 0.0
    %3274 = vmatprep.subr.mxu0 0.0
    %3275 = vmatpush1.msra.mxu0 0.0
    %3276 = vmatprep.subr.mxu0 0.0
    %3277 = vmatpush1.msra.mxu0 0.0
    %3278 = vmatprep.subr.mxu0 0.0
    %3279 = vmatpush1.msra.mxu0 0.0
    %3280 = vmatprep.subr.mxu0 0.0
    %3281 = vmatpush1.msra.mxu0 0.0
    %3282 = vmatprep.subr.mxu0 0.0
    %3283 = vmatpush1.msra.mxu0 0.0
    %3284 = vmatprep.subr.mxu0 0.0
    %3285 = vmatpush1.msra.mxu0 0.0
    %3286 = vmatprep.subr.mxu0 0.0
    %3287 = vmatpush1.msra.mxu0 0.0
    %3288 = vmatprep.subr.mxu0 0.0
    %3289 = vmatpush1.msra.mxu0 0.0
    %3290 = vmatprep.subr.mxu0 0.0
    %3291 = vmatpush1.msra.mxu0 0.0
    %3292 = vmatprep.subr.mxu0 0.0
    %3293 = vmatpush1.msra.mxu0 0.0
    %3294 = vmatprep.subr.mxu0 0.0
    %3295 = vmatpush1.msra.mxu0 0.0
    %3296 = vmatprep.subr.mxu0 0.0
    %3297 = vmatpush1.msra.mxu0 0.0
    %3298 = vmatprep.subr.mxu0 0.0
    %3299 = vmatpush1.msra.mxu0 0.0
    %3300 = vmatprep.subr.mxu0 0.0
    %3301 = vmatpush1.msra.mxu0 0.0
    %3302 = vmatprep.subr.mxu0 0.0
    %3303 = vmatpush1.msra.mxu0 0.0
    %3304 = vmatprep.subr.mxu0 0.0
    %3305 = vmatpush1.msra.mxu0 0.0
    %3306 = vmatprep.subr.mxu0 0.0
    %3307 = vmatpush1.msra.mxu0 0.0
    %3308 = vmatprep.subr.mxu0 0.0
    %3309 = vmatpush1.msra.mxu0 0.0
    %3310 = vmatprep.subr.mxu0 0.0
    %3311 = vmatpush1.msra.mxu0 0.0
    %3312 = vmatprep.subr.mxu0 0.0
    %3313 = vmatpush1.msra.mxu0 0.0
    %3314 = vmatprep.subr.mxu0 0.0
    %3315 = vmatpush1.msra.mxu0 0.0
    %3316 = vmatprep.subr.mxu0 0.0
    %3317 = vmatpush1.msra.mxu0 0.0
    %3318 = vmatprep.subr.mxu0 0.0
    %3319 = vmatpush1.msra.mxu0 0.0
    %3320 = vmatprep.mubr.f32.mxu0 0.0
    %3321 = vmatmul.mubr.f32.gmra.mrb[0].mxu0 %v2851
    %v3322 = vpop.f32.mrb[0].mxu0
    %v3323 = vadd.f32 0.0, %v3322
    %v3324 = vpop.f32.mrb[0].mxu0
    %3325 = vmatprep.mubr.f32.mxu0 0.0
    %3326 = vmatmul.mubr.f32.gmra.mrb[0].mxu0 %v2854
    %v3327 = vpop.f32.mrb[0].mxu0
    %v3328 = vadd.f32 0.0, %v3327
    %v3329 = vpop.f32.mrb[0].mxu0
    %3330 = vdwg.mxu0
    %s3331 = scalar_lea.vmem %s5, 192
    %v3332 = vld [vmem:[%s3331] sm:$0xff]
    %v3333 = vld [vmem:[%s3331 + $0x8] sm:$0xff]
    %v3334 = vld [vmem:[%s3331 + $0x10] sm:$0xff]
    %v3335 = vld [vmem:[%s3331 + $0x18] sm:$0xff]
    %3336 = vmatprep.subr.mxu0 0.0
    %3337 = vmatpush1.msra.mxu0 %v3332
    %3338 = vmatprep.subr.mxu0 0.0
    %3339 = vmatpush1.msra.mxu0 %v3333
    %3340 = vmatprep.subr.mxu0 0.0
    %3341 = vmatpush1.msra.mxu0 %v3334
    %3342 = vmatprep.subr.mxu0 0.0
    %3343 = vmatpush1.msra.mxu0 %v3335
    %3344 = vmatprep.subr.mxu0 0.0
    %3345 = vmatpush1.msra.mxu0 0.0
    %3346 = vmatprep.subr.mxu0 0.0
    %3347 = vmatpush1.msra.mxu0 0.0
    %3348 = vmatprep.subr.mxu0 0.0
    %3349 = vmatpush1.msra.mxu0 0.0
    %3350 = vmatprep.subr.mxu0 0.0
    %3351 = vmatpush1.msra.mxu0 0.0
    %3352 = vmatprep.subr.mxu0 0.0
    %3353 = vmatpush1.msra.mxu0 0.0
    %3354 = vmatprep.subr.mxu0 0.0
    %3355 = vmatpush1.msra.mxu0 0.0
    %3356 = vmatprep.subr.mxu0 0.0
    %3357 = vmatpush1.msra.mxu0 0.0
    %3358 = vmatprep.subr.mxu0 0.0
    %3359 = vmatpush1.msra.mxu0 0.0
    %3360 = vmatprep.subr.mxu0 0.0
    %3361 = vmatpush1.msra.mxu0 0.0
    %3362 = vmatprep.subr.mxu0 0.0
    %3363 = vmatpush1.msra.mxu0 0.0
    %3364 = vmatprep.subr.mxu0 0.0
    %3365 = vmatpush1.msra.mxu0 0.0
    %3366 = vmatprep.subr.mxu0 0.0
    %3367 = vmatpush1.msra.mxu0 0.0
    %3368 = vmatprep.subr.mxu0 0.0
    %3369 = vmatpush1.msra.mxu0 0.0
    %3370 = vmatprep.subr.mxu0 0.0
    %3371 = vmatpush1.msra.mxu0 0.0
    %3372 = vmatprep.subr.mxu0 0.0
    %3373 = vmatpush1.msra.mxu0 0.0
    %3374 = vmatprep.subr.mxu0 0.0
    %3375 = vmatpush1.msra.mxu0 0.0
    %3376 = vmatprep.subr.mxu0 0.0
    %3377 = vmatpush1.msra.mxu0 0.0
    %3378 = vmatprep.subr.mxu0 0.0
    %3379 = vmatpush1.msra.mxu0 0.0
    %3380 = vmatprep.subr.mxu0 0.0
    %3381 = vmatpush1.msra.mxu0 0.0
    %3382 = vmatprep.subr.mxu0 0.0
    %3383 = vmatpush1.msra.mxu0 0.0
    %3384 = vmatprep.subr.mxu0 0.0
    %3385 = vmatpush1.msra.mxu0 0.0
    %3386 = vmatprep.subr.mxu0 0.0
    %3387 = vmatpush1.msra.mxu0 0.0
    %3388 = vmatprep.subr.mxu0 0.0
    %3389 = vmatpush1.msra.mxu0 0.0
    %3390 = vmatprep.subr.mxu0 0.0
    %3391 = vmatpush1.msra.mxu0 0.0
    %3392 = vmatprep.subr.mxu0 0.0
    %3393 = vmatpush1.msra.mxu0 0.0
    %3394 = vmatprep.subr.mxu0 0.0
    %3395 = vmatpush1.msra.mxu0 0.0
    %3396 = vmatprep.subr.mxu0 0.0
    %3397 = vmatpush1.msra.mxu0 0.0
    %3398 = vmatprep.subr.mxu0 0.0
    %3399 = vmatpush1.msra.mxu0 0.0
    %3400 = vmatprep.mubr.f32.mxu0 0.0
    %3401 = vmatmul.mubr.f32.gmra.mrb[0].mxu0 %v2851
    %v3402 = vpop.f32.mrb[0].mxu0
    %v3403 = vadd.f32 0.0, %v3402
    %v3404 = vpop.f32.mrb[0].mxu0
    %3405 = vmatprep.mubr.f32.mxu0 0.0
    %3406 = vmatmul.mubr.f32.gmra.mrb[0].mxu0 %v2854
    %v3407 = vpop.f32.mrb[0].mxu0
    %v3408 = vadd.f32 0.0, %v3407
    %v3409 = vpop.f32.mrb[0].mxu0
    %3410 = vdwg.mxu0
    %s3411 = scalar_lea.vmem %s5, 224
    %v3412 = vld [vmem:[%s3411] sm:$0xff]
    %v3413 = vld [vmem:[%s3411 + $0x8] sm:$0xff]
    %v3414 = vld [vmem:[%s3411 + $0x10] sm:$0xff]
    %v3415 = vld [vmem:[%s3411 + $0x18] sm:$0xff]
    %3416 = vmatprep.subr.mxu0 0.0
    %3417 = vmatpush1.msra.mxu0 %v3412
    %3418 = vmatprep.subr.mxu0 0.0
    %3419 = vmatpush1.msra.mxu0 %v3413
    %3420 = vmatprep.subr.mxu0 0.0
    %3421 = vmatpush1.msra.mxu0 %v3414
    %3422 = vmatprep.subr.mxu0 0.0
    %3423 = vmatpush1.msra.mxu0 %v3415
    %3424 = vmatprep.subr.mxu0 0.0
    %3425 = vmatpush1.msra.mxu0 0.0
    %3426 = vmatprep.subr.mxu0 0.0
    %3427 = vmatpush1.msra.mxu0 0.0
    %3428 = vmatprep.subr.mxu0 0.0
    %3429 = vmatpush1.msra.mxu0 0.0
    %3430 = vmatprep.subr.mxu0 0.0
    %3431 = vmatpush1.msra.mxu0 0.0
    %3432 = vmatprep.subr.mxu0 0.0
    %3433 = vmatpush1.msra.mxu0 0.0
    %3434 = vmatprep.subr.mxu0 0.0
    %3435 = vmatpush1.msra.mxu0 0.0
    %3436 = vmatprep.subr.mxu0 0.0
    %3437 = vmatpush1.msra.mxu0 0.0
    %3438 = vmatprep.subr.mxu0 0.0
    %3439 = vmatpush1.msra.mxu0 0.0
    %3440 = vmatprep.subr.mxu0 0.0
    %3441 = vmatpush1.msra.mxu0 0.0
    %3442 = vmatprep.subr.mxu0 0.0
    %3443 = vmatpush1.msra.mxu0 0.0
    %3444 = vmatprep.subr.mxu0 0.0
    %3445 = vmatpush1.msra.mxu0 0.0
    %3446 = vmatprep.subr.mxu0 0.0
    %3447 = vmatpush1.msra.mxu0 0.0
    %3448 = vmatprep.subr.mxu0 0.0
    %3449 = vmatpush1.msra.mxu0 0.0
    %3450 = vmatprep.subr.mxu0 0.0
    %3451 = vmatpush1.msra.mxu0 0.0
    %3452 = vmatprep.subr.mxu0 0.0
    %3453 = vmatpush1.msra.mxu0 0.0
    %3454 = vmatprep.subr.mxu0 0.0
    %3455 = vmatpush1.msra.mxu0 0.0
    %3456 = vmatprep.subr.mxu0 0.0
    %3457 = vmatpush1.msra.mxu0 0.0
    %3458 = vmatprep.subr.mxu0 0.0
    %3459 = vmatpush1.msra.mxu0 0.0
    %3460 = vmatprep.subr.mxu0 0.0
    %3461 = vmatpush1.msra.mxu0 0.0
    %3462 = vmatprep.subr.mxu0 0.0
    %3463 = vmatpush1.msra.mxu0 0.0
    %3464 = vmatprep.subr.mxu0 0.0
    %3465 = vmatpush1.msra.mxu0 0.0
    %3466 = vmatprep.subr.mxu0 0.0
    %3467 = vmatpush1.msra.mxu0 0.0
    %3468 = vmatprep.subr.mxu0 0.0
    %3469 = vmatpush1.msra.mxu0 0.0
    %3470 = vmatprep.subr.mxu0 0.0
    %3471 = vmatpush1.msra.mxu0 0.0
    %3472 = vmatprep.subr.mxu0 0.0
    %3473 = vmatpush1.msra.mxu0 0.0
    %3474 = vmatprep.subr.mxu0 0.0
    %3475 = vmatpush1.msra.mxu0 0.0
    %3476 = vmatprep.subr.mxu0 0.0
    %3477 = vmatpush1.msra.mxu0 0.0
    %3478 = vmatprep.subr.mxu0 0.0
    %3479 = vmatpush1.msra.mxu0 0.0
    %3480 = vmatprep.mubr.f32.mxu0 0.0
    %3481 = vmatmul.mubr.f32.gmra.mrb[0].mxu0 %v2851
    %v3482 = vpop.f32.mrb[0].mxu0
    %v3483 = vadd.f32 0.0, %v3482
    %v3484 = vpop.f32.mrb[0].mxu0
    %3485 = vmatprep.mubr.f32.mxu0 0.0
    %3486 = vmatmul.mubr.f32.gmra.mrb[0].mxu0 %v2854
    %v3487 = vpop.f32.mrb[0].mxu0
    %v3488 = vadd.f32 0.0, %v3487
    %v3489 = vpop.f32.mrb[0].mxu0
    %3490 = vdwg.mxu0
    %s3491 = scalar_lea.vmem %s6, 128
    %v3492 = vld [vmem:[%s3491] sm:$0xff]
    %v3493 = vld [vmem:[%s3491 + $0x8] sm:$0xff]
    %v3494 = vld [vmem:[%s3491 + $0x10] sm:$0xff]
    %v3495 = vld [vmem:[%s3491 + $0x18] sm:$0xff]
    %3496 = vmatprep.subr.mxu0 0.0
    %3497 = vmatpush1.msra.mxu0 %v3492
    %3498 = vmatprep.subr.mxu0 0.0
    %3499 = vmatpush1.msra.mxu0 %v3493
    %3500 = vmatprep.subr.mxu0 0.0
    %3501 = vmatpush1.msra.mxu0 %v3494
    %3502 = vmatprep.subr.mxu0 0.0
    %3503 = vmatpush1.msra.mxu0 %v3495
    %3504 = vmatprep.subr.mxu0 0.0
    %3505 = vmatpush1.msra.mxu0 0.0
    %3506 = vmatprep.subr.mxu0 0.0
    %3507 = vmatpush1.msra.mxu0 0.0
    %3508 = vmatprep.subr.mxu0 0.0
    %3509 = vmatpush1.msra.mxu0 0.0
    %3510 = vmatprep.subr.mxu0 0.0
    %3511 = vmatpush1.msra.mxu0 0.0
    %3512 = vmatprep.subr.mxu0 0.0
    %3513 = vmatpush1.msra.mxu0 0.0
    %3514 = vmatprep.subr.mxu0 0.0
    %3515 = vmatpush1.msra.mxu0 0.0
    %3516 = vmatprep.subr.mxu0 0.0
    %3517 = vmatpush1.msra.mxu0 0.0
    %3518 = vmatprep.subr.mxu0 0.0
    %3519 = vmatpush1.msra.mxu0 0.0
    %3520 = vmatprep.subr.mxu0 0.0
    %3521 = vmatpush1.msra.mxu0 0.0
    %3522 = vmatprep.subr.mxu0 0.0
    %3523 = vmatpush1.msra.mxu0 0.0
    %3524 = vmatprep.subr.mxu0 0.0
    %3525 = vmatpush1.msra.mxu0 0.0
    %3526 = vmatprep.subr.mxu0 0.0
    %3527 = vmatpush1.msra.mxu0 0.0
    %3528 = vmatprep.subr.mxu0 0.0
    %3529 = vmatpush1.msra.mxu0 0.0
    %3530 = vmatprep.subr.mxu0 0.0
    %3531 = vmatpush1.msra.mxu0 0.0
    %3532 = vmatprep.subr.mxu0 0.0
    %3533 = vmatpush1.msra.mxu0 0.0
    %3534 = vmatprep.subr.mxu0 0.0
    %3535 = vmatpush1.msra.mxu0 0.0
    %3536 = vmatprep.subr.mxu0 0.0
    %3537 = vmatpush1.msra.mxu0 0.0
    %3538 = vmatprep.subr.mxu0 0.0
    %3539 = vmatpush1.msra.mxu0 0.0
    %3540 = vmatprep.subr.mxu0 0.0
    %3541 = vmatpush1.msra.mxu0 0.0
    %3542 = vmatprep.subr.mxu0 0.0
    %3543 = vmatpush1.msra.mxu0 0.0
    %3544 = vmatprep.subr.mxu0 0.0
    %3545 = vmatpush1.msra.mxu0 0.0
    %3546 = vmatprep.subr.mxu0 0.0
    %3547 = vmatpush1.msra.mxu0 0.0
    %3548 = vmatprep.subr.mxu0 0.0
    %3549 = vmatpush1.msra.mxu0 0.0
    %3550 = vmatprep.subr.mxu0 0.0
    %3551 = vmatpush1.msra.mxu0 0.0
    %3552 = vmatprep.subr.mxu0 0.0
    %3553 = vmatpush1.msra.mxu0 0.0
    %3554 = vmatprep.subr.mxu0 0.0
    %3555 = vmatpush1.msra.mxu0 0.0
    %3556 = vmatprep.subr.mxu0 0.0
    %3557 = vmatpush1.msra.mxu0 0.0
    %3558 = vmatprep.subr.mxu0 0.0
    %3559 = vmatpush1.msra.mxu0 0.0
    %3560 = vmatprep.mubr.f32.mxu0 0.0
    %3561 = vmatmul.mubr.f32.gmra.mrb[0].mxu0 %v2851
    %v3562 = vpop.f32.mrb[0].mxu0
    %v3563 = vadd.f32 0.0, %v3562
    %v3564 = vpop.f32.mrb[0].mxu0
    %3565 = vmatprep.mubr.f32.mxu0 0.0
    %3566 = vmatmul.mubr.f32.gmra.mrb[0].mxu0 %v2854
    %v3567 = vpop.f32.mrb[0].mxu0
    %v3568 = vadd.f32 0.0, %v3567
    %v3569 = vpop.f32.mrb[0].mxu0
    %3570 = vdwg.mxu0
    %s3571 = scalar_lea.vmem %s6, 160
    %v3572 = vld [vmem:[%s3571] sm:$0xff]
    %v3573 = vld [vmem:[%s3571 + $0x8] sm:$0xff]
    %v3574 = vld [vmem:[%s3571 + $0x10] sm:$0xff]
    %v3575 = vld [vmem:[%s3571 + $0x18] sm:$0xff]
    %3576 = vmatprep.subr.mxu0 0.0
    %3577 = vmatpush1.msra.mxu0 %v3572
    %3578 = vmatprep.subr.mxu0 0.0
    %3579 = vmatpush1.msra.mxu0 %v3573
    %3580 = vmatprep.subr.mxu0 0.0
    %3581 = vmatpush1.msra.mxu0 %v3574
    %3582 = vmatprep.subr.mxu0 0.0
    %3583 = vmatpush1.msra.mxu0 %v3575
    %3584 = vmatprep.subr.mxu0 0.0
    %3585 = vmatpush1.msra.mxu0 0.0
    %3586 = vmatprep.subr.mxu0 0.0
    %3587 = vmatpush1.msra.mxu0 0.0
    %3588 = vmatprep.subr.mxu0 0.0
    %3589 = vmatpush1.msra.mxu0 0.0
    %3590 = vmatprep.subr.mxu0 0.0
    %3591 = vmatpush1.msra.mxu0 0.0
    %3592 = vmatprep.subr.mxu0 0.0
    %3593 = vmatpush1.msra.mxu0 0.0
    %3594 = vmatprep.subr.mxu0 0.0
    %3595 = vmatpush1.msra.mxu0 0.0
    %3596 = vmatprep.subr.mxu0 0.0
    %3597 = vmatpush1.msra.mxu0 0.0
    %3598 = vmatprep.subr.mxu0 0.0
    %3599 = vmatpush1.msra.mxu0 0.0
    %3600 = vmatprep.subr.mxu0 0.0
    %3601 = vmatpush1.msra.mxu0 0.0
    %3602 = vmatprep.subr.mxu0 0.0
    %3603 = vmatpush1.msra.mxu0 0.0
    %3604 = vmatprep.subr.mxu0 0.0
    %3605 = vmatpush1.msra.mxu0 0.0
    %3606 = vmatprep.subr.mxu0 0.0
    %3607 = vmatpush1.msra.mxu0 0.0
    %3608 = vmatprep.subr.mxu0 0.0
    %3609 = vmatpush1.msra.mxu0 0.0
    %3610 = vmatprep.subr.mxu0 0.0
    %3611 = vmatpush1.msra.mxu0 0.0
    %3612 = vmatprep.subr.mxu0 0.0
    %3613 = vmatpush1.msra.mxu0 0.0
    %3614 = vmatprep.subr.mxu0 0.0
    %3615 = vmatpush1.msra.mxu0 0.0
    %3616 = vmatprep.subr.mxu0 0.0
    %3617 = vmatpush1.msra.mxu0 0.0
    %3618 = vmatprep.subr.mxu0 0.0
    %3619 = vmatpush1.msra.mxu0 0.0
    %3620 = vmatprep.subr.mxu0 0.0
    %3621 = vmatpush1.msra.mxu0 0.0
    %3622 = vmatprep.subr.mxu0 0.0
    %3623 = vmatpush1.msra.mxu0 0.0
    %3624 = vmatprep.subr.mxu0 0.0
    %3625 = vmatpush1.msra.mxu0 0.0
    %3626 = vmatprep.subr.mxu0 0.0
    %3627 = vmatpush1.msra.mxu0 0.0
    %3628 = vmatprep.subr.mxu0 0.0
    %3629 = vmatpush1.msra.mxu0 0.0
    %3630 = vmatprep.subr.mxu0 0.0
    %3631 = vmatpush1.msra.mxu0 0.0
    %3632 = vmatprep.subr.mxu0 0.0
    %3633 = vmatpush1.msra.mxu0 0.0
    %3634 = vmatprep.subr.mxu0 0.0
    %3635 = vmatpush1.msra.mxu0 0.0
    %3636 = vmatprep.subr.mxu0 0.0
    %3637 = vmatpush1.msra.mxu0 0.0
    %3638 = vmatprep.subr.mxu0 0.0
    %3639 = vmatpush1.msra.mxu0 0.0
    %3640 = vmatprep.mubr.f32.mxu0 0.0
    %3641 = vmatmul.mubr.f32.gmra.mrb[0].mxu0 %v2851
    %v3642 = vpop.f32.mrb[0].mxu0
    %v3643 = vadd.f32 0.0, %v3642
    %v3644 = vpop.f32.mrb[0].mxu0
    %3645 = vmatprep.mubr.f32.mxu0 0.0
    %3646 = vmatmul.mubr.f32.gmra.mrb[0].mxu0 %v2854
    %v3647 = vpop.f32.mrb[0].mxu0
    %v3648 = vadd.f32 0.0, %v3647
    %v3649 = vpop.f32.mrb[0].mxu0
    %3650 = vdwg.mxu0
    %s3651 = scalar_lea.vmem %s6, 192
    %v3652 = vld [vmem:[%s3651] sm:$0xff]
    %v3653 = vld [vmem:[%s3651 + $0x8] sm:$0xff]
    %v3654 = vld [vmem:[%s3651 + $0x10] sm:$0xff]
    %v3655 = vld [vmem:[%s3651 + $0x18] sm:$0xff]
    %3656 = vmatprep.subr.mxu0 0.0
    %3657 = vmatpush1.msra.mxu0 %v3652
    %3658 = vmatprep.subr.mxu0 0.0
    %3659 = vmatpush1.msra.mxu0 %v3653
    %3660 = vmatprep.subr.mxu0 0.0
    %3661 = vmatpush1.msra.mxu0 %v3654
    %3662 = vmatprep.subr.mxu0 0.0
    %3663 = vmatpush1.msra.mxu0 %v3655
    %3664 = vmatprep.subr.mxu0 0.0
    %3665 = vmatpush1.msra.mxu0 0.0
    %3666 = vmatprep.subr.mxu0 0.0
    %3667 = vmatpush1.msra.mxu0 0.0
    %3668 = vmatprep.subr.mxu0 0.0
    %3669 = vmatpush1.msra.mxu0 0.0
    %3670 = vmatprep.subr.mxu0 0.0
    %3671 = vmatpush1.msra.mxu0 0.0
    %3672 = vmatprep.subr.mxu0 0.0
    %3673 = vmatpush1.msra.mxu0 0.0
    %3674 = vmatprep.subr.mxu0 0.0
    %3675 = vmatpush1.msra.mxu0 0.0
    %3676 = vmatprep.subr.mxu0 0.0
    %3677 = vmatpush1.msra.mxu0 0.0
    %3678 = vmatprep.subr.mxu0 0.0
    %3679 = vmatpush1.msra.mxu0 0.0
    %3680 = vmatprep.subr.mxu0 0.0
    %3681 = vmatpush1.msra.mxu0 0.0
    %3682 = vmatprep.subr.mxu0 0.0
    %3683 = vmatpush1.msra.mxu0 0.0
    %3684 = vmatprep.subr.mxu0 0.0
    %3685 = vmatpush1.msra.mxu0 0.0
    %3686 = vmatprep.subr.mxu0 0.0
    %3687 = vmatpush1.msra.mxu0 0.0
    %3688 = vmatprep.subr.mxu0 0.0
    %3689 = vmatpush1.msra.mxu0 0.0
    %3690 = vmatprep.subr.mxu0 0.0
    %3691 = vmatpush1.msra.mxu0 0.0
    %3692 = vmatprep.subr.mxu0 0.0
    %3693 = vmatpush1.msra.mxu0 0.0
    %3694 = vmatprep.subr.mxu0 0.0
    %3695 = vmatpush1.msra.mxu0 0.0
    %3696 = vmatprep.subr.mxu0 0.0
    %3697 = vmatpush1.msra.mxu0 0.0
    %3698 = vmatprep.subr.mxu0 0.0
    %3699 = vmatpush1.msra.mxu0 0.0
    %3700 = vmatprep.subr.mxu0 0.0
    %3701 = vmatpush1.msra.mxu0 0.0
    %3702 = vmatprep.subr.mxu0 0.0
    %3703 = vmatpush1.msra.mxu0 0.0
    %3704 = vmatprep.subr.mxu0 0.0
    %3705 = vmatpush1.msra.mxu0 0.0
    %3706 = vmatprep.subr.mxu0 0.0
    %3707 = vmatpush1.msra.mxu0 0.0
    %3708 = vmatprep.subr.mxu0 0.0
    %3709 = vmatpush1.msra.mxu0 0.0
    %3710 = vmatprep.subr.mxu0 0.0
    %3711 = vmatpush1.msra.mxu0 0.0
    %3712 = vmatprep.subr.mxu0 0.0
    %3713 = vmatpush1.msra.mxu0 0.0
    %3714 = vmatprep.subr.mxu0 0.0
    %3715 = vmatpush1.msra.mxu0 0.0
    %3716 = vmatprep.subr.mxu0 0.0
    %3717 = vmatpush1.msra.mxu0 0.0
    %3718 = vmatprep.subr.mxu0 0.0
    %3719 = vmatpush1.msra.mxu0 0.0
    %3720 = vmatprep.mubr.f32.mxu0 0.0
    %3721 = vmatmul.mubr.f32.gmra.mrb[0].mxu0 %v2851
    %v3722 = vpop.f32.mrb[0].mxu0
    %v3723 = vadd.f32 0.0, %v3722
    %v3724 = vpop.f32.mrb[0].mxu0
    %3725 = vmatprep.mubr.f32.mxu0 0.0
    %3726 = vmatmul.mubr.f32.gmra.mrb[0].mxu0 %v2854
    %v3727 = vpop.f32.mrb[0].mxu0
    %v3728 = vadd.f32 0.0, %v3727
    %v3729 = vpop.f32.mrb[0].mxu0
    %3730 = vdwg.mxu0
    %s3731 = scalar_lea.vmem %s6, 224
    %v3732 = vld [vmem:[%s3731] sm:$0xff]
    %v3733 = vld [vmem:[%s3731 + $0x8] sm:$0xff]
    %v3734 = vld [vmem:[%s3731 + $0x10] sm:$0xff]
    %v3735 = vld [vmem:[%s3731 + $0x18] sm:$0xff]
    %3736 = vmatprep.subr.mxu0 0.0
    %3737 = vmatpush1.msra.mxu0 %v3732
    %3738 = vmatprep.subr.mxu0 0.0
    %3739 = vmatpush1.msra.mxu0 %v3733
    %3740 = vmatprep.subr.mxu0 0.0
    %3741 = vmatpush1.msra.mxu0 %v3734
    %3742 = vmatprep.subr.mxu0 0.0
    %3743 = vmatpush1.msra.mxu0 %v3735
    %3744 = vmatprep.subr.mxu0 0.0
    %3745 = vmatpush1.msra.mxu0 0.0
    %3746 = vmatprep.subr.mxu0 0.0
    %3747 = vmatpush1.msra.mxu0 0.0
    %3748 = vmatprep.subr.mxu0 0.0
    %3749 = vmatpush1.msra.mxu0 0.0
    %3750 = vmatprep.subr.mxu0 0.0
    %3751 = vmatpush1.msra.mxu0 0.0
    %3752 = vmatprep.subr.mxu0 0.0
    %3753 = vmatpush1.msra.mxu0 0.0
    %3754 = vmatprep.subr.mxu0 0.0
    %3755 = vmatpush1.msra.mxu0 0.0
    %3756 = vmatprep.subr.mxu0 0.0
    %3757 = vmatpush1.msra.mxu0 0.0
    %3758 = vmatprep.subr.mxu0 0.0
    %3759 = vmatpush1.msra.mxu0 0.0
    %3760 = vmatprep.subr.mxu0 0.0
    %3761 = vmatpush1.msra.mxu0 0.0
    %3762 = vmatprep.subr.mxu0 0.0
    %3763 = vmatpush1.msra.mxu0 0.0
    %3764 = vmatprep.subr.mxu0 0.0
    %3765 = vmatpush1.msra.mxu0 0.0
    %3766 = vmatprep.subr.mxu0 0.0
    %3767 = vmatpush1.msra.mxu0 0.0
    %3768 = vmatprep.subr.mxu0 0.0
    %3769 = vmatpush1.msra.mxu0 0.0
    %3770 = vmatprep.subr.mxu0 0.0
    %3771 = vmatpush1.msra.mxu0 0.0
    %3772 = vmatprep.subr.mxu0 0.0
    %3773 = vmatpush1.msra.mxu0 0.0
    %3774 = vmatprep.subr.mxu0 0.0
    %3775 = vmatpush1.msra.mxu0 0.0
    %3776 = vmatprep.subr.mxu0 0.0
    %3777 = vmatpush1.msra.mxu0 0.0
    %3778 = vmatprep.subr.mxu0 0.0
    %3779 = vmatpush1.msra.mxu0 0.0
    %3780 = vmatprep.subr.mxu0 0.0
    %3781 = vmatpush1.msra.mxu0 0.0
    %3782 = vmatprep.subr.mxu0 0.0
    %3783 = vmatpush1.msra.mxu0 0.0
    %3784 = vmatprep.subr.mxu0 0.0
    %3785 = vmatpush1.msra.mxu0 0.0
    %3786 = vmatprep.subr.mxu0 0.0
    %3787 = vmatpush1.msra.mxu0 0.0
    %3788 = vmatprep.subr.mxu0 0.0
    %3789 = vmatpush1.msra.mxu0 0.0
    %3790 = vmatprep.subr.mxu0 0.0
    %3791 = vmatpush1.msra.mxu0 0.0
    %3792 = vmatprep.subr.mxu0 0.0
    %3793 = vmatpush1.msra.mxu0 0.0
    %3794 = vmatprep.subr.mxu0 0.0
    %3795 = vmatpush1.msra.mxu0 0.0
    %3796 = vmatprep.subr.mxu0 0.0
    %3797 = vmatpush1.msra.mxu0 0.0
    %3798 = vmatprep.subr.mxu0 0.0
    %3799 = vmatpush1.msra.mxu0 0.0
    %3800 = vmatprep.mubr.f32.mxu0 0.0
    %3801 = vmatmul.mubr.f32.gmra.mrb[0].mxu0 %v2851
    %v3802 = vpop.f32.mrb[0].mxu0
    %v3803 = vadd.f32 0.0, %v3802
    %v3804 = vpop.f32.mrb[0].mxu0
    %3805 = vmatprep.mubr.f32.mxu0 0.0
    %3806 = vmatmul.mubr.f32.gmra.mrb[0].mxu0 %v2854
    %v3807 = vpop.f32.mrb[0].mxu0
    %v3808 = vadd.f32 0.0, %v3807
    %v3809 = vpop.f32.mrb[0].mxu0
    %3810 = vdwg.mxu0
    %s3811 = scalar_lea.vmem %s7, 4
    %v3812 = vld [vmem:[%s3811] sm:$0x1]
    %s3813 = scalar_lea.vmem %s7, 5
    %v3814 = vld [vmem:[%s3813] sm:$0x1]
    %s3815 = scalar_lea.vmem %s7, 6
    %v3816 = vld [vmem:[%s3815] sm:$0x1]
    %s3817 = scalar_lea.vmem %s7, 7
    %v3818 = vld [vmem:[%s3817] sm:$0x1]
    %v3819 = vsel %vm1068, %v2923, 0.0
    %3820 = vadd.xlane.f32.xlu0 %v3819
    %v3821 = vpop.xlane.xlu0 %3820
    %v3822 = vsel %vm1068, %v2928, 0.0
    %3823 = vadd.xlane.f32.xlu0 %v3822
    %v3824 = vpop.xlane.xlu0 %3823
    %v3825 = vadd.f32 %v3821, 0.0
    %v3826 = vadd.f32 %v3824, 0.0
    %v3827 = vsel %vm1068, %v3003, 0.0
    %3828 = vadd.xlane.f32.xlu0 %v3827
    %v3829 = vpop.xlane.xlu0 %3828
    %v3830 = vsel %vm1068, %v3008, 0.0
    %3831 = vadd.xlane.f32.xlu0 %v3830
    %v3832 = vpop.xlane.xlu0 %3831
    %v3833 = vadd.f32 %v3825, %v3829
    %v3834 = vadd.f32 %v3826, %v3832
    %v3835 = vsel %vm1068, %v3083, 0.0
    %3836 = vadd.xlane.f32.xlu0 %v3835
    %v3837 = vpop.xlane.xlu0 %3836
    %v3838 = vsel %vm1068, %v3088, 0.0
    %3839 = vadd.xlane.f32.xlu0 %v3838
    %v3840 = vpop.xlane.xlu0 %3839
    %v3841 = vadd.f32 %v3833, %v3837
    %v3842 = vadd.f32 %v3834, %v3840
    %v3843 = vsel %vm1068, %v3163, 0.0
    %3844 = vadd.xlane.f32.xlu0 %v3843
    %v3845 = vpop.xlane.xlu0 %3844
    %v3846 = vsel %vm1068, %v3168, 0.0
    %3847 = vadd.xlane.f32.xlu0 %v3846
    %v3848 = vpop.xlane.xlu0 %3847
    %v3849 = vadd.f32 %v3841, %v3845
    %v3850 = vadd.f32 %v3842, %v3848
    %v3851 = vmul.f32 %v2923, %v2923
    %v3852 = vmul.f32 %v2928, %v2928
    %v3853 = vsel %vm1068, %v3851, 0.0
    %3854 = vadd.xlane.f32.xlu0 %v3853
    %v3855 = vpop.xlane.xlu0 %3854
    %v3856 = vsel %vm1068, %v3852, 0.0
    %3857 = vadd.xlane.f32.xlu0 %v3856
    %v3858 = vpop.xlane.xlu0 %3857
    %v3859 = vadd.f32 %v3855, 0.0
    %v3860 = vadd.f32 %v3858, 0.0
    %v3861 = vmul.f32 %v3003, %v3003
    %v3862 = vmul.f32 %v3008, %v3008
    %v3863 = vsel %vm1068, %v3861, 0.0
    %3864 = vadd.xlane.f32.xlu0 %v3863
    %v3865 = vpop.xlane.xlu0 %3864
    %v3866 = vsel %vm1068, %v3862, 0.0
    %3867 = vadd.xlane.f32.xlu0 %v3866
    %v3868 = vpop.xlane.xlu0 %3867
    %v3869 = vadd.f32 %v3859, %v3865
    %v3870 = vadd.f32 %v3860, %v3868
    %v3871 = vmul.f32 %v3083, %v3083
    %v3872 = vmul.f32 %v3088, %v3088
    %v3873 = vsel %vm1068, %v3871, 0.0
    %3874 = vadd.xlane.f32.xlu0 %v3873
    %v3875 = vpop.xlane.xlu0 %3874
    %v3876 = vsel %vm1068, %v3872, 0.0
    %3877 = vadd.xlane.f32.xlu0 %v3876
    %v3878 = vpop.xlane.xlu0 %3877
    %v3879 = vadd.f32 %v3869, %v3875
    %v3880 = vadd.f32 %v3870, %v3878
    %v3881 = vmul.f32 %v3163, %v3163
    %v3882 = vmul.f32 %v3168, %v3168
    %v3883 = vsel %vm1068, %v3881, 0.0
    %3884 = vadd.xlane.f32.xlu0 %v3883
    %v3885 = vpop.xlane.xlu0 %3884
    %v3886 = vsel %vm1068, %v3882, 0.0
    %3887 = vadd.xlane.f32.xlu0 %v3886
    %v3888 = vpop.xlane.xlu0 %3887
    %v3889 = vadd.f32 %v3879, %v3885
    %v3890 = vadd.f32 %v3880, %v3888
    %v3891 = vmul.f32 %v3849, %v61
    %v3892 = vmul.f32 %v3850, %v61
    %v3893 = vmul.f32 %v3889, %v61
    %v3894 = vmul.f32 %v3890, %v61
    %v3895 = vmul.f32 %v3891, %v3891
    %v3896 = vmul.f32 %v3892, %v3892
    %v3897 = vsub.f32 %v3893, %v3895
    %v3898 = vsub.f32 %v3894, %v3896
    %v3899 = vadd.f32 %v3897, 1e-05
    %v3900 = vadd.f32 %v3898, 1e-05
    %v3901 = vrsqrt.pop %v3899
    %v3902 = vrsqrt.pop %v3900
    %v3903 = vsub.f32 %v2923, %v3891
    %v3904 = vsub.f32 %v2928, %v3892
    %v3905 = vmul.f32 %v3903, %v3901
    %v3906 = vmul.f32 %v3904, %v3902
    %v3908 = vlaneseq
    %v3909 = vshrl.u32 %v3908, 7
    %v3910 = vsub.s32 0, %v3909
    %v3911 = vrot.slane %v3812, %v3910
    %v3913 = vmul.f32 %v3905, %v3911
    %v3914 = vmul.f32 %v3906, %v3911
    %v3915 = vsub.f32 %v3003, %v3891
    %v3916 = vsub.f32 %v3008, %v3892
    %v3917 = vmul.f32 %v3915, %v3901
    %v3918 = vmul.f32 %v3916, %v3902
    %v3920 = vlaneseq
    %v3921 = vshrl.u32 %v3920, 7
    %v3922 = vsub.s32 0, %v3921
    %v3923 = vrot.slane %v3814, %v3922
    %v3925 = vmul.f32 %v3917, %v3923
    %v3926 = vmul.f32 %v3918, %v3923
    %v3927 = vsub.f32 %v3083, %v3891
    %v3928 = vsub.f32 %v3088, %v3892
    %v3929 = vmul.f32 %v3927, %v3901
    %v3930 = vmul.f32 %v3928, %v3902
    %v3932 = vlaneseq
    %v3933 = vshrl.u32 %v3932, 7
    %v3934 = vsub.s32 0, %v3933
    %v3935 = vrot.slane %v3816, %v3934
    %v3937 = vmul.f32 %v3929, %v3935
    %v3938 = vmul.f32 %v3930, %v3935
    %v3939 = vsub.f32 %v3163, %v3891
    %v3940 = vsub.f32 %v3168, %v3892
    %v3941 = vmul.f32 %v3939, %v3901
    %v3942 = vmul.f32 %v3940, %v3902
    %v3944 = vlaneseq
    %v3945 = vshrl.u32 %v3944, 7
    %v3946 = vsub.s32 0, %v3945
    %v3947 = vrot.slane %v3818, %v3946
    %v3949 = vmul.f32 %v3941, %v3947
    %v3950 = vmul.f32 %v3942, %v3947
    %s3951 = scalar_lea.vmem %s8, 4
    %v3952 = vld [vmem:[%s3951] sm:$0x1]
    %s3953 = scalar_lea.vmem %s8, 5
    %v3954 = vld [vmem:[%s3953] sm:$0x1]
    %s3955 = scalar_lea.vmem %s8, 6
    %v3956 = vld [vmem:[%s3955] sm:$0x1]
    %s3957 = scalar_lea.vmem %s8, 7
    %v3958 = vld [vmem:[%s3957] sm:$0x1]
    %v3959 = vsel %vm1068, %v3243, 0.0
    %3960 = vadd.xlane.f32.xlu0 %v3959
    %v3961 = vpop.xlane.xlu0 %3960
    %v3962 = vsel %vm1068, %v3248, 0.0
    %3963 = vadd.xlane.f32.xlu0 %v3962
    %v3964 = vpop.xlane.xlu0 %3963
    %v3965 = vadd.f32 %v3961, 0.0
    %v3966 = vadd.f32 %v3964, 0.0
    %v3967 = vsel %vm1068, %v3323, 0.0
    %3968 = vadd.xlane.f32.xlu0 %v3967
    %v3969 = vpop.xlane.xlu0 %3968
    %v3970 = vsel %vm1068, %v3328, 0.0
    %3971 = vadd.xlane.f32.xlu0 %v3970
    %v3972 = vpop.xlane.xlu0 %3971
    %v3973 = vadd.f32 %v3965, %v3969
    %v3974 = vadd.f32 %v3966, %v3972
    %v3975 = vsel %vm1068, %v3403, 0.0
    %3976 = vadd.xlane.f32.xlu0 %v3975
    %v3977 = vpop.xlane.xlu0 %3976
    %v3978 = vsel %vm1068, %v3408, 0.0
    %3979 = vadd.xlane.f32.xlu0 %v3978
    %v3980 = vpop.xlane.xlu0 %3979
    %v3981 = vadd.f32 %v3973, %v3977
    %v3982 = vadd.f32 %v3974, %v3980
    %v3983 = vsel %vm1068, %v3483, 0.0
    %3984 = vadd.xlane.f32.xlu0 %v3983
    %v3985 = vpop.xlane.xlu0 %3984
    %v3986 = vsel %vm1068, %v3488, 0.0
    %3987 = vadd.xlane.f32.xlu0 %v3986
    %v3988 = vpop.xlane.xlu0 %3987
    %v3989 = vadd.f32 %v3981, %v3985
    %v3990 = vadd.f32 %v3982, %v3988
    %v3991 = vmul.f32 %v3243, %v3243
    %v3992 = vmul.f32 %v3248, %v3248
    %v3993 = vsel %vm1068, %v3991, 0.0
    %3994 = vadd.xlane.f32.xlu0 %v3993
    %v3995 = vpop.xlane.xlu0 %3994
    %v3996 = vsel %vm1068, %v3992, 0.0
    %3997 = vadd.xlane.f32.xlu0 %v3996
    %v3998 = vpop.xlane.xlu0 %3997
    %v3999 = vadd.f32 %v3995, 0.0
    %v4000 = vadd.f32 %v3998, 0.0
    %v4001 = vmul.f32 %v3323, %v3323
    %v4002 = vmul.f32 %v3328, %v3328
    %v4003 = vsel %vm1068, %v4001, 0.0
    %4004 = vadd.xlane.f32.xlu0 %v4003
    %v4005 = vpop.xlane.xlu0 %4004
    %v4006 = vsel %vm1068, %v4002, 0.0
    %4007 = vadd.xlane.f32.xlu0 %v4006
    %v4008 = vpop.xlane.xlu0 %4007
    %v4009 = vadd.f32 %v3999, %v4005
    %v4010 = vadd.f32 %v4000, %v4008
    %v4011 = vmul.f32 %v3403, %v3403
    %v4012 = vmul.f32 %v3408, %v3408
    %v4013 = vsel %vm1068, %v4011, 0.0
    %4014 = vadd.xlane.f32.xlu0 %v4013
    %v4015 = vpop.xlane.xlu0 %4014
    %v4016 = vsel %vm1068, %v4012, 0.0
    %4017 = vadd.xlane.f32.xlu0 %v4016
    %v4018 = vpop.xlane.xlu0 %4017
    %v4019 = vadd.f32 %v4009, %v4015
    %v4020 = vadd.f32 %v4010, %v4018
    %v4021 = vmul.f32 %v3483, %v3483
    %v4022 = vmul.f32 %v3488, %v3488
    %v4023 = vsel %vm1068, %v4021, 0.0
    %4024 = vadd.xlane.f32.xlu0 %v4023
    %v4025 = vpop.xlane.xlu0 %4024
    %v4026 = vsel %vm1068, %v4022, 0.0
    %4027 = vadd.xlane.f32.xlu0 %v4026
    %v4028 = vpop.xlane.xlu0 %4027
    %v4029 = vadd.f32 %v4019, %v4025
    %v4030 = vadd.f32 %v4020, %v4028
    %v4031 = vmul.f32 %v3989, %v61
    %v4032 = vmul.f32 %v3990, %v61
    %v4033 = vmul.f32 %v4029, %v61
    %v4034 = vmul.f32 %v4030, %v61
    %v4035 = vmul.f32 %v4031, %v4031
    %v4036 = vmul.f32 %v4032, %v4032
    %v4037 = vsub.f32 %v4033, %v4035
    %v4038 = vsub.f32 %v4034, %v4036
    %v4039 = vadd.f32 %v4037, 1e-05
    %v4040 = vadd.f32 %v4038, 1e-05
    %v4041 = vrsqrt.pop %v4039
    %v4042 = vrsqrt.pop %v4040
    %v4043 = vsub.f32 %v3243, %v4031
    %v4044 = vsub.f32 %v3248, %v4032
    %v4045 = vmul.f32 %v4043, %v4041
    %v4046 = vmul.f32 %v4044, %v4042
    %v4048 = vlaneseq
    %v4049 = vshrl.u32 %v4048, 7
    %v4050 = vsub.s32 0, %v4049
    %v4051 = vrot.slane %v3952, %v4050
    %v4053 = vmul.f32 %v4045, %v4051
    %v4054 = vmul.f32 %v4046, %v4051
    %v4055 = vsub.f32 %v3323, %v4031
    %v4056 = vsub.f32 %v3328, %v4032
    %v4057 = vmul.f32 %v4055, %v4041
    %v4058 = vmul.f32 %v4056, %v4042
    %v4060 = vlaneseq
    %v4061 = vshrl.u32 %v4060, 7
    %v4062 = vsub.s32 0, %v4061
    %v4063 = vrot.slane %v3954, %v4062
    %v4065 = vmul.f32 %v4057, %v4063
    %v4066 = vmul.f32 %v4058, %v4063
    %v4067 = vsub.f32 %v3403, %v4031
    %v4068 = vsub.f32 %v3408, %v4032
    %v4069 = vmul.f32 %v4067, %v4041
    %v4070 = vmul.f32 %v4068, %v4042
    %v4072 = vlaneseq
    %v4073 = vshrl.u32 %v4072, 7
    %v4074 = vsub.s32 0, %v4073
    %v4075 = vrot.slane %v3956, %v4074
    %v4077 = vmul.f32 %v4069, %v4075
    %v4078 = vmul.f32 %v4070, %v4075
    %v4079 = vsub.f32 %v3483, %v4031
    %v4080 = vsub.f32 %v3488, %v4032
    %v4081 = vmul.f32 %v4079, %v4041
    %v4082 = vmul.f32 %v4080, %v4042
    %v4084 = vlaneseq
    %v4085 = vshrl.u32 %v4084, 7
    %v4086 = vsub.s32 0, %v4085
    %v4087 = vrot.slane %v3958, %v4086
    %v4089 = vmul.f32 %v4081, %v4087
    %v4090 = vmul.f32 %v4082, %v4087
    %v4092 = vsel %vm1068, %v3913, 0
    %v4095 = vsel %vm1068, %v3914, 0
    %v4098 = vsel %vm1068, %v4053, 0
    %v4101 = vsel %vm1068, %v4054, 0
    %4103 = vmatprep.subr.mxu0 0.0
    %4104 = vmatpush1.xpose.msra.mxu0 %v4098
    %4105 = vmatprep.subr.mxu0 0.0
    %4106 = vmatpush1.xpose.msra.mxu0 %v4101
    %4107 = vmatprep.subr.mxu0 0.0
    %4108 = vmatpush1.xpose.msra.mxu0 0.0
    %4109 = vmatprep.subr.mxu0 0.0
    %4110 = vmatpush1.xpose.msra.mxu0 0.0
    %4111 = vmatprep.subr.mxu0 0.0
    %4112 = vmatpush1.xpose.msra.mxu0 0.0
    %4113 = vmatprep.subr.mxu0 0.0
    %4114 = vmatpush1.xpose.msra.mxu0 0.0
    %4115 = vmatprep.subr.mxu0 0.0
    %4116 = vmatpush1.xpose.msra.mxu0 0.0
    %4117 = vmatprep.subr.mxu0 0.0
    %4118 = vmatpush1.xpose.msra.mxu0 0.0
    %4119 = vmatprep.subr.mxu0 0.0
    %4120 = vmatpush1.xpose.msra.mxu0 0.0
    %4121 = vmatprep.subr.mxu0 0.0
    %4122 = vmatpush1.xpose.msra.mxu0 0.0
    %4123 = vmatprep.subr.mxu0 0.0
    %4124 = vmatpush1.xpose.msra.mxu0 0.0
    %4125 = vmatprep.subr.mxu0 0.0
    %4126 = vmatpush1.xpose.msra.mxu0 0.0
    %4127 = vmatprep.subr.mxu0 0.0
    %4128 = vmatpush1.xpose.msra.mxu0 0.0
    %4129 = vmatprep.subr.mxu0 0.0
    %4130 = vmatpush1.xpose.msra.mxu0 0.0
    %4131 = vmatprep.subr.mxu0 0.0
    %4132 = vmatpush1.xpose.msra.mxu0 0.0
    %4133 = vmatprep.subr.mxu0 0.0
    %4134 = vmatpush1.xpose.msra.mxu0 0.0
    %4135 = vmatprep.subr.mxu0 0.0
    %4136 = vmatpush1.xpose.msra.mxu0 0.0
    %4137 = vmatprep.subr.mxu0 0.0
    %4138 = vmatpush1.xpose.msra.mxu0 0.0
    %4139 = vmatprep.subr.mxu0 0.0
    %4140 = vmatpush1.xpose.msra.mxu0 0.0
    %4141 = vmatprep.subr.mxu0 0.0
    %4142 = vmatpush1.xpose.msra.mxu0 0.0
    %4143 = vmatprep.subr.mxu0 0.0
    %4144 = vmatpush1.xpose.msra.mxu0 0.0
    %4145 = vmatprep.subr.mxu0 0.0
    %4146 = vmatpush1.xpose.msra.mxu0 0.0
    %4147 = vmatprep.subr.mxu0 0.0
    %4148 = vmatpush1.xpose.msra.mxu0 0.0
    %4149 = vmatprep.subr.mxu0 0.0
    %4150 = vmatpush1.xpose.msra.mxu0 0.0
    %4151 = vmatprep.subr.mxu0 0.0
    %4152 = vmatpush1.xpose.msra.mxu0 0.0
    %4153 = vmatprep.subr.mxu0 0.0
    %4154 = vmatpush1.xpose.msra.mxu0 0.0
    %4155 = vmatprep.subr.mxu0 0.0
    %4156 = vmatpush1.xpose.msra.mxu0 0.0
    %4157 = vmatprep.subr.mxu0 0.0
    %4158 = vmatpush1.xpose.msra.mxu0 0.0
    %4159 = vmatprep.subr.mxu0 0.0
    %4160 = vmatpush1.xpose.msra.mxu0 0.0
    %4161 = vmatprep.subr.mxu0 0.0
    %4162 = vmatpush1.xpose.msra.mxu0 0.0
    %4163 = vmatprep.subr.mxu0 0.0
    %4164 = vmatpush1.xpose.msra.mxu0 0.0
    %4165 = vmatprep.subr.mxu0 0.0
    %4166 = vmatpush1.xpose.msra.mxu0 0.0
    %4167 = vmatprep.mubr.f32.mxu0 0.0
    %4168 = vmatmul.mubr.f32.gmra.mrb[0].mxu0 %v4092
    %v4169 = vpop.f32.mrb[0].mxu0
    %v4170 = vadd.f32 %v50, %v4169
    %v4171 = vpop.f32.mrb[0].mxu0
    %4172 = vmatprep.mubr.f32.mxu0 0.0
    %4173 = vmatmul.mubr.f32.gmra.mrb[0].mxu0 %v4095
    %v4174 = vpop.f32.mrb[0].mxu0
    %v4175 = vadd.f32 %v51, %v4174
    %v4176 = vpop.f32.mrb[0].mxu0
    %4177 = vdwg.mxu0
    %v4178 = vsel %vm1427, %v4170, -inf
    %4179 = vmax.xlane.f32.xlu0 %v4178
    %v4180 = vpop.xlane.xlu0 %4179
    %v4181 = vsel %vm1427, %v4175, -inf
    %4182 = vmax.xlane.f32.xlu0 %v4181
    %v4183 = vpop.xlane.xlu0 %4182
    %v4184 = vsub.f32 %v4170, %v4180
    %v4185 = vsub.f32 %v4175, %v4183
    %v4186 = vmul.f32 %v4184, 1.442695
    %v4187 = vpow.pop %v4186
    %v4188 = vmul.f32 %v4185, 1.442695
    %v4189 = vpow.pop %v4188
    %v4190 = vsel %vm1427, %v4187, 0.0
    %4191 = vadd.xlane.f32.xlu0 %v4190
    %v4192 = vpop.xlane.xlu0 %4191
    %v4193 = vsel %vm1427, %v4189, 0.0
    %4194 = vadd.xlane.f32.xlu0 %v4193
    %v4195 = vpop.xlane.xlu0 %4194
    %v4196 = vrcp.pop %v4192
    %v4197 = vrcp.pop %v4195
    %v4198 = vmul.f32 %v4187, %v4196
    %v4199 = vmul.f32 %v4189, %v4197
    %v4201 = vsel %vm1427, %v4198, 0
    %v4204 = vsel %vm1427, %v4199, 0
    %4206 = vmatprep.subr.mxu0 0.0
    %4207 = vmatpush1.msra.mxu0 %v3563
    %4208 = vmatprep.subr.mxu0 0.0
    %4209 = vmatpush1.msra.mxu0 %v3568
    %4210 = vmatprep.subr.mxu0 0.0
    %4211 = vmatpush1.msra.mxu0 0.0
    %4212 = vmatprep.subr.mxu0 0.0
    %4213 = vmatpush1.msra.mxu0 0.0
    %4214 = vmatprep.subr.mxu0 0.0
    %4215 = vmatpush1.msra.mxu0 0.0
    %4216 = vmatprep.subr.mxu0 0.0
    %4217 = vmatpush1.msra.mxu0 0.0
    %4218 = vmatprep.subr.mxu0 0.0
    %4219 = vmatpush1.msra.mxu0 0.0
    %4220 = vmatprep.subr.mxu0 0.0
    %4221 = vmatpush1.msra.mxu0 0.0
    %4222 = vmatprep.subr.mxu0 0.0
    %4223 = vmatpush1.msra.mxu0 0.0
    %4224 = vmatprep.subr.mxu0 0.0
    %4225 = vmatpush1.msra.mxu0 0.0
    %4226 = vmatprep.subr.mxu0 0.0
    %4227 = vmatpush1.msra.mxu0 0.0
    %4228 = vmatprep.subr.mxu0 0.0
    %4229 = vmatpush1.msra.mxu0 0.0
    %4230 = vmatprep.subr.mxu0 0.0
    %4231 = vmatpush1.msra.mxu0 0.0
    %4232 = vmatprep.subr.mxu0 0.0
    %4233 = vmatpush1.msra.mxu0 0.0
    %4234 = vmatprep.subr.mxu0 0.0
    %4235 = vmatpush1.msra.mxu0 0.0
    %4236 = vmatprep.subr.mxu0 0.0
    %4237 = vmatpush1.msra.mxu0 0.0
    %4238 = vmatprep.subr.mxu0 0.0
    %4239 = vmatpush1.msra.mxu0 0.0
    %4240 = vmatprep.subr.mxu0 0.0
    %4241 = vmatpush1.msra.mxu0 0.0
    %4242 = vmatprep.subr.mxu0 0.0
    %4243 = vmatpush1.msra.mxu0 0.0
    %4244 = vmatprep.subr.mxu0 0.0
    %4245 = vmatpush1.msra.mxu0 0.0
    %4246 = vmatprep.subr.mxu0 0.0
    %4247 = vmatpush1.msra.mxu0 0.0
    %4248 = vmatprep.subr.mxu0 0.0
    %4249 = vmatpush1.msra.mxu0 0.0
    %4250 = vmatprep.subr.mxu0 0.0
    %4251 = vmatpush1.msra.mxu0 0.0
    %4252 = vmatprep.subr.mxu0 0.0
    %4253 = vmatpush1.msra.mxu0 0.0
    %4254 = vmatprep.subr.mxu0 0.0
    %4255 = vmatpush1.msra.mxu0 0.0
    %4256 = vmatprep.subr.mxu0 0.0
    %4257 = vmatpush1.msra.mxu0 0.0
    %4258 = vmatprep.subr.mxu0 0.0
    %4259 = vmatpush1.msra.mxu0 0.0
    %4260 = vmatprep.subr.mxu0 0.0
    %4261 = vmatpush1.msra.mxu0 0.0
    %4262 = vmatprep.subr.mxu0 0.0
    %4263 = vmatpush1.msra.mxu0 0.0
    %4264 = vmatprep.subr.mxu0 0.0
    %4265 = vmatpush1.msra.mxu0 0.0
    %4266 = vmatprep.subr.mxu0 0.0
    %4267 = vmatpush1.msra.mxu0 0.0
    %4268 = vmatprep.subr.mxu0 0.0
    %4269 = vmatpush1.msra.mxu0 0.0
    %4270 = vmatprep.mubr.f32.mxu0 0.0
    %4271 = vmatmul.mubr.f32.gmra.mrb[0].mxu0 %v4201
    %v4272 = vpop.f32.mrb[0].mxu0
    %v4273 = vadd.f32 0.0, %v4272
    %v4274 = vpop.f32.mrb[0].mxu0
    %4275 = vmatprep.mubr.f32.mxu0 0.0
    %4276 = vmatmul.mubr.f32.gmra.mrb[0].mxu0 %v4204
    %v4277 = vpop.f32.mrb[0].mxu0
    %v4278 = vadd.f32 0.0, %v4277
    %v4279 = vpop.f32.mrb[0].mxu0
    %4280 = vdwg.mxu0
    %s4281 = scalar_lea.vmem %s9, 32
    %v4282 = vld [vmem:[%s4281] sm:$0xff]
    %v4284 = vsel %vm1068, %v3925, 0
    %v4287 = vsel %vm1068, %v3926, 0
    %v4290 = vsel %vm1068, %v4065, 0
    %v4293 = vsel %vm1068, %v4066, 0
    %4295 = vmatprep.subr.mxu0 0.0
    %4296 = vmatpush1.xpose.msra.mxu0 %v4290
    %4297 = vmatprep.subr.mxu0 0.0
    %4298 = vmatpush1.xpose.msra.mxu0 %v4293
    %4299 = vmatprep.subr.mxu0 0.0
    %4300 = vmatpush1.xpose.msra.mxu0 0.0
    %4301 = vmatprep.subr.mxu0 0.0
    %4302 = vmatpush1.xpose.msra.mxu0 0.0
    %4303 = vmatprep.subr.mxu0 0.0
    %4304 = vmatpush1.xpose.msra.mxu0 0.0
    %4305 = vmatprep.subr.mxu0 0.0
    %4306 = vmatpush1.xpose.msra.mxu0 0.0
    %4307 = vmatprep.subr.mxu0 0.0
    %4308 = vmatpush1.xpose.msra.mxu0 0.0
    %4309 = vmatprep.subr.mxu0 0.0
    %4310 = vmatpush1.xpose.msra.mxu0 0.0
    %4311 = vmatprep.subr.mxu0 0.0
    %4312 = vmatpush1.xpose.msra.mxu0 0.0
    %4313 = vmatprep.subr.mxu0 0.0
    %4314 = vmatpush1.xpose.msra.mxu0 0.0
    %4315 = vmatprep.subr.mxu0 0.0
    %4316 = vmatpush1.xpose.msra.mxu0 0.0
    %4317 = vmatprep.subr.mxu0 0.0
    %4318 = vmatpush1.xpose.msra.mxu0 0.0
    %4319 = vmatprep.subr.mxu0 0.0
    %4320 = vmatpush1.xpose.msra.mxu0 0.0
    %4321 = vmatprep.subr.mxu0 0.0
    %4322 = vmatpush1.xpose.msra.mxu0 0.0
    %4323 = vmatprep.subr.mxu0 0.0
    %4324 = vmatpush1.xpose.msra.mxu0 0.0
    %4325 = vmatprep.subr.mxu0 0.0
    %4326 = vmatpush1.xpose.msra.mxu0 0.0
    %4327 = vmatprep.subr.mxu0 0.0
    %4328 = vmatpush1.xpose.msra.mxu0 0.0
    %4329 = vmatprep.subr.mxu0 0.0
    %4330 = vmatpush1.xpose.msra.mxu0 0.0
    %4331 = vmatprep.subr.mxu0 0.0
    %4332 = vmatpush1.xpose.msra.mxu0 0.0
    %4333 = vmatprep.subr.mxu0 0.0
    %4334 = vmatpush1.xpose.msra.mxu0 0.0
    %4335 = vmatprep.subr.mxu0 0.0
    %4336 = vmatpush1.xpose.msra.mxu0 0.0
    %4337 = vmatprep.subr.mxu0 0.0
    %4338 = vmatpush1.xpose.msra.mxu0 0.0
    %4339 = vmatprep.subr.mxu0 0.0
    %4340 = vmatpush1.xpose.msra.mxu0 0.0
    %4341 = vmatprep.subr.mxu0 0.0
    %4342 = vmatpush1.xpose.msra.mxu0 0.0
    %4343 = vmatprep.subr.mxu0 0.0
    %4344 = vmatpush1.xpose.msra.mxu0 0.0
    %4345 = vmatprep.subr.mxu0 0.0
    %4346 = vmatpush1.xpose.msra.mxu0 0.0
    %4347 = vmatprep.subr.mxu0 0.0
    %4348 = vmatpush1.xpose.msra.mxu0 0.0
    %4349 = vmatprep.subr.mxu0 0.0
    %4350 = vmatpush1.xpose.msra.mxu0 0.0
    %4351 = vmatprep.subr.mxu0 0.0
    %4352 = vmatpush1.xpose.msra.mxu0 0.0
    %4353 = vmatprep.subr.mxu0 0.0
    %4354 = vmatpush1.xpose.msra.mxu0 0.0
    %4355 = vmatprep.subr.mxu0 0.0
    %4356 = vmatpush1.xpose.msra.mxu0 0.0
    %4357 = vmatprep.subr.mxu0 0.0
    %4358 = vmatpush1.xpose.msra.mxu0 0.0
    %4359 = vmatprep.mubr.f32.mxu0 0.0
    %4360 = vmatmul.mubr.f32.gmra.mrb[0].mxu0 %v4284
    %v4361 = vpop.f32.mrb[0].mxu0
    %v4362 = vadd.f32 %v50, %v4361
    %v4363 = vpop.f32.mrb[0].mxu0
    %4364 = vmatprep.mubr.f32.mxu0 0.0
    %4365 = vmatmul.mubr.f32.gmra.mrb[0].mxu0 %v4287
    %v4366 = vpop.f32.mrb[0].mxu0
    %v4367 = vadd.f32 %v51, %v4366
    %v4368 = vpop.f32.mrb[0].mxu0
    %4369 = vdwg.mxu0
    %v4370 = vsel %vm1427, %v4362, -inf
    %4371 = vmax.xlane.f32.xlu0 %v4370
    %v4372 = vpop.xlane.xlu0 %4371
    %v4373 = vsel %vm1427, %v4367, -inf
    %4374 = vmax.xlane.f32.xlu0 %v4373
    %v4375 = vpop.xlane.xlu0 %4374
    %v4376 = vsub.f32 %v4362, %v4372
    %v4377 = vsub.f32 %v4367, %v4375
    %v4378 = vmul.f32 %v4376, 1.442695
    %v4379 = vpow.pop %v4378
    %v4380 = vmul.f32 %v4377, 1.442695
    %v4381 = vpow.pop %v4380
    %v4382 = vsel %vm1427, %v4379, 0.0
    %4383 = vadd.xlane.f32.xlu0 %v4382
    %v4384 = vpop.xlane.xlu0 %4383
    %v4385 = vsel %vm1427, %v4381, 0.0
    %4386 = vadd.xlane.f32.xlu0 %v4385
    %v4387 = vpop.xlane.xlu0 %4386
    %v4388 = vrcp.pop %v4384
    %v4389 = vrcp.pop %v4387
    %v4390 = vmul.f32 %v4379, %v4388
    %v4391 = vmul.f32 %v4381, %v4389
    %v4393 = vsel %vm1427, %v4390, 0
    %v4396 = vsel %vm1427, %v4391, 0
    %4398 = vmatprep.subr.mxu0 0.0
    %4399 = vmatpush1.msra.mxu0 %v3643
    %4400 = vmatprep.subr.mxu0 0.0
    %4401 = vmatpush1.msra.mxu0 %v3648
    %4402 = vmatprep.subr.mxu0 0.0
    %4403 = vmatpush1.msra.mxu0 0.0
    %4404 = vmatprep.subr.mxu0 0.0
    %4405 = vmatpush1.msra.mxu0 0.0
    %4406 = vmatprep.subr.mxu0 0.0
    %4407 = vmatpush1.msra.mxu0 0.0
    %4408 = vmatprep.subr.mxu0 0.0
    %4409 = vmatpush1.msra.mxu0 0.0
    %4410 = vmatprep.subr.mxu0 0.0
    %4411 = vmatpush1.msra.mxu0 0.0
    %4412 = vmatprep.subr.mxu0 0.0
    %4413 = vmatpush1.msra.mxu0 0.0
    %4414 = vmatprep.subr.mxu0 0.0
    %4415 = vmatpush1.msra.mxu0 0.0
    %4416 = vmatprep.subr.mxu0 0.0
    %4417 = vmatpush1.msra.mxu0 0.0
    %4418 = vmatprep.subr.mxu0 0.0
    %4419 = vmatpush1.msra.mxu0 0.0
    %4420 = vmatprep.subr.mxu0 0.0
    %4421 = vmatpush1.msra.mxu0 0.0
    %4422 = vmatprep.subr.mxu0 0.0
    %4423 = vmatpush1.msra.mxu0 0.0
    %4424 = vmatprep.subr.mxu0 0.0
    %4425 = vmatpush1.msra.mxu0 0.0
    %4426 = vmatprep.subr.mxu0 0.0
    %4427 = vmatpush1.msra.mxu0 0.0
    %4428 = vmatprep.subr.mxu0 0.0
    %4429 = vmatpush1.msra.mxu0 0.0
    %4430 = vmatprep.subr.mxu0 0.0
    %4431 = vmatpush1.msra.mxu0 0.0
    %4432 = vmatprep.subr.mxu0 0.0
    %4433 = vmatpush1.msra.mxu0 0.0
    %4434 = vmatprep.subr.mxu0 0.0
    %4435 = vmatpush1.msra.mxu0 0.0
    %4436 = vmatprep.subr.mxu0 0.0
    %4437 = vmatpush1.msra.mxu0 0.0
    %4438 = vmatprep.subr.mxu0 0.0
    %4439 = vmatpush1.msra.mxu0 0.0
    %4440 = vmatprep.subr.mxu0 0.0
    %4441 = vmatpush1.msra.mxu0 0.0
    %4442 = vmatprep.subr.mxu0 0.0
    %4443 = vmatpush1.msra.mxu0 0.0
    %4444 = vmatprep.subr.mxu0 0.0
    %4445 = vmatpush1.msra.mxu0 0.0
    %4446 = vmatprep.subr.mxu0 0.0
    %4447 = vmatpush1.msra.mxu0 0.0
    %4448 = vmatprep.subr.mxu0 0.0
    %4449 = vmatpush1.msra.mxu0 0.0
    %4450 = vmatprep.subr.mxu0 0.0
    %4451 = vmatpush1.msra.mxu0 0.0
    %4452 = vmatprep.subr.mxu0 0.0
    %4453 = vmatpush1.msra.mxu0 0.0
    %4454 = vmatprep.subr.mxu0 0.0
    %4455 = vmatpush1.msra.mxu0 0.0
    %4456 = vmatprep.subr.mxu0 0.0
    %4457 = vmatpush1.msra.mxu0 0.0
    %4458 = vmatprep.subr.mxu0 0.0
    %4459 = vmatpush1.msra.mxu0 0.0
    %4460 = vmatprep.subr.mxu0 0.0
    %4461 = vmatpush1.msra.mxu0 0.0
    %4462 = vmatprep.mubr.f32.mxu0 0.0
    %4463 = vmatmul.mubr.f32.gmra.mrb[0].mxu0 %v4393
    %v4464 = vpop.f32.mrb[0].mxu0
    %v4465 = vadd.f32 0.0, %v4464
    %v4466 = vpop.f32.mrb[0].mxu0
    %4467 = vmatprep.mubr.f32.mxu0 0.0
    %4468 = vmatmul.mubr.f32.gmra.mrb[0].mxu0 %v4396
    %v4469 = vpop.f32.mrb[0].mxu0
    %v4470 = vadd.f32 0.0, %v4469
    %v4471 = vpop.f32.mrb[0].mxu0
    %4472 = vdwg.mxu0
    %s4473 = scalar_lea.vmem %s9, 40
    %v4474 = vld [vmem:[%s4473] sm:$0xff]
    %v4476 = vsel %vm1068, %v4465, 0
    %v4479 = vsel %vm1068, %v4470, 0
    %4481 = vmatprep.subr.mxu0 0.0
    %4482 = vmatpush1.msra.mxu0 %v4474
    %4483 = vmatprep.subr.mxu0 0.0
    %4484 = vmatpush1.msra.mxu0 0.0
    %4485 = vmatprep.subr.mxu0 0.0
    %4486 = vmatpush1.msra.mxu0 0.0
    %4487 = vmatprep.subr.mxu0 0.0
    %4488 = vmatpush1.msra.mxu0 0.0
    %4489 = vmatprep.subr.mxu0 0.0
    %4490 = vmatpush1.msra.mxu0 0.0
    %4491 = vmatprep.subr.mxu0 0.0
    %4492 = vmatpush1.msra.mxu0 0.0
    %4493 = vmatprep.subr.mxu0 0.0
    %4494 = vmatpush1.msra.mxu0 0.0
    %4495 = vmatprep.subr.mxu0 0.0
    %4496 = vmatpush1.msra.mxu0 0.0
    %4497 = vmatprep.subr.mxu0 0.0
    %4498 = vmatpush1.msra.mxu0 0.0
    %4499 = vmatprep.subr.mxu0 0.0
    %4500 = vmatpush1.msra.mxu0 0.0
    %4501 = vmatprep.subr.mxu0 0.0
    %4502 = vmatpush1.msra.mxu0 0.0
    %4503 = vmatprep.subr.mxu0 0.0
    %4504 = vmatpush1.msra.mxu0 0.0
    %4505 = vmatprep.subr.mxu0 0.0
    %4506 = vmatpush1.msra.mxu0 0.0
    %4507 = vmatprep.subr.mxu0 0.0
    %4508 = vmatpush1.msra.mxu0 0.0
    %4509 = vmatprep.subr.mxu0 0.0
    %4510 = vmatpush1.msra.mxu0 0.0
    %4511 = vmatprep.subr.mxu0 0.0
    %4512 = vmatpush1.msra.mxu0 0.0
    %4513 = vmatprep.subr.mxu0 0.0
    %4514 = vmatpush1.msra.mxu0 0.0
    %4515 = vmatprep.subr.mxu0 0.0
    %4516 = vmatpush1.msra.mxu0 0.0
    %4517 = vmatprep.subr.mxu0 0.0
    %4518 = vmatpush1.msra.mxu0 0.0
    %4519 = vmatprep.subr.mxu0 0.0
    %4520 = vmatpush1.msra.mxu0 0.0
    %4521 = vmatprep.subr.mxu0 0.0
    %4522 = vmatpush1.msra.mxu0 0.0
    %4523 = vmatprep.subr.mxu0 0.0
    %4524 = vmatpush1.msra.mxu0 0.0
    %4525 = vmatprep.subr.mxu0 0.0
    %4526 = vmatpush1.msra.mxu0 0.0
    %4527 = vmatprep.subr.mxu0 0.0
    %4528 = vmatpush1.msra.mxu0 0.0
    %4529 = vmatprep.subr.mxu0 0.0
    %4530 = vmatpush1.msra.mxu0 0.0
    %4531 = vmatprep.subr.mxu0 0.0
    %4532 = vmatpush1.msra.mxu0 0.0
    %4533 = vmatprep.subr.mxu0 0.0
    %4534 = vmatpush1.msra.mxu0 0.0
    %4535 = vmatprep.subr.mxu0 0.0
    %4536 = vmatpush1.msra.mxu0 0.0
    %4537 = vmatprep.subr.mxu0 0.0
    %4538 = vmatpush1.msra.mxu0 0.0
    %4539 = vmatprep.subr.mxu0 0.0
    %4540 = vmatpush1.msra.mxu0 0.0
    %4541 = vmatprep.subr.mxu0 0.0
    %4542 = vmatpush1.msra.mxu0 0.0
    %4543 = vmatprep.subr.mxu0 0.0
    %4544 = vmatpush1.msra.mxu0 0.0
    %4545 = vmatprep.mubr.f32.mxu0 0.0
    %4546 = vmatmul.mubr.f32.gmra.mrb[0].mxu0 %v4476
    %v4547 = vpop.f32.mrb[0].mxu0
    %v4548 = vadd.f32 0.0, %v4547
    %v4549 = vpop.f32.mrb[0].mxu0
    %4550 = vmatprep.mubr.f32.mxu0 0.0
    %4551 = vmatmul.mubr.f32.gmra.mrb[0].mxu0 %v4479
    %v4552 = vpop.f32.mrb[0].mxu0
    %v4553 = vadd.f32 0.0, %v4552
    %v4554 = vpop.f32.mrb[0].mxu0
    %4555 = vdwg.mxu0
    %v4557 = vsel %vm1068, %v3937, 0
    %v4560 = vsel %vm1068, %v3938, 0
    %v4563 = vsel %vm1068, %v4077, 0
    %v4566 = vsel %vm1068, %v4078, 0
    %4568 = vmatprep.subr.mxu0 0.0
    %4569 = vmatpush1.xpose.msra.mxu0 %v4563
    %4570 = vmatprep.subr.mxu0 0.0
    %4571 = vmatpush1.xpose.msra.mxu0 %v4566
    %4572 = vmatprep.subr.mxu0 0.0
    %4573 = vmatpush1.xpose.msra.mxu0 0.0
    %4574 = vmatprep.subr.mxu0 0.0
    %4575 = vmatpush1.xpose.msra.mxu0 0.0
    %4576 = vmatprep.subr.mxu0 0.0
    %4577 = vmatpush1.xpose.msra.mxu0 0.0
    %4578 = vmatprep.subr.mxu0 0.0
    %4579 = vmatpush1.xpose.msra.mxu0 0.0
    %4580 = vmatprep.subr.mxu0 0.0
    %4581 = vmatpush1.xpose.msra.mxu0 0.0
    %4582 = vmatprep.subr.mxu0 0.0
    %4583 = vmatpush1.xpose.msra.mxu0 0.0
    %4584 = vmatprep.subr.mxu0 0.0
    %4585 = vmatpush1.xpose.msra.mxu0 0.0
    %4586 = vmatprep.subr.mxu0 0.0
    %4587 = vmatpush1.xpose.msra.mxu0 0.0
    %4588 = vmatprep.subr.mxu0 0.0
    %4589 = vmatpush1.xpose.msra.mxu0 0.0
    %4590 = vmatprep.subr.mxu0 0.0
    %4591 = vmatpush1.xpose.msra.mxu0 0.0
    %4592 = vmatprep.subr.mxu0 0.0
    %4593 = vmatpush1.xpose.msra.mxu0 0.0
    %4594 = vmatprep.subr.mxu0 0.0
    %4595 = vmatpush1.xpose.msra.mxu0 0.0
    %4596 = vmatprep.subr.mxu0 0.0
    %4597 = vmatpush1.xpose.msra.mxu0 0.0
    %4598 = vmatprep.subr.mxu0 0.0
    %4599 = vmatpush1.xpose.msra.mxu0 0.0
    %4600 = vmatprep.subr.mxu0 0.0
    %4601 = vmatpush1.xpose.msra.mxu0 0.0
    %4602 = vmatprep.subr.mxu0 0.0
    %4603 = vmatpush1.xpose.msra.mxu0 0.0
    %4604 = vmatprep.subr.mxu0 0.0
    %4605 = vmatpush1.xpose.msra.mxu0 0.0
    %4606 = vmatprep.subr.mxu0 0.0
    %4607 = vmatpush1.xpose.msra.mxu0 0.0
    %4608 = vmatprep.subr.mxu0 0.0
    %4609 = vmatpush1.xpose.msra.mxu0 0.0
    %4610 = vmatprep.subr.mxu0 0.0
    %4611 = vmatpush1.xpose.msra.mxu0 0.0
    %4612 = vmatprep.subr.mxu0 0.0
    %4613 = vmatpush1.xpose.msra.mxu0 0.0
    %4614 = vmatprep.subr.mxu0 0.0
    %4615 = vmatpush1.xpose.msra.mxu0 0.0
    %4616 = vmatprep.subr.mxu0 0.0
    %4617 = vmatpush1.xpose.msra.mxu0 0.0
    %4618 = vmatprep.subr.mxu0 0.0
    %4619 = vmatpush1.xpose.msra.mxu0 0.0
    %4620 = vmatprep.subr.mxu0 0.0
    %4621 = vmatpush1.xpose.msra.mxu0 0.0
    %4622 = vmatprep.subr.mxu0 0.0
    %4623 = vmatpush1.xpose.msra.mxu0 0.0
    %4624 = vmatprep.subr.mxu0 0.0
    %4625 = vmatpush1.xpose.msra.mxu0 0.0
    %4626 = vmatprep.subr.mxu0 0.0
    %4627 = vmatpush1.xpose.msra.mxu0 0.0
    %4628 = vmatprep.subr.mxu0 0.0
    %4629 = vmatpush1.xpose.msra.mxu0 0.0
    %4630 = vmatprep.subr.mxu0 0.0
    %4631 = vmatpush1.xpose.msra.mxu0 0.0
    %4632 = vmatprep.mubr.f32.mxu0 0.0
    %4633 = vmatmul.mubr.f32.gmra.mrb[0].mxu0 %v4557
    %v4634 = vpop.f32.mrb[0].mxu0
    %v4635 = vadd.f32 %v50, %v4634
    %v4636 = vpop.f32.mrb[0].mxu0
    %4637 = vmatprep.mubr.f32.mxu0 0.0
    %4638 = vmatmul.mubr.f32.gmra.mrb[0].mxu0 %v4560
    %v4639 = vpop.f32.mrb[0].mxu0
    %v4640 = vadd.f32 %v51, %v4639
    %v4641 = vpop.f32.mrb[0].mxu0
    %4642 = vdwg.mxu0
    %v4643 = vsel %vm1427, %v4635, -inf
    %4644 = vmax.xlane.f32.xlu0 %v4643
    %v4645 = vpop.xlane.xlu0 %4644
    %v4646 = vsel %vm1427, %v4640, -inf
    %4647 = vmax.xlane.f32.xlu0 %v4646
    %v4648 = vpop.xlane.xlu0 %4647
    %v4649 = vsub.f32 %v4635, %v4645
    %v4650 = vsub.f32 %v4640, %v4648
    %v4651 = vmul.f32 %v4649, 1.442695
    %v4652 = vpow.pop %v4651
    %v4653 = vmul.f32 %v4650, 1.442695
    %v4654 = vpow.pop %v4653
    %v4655 = vsel %vm1427, %v4652, 0.0
    %4656 = vadd.xlane.f32.xlu0 %v4655
    %v4657 = vpop.xlane.xlu0 %4656
    %v4658 = vsel %vm1427, %v4654, 0.0
    %4659 = vadd.xlane.f32.xlu0 %v4658
    %v4660 = vpop.xlane.xlu0 %4659
    %v4661 = vrcp.pop %v4657
    %v4662 = vrcp.pop %v4660
    %v4663 = vmul.f32 %v4652, %v4661
    %v4664 = vmul.f32 %v4654, %v4662
    %v4666 = vsel %vm1427, %v4663, 0
    %v4669 = vsel %vm1427, %v4664, 0
    %4671 = vmatprep.subr.mxu0 0.0
    %4672 = vmatpush1.msra.mxu0 %v3723
    %4673 = vmatprep.subr.mxu0 0.0
    %4674 = vmatpush1.msra.mxu0 %v3728
    %4675 = vmatprep.subr.mxu0 0.0
    %4676 = vmatpush1.msra.mxu0 0.0
    %4677 = vmatprep.subr.mxu0 0.0
    %4678 = vmatpush1.msra.mxu0 0.0
    %4679 = vmatprep.subr.mxu0 0.0
    %4680 = vmatpush1.msra.mxu0 0.0
    %4681 = vmatprep.subr.mxu0 0.0
    %4682 = vmatpush1.msra.mxu0 0.0
    %4683 = vmatprep.subr.mxu0 0.0
    %4684 = vmatpush1.msra.mxu0 0.0
    %4685 = vmatprep.subr.mxu0 0.0
    %4686 = vmatpush1.msra.mxu0 0.0
    %4687 = vmatprep.subr.mxu0 0.0
    %4688 = vmatpush1.msra.mxu0 0.0
    %4689 = vmatprep.subr.mxu0 0.0
    %4690 = vmatpush1.msra.mxu0 0.0
    %4691 = vmatprep.subr.mxu0 0.0
    %4692 = vmatpush1.msra.mxu0 0.0
    %4693 = vmatprep.subr.mxu0 0.0
    %4694 = vmatpush1.msra.mxu0 0.0
    %4695 = vmatprep.subr.mxu0 0.0
    %4696 = vmatpush1.msra.mxu0 0.0
    %4697 = vmatprep.subr.mxu0 0.0
    %4698 = vmatpush1.msra.mxu0 0.0
    %4699 = vmatprep.subr.mxu0 0.0
    %4700 = vmatpush1.msra.mxu0 0.0
    %4701 = vmatprep.subr.mxu0 0.0
    %4702 = vmatpush1.msra.mxu0 0.0
    %4703 = vmatprep.subr.mxu0 0.0
    %4704 = vmatpush1.msra.mxu0 0.0
    %4705 = vmatprep.subr.mxu0 0.0
    %4706 = vmatpush1.msra.mxu0 0.0
    %4707 = vmatprep.subr.mxu0 0.0
    %4708 = vmatpush1.msra.mxu0 0.0
    %4709 = vmatprep.subr.mxu0 0.0
    %4710 = vmatpush1.msra.mxu0 0.0
    %4711 = vmatprep.subr.mxu0 0.0
    %4712 = vmatpush1.msra.mxu0 0.0
    %4713 = vmatprep.subr.mxu0 0.0
    %4714 = vmatpush1.msra.mxu0 0.0
    %4715 = vmatprep.subr.mxu0 0.0
    %4716 = vmatpush1.msra.mxu0 0.0
    %4717 = vmatprep.subr.mxu0 0.0
    %4718 = vmatpush1.msra.mxu0 0.0
    %4719 = vmatprep.subr.mxu0 0.0
    %4720 = vmatpush1.msra.mxu0 0.0
    %4721 = vmatprep.subr.mxu0 0.0
    %4722 = vmatpush1.msra.mxu0 0.0
    %4723 = vmatprep.subr.mxu0 0.0
    %4724 = vmatpush1.msra.mxu0 0.0
    %4725 = vmatprep.subr.mxu0 0.0
    %4726 = vmatpush1.msra.mxu0 0.0
    %4727 = vmatprep.subr.mxu0 0.0
    %4728 = vmatpush1.msra.mxu0 0.0
    %4729 = vmatprep.subr.mxu0 0.0
    %4730 = vmatpush1.msra.mxu0 0.0
    %4731 = vmatprep.subr.mxu0 0.0
    %4732 = vmatpush1.msra.mxu0 0.0
    %4733 = vmatprep.subr.mxu0 0.0
    %4734 = vmatpush1.msra.mxu0 0.0
    %4735 = vmatprep.mubr.f32.mxu0 0.0
    %4736 = vmatmul.mubr.f32.gmra.mrb[0].mxu0 %v4666
    %v4737 = vpop.f32.mrb[0].mxu0
    %v4738 = vadd.f32 0.0, %v4737
    %v4739 = vpop.f32.mrb[0].mxu0
    %4740 = vmatprep.mubr.f32.mxu0 0.0
    %4741 = vmatmul.mubr.f32.gmra.mrb[0].mxu0 %v4669
    %v4742 = vpop.f32.mrb[0].mxu0
    %v4743 = vadd.f32 0.0, %v4742
    %v4744 = vpop.f32.mrb[0].mxu0
    %4745 = vdwg.mxu0
    %s4746 = scalar_lea.vmem %s9, 48
    %v4747 = vld [vmem:[%s4746] sm:$0xff]
    %v4749 = vsel %vm1068, %v4738, 0
    %v4752 = vsel %vm1068, %v4743, 0
    %4754 = vmatprep.subr.mxu0 0.0
    %4755 = vmatpush1.msra.mxu0 %v4747
    %4756 = vmatprep.subr.mxu0 0.0
    %4757 = vmatpush1.msra.mxu0 0.0
    %4758 = vmatprep.subr.mxu0 0.0
    %4759 = vmatpush1.msra.mxu0 0.0
    %4760 = vmatprep.subr.mxu0 0.0
    %4761 = vmatpush1.msra.mxu0 0.0
    %4762 = vmatprep.subr.mxu0 0.0
    %4763 = vmatpush1.msra.mxu0 0.0
    %4764 = vmatprep.subr.mxu0 0.0
    %4765 = vmatpush1.msra.mxu0 0.0
    %4766 = vmatprep.subr.mxu0 0.0
    %4767 = vmatpush1.msra.mxu0 0.0
    %4768 = vmatprep.subr.mxu0 0.0
    %4769 = vmatpush1.msra.mxu0 0.0
    %4770 = vmatprep.subr.mxu0 0.0
    %4771 = vmatpush1.msra.mxu0 0.0
    %4772 = vmatprep.subr.mxu0 0.0
    %4773 = vmatpush1.msra.mxu0 0.0
    %4774 = vmatprep.subr.mxu0 0.0
    %4775 = vmatpush1.msra.mxu0 0.0
    %4776 = vmatprep.subr.mxu0 0.0
    %4777 = vmatpush1.msra.mxu0 0.0
    %4778 = vmatprep.subr.mxu0 0.0
    %4779 = vmatpush1.msra.mxu0 0.0
    %4780 = vmatprep.subr.mxu0 0.0
    %4781 = vmatpush1.msra.mxu0 0.0
    %4782 = vmatprep.subr.mxu0 0.0
    %4783 = vmatpush1.msra.mxu0 0.0
    %4784 = vmatprep.subr.mxu0 0.0
    %4785 = vmatpush1.msra.mxu0 0.0
    %4786 = vmatprep.subr.mxu0 0.0
    %4787 = vmatpush1.msra.mxu0 0.0
    %4788 = vmatprep.subr.mxu0 0.0
    %4789 = vmatpush1.msra.mxu0 0.0
    %4790 = vmatprep.subr.mxu0 0.0
    %4791 = vmatpush1.msra.mxu0 0.0
    %4792 = vmatprep.subr.mxu0 0.0
    %4793 = vmatpush1.msra.mxu0 0.0
    %4794 = vmatprep.subr.mxu0 0.0
    %4795 = vmatpush1.msra.mxu0 0.0
    %4796 = vmatprep.subr.mxu0 0.0
    %4797 = vmatpush1.msra.mxu0 0.0
    %4798 = vmatprep.subr.mxu0 0.0
    %4799 = vmatpush1.msra.mxu0 0.0
    %4800 = vmatprep.subr.mxu0 0.0
    %4801 = vmatpush1.msra.mxu0 0.0
    %4802 = vmatprep.subr.mxu0 0.0
    %4803 = vmatpush1.msra.mxu0 0.0
    %4804 = vmatprep.subr.mxu0 0.0
    %4805 = vmatpush1.msra.mxu0 0.0
    %4806 = vmatprep.subr.mxu0 0.0
    %4807 = vmatpush1.msra.mxu0 0.0
    %4808 = vmatprep.subr.mxu0 0.0
    %4809 = vmatpush1.msra.mxu0 0.0
    %4810 = vmatprep.subr.mxu0 0.0
    %4811 = vmatpush1.msra.mxu0 0.0
    %4812 = vmatprep.subr.mxu0 0.0
    %4813 = vmatpush1.msra.mxu0 0.0
    %4814 = vmatprep.subr.mxu0 0.0
    %4815 = vmatpush1.msra.mxu0 0.0
    %4816 = vmatprep.subr.mxu0 0.0
    %4817 = vmatpush1.msra.mxu0 0.0
    %4818 = vmatprep.mubr.f32.mxu0 0.0
    %4819 = vmatmul.mubr.f32.gmra.mrb[0].mxu0 %v4749
    %v4820 = vpop.f32.mrb[0].mxu0
    %v4821 = vadd.f32 0.0, %v4820
    %v4822 = vpop.f32.mrb[0].mxu0
    %4823 = vmatprep.mubr.f32.mxu0 0.0
    %4824 = vmatmul.mubr.f32.gmra.mrb[0].mxu0 %v4752
    %v4825 = vpop.f32.mrb[0].mxu0
    %v4826 = vadd.f32 0.0, %v4825
    %v4827 = vpop.f32.mrb[0].mxu0
    %4828 = vdwg.mxu0
    %v4830 = vsel %vm1068, %v3949, 0
    %v4833 = vsel %vm1068, %v3950, 0
    %v4836 = vsel %vm1068, %v4089, 0
    %v4839 = vsel %vm1068, %v4090, 0
    %4841 = vmatprep.subr.mxu0 0.0
    %4842 = vmatpush1.xpose.msra.mxu0 %v4836
    %4843 = vmatprep.subr.mxu0 0.0
    %4844 = vmatpush1.xpose.msra.mxu0 %v4839
    %4845 = vmatprep.subr.mxu0 0.0
    %4846 = vmatpush1.xpose.msra.mxu0 0.0
    %4847 = vmatprep.subr.mxu0 0.0
    %4848 = vmatpush1.xpose.msra.mxu0 0.0
    %4849 = vmatprep.subr.mxu0 0.0
    %4850 = vmatpush1.xpose.msra.mxu0 0.0
    %4851 = vmatprep.subr.mxu0 0.0
    %4852 = vmatpush1.xpose.msra.mxu0 0.0
    %4853 = vmatprep.subr.mxu0 0.0
    %4854 = vmatpush1.xpose.msra.mxu0 0.0
    %4855 = vmatprep.subr.mxu0 0.0
    %4856 = vmatpush1.xpose.msra.mxu0 0.0
    %4857 = vmatprep.subr.mxu0 0.0
    %4858 = vmatpush1.xpose.msra.mxu0 0.0
    %4859 = vmatprep.subr.mxu0 0.0
    %4860 = vmatpush1.xpose.msra.mxu0 0.0
    %4861 = vmatprep.subr.mxu0 0.0
    %4862 = vmatpush1.xpose.msra.mxu0 0.0
    %4863 = vmatprep.subr.mxu0 0.0
    %4864 = vmatpush1.xpose.msra.mxu0 0.0
    %4865 = vmatprep.subr.mxu0 0.0
    %4866 = vmatpush1.xpose.msra.mxu0 0.0
    %4867 = vmatprep.subr.mxu0 0.0
    %4868 = vmatpush1.xpose.msra.mxu0 0.0
    %4869 = vmatprep.subr.mxu0 0.0
    %4870 = vmatpush1.xpose.msra.mxu0 0.0
    %4871 = vmatprep.subr.mxu0 0.0
    %4872 = vmatpush1.xpose.msra.mxu0 0.0
    %4873 = vmatprep.subr.mxu0 0.0
    %4874 = vmatpush1.xpose.msra.mxu0 0.0
    %4875 = vmatprep.subr.mxu0 0.0
    %4876 = vmatpush1.xpose.msra.mxu0 0.0
    %4877 = vmatprep.subr.mxu0 0.0
    %4878 = vmatpush1.xpose.msra.mxu0 0.0
    %4879 = vmatprep.subr.mxu0 0.0
    %4880 = vmatpush1.xpose.msra.mxu0 0.0
    %4881 = vmatprep.subr.mxu0 0.0
    %4882 = vmatpush1.xpose.msra.mxu0 0.0
    %4883 = vmatprep.subr.mxu0 0.0
    %4884 = vmatpush1.xpose.msra.mxu0 0.0
    %4885 = vmatprep.subr.mxu0 0.0
    %4886 = vmatpush1.xpose.msra.mxu0 0.0
    %4887 = vmatprep.subr.mxu0 0.0
    %4888 = vmatpush1.xpose.msra.mxu0 0.0
    %4889 = vmatprep.subr.mxu0 0.0
    %4890 = vmatpush1.xpose.msra.mxu0 0.0
    %4891 = vmatprep.subr.mxu0 0.0
    %4892 = vmatpush1.xpose.msra.mxu0 0.0
    %4893 = vmatprep.subr.mxu0 0.0
    %4894 = vmatpush1.xpose.msra.mxu0 0.0
    %4895 = vmatprep.subr.mxu0 0.0
    %4896 = vmatpush1.xpose.msra.mxu0 0.0
    %4897 = vmatprep.subr.mxu0 0.0
    %4898 = vmatpush1.xpose.msra.mxu0 0.0
    %4899 = vmatprep.subr.mxu0 0.0
    %4900 = vmatpush1.xpose.msra.mxu0 0.0
    %4901 = vmatprep.subr.mxu0 0.0
    %4902 = vmatpush1.xpose.msra.mxu0 0.0
    %4903 = vmatprep.subr.mxu0 0.0
    %4904 = vmatpush1.xpose.msra.mxu0 0.0
    %4905 = vmatprep.mubr.f32.mxu0 0.0
    %4906 = vmatmul.mubr.f32.gmra.mrb[0].mxu0 %v4830
    %v4907 = vpop.f32.mrb[0].mxu0
    %v4908 = vadd.f32 %v50, %v4907
    %v4909 = vpop.f32.mrb[0].mxu0
    %4910 = vmatprep.mubr.f32.mxu0 0.0
    %4911 = vmatmul.mubr.f32.gmra.mrb[0].mxu0 %v4833
    %v4912 = vpop.f32.mrb[0].mxu0
    %v4913 = vadd.f32 %v51, %v4912
    %v4914 = vpop.f32.mrb[0].mxu0
    %4915 = vdwg.mxu0
    %v4916 = vsel %vm1427, %v4908, -inf
    %4917 = vmax.xlane.f32.xlu0 %v4916
    %v4918 = vpop.xlane.xlu0 %4917
    %v4919 = vsel %vm1427, %v4913, -inf
    %4920 = vmax.xlane.f32.xlu0 %v4919
    %v4921 = vpop.xlane.xlu0 %4920
    %v4922 = vsub.f32 %v4908, %v4918
    %v4923 = vsub.f32 %v4913, %v4921
    %v4924 = vmul.f32 %v4922, 1.442695
    %v4925 = vpow.pop %v4924
    %v4926 = vmul.f32 %v4923, 1.442695
    %v4927 = vpow.pop %v4926
    %v4928 = vsel %vm1427, %v4925, 0.0
    %4929 = vadd.xlane.f32.xlu0 %v4928
    %v4930 = vpop.xlane.xlu0 %4929
    %v4931 = vsel %vm1427, %v4927, 0.0
    %4932 = vadd.xlane.f32.xlu0 %v4931
    %v4933 = vpop.xlane.xlu0 %4932
    %v4934 = vrcp.pop %v4930
    %v4935 = vrcp.pop %v4933
    %v4936 = vmul.f32 %v4925, %v4934
    %v4937 = vmul.f32 %v4927, %v4935
    %v4939 = vsel %vm1427, %v4936, 0
    %v4942 = vsel %vm1427, %v4937, 0
    %4944 = vmatprep.subr.mxu0 0.0
    %4945 = vmatpush1.msra.mxu0 %v3803
    %4946 = vmatprep.subr.mxu0 0.0
    %4947 = vmatpush1.msra.mxu0 %v3808
    %4948 = vmatprep.subr.mxu0 0.0
    %4949 = vmatpush1.msra.mxu0 0.0
    %4950 = vmatprep.subr.mxu0 0.0
    %4951 = vmatpush1.msra.mxu0 0.0
    %4952 = vmatprep.subr.mxu0 0.0
    %4953 = vmatpush1.msra.mxu0 0.0
    %4954 = vmatprep.subr.mxu0 0.0
    %4955 = vmatpush1.msra.mxu0 0.0
    %4956 = vmatprep.subr.mxu0 0.0
    %4957 = vmatpush1.msra.mxu0 0.0
    %4958 = vmatprep.subr.mxu0 0.0
    %4959 = vmatpush1.msra.mxu0 0.0
    %4960 = vmatprep.subr.mxu0 0.0
    %4961 = vmatpush1.msra.mxu0 0.0
    %4962 = vmatprep.subr.mxu0 0.0
    %4963 = vmatpush1.msra.mxu0 0.0
    %4964 = vmatprep.subr.mxu0 0.0
    %4965 = vmatpush1.msra.mxu0 0.0
    %4966 = vmatprep.subr.mxu0 0.0
    %4967 = vmatpush1.msra.mxu0 0.0
    %4968 = vmatprep.subr.mxu0 0.0
    %4969 = vmatpush1.msra.mxu0 0.0
    %4970 = vmatprep.subr.mxu0 0.0
    %4971 = vmatpush1.msra.mxu0 0.0
    %4972 = vmatprep.subr.mxu0 0.0
    %4973 = vmatpush1.msra.mxu0 0.0
    %4974 = vmatprep.subr.mxu0 0.0
    %4975 = vmatpush1.msra.mxu0 0.0
    %4976 = vmatprep.subr.mxu0 0.0
    %4977 = vmatpush1.msra.mxu0 0.0
    %4978 = vmatprep.subr.mxu0 0.0
    %4979 = vmatpush1.msra.mxu0 0.0
    %4980 = vmatprep.subr.mxu0 0.0
    %4981 = vmatpush1.msra.mxu0 0.0
    %4982 = vmatprep.subr.mxu0 0.0
    %4983 = vmatpush1.msra.mxu0 0.0
    %4984 = vmatprep.subr.mxu0 0.0
    %4985 = vmatpush1.msra.mxu0 0.0
    %4986 = vmatprep.subr.mxu0 0.0
    %4987 = vmatpush1.msra.mxu0 0.0
    %4988 = vmatprep.subr.mxu0 0.0
    %4989 = vmatpush1.msra.mxu0 0.0
    %4990 = vmatprep.subr.mxu0 0.0
    %4991 = vmatpush1.msra.mxu0 0.0
    %4992 = vmatprep.subr.mxu0 0.0
    %4993 = vmatpush1.msra.mxu0 0.0
    %4994 = vmatprep.subr.mxu0 0.0
    %4995 = vmatpush1.msra.mxu0 0.0
    %4996 = vmatprep.subr.mxu0 0.0
    %4997 = vmatpush1.msra.mxu0 0.0
    %4998 = vmatprep.subr.mxu0 0.0
    %4999 = vmatpush1.msra.mxu0 0.0
    %5000 = vmatprep.subr.mxu0 0.0
    %5001 = vmatpush1.msra.mxu0 0.0
    %5002 = vmatprep.subr.mxu0 0.0
    %5003 = vmatpush1.msra.mxu0 0.0
    %5004 = vmatprep.subr.mxu0 0.0
    %5005 = vmatpush1.msra.mxu0 0.0
    %5006 = vmatprep.subr.mxu0 0.0
    %5007 = vmatpush1.msra.mxu0 0.0
    %5008 = vmatprep.mubr.f32.mxu0 0.0
    %5009 = vmatmul.mubr.f32.gmra.mrb[0].mxu0 %v4939
    %v5010 = vpop.f32.mrb[0].mxu0
    %v5011 = vadd.f32 0.0, %v5010
    %v5012 = vpop.f32.mrb[0].mxu0
    %5013 = vmatprep.mubr.f32.mxu0 0.0
    %5014 = vmatmul.mubr.f32.gmra.mrb[0].mxu0 %v4942
    %v5015 = vpop.f32.mrb[0].mxu0
    %v5016 = vadd.f32 0.0, %v5015
    %v5017 = vpop.f32.mrb[0].mxu0
    %5018 = vdwg.mxu0
    %s5019 = scalar_lea.vmem %s9, 56
    %v5020 = vld [vmem:[%s5019] sm:$0xff]
    %v5022 = vsel %vm1068, %v5011, 0
    %v5025 = vsel %vm1068, %v5016, 0
    %5027 = vmatprep.subr.mxu0 0.0
    %5028 = vmatpush1.msra.mxu0 %v5020
    %5029 = vmatprep.subr.mxu0 0.0
    %5030 = vmatpush1.msra.mxu0 0.0
    %5031 = vmatprep.subr.mxu0 0.0
    %5032 = vmatpush1.msra.mxu0 0.0
    %5033 = vmatprep.subr.mxu0 0.0
    %5034 = vmatpush1.msra.mxu0 0.0
    %5035 = vmatprep.subr.mxu0 0.0
    %5036 = vmatpush1.msra.mxu0 0.0
    %5037 = vmatprep.subr.mxu0 0.0
    %5038 = vmatpush1.msra.mxu0 0.0
    %5039 = vmatprep.subr.mxu0 0.0
    %5040 = vmatpush1.msra.mxu0 0.0
    %5041 = vmatprep.subr.mxu0 0.0
    %5042 = vmatpush1.msra.mxu0 0.0
    %5043 = vmatprep.subr.mxu0 0.0
    %5044 = vmatpush1.msra.mxu0 0.0
    %5045 = vmatprep.subr.mxu0 0.0
    %5046 = vmatpush1.msra.mxu0 0.0
    %5047 = vmatprep.subr.mxu0 0.0
    %5048 = vmatpush1.msra.mxu0 0.0
    %5049 = vmatprep.subr.mxu0 0.0
    %5050 = vmatpush1.msra.mxu0 0.0
    %5051 = vmatprep.subr.mxu0 0.0
    %5052 = vmatpush1.msra.mxu0 0.0
    %5053 = vmatprep.subr.mxu0 0.0
    %5054 = vmatpush1.msra.mxu0 0.0
    %5055 = vmatprep.subr.mxu0 0.0
    %5056 = vmatpush1.msra.mxu0 0.0
    %5057 = vmatprep.subr.mxu0 0.0
    %5058 = vmatpush1.msra.mxu0 0.0
    %5059 = vmatprep.subr.mxu0 0.0
    %5060 = vmatpush1.msra.mxu0 0.0
    %5061 = vmatprep.subr.mxu0 0.0
    %5062 = vmatpush1.msra.mxu0 0.0
    %5063 = vmatprep.subr.mxu0 0.0
    %5064 = vmatpush1.msra.mxu0 0.0
    %5065 = vmatprep.subr.mxu0 0.0
    %5066 = vmatpush1.msra.mxu0 0.0
    %5067 = vmatprep.subr.mxu0 0.0
    %5068 = vmatpush1.msra.mxu0 0.0
    %5069 = vmatprep.subr.mxu0 0.0
    %5070 = vmatpush1.msra.mxu0 0.0
    %5071 = vmatprep.subr.mxu0 0.0
    %5072 = vmatpush1.msra.mxu0 0.0
    %5073 = vmatprep.subr.mxu0 0.0
    %5074 = vmatpush1.msra.mxu0 0.0
    %5075 = vmatprep.subr.mxu0 0.0
    %5076 = vmatpush1.msra.mxu0 0.0
    %5077 = vmatprep.subr.mxu0 0.0
    %5078 = vmatpush1.msra.mxu0 0.0
    %5079 = vmatprep.subr.mxu0 0.0
    %5080 = vmatpush1.msra.mxu0 0.0
    %5081 = vmatprep.subr.mxu0 0.0
    %5082 = vmatpush1.msra.mxu0 0.0
    %5083 = vmatprep.subr.mxu0 0.0
    %5084 = vmatpush1.msra.mxu0 0.0
    %5085 = vmatprep.subr.mxu0 0.0
    %5086 = vmatpush1.msra.mxu0 0.0
    %5087 = vmatprep.subr.mxu0 0.0
    %5088 = vmatpush1.msra.mxu0 0.0
    %5089 = vmatprep.subr.mxu0 0.0
    %5090 = vmatpush1.msra.mxu0 0.0
    %5091 = vmatprep.mubr.f32.mxu0 0.0
    %5092 = vmatmul.mubr.f32.gmra.mrb[0].mxu0 %v5022
    %v5093 = vpop.f32.mrb[0].mxu0
    %v5094 = vadd.f32 0.0, %v5093
    %v5095 = vpop.f32.mrb[0].mxu0
    %5096 = vmatprep.mubr.f32.mxu0 0.0
    %5097 = vmatmul.mubr.f32.gmra.mrb[0].mxu0 %v5025
    %v5098 = vpop.f32.mrb[0].mxu0
    %v5099 = vadd.f32 0.0, %v5098
    %v5100 = vpop.f32.mrb[0].mxu0
    %5101 = vdwg.mxu0
    %v5103 = vsel %vm1068, %v4273, 0
    %v5106 = vsel %vm1068, %v4278, 0
    %5108 = vmatprep.subr.mxu0 0.0
    %5109 = vmatpush1.msra.mxu0 %v4282
    %5110 = vmatprep.subr.mxu0 0.0
    %5111 = vmatpush1.msra.mxu0 0.0
    %5112 = vmatprep.subr.mxu0 0.0
    %5113 = vmatpush1.msra.mxu0 0.0
    %5114 = vmatprep.subr.mxu0 0.0
    %5115 = vmatpush1.msra.mxu0 0.0
    %5116 = vmatprep.subr.mxu0 0.0
    %5117 = vmatpush1.msra.mxu0 0.0
    %5118 = vmatprep.subr.mxu0 0.0
    %5119 = vmatpush1.msra.mxu0 0.0
    %5120 = vmatprep.subr.mxu0 0.0
    %5121 = vmatpush1.msra.mxu0 0.0
    %5122 = vmatprep.subr.mxu0 0.0
    %5123 = vmatpush1.msra.mxu0 0.0
    %5124 = vmatprep.subr.mxu0 0.0
    %5125 = vmatpush1.msra.mxu0 0.0
    %5126 = vmatprep.subr.mxu0 0.0
    %5127 = vmatpush1.msra.mxu0 0.0
    %5128 = vmatprep.subr.mxu0 0.0
    %5129 = vmatpush1.msra.mxu0 0.0
    %5130 = vmatprep.subr.mxu0 0.0
    %5131 = vmatpush1.msra.mxu0 0.0
    %5132 = vmatprep.subr.mxu0 0.0
    %5133 = vmatpush1.msra.mxu0 0.0
    %5134 = vmatprep.subr.mxu0 0.0
    %5135 = vmatpush1.msra.mxu0 0.0
    %5136 = vmatprep.subr.mxu0 0.0
    %5137 = vmatpush1.msra.mxu0 0.0
    %5138 = vmatprep.subr.mxu0 0.0
    %5139 = vmatpush1.msra.mxu0 0.0
    %5140 = vmatprep.subr.mxu0 0.0
    %5141 = vmatpush1.msra.mxu0 0.0
    %5142 = vmatprep.subr.mxu0 0.0
    %5143 = vmatpush1.msra.mxu0 0.0
    %5144 = vmatprep.subr.mxu0 0.0
    %5145 = vmatpush1.msra.mxu0 0.0
    %5146 = vmatprep.subr.mxu0 0.0
    %5147 = vmatpush1.msra.mxu0 0.0
    %5148 = vmatprep.subr.mxu0 0.0
    %5149 = vmatpush1.msra.mxu0 0.0
    %5150 = vmatprep.subr.mxu0 0.0
    %5151 = vmatpush1.msra.mxu0 0.0
    %5152 = vmatprep.subr.mxu0 0.0
    %5153 = vmatpush1.msra.mxu0 0.0
    %5154 = vmatprep.subr.mxu0 0.0
    %5155 = vmatpush1.msra.mxu0 0.0
    %5156 = vmatprep.subr.mxu0 0.0
    %5157 = vmatpush1.msra.mxu0 0.0
    %5158 = vmatprep.subr.mxu0 0.0
    %5159 = vmatpush1.msra.mxu0 0.0
    %5160 = vmatprep.subr.mxu0 0.0
    %5161 = vmatpush1.msra.mxu0 0.0
    %5162 = vmatprep.subr.mxu0 0.0
    %5163 = vmatpush1.msra.mxu0 0.0
    %5164 = vmatprep.subr.mxu0 0.0
    %5165 = vmatpush1.msra.mxu0 0.0
    %5166 = vmatprep.subr.mxu0 0.0
    %5167 = vmatpush1.msra.mxu0 0.0
    %5168 = vmatprep.subr.mxu0 0.0
    %5169 = vmatpush1.msra.mxu0 0.0
    %5170 = vmatprep.subr.mxu0 0.0
    %5171 = vmatpush1.msra.mxu0 0.0
    %5172 = vmatprep.mubr.f32.mxu0 0.0
    %5173 = vmatmul.mubr.f32.gmra.mrb[0].mxu0 %v5103
    %v5174 = vpop.f32.mrb[0].mxu0
    %v5175 = vadd.f32 %v4548, %v5174
    %v5176 = vpop.f32.mrb[0].mxu0
    %5177 = vmatprep.mubr.f32.mxu0 0.0
    %5178 = vmatmul.mubr.f32.gmra.mrb[0].mxu0 %v5106
    %v5179 = vpop.f32.mrb[0].mxu0
    %v5180 = vadd.f32 %v4553, %v5179
    %v5181 = vpop.f32.mrb[0].mxu0
    %5182 = vdwg.mxu0
    %v5183 = vadd.f32 %v5175, %v4821
    %v5184 = vadd.f32 %v5180, %v4826
    %v5185 = vadd.f32 %v5183, %v5094
    %v5186 = vadd.f32 %v5184, %v5099
    %v5187 = vadd.f32 %v2797, %v5185
    %v5188 = vadd.f32 %v2798, %v5186
    %s5189 = scalar_lea.vmem %s10, 1
    %v5190 = vld [vmem:[%s5189] sm:$0x1]
    %s5191 = scalar_lea.vmem %s11, 1
    %v5192 = vld [vmem:[%s5191] sm:$0x1]
    %v5193 = vsel %vm54, %v5187, 0.0
    %5194 = vadd.xlane.f32.xlu0 %v5193
    %v5195 = vpop.xlane.xlu0 %5194
    %v5196 = vsel %vm54, %v5188, 0.0
    %5197 = vadd.xlane.f32.xlu0 %v5196
    %v5198 = vpop.xlane.xlu0 %5197
    %v5199 = vmul.f32 %v5195, %v61
    %v5200 = vmul.f32 %v5198, %v61
    %v5201 = vsub.f32 %v5187, %v5199
    %v5202 = vsub.f32 %v5188, %v5200
    %v5203 = vmul.f32 %v5201, %v5201
    %v5204 = vmul.f32 %v5202, %v5202
    %v5205 = vsel %vm54, %v5203, 0.0
    %5206 = vadd.xlane.f32.xlu0 %v5205
    %v5207 = vpop.xlane.xlu0 %5206
    %v5208 = vsel %vm54, %v5204, 0.0
    %5209 = vadd.xlane.f32.xlu0 %v5208
    %v5210 = vpop.xlane.xlu0 %5209
    %v5211 = vmul.f32 %v5207, %v61
    %v5212 = vmul.f32 %v5210, %v61
    %v5213 = vadd.f32 %v5211, 1e-05
    %v5214 = vadd.f32 %v5212, 1e-05
    %v5215 = vrsqrt.pop %v5213
    %v5216 = vrsqrt.pop %v5214
    %v5217 = vmul.f32 %v5201, %v5215
    %v5218 = vmul.f32 %v5202, %v5216
    %v5220 = vlaneseq
    %v5221 = vshrl.u32 %v5220, 7
    %v5222 = vsub.s32 0, %v5221
    %v5223 = vrot.slane %v5190, %v5222
    %v5225 = vmul.f32 %v5217, %v5223
    %v5226 = vmul.f32 %v5218, %v5223
    %v5228 = vlaneseq
    %v5229 = vshrl.u32 %v5228, 7
    %v5230 = vsub.s32 0, %v5229
    %v5231 = vrot.slane %v5192, %v5230
    %v5233 = vadd.f32 %v5225, %v5231
    %v5234 = vadd.f32 %v5226, %v5231
    %s5235 = scalar_lea.vmem %s12, 128
    %v5236 = vld [vmem:[%s5235] sm:$0xff]
    %v5237 = vld [vmem:[%s5235 + $0x8] sm:$0xff]
    %v5238 = vld [vmem:[%s5235 + $0x10] sm:$0xff]
    %v5239 = vld [vmem:[%s5235 + $0x18] sm:$0xff]
    %v5240 = vld [vmem:[%s5235 + $0x20] sm:$0xff]
    %v5241 = vld [vmem:[%s5235 + $0x28] sm:$0xff]
    %v5242 = vld [vmem:[%s5235 + $0x30] sm:$0xff]
    %v5243 = vld [vmem:[%s5235 + $0x38] sm:$0xff]
    %v5244 = vld [vmem:[%s5235 + $0x40] sm:$0xff]
    %v5245 = vld [vmem:[%s5235 + $0x48] sm:$0xff]
    %v5246 = vld [vmem:[%s5235 + $0x50] sm:$0xff]
    %v5247 = vld [vmem:[%s5235 + $0x58] sm:$0xff]
    %v5248 = vld [vmem:[%s5235 + $0x60] sm:$0xff]
    %v5249 = vld [vmem:[%s5235 + $0x68] sm:$0xff]
    %v5250 = vld [vmem:[%s5235 + $0x70] sm:$0xff]
    %v5251 = vld [vmem:[%s5235 + $0x78] sm:$0xff]
    %v5253 = vsel %vm54, %v5233, 0
    %v5256 = vsel %vm54, %v5234, 0
    %5258 = vmatprep.subr.mxu0 %v5237
    %5259 = vmatpush1.msra.mxu0 %v5236
    %5260 = vmatprep.subr.mxu0 %v5241
    %5261 = vmatpush1.msra.mxu0 %v5240
    %5262 = vmatprep.subr.mxu0 %v5245
    %5263 = vmatpush1.msra.mxu0 %v5244
    %5264 = vmatprep.subr.mxu0 %v5249
    %5265 = vmatpush1.msra.mxu0 %v5248
    %5266 = vmatprep.subr.mxu0 0.0
    %5267 = vmatpush1.msra.mxu0 0.0
    %5268 = vmatprep.subr.mxu0 0.0
    %5269 = vmatpush1.msra.mxu0 0.0
    %5270 = vmatprep.subr.mxu0 0.0
    %5271 = vmatpush1.msra.mxu0 0.0
    %5272 = vmatprep.subr.mxu0 0.0
    %5273 = vmatpush1.msra.mxu0 0.0
    %5274 = vmatprep.subr.mxu0 0.0
    %5275 = vmatpush1.msra.mxu0 0.0
    %5276 = vmatprep.subr.mxu0 0.0
    %5277 = vmatpush1.msra.mxu0 0.0
    %5278 = vmatprep.subr.mxu0 0.0
    %5279 = vmatpush1.msra.mxu0 0.0
    %5280 = vmatprep.subr.mxu0 0.0
    %5281 = vmatpush1.msra.mxu0 0.0
    %5282 = vmatprep.subr.mxu0 0.0
    %5283 = vmatpush1.msra.mxu0 0.0
    %5284 = vmatprep.subr.mxu0 0.0
    %5285 = vmatpush1.msra.mxu0 0.0
    %5286 = vmatprep.subr.mxu0 0.0
    %5287 = vmatpush1.msra.mxu0 0.0
    %5288 = vmatprep.subr.mxu0 0.0
    %5289 = vmatpush1.msra.mxu0 0.0
    %5290 = vmatprep.subr.mxu0 0.0
    %5291 = vmatpush1.msra.mxu0 0.0
    %5292 = vmatprep.subr.mxu0 0.0
    %5293 = vmatpush1.msra.mxu0 0.0
    %5294 = vmatprep.subr.mxu0 0.0
    %5295 = vmatpush1.msra.mxu0 0.0
    %5296 = vmatprep.subr.mxu0 0.0
    %5297 = vmatpush1.msra.mxu0 0.0
    %5298 = vmatprep.subr.mxu0 0.0
    %5299 = vmatpush1.msra.mxu0 0.0
    %5300 = vmatprep.subr.mxu0 0.0
    %5301 = vmatpush1.msra.mxu0 0.0
    %5302 = vmatprep.subr.mxu0 0.0
    %5303 = vmatpush1.msra.mxu0 0.0
    %5304 = vmatprep.subr.mxu0 0.0
    %5305 = vmatpush1.msra.mxu0 0.0
    %5306 = vmatprep.subr.mxu0 0.0
    %5307 = vmatpush1.msra.mxu0 0.0
    %5308 = vmatprep.subr.mxu0 0.0
    %5309 = vmatpush1.msra.mxu0 0.0
    %5310 = vmatprep.subr.mxu0 0.0
    %5311 = vmatpush1.msra.mxu0 0.0
    %5312 = vmatprep.subr.mxu0 0.0
    %5313 = vmatpush1.msra.mxu0 0.0
    %5314 = vmatprep.subr.mxu0 0.0
    %5315 = vmatpush1.msra.mxu0 0.0
    %5316 = vmatprep.subr.mxu0 0.0
    %5317 = vmatpush1.msra.mxu0 0.0
    %5318 = vmatprep.subr.mxu0 0.0
    %5319 = vmatpush1.msra.mxu0 0.0
    %5320 = vmatprep.subr.mxu0 0.0
    %5321 = vmatpush1.msra.mxu0 0.0
    %5322 = vmatprep.mubr.f32.mxu0 0.0
    %5323 = vmatmul.mubr.f32.gmra.mrb[0].mxu0 %v5253
    %v5324 = vpop.f32.mrb[0].mxu0
    %v5325 = vadd.f32 0.0, %v5324
    %v5326 = vpop.f32.mrb[0].mxu0
    %v5327 = vadd.f32 0.0, %v5326
    %5328 = vmatprep.mubr.f32.mxu0 0.0
    %5329 = vmatmul.mubr.f32.gmra.mrb[0].mxu0 %v5256
    %v5330 = vpop.f32.mrb[0].mxu0
    %v5331 = vadd.f32 0.0, %v5330
    %v5332 = vpop.f32.mrb[0].mxu0
    %v5333 = vadd.f32 0.0, %v5332
    %5334 = vdwg.mxu0
    %5335 = vmatprep.subr.mxu0 %v5239
    %5336 = vmatpush1.msra.mxu0 %v5238
    %5337 = vmatprep.subr.mxu0 %v5243
    %5338 = vmatpush1.msra.mxu0 %v5242
    %5339 = vmatprep.subr.mxu0 %v5247
    %5340 = vmatpush1.msra.mxu0 %v5246
    %5341 = vmatprep.subr.mxu0 %v5251
    %5342 = vmatpush1.msra.mxu0 %v5250
    %5343 = vmatprep.subr.mxu0 0.0
    %5344 = vmatpush1.msra.mxu0 0.0
    %5345 = vmatprep.subr.mxu0 0.0
    %5346 = vmatpush1.msra.mxu0 0.0
    %5347 = vmatprep.subr.mxu0 0.0
    %5348 = vmatpush1.msra.mxu0 0.0
    %5349 = vmatprep.subr.mxu0 0.0
    %5350 = vmatpush1.msra.mxu0 0.0
    %5351 = vmatprep.subr.mxu0 0.0
    %5352 = vmatpush1.msra.mxu0 0.0
    %5353 = vmatprep.subr.mxu0 0.0
    %5354 = vmatpush1.msra.mxu0 0.0
    %5355 = vmatprep.subr.mxu0 0.0
    %5356 = vmatpush1.msra.mxu0 0.0
    %5357 = vmatprep.subr.mxu0 0.0
    %5358 = vmatpush1.msra.mxu0 0.0
    %5359 = vmatprep.subr.mxu0 0.0
    %5360 = vmatpush1.msra.mxu0 0.0
    %5361 = vmatprep.subr.mxu0 0.0
    %5362 = vmatpush1.msra.mxu0 0.0
    %5363 = vmatprep.subr.mxu0 0.0
    %5364 = vmatpush1.msra.mxu0 0.0
    %5365 = vmatprep.subr.mxu0 0.0
    %5366 = vmatpush1.msra.mxu0 0.0
    %5367 = vmatprep.subr.mxu0 0.0
    %5368 = vmatpush1.msra.mxu0 0.0
    %5369 = vmatprep.subr.mxu0 0.0
    %5370 = vmatpush1.msra.mxu0 0.0
    %5371 = vmatprep.subr.mxu0 0.0
    %5372 = vmatpush1.msra.mxu0 0.0
    %5373 = vmatprep.subr.mxu0 0.0
    %5374 = vmatpush1.msra.mxu0 0.0
    %5375 = vmatprep.subr.mxu0 0.0
    %5376 = vmatpush1.msra.mxu0 0.0
    %5377 = vmatprep.subr.mxu0 0.0
    %5378 = vmatpush1.msra.mxu0 0.0
    %5379 = vmatprep.subr.mxu0 0.0
    %5380 = vmatpush1.msra.mxu0 0.0
    %5381 = vmatprep.subr.mxu0 0.0
    %5382 = vmatpush1.msra.mxu0 0.0
    %5383 = vmatprep.subr.mxu0 0.0
    %5384 = vmatpush1.msra.mxu0 0.0
    %5385 = vmatprep.subr.mxu0 0.0
    %5386 = vmatpush1.msra.mxu0 0.0
    %5387 = vmatprep.subr.mxu0 0.0
    %5388 = vmatpush1.msra.mxu0 0.0
    %5389 = vmatprep.subr.mxu0 0.0
    %5390 = vmatpush1.msra.mxu0 0.0
    %5391 = vmatprep.subr.mxu0 0.0
    %5392 = vmatpush1.msra.mxu0 0.0
    %5393 = vmatprep.subr.mxu0 0.0
    %5394 = vmatpush1.msra.mxu0 0.0
    %5395 = vmatprep.subr.mxu0 0.0
    %5396 = vmatpush1.msra.mxu0 0.0
    %5397 = vmatprep.subr.mxu0 0.0
    %5398 = vmatpush1.msra.mxu0 0.0
    %5399 = vmatprep.mubr.f32.mxu0 0.0
    %5400 = vmatmul.mubr.f32.gmra.mrb[0].mxu0 %v5253
    %v5401 = vpop.f32.mrb[0].mxu0
    %v5402 = vadd.f32 0.0, %v5401
    %v5403 = vpop.f32.mrb[0].mxu0
    %v5404 = vadd.f32 0.0, %v5403
    %5405 = vmatprep.mubr.f32.mxu0 0.0
    %5406 = vmatmul.mubr.f32.gmra.mrb[0].mxu0 %v5256
    %v5407 = vpop.f32.mrb[0].mxu0
    %v5408 = vadd.f32 0.0, %v5407
    %v5409 = vpop.f32.mrb[0].mxu0
    %v5410 = vadd.f32 0.0, %v5409
    %5411 = vdwg.mxu0
    %v5412 = vxor.u32 %v5325, 2147483648
    %v5413 = vxor.u32 %v5327, 2147483648
    %v5414 = vxor.u32 %v5331, 2147483648
    %v5415 = vxor.u32 %v5333, 2147483648
    %v5416 = vmul.f32 %v5412, 1.442695
    %v5417 = vpow.pop %v5416
    %v5418 = vmul.f32 %v5413, 1.442695
    %v5419 = vpow.pop %v5418
    %v5420 = vmul.f32 %v5414, 1.442695
    %v5421 = vpow.pop %v5420
    %v5422 = vmul.f32 %v5415, 1.442695
    %v5423 = vpow.pop %v5422
    %v5424 = vadd.f32 %v5417, 1.0
    %v5425 = vadd.f32 %v5419, 1.0
    %v5426 = vadd.f32 %v5421, 1.0
    %v5427 = vadd.f32 %v5423, 1.0
    %v5428 = vrcp.pop %v5424
    %v5429 = vmul.f32 1.0, %v5428
    %v5430 = vrcp.pop %v5425
    %v5431 = vmul.f32 1.0, %v5430
    %v5432 = vrcp.pop %v5426
    %v5433 = vmul.f32 1.0, %v5432
    %v5434 = vrcp.pop %v5427
    %v5435 = vmul.f32 1.0, %v5434
    %v5436 = vmul.f32 %v5325, %v5429
    %v5437 = vmul.f32 %v5327, %v5431
    %v5438 = vmul.f32 %v5331, %v5433
    %v5439 = vmul.f32 %v5333, %v5435
    %v5440 = vmul.f32 %v5436, %v5402
    %v5441 = vmul.f32 %v5437, %v5404
    %v5442 = vmul.f32 %v5438, %v5408
    %v5443 = vmul.f32 %v5439, %v5410
    %s5444 = scalar_lea.vmem %s13, 256
    %v5445 = vld [vmem:[%s5444] sm:$0xff]
    %v5446 = vld [vmem:[%s5444 + $0x8] sm:$0xff]
    %v5447 = vld [vmem:[%s5444 + $0x10] sm:$0xff]
    %v5448 = vld [vmem:[%s5444 + $0x18] sm:$0xff]
    %v5449 = vld [vmem:[%s5444 + $0x20] sm:$0xff]
    %v5450 = vld [vmem:[%s5444 + $0x28] sm:$0xff]
    %v5451 = vld [vmem:[%s5444 + $0x30] sm:$0xff]
    %v5452 = vld [vmem:[%s5444 + $0x38] sm:$0xff]
    %v5453 = vld [vmem:[%s5444 + $0x40] sm:$0xff]
    %v5454 = vld [vmem:[%s5444 + $0x48] sm:$0xff]
    %v5455 = vld [vmem:[%s5444 + $0x50] sm:$0xff]
    %v5456 = vld [vmem:[%s5444 + $0x58] sm:$0xff]
    %v5457 = vld [vmem:[%s5444 + $0x60] sm:$0xff]
    %v5458 = vld [vmem:[%s5444 + $0x68] sm:$0xff]
    %v5459 = vld [vmem:[%s5444 + $0x70] sm:$0xff]
    %v5460 = vld [vmem:[%s5444 + $0x78] sm:$0xff]
    %v5461 = vld [vmem:[%s5444 + $0x80] sm:$0xff]
    %v5462 = vld [vmem:[%s5444 + $0x88] sm:$0xff]
    %v5463 = vld [vmem:[%s5444 + $0x90] sm:$0xff]
    %v5464 = vld [vmem:[%s5444 + $0x98] sm:$0xff]
    %v5465 = vld [vmem:[%s5444 + $0xa0] sm:$0xff]
    %v5466 = vld [vmem:[%s5444 + $0xa8] sm:$0xff]
    %v5467 = vld [vmem:[%s5444 + $0xb0] sm:$0xff]
    %v5468 = vld [vmem:[%s5444 + $0xb8] sm:$0xff]
    %v5469 = vld [vmem:[%s5444 + $0xc0] sm:$0xff]
    %v5470 = vld [vmem:[%s5444 + $0xc8] sm:$0xff]
    %v5471 = vld [vmem:[%s5444 + $0xd0] sm:$0xff]
    %v5472 = vld [vmem:[%s5444 + $0xd8] sm:$0xff]
    %v5473 = vld [vmem:[%s5444 + $0xe0] sm:$0xff]
    %v5474 = vld [vmem:[%s5444 + $0xe8] sm:$0xff]
    %v5475 = vld [vmem:[%s5444 + $0xf0] sm:$0xff]
    %v5476 = vld [vmem:[%s5444 + $0xf8] sm:$0xff]
    %5477 = vmatprep.subr.mxu0 0.0
    %5478 = vmatpush1.msra.mxu0 %v5445
    %5479 = vmatprep.subr.mxu0 0.0
    %5480 = vmatpush1.msra.mxu0 %v5446
    %5481 = vmatprep.subr.mxu0 0.0
    %5482 = vmatpush1.msra.mxu0 %v5447
    %5483 = vmatprep.subr.mxu0 0.0
    %5484 = vmatpush1.msra.mxu0 %v5448
    %5485 = vmatprep.subr.mxu0 0.0
    %5486 = vmatpush1.msra.mxu0 %v5449
    %5487 = vmatprep.subr.mxu0 0.0
    %5488 = vmatpush1.msra.mxu0 %v5450
    %5489 = vmatprep.subr.mxu0 0.0
    %5490 = vmatpush1.msra.mxu0 %v5451
    %5491 = vmatprep.subr.mxu0 0.0
    %5492 = vmatpush1.msra.mxu0 %v5452
    %5493 = vmatprep.subr.mxu0 0.0
    %5494 = vmatpush1.msra.mxu0 %v5453
    %5495 = vmatprep.subr.mxu0 0.0
    %5496 = vmatpush1.msra.mxu0 %v5454
    %5497 = vmatprep.subr.mxu0 0.0
    %5498 = vmatpush1.msra.mxu0 %v5455
    %5499 = vmatprep.subr.mxu0 0.0
    %5500 = vmatpush1.msra.mxu0 %v5456
    %5501 = vmatprep.subr.mxu0 0.0
    %5502 = vmatpush1.msra.mxu0 %v5457
    %5503 = vmatprep.subr.mxu0 0.0
    %5504 = vmatpush1.msra.mxu0 %v5458
    %5505 = vmatprep.subr.mxu0 0.0
    %5506 = vmatpush1.msra.mxu0 %v5459
    %5507 = vmatprep.subr.mxu0 0.0
    %5508 = vmatpush1.msra.mxu0 %v5460
    %5509 = vmatprep.subr.mxu0 0.0
    %5510 = vmatpush1.msra.mxu0 %v5461
    %5511 = vmatprep.subr.mxu0 0.0
    %5512 = vmatpush1.msra.mxu0 %v5462
    %5513 = vmatprep.subr.mxu0 0.0
    %5514 = vmatpush1.msra.mxu0 %v5463
    %5515 = vmatprep.subr.mxu0 0.0
    %5516 = vmatpush1.msra.mxu0 %v5464
    %5517 = vmatprep.subr.mxu0 0.0
    %5518 = vmatpush1.msra.mxu0 %v5465
    %5519 = vmatprep.subr.mxu0 0.0
    %5520 = vmatpush1.msra.mxu0 %v5466
    %5521 = vmatprep.subr.mxu0 0.0
    %5522 = vmatpush1.msra.mxu0 %v5467
    %5523 = vmatprep.subr.mxu0 0.0
    %5524 = vmatpush1.msra.mxu0 %v5468
    %5525 = vmatprep.subr.mxu0 0.0
    %5526 = vmatpush1.msra.mxu0 %v5469
    %5527 = vmatprep.subr.mxu0 0.0
    %5528 = vmatpush1.msra.mxu0 %v5470
    %5529 = vmatprep.subr.mxu0 0.0
    %5530 = vmatpush1.msra.mxu0 %v5471
    %5531 = vmatprep.subr.mxu0 0.0
    %5532 = vmatpush1.msra.mxu0 %v5472
    %5533 = vmatprep.subr.mxu0 0.0
    %5534 = vmatpush1.msra.mxu0 %v5473
    %5535 = vmatprep.subr.mxu0 0.0
    %5536 = vmatpush1.msra.mxu0 %v5474
    %5537 = vmatprep.subr.mxu0 0.0
    %5538 = vmatpush1.msra.mxu0 %v5475
    %5539 = vmatprep.subr.mxu0 0.0
    %5540 = vmatpush1.msra.mxu0 %v5476
    %5541 = vmatprep.mubr.f32.mxu0 %v5441
    %5542 = vmatmul.mubr.f32.gmra.mrb[0].mxu0 %v5440
    %v5543 = vpop.f32.mrb[0].mxu0
    %v5544 = vadd.f32 0.0, %v5543
    %v5545 = vpop.f32.mrb[0].mxu0
    %5546 = vmatprep.mubr.f32.mxu0 %v5443
    %5547 = vmatmul.mubr.f32.gmra.mrb[0].mxu0 %v5442
    %v5548 = vpop.f32.mrb[0].mxu0
    %v5549 = vadd.f32 0.0, %v5548
    %v5550 = vpop.f32.mrb[0].mxu0
    %5551 = vdwg.mxu0
    %v5552 = vadd.f32 %v5187, %v5544
    %v5553 = vadd.f32 %v5188, %v5549
    %5554 = vst.msk [vmem:[#allocation2] sm:$0xff] %vm54, %v5552
    %5555 = vst.msk [vmem:[#allocation2 + $0x8] sm:$0xff] %vm54, %v5553
    // Predicated region
    $region58: #{tpu_custom_call.1} parent=1 // pred_check
      _
    $region59: #{tpu_custom_call.1} parent=1 // pred_check_branch
      %5557 = sbr.rel (0) target = $region61
    $region60: #{tpu_custom_call.1} parent=1 // pred_region
      %s5559 = ssub.s32 256, 256
      %5560 = vsyncadd [#allocation3], %s5559
      %s5561 = sshll.u32 [#allocation2], 4
      %s5562 = int_to_ptr.vmem [resolvable:$true] %s5561
      %5567 = dma.vmem_to_hbm [thread:$0]  %s5562, 256, %s14, [#allocation3], 128, 128, 8
    $region61: #{tpu_custom_call.1} parent=1 // pred_fallthru
      _
    // Predicated region
    $region62: #{tpu_custom_call.1} parent=1 // pred_check
      _
    $region63: #{tpu_custom_call.1} parent=1 // pred_check_branch
      %5569 = sbr.rel (0) target = $region65
    $region64: #{tpu_custom_call.1} parent=1 // pred_region
      %5570 = dma.done [#allocation3], 256
    $region65: #{tpu_custom_call.1} parent=1 // pred_fallthru
      _
    %5571 = vsyncpa [#allocation3], 1

</llo_original>
